<compile_context>
chip_gen: v7x
topology: tpu7x:2x2x1
jax: 0.10.0
libtpu: 0.0.40
codegen_flags: <defaults>
</compile_context>

<pallas_src>
import functools
import math

import numpy as np
import jax
import jax.numpy as jnp
from jax import lax
from jax.experimental import pallas as pl
from jax.experimental.pallas import tpu as pltpu

# Hyper-parameters (consistent with the module's __init__).
IN_CHANNELS = 4
CIN_PAD = 8          # channel dim zero-padded so the 1x1-conv matmul has a clean K
EMBED_DIM = 128
NUM_HEADS = 4
NUM_EXPERTS = 4
HEAD_DIM = EMBED_DIM // NUM_HEADS
HIDDEN = EMBED_DIM // 2
LN_EPS = 1e-5
OUT_PAD = 128        # lane-dense output width; real experts live in [:NUM_EXPERTS]
MAX_BLK = 8          # max samples fused per grid step
# f32 is exact & portable (v5e EUP/VPU have no bf16). On v6e/v7x set to jnp.bfloat16
# for ~2x EUP throughput on the attention exp.
ATTN_EXP_DTYPE = jnp.float32


def _layernorm(x, g, b):
    mu = jnp.mean(x, axis=-1, keepdims=True)
    var = jnp.mean((x - mu) ** 2, axis=-1, keepdims=True)
    return (x - mu) * lax.rsqrt(var + LN_EPS) * g + b


def router_kernel(
    x_ref,                                  # (1, blk*S, CIN_PAD) f32
    wproj_ref, bproj_ref,                   # (CIN_PAD, E), (1, E) f32
    g1_ref, b1_ref,                         # (1, E) f32
    wq_ref, wk_ref, wv_ref,                 # (E, E) bf16  (wq pre-scaled by 1/sqrt(Dh))
    bq_ref, bv_ref,                         # (1, E) f32   (bk dropped: softmax-invariant)
    wo_ref, bo_ref,                         # (E, E), (1, E) f32
    w1_ref, bm1_ref,                        # (E, Eh), (1, Eh) f32
    g2_ref, b2_ref,                         # (1, Eh) f32
    w2_ref, bm2_ref,                        # (Eh, OUT_PAD), (1, OUT_PAD); pad logits = -1e30
    out_ref,                                # (1, blk, OUT_PAD) f32
    q_scr, k_scr, v_scr,                    # (blk, S, E) bf16 VMEM scratch
    pooled_scr,                             # (blk, E) f32 VMEM scratch
    *, blk, seq_len,
):
    S = seq_len
    x = x_ref[0]                            # (blk*S, CIN_PAD)

    # 1x1 conv == per-token linear: one matmul on the otherwise idle MXU
    # (channel dim zero-padded host-side, so this is exact).
    h = jnp.dot(x, wproj_ref[...], preferred_element_type=jnp.float32) + bproj_ref[...]

    # LayerNorm over the embedding dim (f32).
    hn = _layernorm(h, g1_ref[...], b1_ref[...])
    hn_b = hn.astype(jnp.bfloat16)

    # QKV projections: bf16 operands on the MXU, f32 accumulate.  bk is dropped
    # (it only adds a per-query constant to the scores -> softmax-invariant).
    q = jnp.dot(hn_b, wq_ref[...], preferred_element_type=jnp.float32) + bq_ref[...]
    k = jnp.dot(hn_b, wk_ref[...], preferred_element_type=jnp.float32)
    v = jnp.dot(hn_b, wv_ref[...], preferred_element_type=jnp.float32) + bv_ref[...]

    # Hoisted bf16 casts; per-sample layout stored once to VMEM scratch.
    q_scr[...] = q.astype(jnp.bfloat16).reshape(blk, S, EMBED_DIM)
    k_scr[...] = k.astype(jnp.bfloat16).reshape(blk, S, EMBED_DIM)
    v_scr[...] = v.astype(jnp.bfloat16).reshape(blk, S, EMBED_DIM)

    inv_S = jnp.float32(1.0 / S)
    ones_row = jnp.ones((1, S), jnp.bfloat16)   # hoisted (pooling weight row for the MXU)

    def sample_body(i, carry):
        q_i = q_scr[i]                       # (S, E) bf16
        k_i = k_scr[i]                       # (S, E) bf16
        v_i = v_scr[i]                       # (S, E) bf16
        kT_i = jnp.transpose(k_i)            # single (S,E)->(E,S) transpose per sample

        for hd in range(NUM_HEADS):          # heads stay unrolled (short, fixed)
            c0 = hd * HEAD_DIM
            qh = q_i[:, c0:c0 + HEAD_DIM]                     # (S, Dh) bf16
            khT = kT_i[c0:c0 + HEAD_DIM, :]                   # (Dh, S) bf16
            vh = v_i[:, c0:c0 + HEAD_DIM]                     # (S, Dh) bf16

            # scores (1/sqrt(Dh) already folded into wq/bq)
            s = jnp.dot(qh, khT, preferred_element_type=jnp.float32)   # (S, S)
            m = jnp.max(s, axis=-1, keepdims=True)
            p = jnp.exp((s - m).astype(ATTN_EXP_DTYPE)).astype(jnp.float32)
            r = jnp.sum(p, axis=-1, keepdims=True)
            w_col = pl.reciprocal(r, approx=True) * inv_S              # (S, 1)

            # Mean over queries commutes with P@V and out_proj: pool the normalized
            # softmax rows with a (1,S)@(S,S) matmul on the MXU (no sublane reduce),
            # then a single (1,S)@(S,Dh) for this head's pooled output.
            p_b = (p * w_col).astype(jnp.bfloat16)                     # (S, S)
            p_pooled = jnp.dot(ones_row, p_b,
                               preferred_element_type=jnp.float32)     # (1, S)
            head_out = jnp.dot(p_pooled.astype(jnp.bfloat16), vh,
                               preferred_element_type=jnp.float32)     # (1, Dh)
            pooled_scr[pl.ds(i, 1), c0:c0 + HEAD_DIM] = head_out
        return carry

    lax.fori_loop(0, blk, sample_body, 0)

    pooled = pooled_scr[...]                                           # (blk, E)

    # Single out_proj on the pooled features.
    attn_pooled = jnp.dot(pooled, wo_ref[...],
                          preferred_element_type=jnp.float32) + bo_ref[...]

    # MLP head: Linear -> ReLU -> LayerNorm -> Linear (padded to OUT_PAD lanes).
    z = jnp.dot(attn_pooled, w1_ref[...],
                preferred_element_type=jnp.float32) + bm1_ref[...]
    z = jnp.maximum(z, 0.0)
    zn = _layernorm(z, g2_ref[...], b2_ref[...])
    logits = jnp.dot(zn, w2_ref[...],
                     preferred_element_type=jnp.float32) + bm2_ref[...]   # (blk, OUT_PAD)

    # Exact softmax over experts (pad logits are -1e30 -> pad probs exactly 0).
    lm = jnp.max(logits, axis=-1, keepdims=True)
    e = jnp.exp(logits - lm)
    out_ref[0] = e / jnp.sum(e, axis=-1, keepdims=True)


def prepare_params(params):
    """Host-side prep: pad conv channels, fold attention scale, cast QKV weights to bf16,
    drop bk, pad the expert head to a lane-dense (Eh, OUT_PAD)."""
    scale = 1.0 / math.sqrt(HEAD_DIM)
    wproj_p = jnp.zeros((CIN_PAD, EMBED_DIM), jnp.float32).at[:IN_CHANNELS, :].set(
        params["w_proj"])
    w2p = jnp.zeros((HIDDEN, OUT_PAD), jnp.float32).at[:, :NUM_EXPERTS].set(params["w2"])
    bm2p = jnp.full((1, OUT_PAD), -1e30, jnp.float32).at[:, :NUM_EXPERTS].set(params["bm2"])
    return [
        wproj_p, params["b_proj"],
        params["g1"], params["b1"],
        (params["wq"] * scale).astype(jnp.bfloat16),
        params["wk"].astype(jnp.bfloat16),
        params["wv"].astype(jnp.bfloat16),
        params["bq"] * scale, params["bv"],
        params["wo"], params["bo"],
        params["w1"], params["bm1"],
        params["g2"], params["b2"],
        w2p, bm2p,
    ]


def _pick_blk(B):
    """Largest blk <= MAX_BLK dividing B with G = B // blk >= 2 (keeps both v7x
    TensorCores busy); falls back to 1."""
    blk = 1
    for d in range(1, min(MAX_BLK, B) + 1):
        if B % d == 0 and (B // d >= 2 or B == 1):
            blk = d
    return blk


def attention_router(x_nchw, params):
    B, C, H, W = x_nchw.shape
    S = H * W
    blk = _pick_blk(B)
    G = B // blk

    # NCHW -> (B, S, Cin) tokens, channel-padded to CIN_PAD, grouped as (G, blk*S, CIN_PAD).
    x_tok = jnp.transpose(x_nchw, (0, 2, 3, 1)).reshape(B, S, C)
    x_tok = jnp.pad(x_tok, ((0, 0), (0, 0), (0, CIN_PAD - C)))
    x_tok = x_tok.reshape(G, blk * S, CIN_PAD)

    plist = prepare_params(params)
    in_specs = [pl.BlockSpec((1, blk * S, CIN_PAD), lambda g: (g, 0, 0))]
    in_specs += [pl.BlockSpec(p.shape, lambda g: (0, 0)) for p in plist]
    # Per-grid-step (disjoint) output blocks -> batch axis can shard across TensorCores.
    out_spec = pl.BlockSpec((1, blk, OUT_PAD), lambda g: (g, 0, 0))

    out = pl.pallas_call(
        functools.partial(router_kernel, blk=blk, seq_len=S),
        out_shape=jax.ShapeDtypeStruct((G, blk, OUT_PAD), jnp.float32),
        grid_spec=pltpu.PrefetchScalarGridSpec(
            num_scalar_prefetch=0,
            grid=(G,),
            in_specs=in_specs,
            out_specs=out_spec,
            scratch_shapes=[
                pltpu.VMEM((blk, S, EMBED_DIM), jnp.bfloat16),   # q
                pltpu.VMEM((blk, S, EMBED_DIM), jnp.bfloat16),   # k
                pltpu.VMEM((blk, S, EMBED_DIM), jnp.bfloat16),   # v
                pltpu.VMEM((blk, EMBED_DIM), jnp.float32),       # pooled rows
            ],
        ),
        compiler_params=pltpu.CompilerParams(
            dimension_semantics=("parallel",),
            vmem_limit_bytes=32 * 1024 * 1024,
        ),
    )(x_tok, *plist)

    return out.reshape(B, OUT_PAD)[:, :NUM_EXPERTS]


def init_params(key):
    E, Eh, Cin, NE = EMBED_DIM, HIDDEN, IN_CHANNELS, NUM_EXPERTS
    ks = jax.random.split(key, 16)

    def r(k, shape, scale=0.05):
        return jax.random.normal(k, shape, jnp.float32) * scale

    return {
        "w_proj": r(ks[0], (Cin, E)),
        "b_proj": r(ks[1], (1, E), 0.01),
        "g1": jnp.ones((1, E), jnp.float32),
        "b1": jnp.zeros((1, E), jnp.float32),
        "wq": r(ks[2], (E, E)), "wk": r(ks[3], (E, E)), "wv": r(ks[4], (E, E)),
        "bq": r(ks[5], (1, E), 0.01), "bk": r(ks[6], (1, E), 0.01), "bv": r(ks[7], (1, E), 0.01),
        "wo": r(ks[8], (E, E)), "bo": r(ks[9], (1, E), 0.01),
        "w1": r(ks[10], (E, Eh)), "bm1": r(ks[11], (1, Eh), 0.01),
        "g2": jnp.ones((1, Eh), jnp.float32),
        "b2": jnp.zeros((1, Eh), jnp.float32),
        "w2": r(ks[12], (Eh, NE)), "bm2": r(ks[13], (1, NE), 0.01),
    }


def reference(x_nchw, p):
    # Pure-JAX f32 reference reproducing the PyTorch forward semantics (incl. bk).
    B, C, H, W = x_nchw.shape
    x = jnp.transpose(x_nchw, (0, 2, 3, 1)).reshape(B, H * W, C)
    h = x @ p["w_proj"] + p["b_proj"]
    mu = h.mean(-1, keepdims=True)
    var = ((h - mu) ** 2).mean(-1, keepdims=True)
    hn = (h - mu) / jnp.sqrt(var + LN_EPS) * p["g1"] + p["b1"]
    q = hn @ p["wq"] + p["bq"]
    k = hn @ p["wk"] + p["bk"]
    v = hn @ p["wv"] + p["bv"]

    def split(t):
        return t.reshape(B, -1, NUM_HEADS, HEAD_DIM).transpose(0, 2, 1, 3)

    qh, kh, vh = split(q), split(k), split(v)
    s = jnp.einsum("bhqd,bhkd->bhqk", qh, kh) / math.sqrt(HEAD_DIM)
    pm = jax.nn.softmax(s, axis=-1)
    o = jnp.einsum("bhqk,bhkd->bhqd", pm, vh).transpose(0, 2, 1, 3).reshape(B, -1, EMBED_DIM)
    o = o @ p["wo"] + p["bo"]
    pooled = o.mean(axis=1)
    z = jnp.maximum(pooled @ p["w1"] + p["bm1"], 0.0)
    mu2 = z.mean(-1, keepdims=True)
    var2 = ((z - mu2) ** 2).mean(-1, keepdims=True)
    zn = (z - mu2) / jnp.sqrt(var2 + LN_EPS) * p["g2"] + p["b2"]
    logits = zn @ p["w2"] + p["bm2"]
    return jax.nn.softmax(logits, axis=-1)


if __name__ == "__main__":
    key = jax.random.PRNGKey(0)
    k_x, k_p = jax.random.split(key)

    B, Hs, Ws = 2, 16, 16
    x = jax.random.normal(k_x, (B, IN_CHANNELS, Hs, Ws), jnp.float32)
    params = init_params(k_p)

    out = attention_router(x, params)
    out = jax.block_until_ready(out)

    ref = reference(x, params)
    # Tolerance accounts for bf16 MXU operands (QKV, softmax pooling, P@V) and the
    # approx reciprocal in the attention softmax vs the pure f32 reference.
    np.testing.assert_allclose(np.asarray(out), np.asarray(ref), rtol=2e-2, atol=2e-3)

    print("KERNEL_OK")
</pallas_src>

<mosaic_0001>
module attributes {stable_mosaic.version = 11 : i64} {
  func.func @router_kernel(%arg0: i32, %arg1: memref<1x256x8xf32, #tpu.memory_space<vmem>>, %arg2: memref<8x128xf32, #tpu.memory_space<vmem>>, %arg3: memref<1x128xf32, #tpu.memory_space<vmem>>, %arg4: memref<1x128xf32, #tpu.memory_space<vmem>>, %arg5: memref<1x128xf32, #tpu.memory_space<vmem>>, %arg6: memref<128x128xbf16, #tpu.memory_space<vmem>>, %arg7: memref<128x128xbf16, #tpu.memory_space<vmem>>, %arg8: memref<128x128xbf16, #tpu.memory_space<vmem>>, %arg9: memref<1x128xf32, #tpu.memory_space<vmem>>, %arg10: memref<1x128xf32, #tpu.memory_space<vmem>>, %arg11: memref<128x128xf32, #tpu.memory_space<vmem>>, %arg12: memref<1x128xf32, #tpu.memory_space<vmem>>, %arg13: memref<128x64xf32, #tpu.memory_space<vmem>>, %arg14: memref<1x64xf32, #tpu.memory_space<vmem>>, %arg15: memref<1x64xf32, #tpu.memory_space<vmem>>, %arg16: memref<1x64xf32, #tpu.memory_space<vmem>>, %arg17: memref<64x128xf32, #tpu.memory_space<vmem>>, %arg18: memref<1x128xf32, #tpu.memory_space<vmem>>, %arg19: memref<1x1x128xf32, #tpu.memory_space<vmem>>, %arg20: memref<1x256x128xbf16, #tpu.memory_space<vmem>>, %arg21: memref<1x256x128xbf16, #tpu.memory_space<vmem>>, %arg22: memref<1x256x128xbf16, #tpu.memory_space<vmem>>, %arg23: memref<1x128xf32, #tpu.memory_space<vmem>>) attributes {dimension_semantics = [#tpu.dimension_semantics<parallel>], iteration_bounds = array<i64: 2>, scalar_prefetch = 0 : i64, scratch_operands = 4 : i64, tpu.core_type = #tpu.core_type<tc>, window_params = [{transform_indices = @transform_0, window_bounds = array<i64: 1, 256, 8>}, {pipeline_mode = #tpu.pipeline_mode<synchronous>, transform_indices = @transform_1, window_bounds = array<i64: 8, 128>}, {pipeline_mode = #tpu.pipeline_mode<synchronous>, transform_indices = @transform_2, window_bounds = array<i64: 1, 128>}, {pipeline_mode = #tpu.pipeline_mode<synchronous>, transform_indices = @transform_3, window_bounds = array<i64: 1, 128>}, {pipeline_mode = #tpu.pipeline_mode<synchronous>, transform_indices = @transform_4, window_bounds = array<i64: 1, 128>}, {pipeline_mode = #tpu.pipeline_mode<synchronous>, transform_indices = @transform_5, window_bounds = array<i64: 128, 128>}, {pipeline_mode = #tpu.pipeline_mode<synchronous>, transform_indices = @transform_6, window_bounds = array<i64: 128, 128>}, {pipeline_mode = #tpu.pipeline_mode<synchronous>, transform_indices = @transform_7, window_bounds = array<i64: 128, 128>}, {pipeline_mode = #tpu.pipeline_mode<synchronous>, transform_indices = @transform_8, window_bounds = array<i64: 1, 128>}, {pipeline_mode = #tpu.pipeline_mode<synchronous>, transform_indices = @transform_9, window_bounds = array<i64: 1, 128>}, {pipeline_mode = #tpu.pipeline_mode<synchronous>, transform_indices = @transform_10, window_bounds = array<i64: 128, 128>}, {pipeline_mode = #tpu.pipeline_mode<synchronous>, transform_indices = @transform_11, window_bounds = array<i64: 1, 128>}, {pipeline_mode = #tpu.pipeline_mode<synchronous>, transform_indices = @transform_12, window_bounds = array<i64: 128, 64>}, {pipeline_mode = #tpu.pipeline_mode<synchronous>, transform_indices = @transform_13, window_bounds = array<i64: 1, 64>}, {pipeline_mode = #tpu.pipeline_mode<synchronous>, transform_indices = @transform_14, window_bounds = array<i64: 1, 64>}, {pipeline_mode = #tpu.pipeline_mode<synchronous>, transform_indices = @transform_15, window_bounds = array<i64: 1, 64>}, {pipeline_mode = #tpu.pipeline_mode<synchronous>, transform_indices = @transform_16, window_bounds = array<i64: 64, 128>}, {pipeline_mode = #tpu.pipeline_mode<synchronous>, transform_indices = @transform_17, window_bounds = array<i64: 1, 128>}, {transform_indices = @transform_18, window_bounds = array<i64: 1, 1, 128>}]} {
    %c0 = arith.constant 0 : index
    %c0_0 = arith.constant 0 : index
    %c0_1 = arith.constant 0 : index
    %0 = vector.load %arg1[%c0, %c0_0, %c0_1] : memref<1x256x8xf32, #tpu.memory_space<vmem>>, vector<1x256x8xf32>
    %1 = vector.shape_cast %0 : vector<1x256x8xf32> to vector<256x8xf32>
    %c0_2 = arith.constant 0 : index
    %c0_3 = arith.constant 0 : index
    %2 = vector.load %arg2[%c0_2, %c0_3] : memref<8x128xf32, #tpu.memory_space<vmem>>, vector<8x128xf32>
    %cst = arith.constant dense<0.000000e+00> : vector<256x128xf32>
    %3 = tpu.matmul %1, %2, %cst {dimension_numbers = #tpu.dot_dimension_numbers<[1], [0], [0], [1], [0, 0, 1, 1], [], []>} : vector<256x8xf32>, vector<8x128xf32>, vector<256x128xf32> -> vector<256x128xf32>
    %c0_4 = arith.constant 0 : index
    %c0_5 = arith.constant 0 : index
    %4 = vector.load %arg3[%c0_4, %c0_5] : memref<1x128xf32, #tpu.memory_space<vmem>>, vector<1x128xf32>
    %5 = vector.broadcast %4 : vector<1x128xf32> to vector<256x128xf32>
    %6 = arith.addf %3, %5 : vector<256x128xf32>
    %c0_6 = arith.constant 0 : index
    %c0_7 = arith.constant 0 : index
    %7 = vector.load %arg4[%c0_6, %c0_7] : memref<1x128xf32, #tpu.memory_space<vmem>>, vector<1x128xf32>
    %c0_8 = arith.constant 0 : index
    %c0_9 = arith.constant 0 : index
    %8 = vector.load %arg5[%c0_8, %c0_9] : memref<1x128xf32, #tpu.memory_space<vmem>>, vector<1x128xf32>
    %cst_10 = arith.constant dense<0.000000e+00> : vector<256xf32>
    %9 = vector.multi_reduction <add>, %6, %cst_10 [1] : vector<256x128xf32> to vector<256xf32>
    %10 = vector.shape_cast %9 : vector<256xf32> to vector<256x1xf32>
    %cst_11 = arith.constant 1.280000e+02 : f32
    %11 = vector.broadcast %cst_11 : f32 to vector<256x1xf32>
    %12 = arith.divf %10, %11 : vector<256x1xf32>
    %13 = vector.broadcast %12 : vector<256x1xf32> to vector<256x128xf32>
    %14 = arith.subf %6, %13 : vector<256x128xf32>
    %15 = arith.mulf %14, %14 : vector<256x128xf32>
    %cst_12 = arith.constant dense<0.000000e+00> : vector<256xf32>
    %16 = vector.multi_reduction <add>, %15, %cst_12 [1] : vector<256x128xf32> to vector<256xf32>
    %17 = vector.shape_cast %16 : vector<256xf32> to vector<256x1xf32>
    %cst_13 = arith.constant 1.280000e+02 : f32
    %18 = vector.broadcast %cst_13 : f32 to vector<256x1xf32>
    %19 = arith.divf %17, %18 : vector<256x1xf32>
    %20 = vector.broadcast %12 : vector<256x1xf32> to vector<256x128xf32>
    %21 = arith.subf %6, %20 : vector<256x128xf32>
    %cst_14 = arith.constant 9.99999974E-6 : f32
    %22 = vector.broadcast %cst_14 : f32 to vector<256x1xf32>
    %23 = arith.addf %19, %22 : vector<256x1xf32>
    %24 = math.rsqrt %23 : vector<256x1xf32>
    %25 = vector.broadcast %24 : vector<256x1xf32> to vector<256x128xf32>
    %26 = arith.mulf %21, %25 : vector<256x128xf32>
    %27 = vector.broadcast %7 : vector<1x128xf32> to vector<256x128xf32>
    %28 = arith.mulf %26, %27 : vector<256x128xf32>
    %29 = vector.broadcast %8 : vector<1x128xf32> to vector<256x128xf32>
    %30 = arith.addf %28, %29 : vector<256x128xf32>
    %31 = arith.truncf %30 : vector<256x128xf32> to vector<256x128xbf16>
    %c0_15 = arith.constant 0 : index
    %c0_16 = arith.constant 0 : index
    %32 = vector.load %arg6[%c0_15, %c0_16] : memref<128x128xbf16, #tpu.memory_space<vmem>>, vector<128x128xbf16>
    %cst_17 = arith.constant dense<0.000000e+00> : vector<256x128xf32>
    %33 = tpu.matmul %31, %32, %cst_17 {dimension_numbers = #tpu.dot_dimension_numbers<[1], [0], [0], [1], [0, 0, 1, 1], [], []>} : vector<256x128xbf16>, vector<128x128xbf16>, vector<256x128xf32> -> vector<256x128xf32>
    %c0_18 = arith.constant 0 : index
    %c0_19 = arith.constant 0 : index
    %34 = vector.load %arg9[%c0_18, %c0_19] : memref<1x128xf32, #tpu.memory_space<vmem>>, vector<1x128xf32>
    %35 = vector.broadcast %34 : vector<1x128xf32> to vector<256x128xf32>
    %36 = arith.addf %33, %35 : vector<256x128xf32>
    %c0_20 = arith.constant 0 : index
    %c0_21 = arith.constant 0 : index
    %37 = vector.load %arg7[%c0_20, %c0_21] : memref<128x128xbf16, #tpu.memory_space<vmem>>, vector<128x128xbf16>
    %cst_22 = arith.constant dense<0.000000e+00> : vector<256x128xf32>
    %38 = tpu.matmul %31, %37, %cst_22 {dimension_numbers = #tpu.dot_dimension_numbers<[1], [0], [0], [1], [0, 0, 1, 1], [], []>} : vector<256x128xbf16>, vector<128x128xbf16>, vector<256x128xf32> -> vector<256x128xf32>
    %c0_23 = arith.constant 0 : index
    %c0_24 = arith.constant 0 : index
    %39 = vector.load %arg8[%c0_23, %c0_24] : memref<128x128xbf16, #tpu.memory_space<vmem>>, vector<128x128xbf16>
    %cst_25 = arith.constant dense<0.000000e+00> : vector<256x128xf32>
    %40 = tpu.matmul %31, %39, %cst_25 {dimension_numbers = #tpu.dot_dimension_numbers<[1], [0], [0], [1], [0, 0, 1, 1], [], []>} : vector<256x128xbf16>, vector<128x128xbf16>, vector<256x128xf32> -> vector<256x128xf32>
    %c0_26 = arith.constant 0 : index
    %c0_27 = arith.constant 0 : index
    %41 = vector.load %arg10[%c0_26, %c0_27] : memref<1x128xf32, #tpu.memory_space<vmem>>, vector<1x128xf32>
    %42 = vector.broadcast %41 : vector<1x128xf32> to vector<256x128xf32>
    %43 = arith.addf %40, %42 : vector<256x128xf32>
    %44 = arith.truncf %36 : vector<256x128xf32> to vector<256x128xbf16>
    %45 = vector.shape_cast %44 : vector<256x128xbf16> to vector<1x256x128xbf16>
    %c0_28 = arith.constant 0 : index
    %c0_29 = arith.constant 0 : index
    %c0_30 = arith.constant 0 : index
    %46 = vector.load %arg20[%c0_28, %c0_29, %c0_30] : memref<1x256x128xbf16, #tpu.memory_space<vmem>>, vector<1x256x128xbf16>
    tpu.vector_store %arg20[%c0_28, %c0_29, %c0_30], %45 {strides = array<i32>} : memref<1x256x128xbf16, #tpu.memory_space<vmem>>, vector<1x256x128xbf16>,
    %47 = arith.truncf %38 : vector<256x128xf32> to vector<256x128xbf16>
    %48 = vector.shape_cast %47 : vector<256x128xbf16> to vector<1x256x128xbf16>
    %c0_31 = arith.constant 0 : index
    %c0_32 = arith.constant 0 : index
    %c0_33 = arith.constant 0 : index
    %49 = vector.load %arg21[%c0_31, %c0_32, %c0_33] : memref<1x256x128xbf16, #tpu.memory_space<vmem>>, vector<1x256x128xbf16>
    tpu.vector_store %arg21[%c0_31, %c0_32, %c0_33], %48 {strides = array<i32>} : memref<1x256x128xbf16, #tpu.memory_space<vmem>>, vector<1x256x128xbf16>,
    %50 = arith.truncf %43 : vector<256x128xf32> to vector<256x128xbf16>
    %51 = vector.shape_cast %50 : vector<256x128xbf16> to vector<1x256x128xbf16>
    %c0_34 = arith.constant 0 : index
    %c0_35 = arith.constant 0 : index
    %c0_36 = arith.constant 0 : index
    %52 = vector.load %arg22[%c0_34, %c0_35, %c0_36] : memref<1x256x128xbf16, #tpu.memory_space<vmem>>, vector<1x256x128xbf16>
    tpu.vector_store %arg22[%c0_34, %c0_35, %c0_36], %51 {strides = array<i32>} : memref<1x256x128xbf16, #tpu.memory_space<vmem>>, vector<1x256x128xbf16>,
    %cst_37 = arith.constant 1.000000e+00 : bf16
    %53 = vector.broadcast %cst_37 : bf16 to vector<1x256xbf16>
    %cst_38 = arith.constant 3.906250e-03 : f32
    %c0_i32 = arith.constant 0 : i32
    %54 = arith.index_cast %c0_i32 : i32 to index
    %c0_39 = arith.constant 0 : index
    %c0_40 = arith.constant 0 : index
    %55 = vector.load %arg20[%54, %c0_39, %c0_40] : memref<1x256x128xbf16, #tpu.memory_space<vmem>>, vector<1x256x128xbf16>
    %56 = vector.shape_cast %55 : vector<1x256x128xbf16> to vector<256x128xbf16>
    %57 = arith.index_cast %c0_i32 : i32 to index
    %c0_41 = arith.constant 0 : index
    %c0_42 = arith.constant 0 : index
    %58 = vector.load %arg21[%57, %c0_41, %c0_42] : memref<1x256x128xbf16, #tpu.memory_space<vmem>>, vector<1x256x128xbf16>
    %59 = vector.shape_cast %58 : vector<1x256x128xbf16> to vector<256x128xbf16>
    %60 = arith.index_cast %c0_i32 : i32 to index
    %c0_43 = arith.constant 0 : index
    %c0_44 = arith.constant 0 : index
    %61 = vector.load %arg22[%60, %c0_43, %c0_44] : memref<1x256x128xbf16, #tpu.memory_space<vmem>>, vector<1x256x128xbf16>
    %62 = vector.shape_cast %61 : vector<1x256x128xbf16> to vector<256x128xbf16>
    %63 = tpu.transpose %59, [1, 0] : vector<256x128xbf16> -> vector<128x256xbf16>
    %64 = vector.extract_strided_slice %56 {offsets = [0, 0], sizes = [256, 32], strides = [1, 1]} : vector<256x128xbf16> to vector<256x32xbf16>
    %65 = vector.extract_strided_slice %63 {offsets = [0, 0], sizes = [32, 256], strides = [1, 1]} : vector<128x256xbf16> to vector<32x256xbf16>
    %66 = vector.extract_strided_slice %62 {offsets = [0, 0], sizes = [256, 32], strides = [1, 1]} : vector<256x128xbf16> to vector<256x32xbf16>
    %cst_45 = arith.constant dense<0.000000e+00> : vector<256x256xf32>
    %67 = tpu.matmul %64, %65, %cst_45 {dimension_numbers = #tpu.dot_dimension_numbers<[1], [0], [0], [1], [0, 0, 1, 1], [], []>} : vector<256x32xbf16>, vector<32x256xbf16>, vector<256x256xf32> -> vector<256x256xf32>
    %cst_46 = arith.constant dense<0xFF800000> : vector<256xf32>
    %68 = vector.multi_reduction <maximumf>, %67, %cst_46 [1] : vector<256x256xf32> to vector<256xf32>
    %69 = vector.shape_cast %68 : vector<256xf32> to vector<256x1xf32>
    %70 = vector.broadcast %69 : vector<256x1xf32> to vector<256x256xf32>
    %71 = arith.subf %67, %70 : vector<256x256xf32>
    %72 = math.exp %71 : vector<256x256xf32>
    %cst_47 = arith.constant dense<0.000000e+00> : vector<256xf32>
    %73 = vector.multi_reduction <add>, %72, %cst_47 [1] : vector<256x256xf32> to vector<256xf32>
    %74 = vector.shape_cast %73 : vector<256xf32> to vector<256x1xf32>
    %75 = tpu.reciprocal %74 {approx = true} : vector<256x1xf32> -> vector<256x1xf32>
    %76 = vector.broadcast %cst_38 : f32 to vector<256x1xf32>
    %77 = arith.mulf %75, %76 : vector<256x1xf32>
    %78 = vector.broadcast %77 : vector<256x1xf32> to vector<256x256xf32>
    %79 = arith.mulf %72, %78 : vector<256x256xf32>
    %80 = arith.truncf %79 : vector<256x256xf32> to vector<256x256xbf16>
    %cst_48 = arith.constant dense<0.000000e+00> : vector<1x256xf32>
    %81 = tpu.matmul %53, %80, %cst_48 {dimension_numbers = #tpu.dot_dimension_numbers<[1], [0], [0], [1], [0, 0, 1, 1], [], []>} : vector<1x256xbf16>, vector<256x256xbf16>, vector<1x256xf32> -> vector<1x256xf32>
    %82 = arith.truncf %81 : vector<1x256xf32> to vector<1x256xbf16>
    %cst_49 = arith.constant dense<0.000000e+00> : vector<1x32xf32>
    %83 = tpu.matmul %82, %66, %cst_49 {dimension_numbers = #tpu.dot_dimension_numbers<[1], [0], [0], [1], [0, 0, 1, 1], [], []>} : vector<1x256xbf16>, vector<256x32xbf16>, vector<1x32xf32> -> vector<1x32xf32>
    %84 = arith.index_cast %c0_i32 : i32 to index
    %c0_50 = arith.constant 0 : index
    %85 = vector.load %arg23[%84, %c0_50] : memref<1x128xf32, #tpu.memory_space<vmem>>, vector<1x32xf32>
    tpu.vector_store %arg23[%84, %c0_50], %83 {strides = array<i32>} : memref<1x128xf32, #tpu.memory_space<vmem>>, vector<1x32xf32>,
    %86 = vector.extract_strided_slice %56 {offsets = [0, 32], sizes = [256, 32], strides = [1, 1]} : vector<256x128xbf16> to vector<256x32xbf16>
    %87 = vector.extract_strided_slice %63 {offsets = [32, 0], sizes = [32, 256], strides = [1, 1]} : vector<128x256xbf16> to vector<32x256xbf16>
    %88 = vector.extract_strided_slice %62 {offsets = [0, 32], sizes = [256, 32], strides = [1, 1]} : vector<256x128xbf16> to vector<256x32xbf16>
    %cst_51 = arith.constant dense<0.000000e+00> : vector<256x256xf32>
    %89 = tpu.matmul %86, %87, %cst_51 {dimension_numbers = #tpu.dot_dimension_numbers<[1], [0], [0], [1], [0, 0, 1, 1], [], []>} : vector<256x32xbf16>, vector<32x256xbf16>, vector<256x256xf32> -> vector<256x256xf32>
    %cst_52 = arith.constant dense<0xFF800000> : vector<256xf32>
    %90 = vector.multi_reduction <maximumf>, %89, %cst_52 [1] : vector<256x256xf32> to vector<256xf32>
    %91 = vector.shape_cast %90 : vector<256xf32> to vector<256x1xf32>
    %92 = vector.broadcast %91 : vector<256x1xf32> to vector<256x256xf32>
    %93 = arith.subf %89, %92 : vector<256x256xf32>
    %94 = math.exp %93 : vector<256x256xf32>
    %cst_53 = arith.constant dense<0.000000e+00> : vector<256xf32>
    %95 = vector.multi_reduction <add>, %94, %cst_53 [1] : vector<256x256xf32> to vector<256xf32>
    %96 = vector.shape_cast %95 : vector<256xf32> to vector<256x1xf32>
    %97 = tpu.reciprocal %96 {approx = true} : vector<256x1xf32> -> vector<256x1xf32>
    %98 = vector.broadcast %cst_38 : f32 to vector<256x1xf32>
    %99 = arith.mulf %97, %98 : vector<256x1xf32>
    %100 = vector.broadcast %99 : vector<256x1xf32> to vector<256x256xf32>
    %101 = arith.mulf %94, %100 : vector<256x256xf32>
    %102 = arith.truncf %101 : vector<256x256xf32> to vector<256x256xbf16>
    %cst_54 = arith.constant dense<0.000000e+00> : vector<1x256xf32>
    %103 = tpu.matmul %53, %102, %cst_54 {dimension_numbers = #tpu.dot_dimension_numbers<[1], [0], [0], [1], [0, 0, 1, 1], [], []>} : vector<1x256xbf16>, vector<256x256xbf16>, vector<1x256xf32> -> vector<1x256xf32>
    %104 = arith.truncf %103 : vector<1x256xf32> to vector<1x256xbf16>
    %cst_55 = arith.constant dense<0.000000e+00> : vector<1x32xf32>
    %105 = tpu.matmul %104, %88, %cst_55 {dimension_numbers = #tpu.dot_dimension_numbers<[1], [0], [0], [1], [0, 0, 1, 1], [], []>} : vector<1x256xbf16>, vector<256x32xbf16>, vector<1x32xf32> -> vector<1x32xf32>
    %106 = arith.index_cast %c0_i32 : i32 to index
    %c32 = arith.constant 32 : index
    %107 = vector.load %arg23[%106, %c32] : memref<1x128xf32, #tpu.memory_space<vmem>>, vector<1x32xf32>
    tpu.vector_store %arg23[%106, %c32], %105 {strides = array<i32>} : memref<1x128xf32, #tpu.memory_space<vmem>>, vector<1x32xf32>,
    %108 = vector.extract_strided_slice %56 {offsets = [0, 64], sizes = [256, 32], strides = [1, 1]} : vector<256x128xbf16> to vector<256x32xbf16>
    %109 = vector.extract_strided_slice %63 {offsets = [64, 0], sizes = [32, 256], strides = [1, 1]} : vector<128x256xbf16> to vector<32x256xbf16>
    %110 = vector.extract_strided_slice %62 {offsets = [0, 64], sizes = [256, 32], strides = [1, 1]} : vector<256x128xbf16> to vector<256x32xbf16>
    %cst_56 = arith.constant dense<0.000000e+00> : vector<256x256xf32>
    %111 = tpu.matmul %108, %109, %cst_56 {dimension_numbers = #tpu.dot_dimension_numbers<[1], [0], [0], [1], [0, 0, 1, 1], [], []>} : vector<256x32xbf16>, vector<32x256xbf16>, vector<256x256xf32> -> vector<256x256xf32>
    %cst_57 = arith.constant dense<0xFF800000> : vector<256xf32>
    %112 = vector.multi_reduction <maximumf>, %111, %cst_57 [1] : vector<256x256xf32> to vector<256xf32>
    %113 = vector.shape_cast %112 : vector<256xf32> to vector<256x1xf32>
    %114 = vector.broadcast %113 : vector<256x1xf32> to vector<256x256xf32>
    %115 = arith.subf %111, %114 : vector<256x256xf32>
    %116 = math.exp %115 : vector<256x256xf32>
    %cst_58 = arith.constant dense<0.000000e+00> : vector<256xf32>
    %117 = vector.multi_reduction <add>, %116, %cst_58 [1] : vector<256x256xf32> to vector<256xf32>
    %118 = vector.shape_cast %117 : vector<256xf32> to vector<256x1xf32>
    %119 = tpu.reciprocal %118 {approx = true} : vector<256x1xf32> -> vector<256x1xf32>
    %120 = vector.broadcast %cst_38 : f32 to vector<256x1xf32>
    %121 = arith.mulf %119, %120 : vector<256x1xf32>
    %122 = vector.broadcast %121 : vector<256x1xf32> to vector<256x256xf32>
    %123 = arith.mulf %116, %122 : vector<256x256xf32>
    %124 = arith.truncf %123 : vector<256x256xf32> to vector<256x256xbf16>
    %cst_59 = arith.constant dense<0.000000e+00> : vector<1x256xf32>
    %125 = tpu.matmul %53, %124, %cst_59 {dimension_numbers = #tpu.dot_dimension_numbers<[1], [0], [0], [1], [0, 0, 1, 1], [], []>} : vector<1x256xbf16>, vector<256x256xbf16>, vector<1x256xf32> -> vector<1x256xf32>
    %126 = arith.truncf %125 : vector<1x256xf32> to vector<1x256xbf16>
    %cst_60 = arith.constant dense<0.000000e+00> : vector<1x32xf32>
    %127 = tpu.matmul %126, %110, %cst_60 {dimension_numbers = #tpu.dot_dimension_numbers<[1], [0], [0], [1], [0, 0, 1, 1], [], []>} : vector<1x256xbf16>, vector<256x32xbf16>, vector<1x32xf32> -> vector<1x32xf32>
    %128 = arith.index_cast %c0_i32 : i32 to index
    %c64 = arith.constant 64 : index
    %129 = vector.load %arg23[%128, %c64] : memref<1x128xf32, #tpu.memory_space<vmem>>, vector<1x32xf32>
    tpu.vector_store %arg23[%128, %c64], %127 {strides = array<i32>} : memref<1x128xf32, #tpu.memory_space<vmem>>, vector<1x32xf32>,
    %130 = vector.extract_strided_slice %56 {offsets = [0, 96], sizes = [256, 32], strides = [1, 1]} : vector<256x128xbf16> to vector<256x32xbf16>
    %131 = vector.extract_strided_slice %63 {offsets = [96, 0], sizes = [32, 256], strides = [1, 1]} : vector<128x256xbf16> to vector<32x256xbf16>
    %132 = vector.extract_strided_slice %62 {offsets = [0, 96], sizes = [256, 32], strides = [1, 1]} : vector<256x128xbf16> to vector<256x32xbf16>
    %cst_61 = arith.constant dense<0.000000e+00> : vector<256x256xf32>
    %133 = tpu.matmul %130, %131, %cst_61 {dimension_numbers = #tpu.dot_dimension_numbers<[1], [0], [0], [1], [0, 0, 1, 1], [], []>} : vector<256x32xbf16>, vector<32x256xbf16>, vector<256x256xf32> -> vector<256x256xf32>
    %cst_62 = arith.constant dense<0xFF800000> : vector<256xf32>
    %134 = vector.multi_reduction <maximumf>, %133, %cst_62 [1] : vector<256x256xf32> to vector<256xf32>
    %135 = vector.shape_cast %134 : vector<256xf32> to vector<256x1xf32>
    %136 = vector.broadcast %135 : vector<256x1xf32> to vector<256x256xf32>
    %137 = arith.subf %133, %136 : vector<256x256xf32>
    %138 = math.exp %137 : vector<256x256xf32>
    %cst_63 = arith.constant dense<0.000000e+00> : vector<256xf32>
    %139 = vector.multi_reduction <add>, %138, %cst_63 [1] : vector<256x256xf32> to vector<256xf32>
    %140 = vector.shape_cast %139 : vector<256xf32> to vector<256x1xf32>
    %141 = tpu.reciprocal %140 {approx = true} : vector<256x1xf32> -> vector<256x1xf32>
    %142 = vector.broadcast %cst_38 : f32 to vector<256x1xf32>
    %143 = arith.mulf %141, %142 : vector<256x1xf32>
    %144 = vector.broadcast %143 : vector<256x1xf32> to vector<256x256xf32>
    %145 = arith.mulf %138, %144 : vector<256x256xf32>
    %146 = arith.truncf %145 : vector<256x256xf32> to vector<256x256xbf16>
    %cst_64 = arith.constant dense<0.000000e+00> : vector<1x256xf32>
    %147 = tpu.matmul %53, %146, %cst_64 {dimension_numbers = #tpu.dot_dimension_numbers<[1], [0], [0], [1], [0, 0, 1, 1], [], []>} : vector<1x256xbf16>, vector<256x256xbf16>, vector<1x256xf32> -> vector<1x256xf32>
    %148 = arith.truncf %147 : vector<1x256xf32> to vector<1x256xbf16>
    %cst_65 = arith.constant dense<0.000000e+00> : vector<1x32xf32>
    %149 = tpu.matmul %148, %132, %cst_65 {dimension_numbers = #tpu.dot_dimension_numbers<[1], [0], [0], [1], [0, 0, 1, 1], [], []>} : vector<1x256xbf16>, vector<256x32xbf16>, vector<1x32xf32> -> vector<1x32xf32>
    %150 = arith.index_cast %c0_i32 : i32 to index
    %c96 = arith.constant 96 : index
    %151 = vector.load %arg23[%150, %c96] : memref<1x128xf32, #tpu.memory_space<vmem>>, vector<1x32xf32>
    tpu.vector_store %arg23[%150, %c96], %149 {strides = array<i32>} : memref<1x128xf32, #tpu.memory_space<vmem>>, vector<1x32xf32>,
    %c1_i32 = arith.constant 1 : i32
    %c0_66 = arith.constant 0 : index
    %c0_67 = arith.constant 0 : index
    %152 = vector.load %arg23[%c0_66, %c0_67] : memref<1x128xf32, #tpu.memory_space<vmem>>, vector<1x128xf32>
    %c0_68 = arith.constant 0 : index
    %c0_69 = arith.constant 0 : index
    %153 = vector.load %arg11[%c0_68, %c0_69] : memref<128x128xf32, #tpu.memory_space<vmem>>, vector<128x128xf32>
    %cst_70 = arith.constant dense<0.000000e+00> : vector<1x128xf32>
    %154 = tpu.matmul %152, %153, %cst_70 {dimension_numbers = #tpu.dot_dimension_numbers<[1], [0], [0], [1], [0, 0, 1, 1], [], []>} : vector<1x128xf32>, vector<128x128xf32>, vector<1x128xf32> -> vector<1x128xf32>
    %c0_71 = arith.constant 0 : index
    %c0_72 = arith.constant 0 : index
    %155 = vector.load %arg12[%c0_71, %c0_72] : memref<1x128xf32, #tpu.memory_space<vmem>>, vector<1x128xf32>
    %156 = arith.addf %154, %155 : vector<1x128xf32>
    %c0_73 = arith.constant 0 : index
    %c0_74 = arith.constant 0 : index
    %157 = vector.load %arg13[%c0_73, %c0_74] : memref<128x64xf32, #tpu.memory_space<vmem>>, vector<128x64xf32>
    %cst_75 = arith.constant dense<0.000000e+00> : vector<1x64xf32>
    %158 = tpu.matmul %156, %157, %cst_75 {dimension_numbers = #tpu.dot_dimension_numbers<[1], [0], [0], [1], [0, 0, 1, 1], [], []>} : vector<1x128xf32>, vector<128x64xf32>, vector<1x64xf32> -> vector<1x64xf32>
    %c0_76 = arith.constant 0 : index
    %c0_77 = arith.constant 0 : index
    %159 = vector.load %arg14[%c0_76, %c0_77] : memref<1x64xf32, #tpu.memory_space<vmem>>, vector<1x64xf32>
    %160 = arith.addf %158, %159 : vector<1x64xf32>
    %cst_78 = arith.constant 0.000000e+00 : f32
    %161 = vector.broadcast %cst_78 : f32 to vector<1x64xf32>
    %162 = arith.maximumf %160, %161 : vector<1x64xf32>
    %c0_79 = arith.constant 0 : index
    %c0_80 = arith.constant 0 : index
    %163 = vector.load %arg15[%c0_79, %c0_80] : memref<1x64xf32, #tpu.memory_space<vmem>>, vector<1x64xf32>
    %c0_81 = arith.constant 0 : index
    %c0_82 = arith.constant 0 : index
    %164 = vector.load %arg16[%c0_81, %c0_82] : memref<1x64xf32, #tpu.memory_space<vmem>>, vector<1x64xf32>
    %cst_83 = arith.constant dense<0.000000e+00> : vector<1xf32>
    %165 = vector.multi_reduction <add>, %162, %cst_83 [1] : vector<1x64xf32> to vector<1xf32>
    %166 = vector.shape_cast %165 : vector<1xf32> to vector<1x1xf32>
    %cst_84 = arith.constant 6.400000e+01 : f32
    %167 = vector.broadcast %cst_84 : f32 to vector<1x1xf32>
    %168 = arith.divf %166, %167 : vector<1x1xf32>
    %169 = vector.broadcast %168 : vector<1x1xf32> to vector<1x64xf32>
    %170 = arith.subf %162, %169 : vector<1x64xf32>
    %171 = arith.mulf %170, %170 : vector<1x64xf32>
    %cst_85 = arith.constant dense<0.000000e+00> : vector<1xf32>
    %172 = vector.multi_reduction <add>, %171, %cst_85 [1] : vector<1x64xf32> to vector<1xf32>
    %173 = vector.shape_cast %172 : vector<1xf32> to vector<1x1xf32>
    %cst_86 = arith.constant 6.400000e+01 : f32
    %174 = vector.broadcast %cst_86 : f32 to vector<1x1xf32>
    %175 = arith.divf %173, %174 : vector<1x1xf32>
    %176 = vector.broadcast %168 : vector<1x1xf32> to vector<1x64xf32>
    %177 = arith.subf %162, %176 : vector<1x64xf32>
    %cst_87 = arith.constant 9.99999974E-6 : f32
    %178 = vector.broadcast %cst_87 : f32 to vector<1x1xf32>
    %179 = arith.addf %175, %178 : vector<1x1xf32>
    %180 = math.rsqrt %179 : vector<1x1xf32>
    %181 = vector.broadcast %180 : vector<1x1xf32> to vector<1x64xf32>
    %182 = arith.mulf %177, %181 : vector<1x64xf32>
    %183 = arith.mulf %182, %163 : vector<1x64xf32>
    %184 = arith.addf %183, %164 : vector<1x64xf32>
    %c0_88 = arith.constant 0 : index
    %c0_89 = arith.constant 0 : index
    %185 = vector.load %arg17[%c0_88, %c0_89] : memref<64x128xf32, #tpu.memory_space<vmem>>, vector<64x128xf32>
    %cst_90 = arith.constant dense<0.000000e+00> : vector<1x128xf32>
    %186 = tpu.matmul %184, %185, %cst_90 {dimension_numbers = #tpu.dot_dimension_numbers<[1], [0], [0], [1], [0, 0, 1, 1], [], []>} : vector<1x64xf32>, vector<64x128xf32>, vector<1x128xf32> -> vector<1x128xf32>
    %c0_91 = arith.constant 0 : index
    %c0_92 = arith.constant 0 : index
    %187 = vector.load %arg18[%c0_91, %c0_92] : memref<1x128xf32, #tpu.memory_space<vmem>>, vector<1x128xf32>
    %188 = arith.addf %186, %187 : vector<1x128xf32>
    %cst_93 = arith.constant dense<0xFF800000> : vector<1xf32>
    %189 = vector.multi_reduction <maximumf>, %188, %cst_93 [1] : vector<1x128xf32> to vector<1xf32>
    %190 = vector.shape_cast %189 : vector<1xf32> to vector<1x1xf32>
    %191 = vector.broadcast %190 : vector<1x1xf32> to vector<1x128xf32>
    %192 = arith.subf %188, %191 : vector<1x128xf32>
    %193 = math.exp %192 : vector<1x128xf32>
    %cst_94 = arith.constant dense<0.000000e+00> : vector<1xf32>
    %194 = vector.multi_reduction <add>, %193, %cst_94 [1] : vector<1x128xf32> to vector<1xf32>
    %195 = vector.shape_cast %194 : vector<1xf32> to vector<1x1xf32>
    %196 = vector.broadcast %195 : vector<1x1xf32> to vector<1x128xf32>
    %197 = arith.divf %193, %196 : vector<1x128xf32>
    %c0_95 = arith.constant 0 : index
    %c0_96 = arith.constant 0 : index
    %c0_97 = arith.constant 0 : index
    %198 = vector.load %arg19[%c0_95, %c0_96, %c0_97] : memref<1x1x128xf32, #tpu.memory_space<vmem>>, vector<1x1x128xf32>
    %199 = vector.shape_cast %198 : vector<1x1x128xf32> to vector<1x128xf32>
    %200 = vector.shape_cast %197 : vector<1x128xf32> to vector<1x1x128xf32>
    tpu.vector_store %arg19[%c0_95, %c0_96, %c0_97], %200 {strides = array<i32>} : memref<1x1x128xf32, #tpu.memory_space<vmem>>, vector<1x1x128xf32>,
    return
  }
  func.func @transform_0(%arg0: i32) -> (i32, i32, i32) {
    %c0_i32 = arith.constant 0 : i32
    %c0_i32_0 = arith.constant 0 : i32
    %c0_i32_1 = arith.constant 0 : i32
    return %arg0, %c0_i32, %c0_i32_0 : i32, i32, i32
  }
  func.func @transform_1(%arg0: i32) -> (i32, i32) {
    %c0_i32 = arith.constant 0 : i32
    %c0_i32_0 = arith.constant 0 : i32
    %c0_i32_1 = arith.constant 0 : i32
    return %c0_i32, %c0_i32_0 : i32, i32
  }
  func.func @transform_2(%arg0: i32) -> (i32, i32) {
    %c0_i32 = arith.constant 0 : i32
    %c0_i32_0 = arith.constant 0 : i32
    %c0_i32_1 = arith.constant 0 : i32
    return %c0_i32, %c0_i32_0 : i32, i32
  }
  func.func @transform_3(%arg0: i32) -> (i32, i32) {
    %c0_i32 = arith.constant 0 : i32
    %c0_i32_0 = arith.constant 0 : i32
    %c0_i32_1 = arith.constant 0 : i32
    return %c0_i32, %c0_i32_0 : i32, i32
  }
  func.func @transform_4(%arg0: i32) -> (i32, i32) {
    %c0_i32 = arith.constant 0 : i32
    %c0_i32_0 = arith.constant 0 : i32
    %c0_i32_1 = arith.constant 0 : i32
    return %c0_i32, %c0_i32_0 : i32, i32
  }
  func.func @transform_5(%arg0: i32) -> (i32, i32) {
    %c0_i32 = arith.constant 0 : i32
    %c0_i32_0 = arith.constant 0 : i32
    %c0_i32_1 = arith.constant 0 : i32
    return %c0_i32, %c0_i32_0 : i32, i32
  }
  func.func @transform_6(%arg0: i32) -> (i32, i32) {
    %c0_i32 = arith.constant 0 : i32
    %c0_i32_0 = arith.constant 0 : i32
    %c0_i32_1 = arith.constant 0 : i32
    return %c0_i32, %c0_i32_0 : i32, i32
  }
  func.func @transform_7(%arg0: i32) -> (i32, i32) {
    %c0_i32 = arith.constant 0 : i32
    %c0_i32_0 = arith.constant 0 : i32
    %c0_i32_1 = arith.constant 0 : i32
    return %c0_i32, %c0_i32_0 : i32, i32
  }
  func.func @transform_8(%arg0: i32) -> (i32, i32) {
    %c0_i32 = arith.constant 0 : i32
    %c0_i32_0 = arith.constant 0 : i32
    %c0_i32_1 = arith.constant 0 : i32
    return %c0_i32, %c0_i32_0 : i32, i32
  }
  func.func @transform_9(%arg0: i32) -> (i32, i32) {
    %c0_i32 = arith.constant 0 : i32
    %c0_i32_0 = arith.constant 0 : i32
    %c0_i32_1 = arith.constant 0 : i32
    return %c0_i32, %c0_i32_0 : i32, i32
  }
  func.func @transform_10(%arg0: i32) -> (i32, i32) {
    %c0_i32 = arith.constant 0 : i32
    %c0_i32_0 = arith.constant 0 : i32
    %c0_i32_1 = arith.constant 0 : i32
    return %c0_i32, %c0_i32_0 : i32, i32
  }
  func.func @transform_11(%arg0: i32) -> (i32, i32) {
    %c0_i32 = arith.constant 0 : i32
    %c0_i32_0 = arith.constant 0 : i32
    %c0_i32_1 = arith.constant 0 : i32
    return %c0_i32, %c0_i32_0 : i32, i32
  }
  func.func @transform_12(%arg0: i32) -> (i32, i32) {
    %c0_i32 = arith.constant 0 : i32
    %c0_i32_0 = arith.constant 0 : i32
    %c0_i32_1 = arith.constant 0 : i32
    return %c0_i32, %c0_i32_0 : i32, i32
  }
  func.func @transform_13(%arg0: i32) -> (i32, i32) {
    %c0_i32 = arith.constant 0 : i32
    %c0_i32_0 = arith.constant 0 : i32
    %c0_i32_1 = arith.constant 0 : i32
    return %c0_i32, %c0_i32_0 : i32, i32
  }
  func.func @transform_14(%arg0: i32) -> (i32, i32) {
    %c0_i32 = arith.constant 0 : i32
    %c0_i32_0 = arith.constant 0 : i32
    %c0_i32_1 = arith.constant 0 : i32
    return %c0_i32, %c0_i32_0 : i32, i32
  }
  func.func @transform_15(%arg0: i32) -> (i32, i32) {
    %c0_i32 = arith.constant 0 : i32
    %c0_i32_0 = arith.constant 0 : i32
    %c0_i32_1 = arith.constant 0 : i32
    return %c0_i32, %c0_i32_0 : i32, i32
  }
  func.func @transform_16(%arg0: i32) -> (i32, i32) {
    %c0_i32 = arith.constant 0 : i32
    %c0_i32_0 = arith.constant 0 : i32
    %c0_i32_1 = arith.constant 0 : i32
    return %c0_i32, %c0_i32_0 : i32, i32
  }
  func.func @transform_17(%arg0: i32) -> (i32, i32) {
    %c0_i32 = arith.constant 0 : i32
    %c0_i32_0 = arith.constant 0 : i32
    %c0_i32_1 = arith.constant 0 : i32
    return %c0_i32, %c0_i32_0 : i32, i32
  }
  func.func @transform_18(%arg0: i32) -> (i32, i32, i32) {
    %c0_i32 = arith.constant 0 : i32
    %c0_i32_0 = arith.constant 0 : i32
    %c0_i32_1 = arith.constant 0 : i32
    return %arg0, %c0_i32, %c0_i32_0 : i32, i32, i32
  }
}

</mosaic_0001>

<llo_original>
// kernel: tpu_custom_call.1
$region0: #{tpu_custom_call.1}
  #allocation0 [shape = 'u32[]', space=smem, size = 0x4, offset = 0x4, fixed_abs, tag = 'smem constant byte address 0x4 - core index']
  #allocation1 [shape = 'u32[144,128]{1,0:T(1,128)}', space=vmem, size = 0x12000, scoped, tag = 'internal scratch']
  #allocation2 [shape = 'bf16[1,256,128]{2,1,0:T(16,128)(2,1)}', space=vmem, size = 0x10000, scoped, tag = 'scratch operand']
  #allocation3 [shape = 'bf16[1,256,128]{2,1,0:T(16,128)(2,1)}', space=vmem, size = 0x10000, scoped, tag = 'scratch operand']
  #allocation4 [shape = 'bf16[1,256,128]{2,1,0:T(16,128)(2,1)}', space=vmem, size = 0x10000, scoped, tag = 'scratch operand']
  #allocation5 [shape = 'f32[1,128]{1,0:T(1,128)}', space=vmem, size = 0x200, scoped, tag = 'scratch operand']
  %s0 = inlined_call_operand.vmem [shape: f32[2,256,8], index: 0, kind: input, shape index: {}]
  %s1 = inlined_call_operand.vmem [shape: f32[8,128], index: 1, kind: input, shape index: {}]
  %s2 = inlined_call_operand.vmem [shape: f32[1,128], index: 2, kind: input, shape index: {}]
  %s3 = inlined_call_operand.vmem [shape: f32[1,128], index: 3, kind: input, shape index: {}]
  %s4 = inlined_call_operand.vmem [shape: f32[1,128], index: 4, kind: input, shape index: {}]
  %s5 = inlined_call_operand.vmem [shape: bf16[128,128], index: 5, kind: input, shape index: {}]
  %s6 = inlined_call_operand.vmem [shape: bf16[128,128], index: 6, kind: input, shape index: {}]
  %s7 = inlined_call_operand.vmem [shape: bf16[128,128], index: 7, kind: input, shape index: {}]
  %s8 = inlined_call_operand.vmem [shape: f32[1,128], index: 8, kind: input, shape index: {}]
  %s9 = inlined_call_operand.vmem [shape: f32[1,128], index: 9, kind: input, shape index: {}]
  %s10 = inlined_call_operand.vmem [shape: f32[128,128], index: 10, kind: input, shape index: {}]
  %s11 = inlined_call_operand.vmem [shape: f32[1,128], index: 11, kind: input, shape index: {}]
  %s12 = inlined_call_operand.vmem [shape: f32[128,64], index: 12, kind: input, shape index: {}]
  %s13 = inlined_call_operand.vmem [shape: f32[1,64], index: 13, kind: input, shape index: {}]
  %s14 = inlined_call_operand.vmem [shape: f32[1,64], index: 14, kind: input, shape index: {}]
  %s15 = inlined_call_operand.vmem [shape: f32[1,64], index: 15, kind: input, shape index: {}]
  %s16 = inlined_call_operand.vmem [shape: f32[64,128], index: 16, kind: input, shape index: {}]
  %s17 = inlined_call_operand.vmem [shape: f32[1,128], index: 17, kind: input, shape index: {}]
  %s18 = inlined_call_operand.hbm [shape: f32[2,1,128], index: 18, kind: output, shape index: {}]
  %s19 = sld [smem:[#allocation0]]
  $region105: #{tpu_custom_call.1} parent=0
    _
  %s21 = ssub.s32 1, %s19
  %s22 = scalar_select 0, %s21, %s19
  $region1: #{tpu_custom_call.1} parent=0
    #allocation6 [shape = 'u8[1024]{0}', space=vmem, size = 0x400, scoped, tag = 'output window, operand 0']
    #allocation7 [shape = 's32[2]{0}', space=sflag, size = 0x8, scoped, tag = 'scoped memory for tpu_custom_call.1']
    %23 = vsyncpa [#allocation7], 0
    %s24 = scalar_lea.sflag [#allocation7], 1
    %25 = vsyncpa %s24, 0
    loop: start=0, step=1, limit=4
    $region2: #{tpu_custom_call.1} parent=1 // loop_pre_header
      _
    $region3: #{tpu_custom_call.1} parent=1 // loop_header
      %s27 = sphi 0, %s31
      %p28 = scmp.ge.s32.totalorder %s27, 4
      %s37 = sphi 0, %s39
      %s40 = sphi 0, %s37
      %s41 = sphi 0, %s40
      %s57 = sphi 0, %s41
      %s61 = sphi 0, %s61
      %s63 = sphi 0, %s61
      %s64 = sphi 0, %s63
      %s78 = sphi 0, %s64
      %s82 = sphi 0, %s82
      %s84 = sphi 0, %s82
      %s85 = sphi 0, %s84
      %s99 = sphi 0, %s85
      %s103 = sphi 0, %s103
      %s105 = sphi 0, %s103
      %s106 = sphi 0, %s105
      %s120 = sphi 0, %s106
      %s124 = sphi 0, %s124
      %s126 = sphi 0, %s124
      %s127 = sphi 0, %s126
      %s141 = sphi 0, %s127
      %s145 = sphi 0, %s145
      %s147 = sphi 0, %s145
      %s148 = sphi 0, %s147
      %s162 = sphi 0, %s148
      %s166 = sphi 0, %s166
      %s168 = sphi 0, %s166
      %s169 = sphi 0, %s168
      %s183 = sphi 0, %s169
      %s187 = sphi 0, %s187
      %s189 = sphi 0, %s187
      %s190 = sphi 0, %s189
      %s204 = sphi 0, %s190
      %s208 = sphi 0, %s208
      %s210 = sphi 0, %s208
      %s211 = sphi 0, %s210
      %s225 = sphi 0, %s211
      %s229 = sphi 0, %s229
      %s231 = sphi 0, %s229
      %s232 = sphi 0, %s231
      %s246 = sphi 0, %s232
      %s250 = sphi 0, %s250
      %s252 = sphi 0, %s250
      %s253 = sphi 0, %s252
      %s267 = sphi 0, %s253
      %s271 = sphi 0, %s271
      %s273 = sphi 0, %s271
      %s274 = sphi 0, %s273
      %s288 = sphi 0, %s274
      %s292 = sphi 0, %s292
      %s294 = sphi 0, %s292
      %s295 = sphi 0, %s294
      %s309 = sphi 0, %s295
      %s313 = sphi 0, %s313
      %s315 = sphi 0, %s313
      %s316 = sphi 0, %s315
      %s330 = sphi 0, %s316
      %s334 = sphi 0, %s334
      %s336 = sphi 0, %s334
      %s337 = sphi 0, %s336
      %s351 = sphi 0, %s337
      %s355 = sphi 0, %s355
      %s357 = sphi 0, %s355
      %s358 = sphi 0, %s357
      %s372 = sphi 0, %s358
      %s376 = sphi 0, %s376
      %s378 = sphi 0, %s376
      %s379 = sphi 0, %s378
      %s393 = sphi 0, %s379
      %s397 = sphi 0, %s397
      %s399 = sphi 0, %s397
      %s400 = sphi 0, %s399
      %s414 = sphi 0, %s400
      %s420 = sphi 0, %s422
      %s423 = sphi 0, %s420
      %s424 = sphi 0, %s423
      %s440 = sphi 0, %s424
    $region4: #{tpu_custom_call.1} parent=1 // loop_header_branch
      %30 = sbr.rel (%p28) target = $region8
    $region5: #{tpu_custom_call.1} parent=1 // loop_body
      %s32 = ssub.s32 %s27, 1
      %s33 = ssub.s32 %s27, 2
      %s34 = sadd.s32 %s27, 1
      %s35 = ssub.s32 %s27, %s34
      %p36 = scmp.eq.s32.totalorder %s35, 0
      %s38 = sadd.s32 %s37, 1
      %s39 = scalar_select %p36, %s37, %s38
      %p42 = pneg %p36
      %p43 = scmp.eq.s32.totalorder %s27, 1
      %p44 = por %p42, %p43
      %p45 = scmp.ne.s32.totalorder %s37, %s40
      %p46 = scmp.eq.s32.totalorder %s27, 0
      %p47 = por %p45, %p46
      %p48 = scmp.ne.s32.totalorder %s37, %s40
      %p49 = scmp.eq.s32.totalorder %s32, 1
      %p50 = por %p48, %p49
      %p51 = scmp.ne.s32.totalorder %s40, %s41
      %p52 = scmp.eq.s32.totalorder %s32, 0
      %p53 = por %p51, %p52
      %p54 = scmp.ne.s32.totalorder %s40, %s41
      %p55 = scmp.eq.s32.totalorder %s33, 1
      %p56 = por %p54, %p55
      %p58 = scmp.ne.s32.totalorder %s41, %s57
      %p59 = scmp.eq.s32.totalorder %s33, 0
      %p60 = por %p58, %p59
      %s62 = sadd.s32 %s61, 1
      %p65 = scmp.eq.s32.totalorder %s27, 1
      %p66 = scmp.ne.s32.totalorder %s61, %s63
      %p67 = scmp.eq.s32.totalorder %s27, 0
      %p68 = por %p66, %p67
      %p69 = scmp.ne.s32.totalorder %s61, %s63
      %p70 = scmp.eq.s32.totalorder %s32, 1
      %p71 = por %p69, %p70
      %p72 = scmp.ne.s32.totalorder %s63, %s64
      %p73 = scmp.eq.s32.totalorder %s32, 0
      %p74 = por %p72, %p73
      %p75 = scmp.ne.s32.totalorder %s63, %s64
      %p76 = scmp.eq.s32.totalorder %s33, 1
      %p77 = por %p75, %p76
      %p79 = scmp.ne.s32.totalorder %s64, %s78
      %p80 = scmp.eq.s32.totalorder %s33, 0
      %p81 = por %p79, %p80
      %s83 = sadd.s32 %s82, 1
      %p86 = scmp.eq.s32.totalorder %s27, 1
      %p87 = scmp.ne.s32.totalorder %s82, %s84
      %p88 = scmp.eq.s32.totalorder %s27, 0
      %p89 = por %p87, %p88
      %p90 = scmp.ne.s32.totalorder %s82, %s84
      %p91 = scmp.eq.s32.totalorder %s32, 1
      %p92 = por %p90, %p91
      %p93 = scmp.ne.s32.totalorder %s84, %s85
      %p94 = scmp.eq.s32.totalorder %s32, 0
      %p95 = por %p93, %p94
      %p96 = scmp.ne.s32.totalorder %s84, %s85
      %p97 = scmp.eq.s32.totalorder %s33, 1
      %p98 = por %p96, %p97
      %p100 = scmp.ne.s32.totalorder %s85, %s99
      %p101 = scmp.eq.s32.totalorder %s33, 0
      %p102 = por %p100, %p101
      %s104 = sadd.s32 %s103, 1
      %p107 = scmp.eq.s32.totalorder %s27, 1
      %p108 = scmp.ne.s32.totalorder %s103, %s105
      %p109 = scmp.eq.s32.totalorder %s27, 0
      %p110 = por %p108, %p109
      %p111 = scmp.ne.s32.totalorder %s103, %s105
      %p112 = scmp.eq.s32.totalorder %s32, 1
      %p113 = por %p111, %p112
      %p114 = scmp.ne.s32.totalorder %s105, %s106
      %p115 = scmp.eq.s32.totalorder %s32, 0
      %p116 = por %p114, %p115
      %p117 = scmp.ne.s32.totalorder %s105, %s106
      %p118 = scmp.eq.s32.totalorder %s33, 1
      %p119 = por %p117, %p118
      %p121 = scmp.ne.s32.totalorder %s106, %s120
      %p122 = scmp.eq.s32.totalorder %s33, 0
      %p123 = por %p121, %p122
      %s125 = sadd.s32 %s124, 1
      %p128 = scmp.eq.s32.totalorder %s27, 1
      %p129 = scmp.ne.s32.totalorder %s124, %s126
      %p130 = scmp.eq.s32.totalorder %s27, 0
      %p131 = por %p129, %p130
      %p132 = scmp.ne.s32.totalorder %s124, %s126
      %p133 = scmp.eq.s32.totalorder %s32, 1
      %p134 = por %p132, %p133
      %p135 = scmp.ne.s32.totalorder %s126, %s127
      %p136 = scmp.eq.s32.totalorder %s32, 0
      %p137 = por %p135, %p136
      %p138 = scmp.ne.s32.totalorder %s126, %s127
      %p139 = scmp.eq.s32.totalorder %s33, 1
      %p140 = por %p138, %p139
      %p142 = scmp.ne.s32.totalorder %s127, %s141
      %p143 = scmp.eq.s32.totalorder %s33, 0
      %p144 = por %p142, %p143
      %s146 = sadd.s32 %s145, 1
      %p149 = scmp.eq.s32.totalorder %s27, 1
      %p150 = scmp.ne.s32.totalorder %s145, %s147
      %p151 = scmp.eq.s32.totalorder %s27, 0
      %p152 = por %p150, %p151
      %p153 = scmp.ne.s32.totalorder %s145, %s147
      %p154 = scmp.eq.s32.totalorder %s32, 1
      %p155 = por %p153, %p154
      %p156 = scmp.ne.s32.totalorder %s147, %s148
      %p157 = scmp.eq.s32.totalorder %s32, 0
      %p158 = por %p156, %p157
      %p159 = scmp.ne.s32.totalorder %s147, %s148
      %p160 = scmp.eq.s32.totalorder %s33, 1
      %p161 = por %p159, %p160
      %p163 = scmp.ne.s32.totalorder %s148, %s162
      %p164 = scmp.eq.s32.totalorder %s33, 0
      %p165 = por %p163, %p164
      %s167 = sadd.s32 %s166, 1
      %p170 = scmp.eq.s32.totalorder %s27, 1
      %p171 = scmp.ne.s32.totalorder %s166, %s168
      %p172 = scmp.eq.s32.totalorder %s27, 0
      %p173 = por %p171, %p172
      %p174 = scmp.ne.s32.totalorder %s166, %s168
      %p175 = scmp.eq.s32.totalorder %s32, 1
      %p176 = por %p174, %p175
      %p177 = scmp.ne.s32.totalorder %s168, %s169
      %p178 = scmp.eq.s32.totalorder %s32, 0
      %p179 = por %p177, %p178
      %p180 = scmp.ne.s32.totalorder %s168, %s169
      %p181 = scmp.eq.s32.totalorder %s33, 1
      %p182 = por %p180, %p181
      %p184 = scmp.ne.s32.totalorder %s169, %s183
      %p185 = scmp.eq.s32.totalorder %s33, 0
      %p186 = por %p184, %p185
      %s188 = sadd.s32 %s187, 1
      %p191 = scmp.eq.s32.totalorder %s27, 1
      %p192 = scmp.ne.s32.totalorder %s187, %s189
      %p193 = scmp.eq.s32.totalorder %s27, 0
      %p194 = por %p192, %p193
      %p195 = scmp.ne.s32.totalorder %s187, %s189
      %p196 = scmp.eq.s32.totalorder %s32, 1
      %p197 = por %p195, %p196
      %p198 = scmp.ne.s32.totalorder %s189, %s190
      %p199 = scmp.eq.s32.totalorder %s32, 0
      %p200 = por %p198, %p199
      %p201 = scmp.ne.s32.totalorder %s189, %s190
      %p202 = scmp.eq.s32.totalorder %s33, 1
      %p203 = por %p201, %p202
      %p205 = scmp.ne.s32.totalorder %s190, %s204
      %p206 = scmp.eq.s32.totalorder %s33, 0
      %p207 = por %p205, %p206
      %s209 = sadd.s32 %s208, 1
      %p212 = scmp.eq.s32.totalorder %s27, 1
      %p213 = scmp.ne.s32.totalorder %s208, %s210
      %p214 = scmp.eq.s32.totalorder %s27, 0
      %p215 = por %p213, %p214
      %p216 = scmp.ne.s32.totalorder %s208, %s210
      %p217 = scmp.eq.s32.totalorder %s32, 1
      %p218 = por %p216, %p217
      %p219 = scmp.ne.s32.totalorder %s210, %s211
      %p220 = scmp.eq.s32.totalorder %s32, 0
      %p221 = por %p219, %p220
      %p222 = scmp.ne.s32.totalorder %s210, %s211
      %p223 = scmp.eq.s32.totalorder %s33, 1
      %p224 = por %p222, %p223
      %p226 = scmp.ne.s32.totalorder %s211, %s225
      %p227 = scmp.eq.s32.totalorder %s33, 0
      %p228 = por %p226, %p227
      %s230 = sadd.s32 %s229, 1
      %p233 = scmp.eq.s32.totalorder %s27, 1
      %p234 = scmp.ne.s32.totalorder %s229, %s231
      %p235 = scmp.eq.s32.totalorder %s27, 0
      %p236 = por %p234, %p235
      %p237 = scmp.ne.s32.totalorder %s229, %s231
      %p238 = scmp.eq.s32.totalorder %s32, 1
      %p239 = por %p237, %p238
      %p240 = scmp.ne.s32.totalorder %s231, %s232
      %p241 = scmp.eq.s32.totalorder %s32, 0
      %p242 = por %p240, %p241
      %p243 = scmp.ne.s32.totalorder %s231, %s232
      %p244 = scmp.eq.s32.totalorder %s33, 1
      %p245 = por %p243, %p244
      %p247 = scmp.ne.s32.totalorder %s232, %s246
      %p248 = scmp.eq.s32.totalorder %s33, 0
      %p249 = por %p247, %p248
      %s251 = sadd.s32 %s250, 1
      %p254 = scmp.eq.s32.totalorder %s27, 1
      %p255 = scmp.ne.s32.totalorder %s250, %s252
      %p256 = scmp.eq.s32.totalorder %s27, 0
      %p257 = por %p255, %p256
      %p258 = scmp.ne.s32.totalorder %s250, %s252
      %p259 = scmp.eq.s32.totalorder %s32, 1
      %p260 = por %p258, %p259
      %p261 = scmp.ne.s32.totalorder %s252, %s253
      %p262 = scmp.eq.s32.totalorder %s32, 0
      %p263 = por %p261, %p262
      %p264 = scmp.ne.s32.totalorder %s252, %s253
      %p265 = scmp.eq.s32.totalorder %s33, 1
      %p266 = por %p264, %p265
      %p268 = scmp.ne.s32.totalorder %s253, %s267
      %p269 = scmp.eq.s32.totalorder %s33, 0
      %p270 = por %p268, %p269
      %s272 = sadd.s32 %s271, 1
      %p275 = scmp.eq.s32.totalorder %s27, 1
      %p276 = scmp.ne.s32.totalorder %s271, %s273
      %p277 = scmp.eq.s32.totalorder %s27, 0
      %p278 = por %p276, %p277
      %p279 = scmp.ne.s32.totalorder %s271, %s273
      %p280 = scmp.eq.s32.totalorder %s32, 1
      %p281 = por %p279, %p280
      %p282 = scmp.ne.s32.totalorder %s273, %s274
      %p283 = scmp.eq.s32.totalorder %s32, 0
      %p284 = por %p282, %p283
      %p285 = scmp.ne.s32.totalorder %s273, %s274
      %p286 = scmp.eq.s32.totalorder %s33, 1
      %p287 = por %p285, %p286
      %p289 = scmp.ne.s32.totalorder %s274, %s288
      %p290 = scmp.eq.s32.totalorder %s33, 0
      %p291 = por %p289, %p290
      %s293 = sadd.s32 %s292, 1
      %p296 = scmp.eq.s32.totalorder %s27, 1
      %p297 = scmp.ne.s32.totalorder %s292, %s294
      %p298 = scmp.eq.s32.totalorder %s27, 0
      %p299 = por %p297, %p298
      %p300 = scmp.ne.s32.totalorder %s292, %s294
      %p301 = scmp.eq.s32.totalorder %s32, 1
      %p302 = por %p300, %p301
      %p303 = scmp.ne.s32.totalorder %s294, %s295
      %p304 = scmp.eq.s32.totalorder %s32, 0
      %p305 = por %p303, %p304
      %p306 = scmp.ne.s32.totalorder %s294, %s295
      %p307 = scmp.eq.s32.totalorder %s33, 1
      %p308 = por %p306, %p307
      %p310 = scmp.ne.s32.totalorder %s295, %s309
      %p311 = scmp.eq.s32.totalorder %s33, 0
      %p312 = por %p310, %p311
      %s314 = sadd.s32 %s313, 1
      %p317 = scmp.eq.s32.totalorder %s27, 1
      %p318 = scmp.ne.s32.totalorder %s313, %s315
      %p319 = scmp.eq.s32.totalorder %s27, 0
      %p320 = por %p318, %p319
      %p321 = scmp.ne.s32.totalorder %s313, %s315
      %p322 = scmp.eq.s32.totalorder %s32, 1
      %p323 = por %p321, %p322
      %p324 = scmp.ne.s32.totalorder %s315, %s316
      %p325 = scmp.eq.s32.totalorder %s32, 0
      %p326 = por %p324, %p325
      %p327 = scmp.ne.s32.totalorder %s315, %s316
      %p328 = scmp.eq.s32.totalorder %s33, 1
      %p329 = por %p327, %p328
      %p331 = scmp.ne.s32.totalorder %s316, %s330
      %p332 = scmp.eq.s32.totalorder %s33, 0
      %p333 = por %p331, %p332
      %s335 = sadd.s32 %s334, 1
      %p338 = scmp.eq.s32.totalorder %s27, 1
      %p339 = scmp.ne.s32.totalorder %s334, %s336
      %p340 = scmp.eq.s32.totalorder %s27, 0
      %p341 = por %p339, %p340
      %p342 = scmp.ne.s32.totalorder %s334, %s336
      %p343 = scmp.eq.s32.totalorder %s32, 1
      %p344 = por %p342, %p343
      %p345 = scmp.ne.s32.totalorder %s336, %s337
      %p346 = scmp.eq.s32.totalorder %s32, 0
      %p347 = por %p345, %p346
      %p348 = scmp.ne.s32.totalorder %s336, %s337
      %p349 = scmp.eq.s32.totalorder %s33, 1
      %p350 = por %p348, %p349
      %p352 = scmp.ne.s32.totalorder %s337, %s351
      %p353 = scmp.eq.s32.totalorder %s33, 0
      %p354 = por %p352, %p353
      %s356 = sadd.s32 %s355, 1
      %p359 = scmp.eq.s32.totalorder %s27, 1
      %p360 = scmp.ne.s32.totalorder %s355, %s357
      %p361 = scmp.eq.s32.totalorder %s27, 0
      %p362 = por %p360, %p361
      %p363 = scmp.ne.s32.totalorder %s355, %s357
      %p364 = scmp.eq.s32.totalorder %s32, 1
      %p365 = por %p363, %p364
      %p366 = scmp.ne.s32.totalorder %s357, %s358
      %p367 = scmp.eq.s32.totalorder %s32, 0
      %p368 = por %p366, %p367
      %p369 = scmp.ne.s32.totalorder %s357, %s358
      %p370 = scmp.eq.s32.totalorder %s33, 1
      %p371 = por %p369, %p370
      %p373 = scmp.ne.s32.totalorder %s358, %s372
      %p374 = scmp.eq.s32.totalorder %s33, 0
      %p375 = por %p373, %p374
      %s377 = sadd.s32 %s376, 1
      %p380 = scmp.eq.s32.totalorder %s27, 1
      %p381 = scmp.ne.s32.totalorder %s376, %s378
      %p382 = scmp.eq.s32.totalorder %s27, 0
      %p383 = por %p381, %p382
      %p384 = scmp.ne.s32.totalorder %s376, %s378
      %p385 = scmp.eq.s32.totalorder %s32, 1
      %p386 = por %p384, %p385
      %p387 = scmp.ne.s32.totalorder %s378, %s379
      %p388 = scmp.eq.s32.totalorder %s32, 0
      %p389 = por %p387, %p388
      %p390 = scmp.ne.s32.totalorder %s378, %s379
      %p391 = scmp.eq.s32.totalorder %s33, 1
      %p392 = por %p390, %p391
      %p394 = scmp.ne.s32.totalorder %s379, %s393
      %p395 = scmp.eq.s32.totalorder %s33, 0
      %p396 = por %p394, %p395
      %s398 = sadd.s32 %s397, 1
      %p401 = scmp.eq.s32.totalorder %s27, 1
      %p402 = scmp.ne.s32.totalorder %s397, %s399
      %p403 = scmp.eq.s32.totalorder %s27, 0
      %p404 = por %p402, %p403
      %p405 = scmp.ne.s32.totalorder %s397, %s399
      %p406 = scmp.eq.s32.totalorder %s32, 1
      %p407 = por %p405, %p406
      %p408 = scmp.ne.s32.totalorder %s399, %s400
      %p409 = scmp.eq.s32.totalorder %s32, 0
      %p410 = por %p408, %p409
      %p411 = scmp.ne.s32.totalorder %s399, %s400
      %p412 = scmp.eq.s32.totalorder %s33, 1
      %p413 = por %p411, %p412
      %p415 = scmp.ne.s32.totalorder %s400, %s414
      %p416 = scmp.eq.s32.totalorder %s33, 0
      %p417 = por %p415, %p416
      %s418 = ssub.s32 %s27, %s34
      %p419 = scmp.eq.s32.totalorder %s418, 0
      %s421 = sadd.s32 %s420, 1
      %s422 = scalar_select %p419, %s420, %s421
      %p425 = pneg %p419
      %p426 = scmp.eq.s32.totalorder %s27, 1
      %p427 = por %p425, %p426
      %p428 = scmp.ne.s32.totalorder %s420, %s423
      %p429 = scmp.eq.s32.totalorder %s27, 0
      %p430 = por %p428, %p429
      %p431 = scmp.ne.s32.totalorder %s420, %s423
      %p432 = scmp.eq.s32.totalorder %s32, 1
      %p433 = por %p431, %p432
      %p434 = scmp.ne.s32.totalorder %s423, %s424
      %p435 = scmp.eq.s32.totalorder %s32, 0
      %p436 = por %p434, %p435
      %p437 = scmp.ne.s32.totalorder %s423, %s424
      %p438 = scmp.eq.s32.totalorder %s33, 1
      %p439 = por %p437, %p438
      %p441 = scmp.ne.s32.totalorder %s424, %s440
      %p442 = scmp.eq.s32.totalorder %s33, 0
      %p443 = por %p441, %p442
      %p444 = scmp.le.s32.totalorder 1, %s27
      %p445 = scmp.lt.s32.totalorder %s27, 3
      %p446 = pnand %p444, %p445
      %p447 = pneg %p446
      // Predicated region
      $region9: #{tpu_custom_call.1} parent=5 // pred_check
        _
      $region10: #{tpu_custom_call.1} parent=5 // pred_check_branch
        %449 = sbr.rel (%p446) target = $region12
      $region11: #{tpu_custom_call.1} parent=5 // pred_region
        %s450 = ssub.s32 %s27, 1
        // Predicated region
        $region13: #{tpu_custom_call.1} parent=11 // pred_check
          %p451 = pneg %p74
        $region14: #{tpu_custom_call.1} parent=11 // pred_check_branch
          %453 = sbr.rel (%p451) target = $region16
        $region15: #{tpu_custom_call.1} parent=11 // pred_region
          _
        $region16: #{tpu_custom_call.1} parent=11 // pred_fallthru
          _
        // Predicated region
        $region17: #{tpu_custom_call.1} parent=11 // pred_check
          %p454 = pneg %p95
        $region18: #{tpu_custom_call.1} parent=11 // pred_check_branch
          %456 = sbr.rel (%p454) target = $region20
        $region19: #{tpu_custom_call.1} parent=11 // pred_region
          _
        $region20: #{tpu_custom_call.1} parent=11 // pred_fallthru
          _
        // Predicated region
        $region21: #{tpu_custom_call.1} parent=11 // pred_check
          %p457 = pneg %p116
        $region22: #{tpu_custom_call.1} parent=11 // pred_check_branch
          %459 = sbr.rel (%p457) target = $region24
        $region23: #{tpu_custom_call.1} parent=11 // pred_region
          _
        $region24: #{tpu_custom_call.1} parent=11 // pred_fallthru
          _
        // Predicated region
        $region25: #{tpu_custom_call.1} parent=11 // pred_check
          %p460 = pneg %p137
        $region26: #{tpu_custom_call.1} parent=11 // pred_check_branch
          %462 = sbr.rel (%p460) target = $region28
        $region27: #{tpu_custom_call.1} parent=11 // pred_region
          _
        $region28: #{tpu_custom_call.1} parent=11 // pred_fallthru
          _
        // Predicated region
        $region29: #{tpu_custom_call.1} parent=11 // pred_check
          %p463 = pneg %p158
        $region30: #{tpu_custom_call.1} parent=11 // pred_check_branch
          %465 = sbr.rel (%p463) target = $region32
        $region31: #{tpu_custom_call.1} parent=11 // pred_region
          _
        $region32: #{tpu_custom_call.1} parent=11 // pred_fallthru
          _
        // Predicated region
        $region33: #{tpu_custom_call.1} parent=11 // pred_check
          %p466 = pneg %p179
        $region34: #{tpu_custom_call.1} parent=11 // pred_check_branch
          %468 = sbr.rel (%p466) target = $region36
        $region35: #{tpu_custom_call.1} parent=11 // pred_region
          _
        $region36: #{tpu_custom_call.1} parent=11 // pred_fallthru
          _
        // Predicated region
        $region37: #{tpu_custom_call.1} parent=11 // pred_check
          %p469 = pneg %p200
        $region38: #{tpu_custom_call.1} parent=11 // pred_check_branch
          %471 = sbr.rel (%p469) target = $region40
        $region39: #{tpu_custom_call.1} parent=11 // pred_region
          _
        $region40: #{tpu_custom_call.1} parent=11 // pred_fallthru
          _
        // Predicated region
        $region41: #{tpu_custom_call.1} parent=11 // pred_check
          %p472 = pneg %p221
        $region42: #{tpu_custom_call.1} parent=11 // pred_check_branch
          %474 = sbr.rel (%p472) target = $region44
        $region43: #{tpu_custom_call.1} parent=11 // pred_region
          _
        $region44: #{tpu_custom_call.1} parent=11 // pred_fallthru
          _
        // Predicated region
        $region45: #{tpu_custom_call.1} parent=11 // pred_check
          %p475 = pneg %p242
        $region46: #{tpu_custom_call.1} parent=11 // pred_check_branch
          %477 = sbr.rel (%p475) target = $region48
        $region47: #{tpu_custom_call.1} parent=11 // pred_region
          _
        $region48: #{tpu_custom_call.1} parent=11 // pred_fallthru
          _
        // Predicated region
        $region49: #{tpu_custom_call.1} parent=11 // pred_check
          %p478 = pneg %p263
        $region50: #{tpu_custom_call.1} parent=11 // pred_check_branch
          %480 = sbr.rel (%p478) target = $region52
        $region51: #{tpu_custom_call.1} parent=11 // pred_region
          _
        $region52: #{tpu_custom_call.1} parent=11 // pred_fallthru
          _
        // Predicated region
        $region53: #{tpu_custom_call.1} parent=11 // pred_check
          %p481 = pneg %p284
        $region54: #{tpu_custom_call.1} parent=11 // pred_check_branch
          %483 = sbr.rel (%p481) target = $region56
        $region55: #{tpu_custom_call.1} parent=11 // pred_region
          _
        $region56: #{tpu_custom_call.1} parent=11 // pred_fallthru
          _
        // Predicated region
        $region57: #{tpu_custom_call.1} parent=11 // pred_check
          %p484 = pneg %p305
        $region58: #{tpu_custom_call.1} parent=11 // pred_check_branch
          %486 = sbr.rel (%p484) target = $region60
        $region59: #{tpu_custom_call.1} parent=11 // pred_region
          _
        $region60: #{tpu_custom_call.1} parent=11 // pred_fallthru
          _
        // Predicated region
        $region61: #{tpu_custom_call.1} parent=11 // pred_check
          %p487 = pneg %p326
        $region62: #{tpu_custom_call.1} parent=11 // pred_check_branch
          %489 = sbr.rel (%p487) target = $region64
        $region63: #{tpu_custom_call.1} parent=11 // pred_region
          _
        $region64: #{tpu_custom_call.1} parent=11 // pred_fallthru
          _
        // Predicated region
        $region65: #{tpu_custom_call.1} parent=11 // pred_check
          %p490 = pneg %p347
        $region66: #{tpu_custom_call.1} parent=11 // pred_check_branch
          %492 = sbr.rel (%p490) target = $region68
        $region67: #{tpu_custom_call.1} parent=11 // pred_region
          _
        $region68: #{tpu_custom_call.1} parent=11 // pred_fallthru
          _
        // Predicated region
        $region69: #{tpu_custom_call.1} parent=11 // pred_check
          %p493 = pneg %p368
        $region70: #{tpu_custom_call.1} parent=11 // pred_check_branch
          %495 = sbr.rel (%p493) target = $region72
        $region71: #{tpu_custom_call.1} parent=11 // pred_region
          _
        $region72: #{tpu_custom_call.1} parent=11 // pred_fallthru
          _
        // Predicated region
        $region73: #{tpu_custom_call.1} parent=11 // pred_check
          %p496 = pneg %p389
        $region74: #{tpu_custom_call.1} parent=11 // pred_check_branch
          %498 = sbr.rel (%p496) target = $region76
        $region75: #{tpu_custom_call.1} parent=11 // pred_region
          _
        $region76: #{tpu_custom_call.1} parent=11 // pred_fallthru
          _
        // Predicated region
        $region77: #{tpu_custom_call.1} parent=11 // pred_check
          %p499 = pneg %p410
        $region78: #{tpu_custom_call.1} parent=11 // pred_check_branch
          %501 = sbr.rel (%p499) target = $region80
        $region79: #{tpu_custom_call.1} parent=11 // pred_region
          _
        $region80: #{tpu_custom_call.1} parent=11 // pred_fallthru
          _
      $region12: #{tpu_custom_call.1} parent=5 // pred_fallthru
        _
      %p502 = scmp.lt.s32.totalorder %s27, 2
      // Predicated region
      $region81: #{tpu_custom_call.1} parent=5 // pred_check
        %p503 = pneg %p502
      $region82: #{tpu_custom_call.1} parent=5 // pred_check_branch
        %505 = sbr.rel (%p503) target = $region84
      $region83: #{tpu_custom_call.1} parent=5 // pred_region
        // Predicated region
        $region85: #{tpu_custom_call.1} parent=83 // pred_check
          %p506 = pneg %p47
        $region86: #{tpu_custom_call.1} parent=83 // pred_check_branch
          %508 = sbr.rel (%p506) target = $region88
        $region87: #{tpu_custom_call.1} parent=83 // pred_region
          %p509 = scmp.lt.s32.totalorder %s27, 1
          %s510 = scalar_select %p509, %s27, 1
          %s511 = smul.addr %s510, 32
          %s512 = smul.addr %s511, 8
          %s513 = scalar_lea.vmem %s0, %s512
        $region88: #{tpu_custom_call.1} parent=83 // pred_fallthru
          _
      $region84: #{tpu_custom_call.1} parent=5 // pred_fallthru
        _
      %p514 = scmp.le.s32.totalorder 1, %s27
      %p515 = scmp.lt.s32.totalorder %s27, 3
      %p516 = pnand %p514, %p515
      %p517 = pneg %p516
      // Predicated region
      $region89: #{tpu_custom_call.1} parent=5 // pred_check
        _
      $region90: #{tpu_custom_call.1} parent=5 // pred_check_branch
        %519 = sbr.rel (%p516) target = $region92
      $region91: #{tpu_custom_call.1} parent=5 // pred_region
        %s520 = ssub.s32 %s27, 1
        %p521 = scmp.lt.s32.totalorder %s32, 1
        %s522 = scalar_select %p521, %s32, 1
        %s523 = smul.addr %s522, 32
        %s524 = smul.addr %s523, 8
        %s525 = scalar_lea.vmem %s0, %s524
        %p526 = pneg %p53
        %p527 = pneg %p50
        %p528 = pneg %p74
        %p529 = pneg %p71
        %p530 = pneg %p95
        %p531 = pneg %p92
        %p532 = pneg %p116
        %p533 = pneg %p113
        %p534 = pneg %p137
        %p535 = pneg %p134
        %p536 = pneg %p158
        %p537 = pneg %p155
        %p538 = pneg %p179
        %p539 = pneg %p176
        %p540 = pneg %p200
        %p541 = pneg %p197
        %p542 = pneg %p221
        %p543 = pneg %p218
        %p544 = pneg %p242
        %p545 = pneg %p239
        %p546 = pneg %p263
        %p547 = pneg %p260
        %p548 = pneg %p284
        %p549 = pneg %p281
        %p550 = pneg %p305
        %p551 = pneg %p302
        %p552 = pneg %p326
        %p553 = pneg %p323
        %p554 = pneg %p347
        %p555 = pneg %p344
        %p556 = pneg %p368
        %p557 = pneg %p365
        %p558 = pneg %p389
        %p559 = pneg %p386
        %p560 = pneg %p410
        %p561 = pneg %p407
        %p562 = pneg %p436
        %p563 = pneg %p433
        %s564 = sand.u32 %s423, 1
        %s565 = scalar_lea.sflag [#allocation7], %s564
        %s566 = sand.u32 %s423, 1
        %s567 = scalar_lea.vmem [#allocation6], %s566
        %p568 = scmp.lt.s32.totalorder %s32, 1
        %s569 = scalar_select %p568, %s32, 1
        %s570 = smul.addr %s569, 32
        %s571 = smul.addr %s570, 8
        %s572 = scalar_lea.vmem %s0, %s571
        %v575 = vld [vmem:[%s572] sm:$0xff]
        %v576 = vld [vmem:[%s572 + $0x8] sm:$0xff]
        %v577 = vld [vmem:[%s572 + $0x10] sm:$0xff]
        %v578 = vld [vmem:[%s572 + $0x18] sm:$0xff]
        %v579 = vld [vmem:[%s572 + $0x20] sm:$0xff]
        %v580 = vld [vmem:[%s572 + $0x28] sm:$0xff]
        %v581 = vld [vmem:[%s572 + $0x30] sm:$0xff]
        %v582 = vld [vmem:[%s572 + $0x38] sm:$0xff]
        %v583 = vld [vmem:[%s572 + $0x40] sm:$0xff]
        %v584 = vld [vmem:[%s572 + $0x48] sm:$0xff]
        %v585 = vld [vmem:[%s572 + $0x50] sm:$0xff]
        %v586 = vld [vmem:[%s572 + $0x58] sm:$0xff]
        %v587 = vld [vmem:[%s572 + $0x60] sm:$0xff]
        %v588 = vld [vmem:[%s572 + $0x68] sm:$0xff]
        %v589 = vld [vmem:[%s572 + $0x70] sm:$0xff]
        %v590 = vld [vmem:[%s572 + $0x78] sm:$0xff]
        %v591 = vld [vmem:[%s572 + $0x80] sm:$0xff]
        %v592 = vld [vmem:[%s572 + $0x88] sm:$0xff]
        %v593 = vld [vmem:[%s572 + $0x90] sm:$0xff]
        %v594 = vld [vmem:[%s572 + $0x98] sm:$0xff]
        %v595 = vld [vmem:[%s572 + $0xa0] sm:$0xff]
        %v596 = vld [vmem:[%s572 + $0xa8] sm:$0xff]
        %v597 = vld [vmem:[%s572 + $0xb0] sm:$0xff]
        %v598 = vld [vmem:[%s572 + $0xb8] sm:$0xff]
        %v599 = vld [vmem:[%s572 + $0xc0] sm:$0xff]
        %v600 = vld [vmem:[%s572 + $0xc8] sm:$0xff]
        %v601 = vld [vmem:[%s572 + $0xd0] sm:$0xff]
        %v602 = vld [vmem:[%s572 + $0xd8] sm:$0xff]
        %v603 = vld [vmem:[%s572 + $0xe0] sm:$0xff]
        %v604 = vld [vmem:[%s572 + $0xe8] sm:$0xff]
        %v605 = vld [vmem:[%s572 + $0xf0] sm:$0xff]
        %v606 = vld [vmem:[%s572 + $0xf8] sm:$0xff]
        %v607 = vld [vmem:[%s1] sm:$0xff]
        %v608 = vld [vmem:[%s2] sm:$0x1]
        %v610 = vlaneseq
        %v611 = vshrl.u32 %v610, 7
        %v612 = vsub.s32 0, %v611
        %v613 = vrot.slane %v608, %v612
        %vm615 = vcmask 64512
        %v617 = vsel %vm615, %v575, 0
        %v620 = vsel %vm615, %v576, 0
        %v623 = vsel %vm615, %v577, 0
        %v626 = vsel %vm615, %v578, 0
        %v629 = vsel %vm615, %v579, 0
        %v632 = vsel %vm615, %v580, 0
        %v635 = vsel %vm615, %v581, 0
        %v638 = vsel %vm615, %v582, 0
        %v641 = vsel %vm615, %v583, 0
        %v644 = vsel %vm615, %v584, 0
        %v647 = vsel %vm615, %v585, 0
        %v650 = vsel %vm615, %v586, 0
        %v653 = vsel %vm615, %v587, 0
        %v656 = vsel %vm615, %v588, 0
        %v659 = vsel %vm615, %v589, 0
        %v662 = vsel %vm615, %v590, 0
        %v665 = vsel %vm615, %v591, 0
        %v668 = vsel %vm615, %v592, 0
        %v671 = vsel %vm615, %v593, 0
        %v674 = vsel %vm615, %v594, 0
        %v677 = vsel %vm615, %v595, 0
        %v680 = vsel %vm615, %v596, 0
        %v683 = vsel %vm615, %v597, 0
        %v686 = vsel %vm615, %v598, 0
        %v689 = vsel %vm615, %v599, 0
        %v692 = vsel %vm615, %v600, 0
        %v695 = vsel %vm615, %v601, 0
        %v698 = vsel %vm615, %v602, 0
        %v701 = vsel %vm615, %v603, 0
        %v704 = vsel %vm615, %v604, 0
        %v707 = vsel %vm615, %v605, 0
        %v710 = vsel %vm615, %v606, 0
        %712 = vmatprep.subr.mxu0 0.0
        %713 = vmatpush1.msra.mxu0 %v607
        %714 = vmatprep.subr.mxu0 0.0
        %715 = vmatpush1.msra.mxu0 0.0
        %716 = vmatprep.subr.mxu0 0.0
        %717 = vmatpush1.msra.mxu0 0.0
        %718 = vmatprep.subr.mxu0 0.0
        %719 = vmatpush1.msra.mxu0 0.0
        %720 = vmatprep.subr.mxu0 0.0
        %721 = vmatpush1.msra.mxu0 0.0
        %722 = vmatprep.subr.mxu0 0.0
        %723 = vmatpush1.msra.mxu0 0.0
        %724 = vmatprep.subr.mxu0 0.0
        %725 = vmatpush1.msra.mxu0 0.0
        %726 = vmatprep.subr.mxu0 0.0
        %727 = vmatpush1.msra.mxu0 0.0
        %728 = vmatprep.subr.mxu0 0.0
        %729 = vmatpush1.msra.mxu0 0.0
        %730 = vmatprep.subr.mxu0 0.0
        %731 = vmatpush1.msra.mxu0 0.0
        %732 = vmatprep.subr.mxu0 0.0
        %733 = vmatpush1.msra.mxu0 0.0
        %734 = vmatprep.subr.mxu0 0.0
        %735 = vmatpush1.msra.mxu0 0.0
        %736 = vmatprep.subr.mxu0 0.0
        %737 = vmatpush1.msra.mxu0 0.0
        %738 = vmatprep.subr.mxu0 0.0
        %739 = vmatpush1.msra.mxu0 0.0
        %740 = vmatprep.subr.mxu0 0.0
        %741 = vmatpush1.msra.mxu0 0.0
        %742 = vmatprep.subr.mxu0 0.0
        %743 = vmatpush1.msra.mxu0 0.0
        %744 = vmatprep.subr.mxu0 0.0
        %745 = vmatpush1.msra.mxu0 0.0
        %746 = vmatprep.subr.mxu0 0.0
        %747 = vmatpush1.msra.mxu0 0.0
        %748 = vmatprep.subr.mxu0 0.0
        %749 = vmatpush1.msra.mxu0 0.0
        %750 = vmatprep.subr.mxu0 0.0
        %751 = vmatpush1.msra.mxu0 0.0
        %752 = vmatprep.subr.mxu0 0.0
        %753 = vmatpush1.msra.mxu0 0.0
        %754 = vmatprep.subr.mxu0 0.0
        %755 = vmatpush1.msra.mxu0 0.0
        %756 = vmatprep.subr.mxu0 0.0
        %757 = vmatpush1.msra.mxu0 0.0
        %758 = vmatprep.subr.mxu0 0.0
        %759 = vmatpush1.msra.mxu0 0.0
        %760 = vmatprep.subr.mxu0 0.0
        %761 = vmatpush1.msra.mxu0 0.0
        %762 = vmatprep.subr.mxu0 0.0
        %763 = vmatpush1.msra.mxu0 0.0
        %764 = vmatprep.subr.mxu0 0.0
        %765 = vmatpush1.msra.mxu0 0.0
        %766 = vmatprep.subr.mxu0 0.0
        %767 = vmatpush1.msra.mxu0 0.0
        %768 = vmatprep.subr.mxu0 0.0
        %769 = vmatpush1.msra.mxu0 0.0
        %770 = vmatprep.subr.mxu0 0.0
        %771 = vmatpush1.msra.mxu0 0.0
        %772 = vmatprep.subr.mxu0 0.0
        %773 = vmatpush1.msra.mxu0 0.0
        %774 = vmatprep.subr.mxu0 0.0
        %775 = vmatpush1.msra.mxu0 0.0
        %776 = vmatprep.mubr.f32.mxu0 0.0
        %777 = vmatmul.mubr.f32.gmra.mrb[0].mxu0 %v617
        %v778 = vpop.f32.mrb[0].mxu0
        %v779 = vadd.f32 %v613, %v778
        %v780 = vpop.f32.mrb[0].mxu0
        %781 = vmatprep.mubr.f32.mxu0 0.0
        %782 = vmatmul.mubr.f32.gmra.mrb[0].mxu0 %v620
        %v783 = vpop.f32.mrb[0].mxu0
        %v784 = vadd.f32 %v613, %v783
        %v785 = vpop.f32.mrb[0].mxu0
        %786 = vmatprep.mubr.f32.mxu0 0.0
        %787 = vmatmul.mubr.f32.gmra.mrb[0].mxu0 %v623
        %v788 = vpop.f32.mrb[0].mxu0
        %v789 = vadd.f32 %v613, %v788
        %v790 = vpop.f32.mrb[0].mxu0
        %791 = vmatprep.mubr.f32.mxu0 0.0
        %792 = vmatmul.mubr.f32.gmra.mrb[0].mxu0 %v626
        %v793 = vpop.f32.mrb[0].mxu0
        %v794 = vadd.f32 %v613, %v793
        %v795 = vpop.f32.mrb[0].mxu0
        %796 = vmatprep.mubr.f32.mxu0 0.0
        %797 = vmatmul.mubr.f32.gmra.mrb[0].mxu0 %v629
        %v798 = vpop.f32.mrb[0].mxu0
        %v799 = vadd.f32 %v613, %v798
        %v800 = vpop.f32.mrb[0].mxu0
        %801 = vmatprep.mubr.f32.mxu0 0.0
        %802 = vmatmul.mubr.f32.gmra.mrb[0].mxu0 %v632
        %v803 = vpop.f32.mrb[0].mxu0
        %v804 = vadd.f32 %v613, %v803
        %v805 = vpop.f32.mrb[0].mxu0
        %806 = vmatprep.mubr.f32.mxu0 0.0
        %807 = vmatmul.mubr.f32.gmra.mrb[0].mxu0 %v635
        %v808 = vpop.f32.mrb[0].mxu0
        %v809 = vadd.f32 %v613, %v808
        %v810 = vpop.f32.mrb[0].mxu0
        %811 = vmatprep.mubr.f32.mxu0 0.0
        %812 = vmatmul.mubr.f32.gmra.mrb[0].mxu0 %v638
        %v813 = vpop.f32.mrb[0].mxu0
        %v814 = vadd.f32 %v613, %v813
        %v815 = vpop.f32.mrb[0].mxu0
        %816 = vmatprep.mubr.f32.mxu0 0.0
        %817 = vmatmul.mubr.f32.gmra.mrb[0].mxu0 %v641
        %v818 = vpop.f32.mrb[0].mxu0
        %v819 = vadd.f32 %v613, %v818
        %v820 = vpop.f32.mrb[0].mxu0
        %821 = vmatprep.mubr.f32.mxu0 0.0
        %822 = vmatmul.mubr.f32.gmra.mrb[0].mxu0 %v644
        %v823 = vpop.f32.mrb[0].mxu0
        %v824 = vadd.f32 %v613, %v823
        %v825 = vpop.f32.mrb[0].mxu0
        %826 = vmatprep.mubr.f32.mxu0 0.0
        %827 = vmatmul.mubr.f32.gmra.mrb[0].mxu0 %v647
        %v828 = vpop.f32.mrb[0].mxu0
        %v829 = vadd.f32 %v613, %v828
        %v830 = vpop.f32.mrb[0].mxu0
        %831 = vmatprep.mubr.f32.mxu0 0.0
        %832 = vmatmul.mubr.f32.gmra.mrb[0].mxu0 %v650
        %v833 = vpop.f32.mrb[0].mxu0
        %v834 = vadd.f32 %v613, %v833
        %v835 = vpop.f32.mrb[0].mxu0
        %836 = vmatprep.mubr.f32.mxu0 0.0
        %837 = vmatmul.mubr.f32.gmra.mrb[0].mxu0 %v653
        %v838 = vpop.f32.mrb[0].mxu0
        %v839 = vadd.f32 %v613, %v838
        %v840 = vpop.f32.mrb[0].mxu0
        %841 = vmatprep.mubr.f32.mxu0 0.0
        %842 = vmatmul.mubr.f32.gmra.mrb[0].mxu0 %v656
        %v843 = vpop.f32.mrb[0].mxu0
        %v844 = vadd.f32 %v613, %v843
        %v845 = vpop.f32.mrb[0].mxu0
        %846 = vmatprep.mubr.f32.mxu0 0.0
        %847 = vmatmul.mubr.f32.gmra.mrb[0].mxu0 %v659
        %v848 = vpop.f32.mrb[0].mxu0
        %v849 = vadd.f32 %v613, %v848
        %v850 = vpop.f32.mrb[0].mxu0
        %851 = vmatprep.mubr.f32.mxu0 0.0
        %852 = vmatmul.mubr.f32.gmra.mrb[0].mxu0 %v662
        %v853 = vpop.f32.mrb[0].mxu0
        %v854 = vadd.f32 %v613, %v853
        %v855 = vpop.f32.mrb[0].mxu0
        %856 = vmatprep.mubr.f32.mxu0 0.0
        %857 = vmatmul.mubr.f32.gmra.mrb[0].mxu0 %v665
        %v858 = vpop.f32.mrb[0].mxu0
        %v859 = vadd.f32 %v613, %v858
        %v860 = vpop.f32.mrb[0].mxu0
        %861 = vmatprep.mubr.f32.mxu0 0.0
        %862 = vmatmul.mubr.f32.gmra.mrb[0].mxu0 %v668
        %v863 = vpop.f32.mrb[0].mxu0
        %v864 = vadd.f32 %v613, %v863
        %v865 = vpop.f32.mrb[0].mxu0
        %866 = vmatprep.mubr.f32.mxu0 0.0
        %867 = vmatmul.mubr.f32.gmra.mrb[0].mxu0 %v671
        %v868 = vpop.f32.mrb[0].mxu0
        %v869 = vadd.f32 %v613, %v868
        %v870 = vpop.f32.mrb[0].mxu0
        %871 = vmatprep.mubr.f32.mxu0 0.0
        %872 = vmatmul.mubr.f32.gmra.mrb[0].mxu0 %v674
        %v873 = vpop.f32.mrb[0].mxu0
        %v874 = vadd.f32 %v613, %v873
        %v875 = vpop.f32.mrb[0].mxu0
        %876 = vmatprep.mubr.f32.mxu0 0.0
        %877 = vmatmul.mubr.f32.gmra.mrb[0].mxu0 %v677
        %v878 = vpop.f32.mrb[0].mxu0
        %v879 = vadd.f32 %v613, %v878
        %v880 = vpop.f32.mrb[0].mxu0
        %881 = vmatprep.mubr.f32.mxu0 0.0
        %882 = vmatmul.mubr.f32.gmra.mrb[0].mxu0 %v680
        %v883 = vpop.f32.mrb[0].mxu0
        %v884 = vadd.f32 %v613, %v883
        %v885 = vpop.f32.mrb[0].mxu0
        %886 = vmatprep.mubr.f32.mxu0 0.0
        %887 = vmatmul.mubr.f32.gmra.mrb[0].mxu0 %v683
        %v888 = vpop.f32.mrb[0].mxu0
        %v889 = vadd.f32 %v613, %v888
        %v890 = vpop.f32.mrb[0].mxu0
        %891 = vmatprep.mubr.f32.mxu0 0.0
        %892 = vmatmul.mubr.f32.gmra.mrb[0].mxu0 %v686
        %v893 = vpop.f32.mrb[0].mxu0
        %v894 = vadd.f32 %v613, %v893
        %v895 = vpop.f32.mrb[0].mxu0
        %896 = vmatprep.mubr.f32.mxu0 0.0
        %897 = vmatmul.mubr.f32.gmra.mrb[0].mxu0 %v689
        %v898 = vpop.f32.mrb[0].mxu0
        %v899 = vadd.f32 %v613, %v898
        %v900 = vpop.f32.mrb[0].mxu0
        %901 = vmatprep.mubr.f32.mxu0 0.0
        %902 = vmatmul.mubr.f32.gmra.mrb[0].mxu0 %v692
        %v903 = vpop.f32.mrb[0].mxu0
        %v904 = vadd.f32 %v613, %v903
        %v905 = vpop.f32.mrb[0].mxu0
        %906 = vmatprep.mubr.f32.mxu0 0.0
        %907 = vmatmul.mubr.f32.gmra.mrb[0].mxu0 %v695
        %v908 = vpop.f32.mrb[0].mxu0
        %v909 = vadd.f32 %v613, %v908
        %v910 = vpop.f32.mrb[0].mxu0
        %911 = vmatprep.mubr.f32.mxu0 0.0
        %912 = vmatmul.mubr.f32.gmra.mrb[0].mxu0 %v698
        %v913 = vpop.f32.mrb[0].mxu0
        %v914 = vadd.f32 %v613, %v913
        %v915 = vpop.f32.mrb[0].mxu0
        %916 = vmatprep.mubr.f32.mxu0 0.0
        %917 = vmatmul.mubr.f32.gmra.mrb[0].mxu0 %v701
        %v918 = vpop.f32.mrb[0].mxu0
        %v919 = vadd.f32 %v613, %v918
        %v920 = vpop.f32.mrb[0].mxu0
        %921 = vmatprep.mubr.f32.mxu0 0.0
        %922 = vmatmul.mubr.f32.gmra.mrb[0].mxu0 %v704
        %v923 = vpop.f32.mrb[0].mxu0
        %v924 = vadd.f32 %v613, %v923
        %v925 = vpop.f32.mrb[0].mxu0
        %926 = vmatprep.mubr.f32.mxu0 0.0
        %927 = vmatmul.mubr.f32.gmra.mrb[0].mxu0 %v707
        %v928 = vpop.f32.mrb[0].mxu0
        %v929 = vadd.f32 %v613, %v928
        %v930 = vpop.f32.mrb[0].mxu0
        %931 = vmatprep.mubr.f32.mxu0 0.0
        %932 = vmatmul.mubr.f32.gmra.mrb[0].mxu0 %v710
        %v933 = vpop.f32.mrb[0].mxu0
        %v934 = vadd.f32 %v613, %v933
        %v935 = vpop.f32.mrb[0].mxu0
        %936 = vdwg.mxu0
        %v937 = vld [vmem:[%s3] sm:$0x1]
        %v938 = vld [vmem:[%s4] sm:$0x1]
        %939 = vadd.xlane.f32.xlu0 %v779
        %v940 = vpop.xlane.xlu0 %939
        %941 = vadd.xlane.f32.xlu0 %v784
        %v942 = vpop.xlane.xlu0 %941
        %943 = vadd.xlane.f32.xlu0 %v789
        %v944 = vpop.xlane.xlu0 %943
        %945 = vadd.xlane.f32.xlu0 %v794
        %v946 = vpop.xlane.xlu0 %945
        %947 = vadd.xlane.f32.xlu0 %v799
        %v948 = vpop.xlane.xlu0 %947
        %949 = vadd.xlane.f32.xlu0 %v804
        %v950 = vpop.xlane.xlu0 %949
        %951 = vadd.xlane.f32.xlu0 %v809
        %v952 = vpop.xlane.xlu0 %951
        %953 = vadd.xlane.f32.xlu0 %v814
        %v954 = vpop.xlane.xlu0 %953
        %955 = vadd.xlane.f32.xlu0 %v819
        %v956 = vpop.xlane.xlu0 %955
        %957 = vadd.xlane.f32.xlu0 %v824
        %v958 = vpop.xlane.xlu0 %957
        %959 = vadd.xlane.f32.xlu0 %v829
        %v960 = vpop.xlane.xlu0 %959
        %961 = vadd.xlane.f32.xlu0 %v834
        %v962 = vpop.xlane.xlu0 %961
        %963 = vadd.xlane.f32.xlu0 %v839
        %v964 = vpop.xlane.xlu0 %963
        %965 = vadd.xlane.f32.xlu0 %v844
        %v966 = vpop.xlane.xlu0 %965
        %967 = vadd.xlane.f32.xlu0 %v849
        %v968 = vpop.xlane.xlu0 %967
        %969 = vadd.xlane.f32.xlu0 %v854
        %v970 = vpop.xlane.xlu0 %969
        %971 = vadd.xlane.f32.xlu0 %v859
        %v972 = vpop.xlane.xlu0 %971
        %973 = vadd.xlane.f32.xlu0 %v864
        %v974 = vpop.xlane.xlu0 %973
        %975 = vadd.xlane.f32.xlu0 %v869
        %v976 = vpop.xlane.xlu0 %975
        %977 = vadd.xlane.f32.xlu0 %v874
        %v978 = vpop.xlane.xlu0 %977
        %979 = vadd.xlane.f32.xlu0 %v879
        %v980 = vpop.xlane.xlu0 %979
        %981 = vadd.xlane.f32.xlu0 %v884
        %v982 = vpop.xlane.xlu0 %981
        %983 = vadd.xlane.f32.xlu0 %v889
        %v984 = vpop.xlane.xlu0 %983
        %985 = vadd.xlane.f32.xlu0 %v894
        %v986 = vpop.xlane.xlu0 %985
        %987 = vadd.xlane.f32.xlu0 %v899
        %v988 = vpop.xlane.xlu0 %987
        %989 = vadd.xlane.f32.xlu0 %v904
        %v990 = vpop.xlane.xlu0 %989
        %991 = vadd.xlane.f32.xlu0 %v909
        %v992 = vpop.xlane.xlu0 %991
        %993 = vadd.xlane.f32.xlu0 %v914
        %v994 = vpop.xlane.xlu0 %993
        %995 = vadd.xlane.f32.xlu0 %v919
        %v996 = vpop.xlane.xlu0 %995
        %997 = vadd.xlane.f32.xlu0 %v924
        %v998 = vpop.xlane.xlu0 %997
        %999 = vadd.xlane.f32.xlu0 %v929
        %v1000 = vpop.xlane.xlu0 %999
        %1001 = vadd.xlane.f32.xlu0 %v934
        %v1002 = vpop.xlane.xlu0 %1001
        %v1003 = vrcp.pop 128.0
        %v1004 = vmul.f32 %v940, %v1003
        %v1005 = vmul.f32 %v942, %v1003
        %v1006 = vmul.f32 %v944, %v1003
        %v1007 = vmul.f32 %v946, %v1003
        %v1008 = vmul.f32 %v948, %v1003
        %v1009 = vmul.f32 %v950, %v1003
        %v1010 = vmul.f32 %v952, %v1003
        %v1011 = vmul.f32 %v954, %v1003
        %v1012 = vmul.f32 %v956, %v1003
        %v1013 = vmul.f32 %v958, %v1003
        %v1014 = vmul.f32 %v960, %v1003
        %v1015 = vmul.f32 %v962, %v1003
        %v1016 = vmul.f32 %v964, %v1003
        %v1017 = vmul.f32 %v966, %v1003
        %v1018 = vmul.f32 %v968, %v1003
        %v1019 = vmul.f32 %v970, %v1003
        %v1020 = vmul.f32 %v972, %v1003
        %v1021 = vmul.f32 %v974, %v1003
        %v1022 = vmul.f32 %v976, %v1003
        %v1023 = vmul.f32 %v978, %v1003
        %v1024 = vmul.f32 %v980, %v1003
        %v1025 = vmul.f32 %v982, %v1003
        %v1026 = vmul.f32 %v984, %v1003
        %v1027 = vmul.f32 %v986, %v1003
        %v1028 = vmul.f32 %v988, %v1003
        %v1029 = vmul.f32 %v990, %v1003
        %v1030 = vmul.f32 %v992, %v1003
        %v1031 = vmul.f32 %v994, %v1003
        %v1032 = vmul.f32 %v996, %v1003
        %v1033 = vmul.f32 %v998, %v1003
        %v1034 = vmul.f32 %v1000, %v1003
        %v1035 = vmul.f32 %v1002, %v1003
        %v1036 = vsub.f32 %v779, %v1004
        %v1037 = vsub.f32 %v784, %v1005
        %v1038 = vsub.f32 %v789, %v1006
        %v1039 = vsub.f32 %v794, %v1007
        %v1040 = vsub.f32 %v799, %v1008
        %v1041 = vsub.f32 %v804, %v1009
        %v1042 = vsub.f32 %v809, %v1010
        %v1043 = vsub.f32 %v814, %v1011
        %v1044 = vsub.f32 %v819, %v1012
        %v1045 = vsub.f32 %v824, %v1013
        %v1046 = vsub.f32 %v829, %v1014
        %v1047 = vsub.f32 %v834, %v1015
        %v1048 = vsub.f32 %v839, %v1016
        %v1049 = vsub.f32 %v844, %v1017
        %v1050 = vsub.f32 %v849, %v1018
        %v1051 = vsub.f32 %v854, %v1019
        %v1052 = vsub.f32 %v859, %v1020
        %v1053 = vsub.f32 %v864, %v1021
        %v1054 = vsub.f32 %v869, %v1022
        %v1055 = vsub.f32 %v874, %v1023
        %v1056 = vsub.f32 %v879, %v1024
        %v1057 = vsub.f32 %v884, %v1025
        %v1058 = vsub.f32 %v889, %v1026
        %v1059 = vsub.f32 %v894, %v1027
        %v1060 = vsub.f32 %v899, %v1028
        %v1061 = vsub.f32 %v904, %v1029
        %v1062 = vsub.f32 %v909, %v1030
        %v1063 = vsub.f32 %v914, %v1031
        %v1064 = vsub.f32 %v919, %v1032
        %v1065 = vsub.f32 %v924, %v1033
        %v1066 = vsub.f32 %v929, %v1034
        %v1067 = vsub.f32 %v934, %v1035
        %v1068 = vmul.f32 %v1036, %v1036
        %v1069 = vmul.f32 %v1037, %v1037
        %v1070 = vmul.f32 %v1038, %v1038
        %v1071 = vmul.f32 %v1039, %v1039
        %v1072 = vmul.f32 %v1040, %v1040
        %v1073 = vmul.f32 %v1041, %v1041
        %v1074 = vmul.f32 %v1042, %v1042
        %v1075 = vmul.f32 %v1043, %v1043
        %v1076 = vmul.f32 %v1044, %v1044
        %v1077 = vmul.f32 %v1045, %v1045
        %v1078 = vmul.f32 %v1046, %v1046
        %v1079 = vmul.f32 %v1047, %v1047
        %v1080 = vmul.f32 %v1048, %v1048
        %v1081 = vmul.f32 %v1049, %v1049
        %v1082 = vmul.f32 %v1050, %v1050
        %v1083 = vmul.f32 %v1051, %v1051
        %v1084 = vmul.f32 %v1052, %v1052
        %v1085 = vmul.f32 %v1053, %v1053
        %v1086 = vmul.f32 %v1054, %v1054
        %v1087 = vmul.f32 %v1055, %v1055
        %v1088 = vmul.f32 %v1056, %v1056
        %v1089 = vmul.f32 %v1057, %v1057
        %v1090 = vmul.f32 %v1058, %v1058
        %v1091 = vmul.f32 %v1059, %v1059
        %v1092 = vmul.f32 %v1060, %v1060
        %v1093 = vmul.f32 %v1061, %v1061
        %v1094 = vmul.f32 %v1062, %v1062
        %v1095 = vmul.f32 %v1063, %v1063
        %v1096 = vmul.f32 %v1064, %v1064
        %v1097 = vmul.f32 %v1065, %v1065
        %v1098 = vmul.f32 %v1066, %v1066
        %v1099 = vmul.f32 %v1067, %v1067
        %1100 = vadd.xlane.f32.xlu0 %v1068
        %v1101 = vpop.xlane.xlu0 %1100
        %1102 = vadd.xlane.f32.xlu0 %v1069
        %v1103 = vpop.xlane.xlu0 %1102
        %1104 = vadd.xlane.f32.xlu0 %v1070
        %v1105 = vpop.xlane.xlu0 %1104
        %1106 = vadd.xlane.f32.xlu0 %v1071
        %v1107 = vpop.xlane.xlu0 %1106
        %1108 = vadd.xlane.f32.xlu0 %v1072
        %v1109 = vpop.xlane.xlu0 %1108
        %1110 = vadd.xlane.f32.xlu0 %v1073
        %v1111 = vpop.xlane.xlu0 %1110
        %1112 = vadd.xlane.f32.xlu0 %v1074
        %v1113 = vpop.xlane.xlu0 %1112
        %1114 = vadd.xlane.f32.xlu0 %v1075
        %v1115 = vpop.xlane.xlu0 %1114
        %1116 = vadd.xlane.f32.xlu0 %v1076
        %v1117 = vpop.xlane.xlu0 %1116
        %1118 = vadd.xlane.f32.xlu0 %v1077
        %v1119 = vpop.xlane.xlu0 %1118
        %1120 = vadd.xlane.f32.xlu0 %v1078
        %v1121 = vpop.xlane.xlu0 %1120
        %1122 = vadd.xlane.f32.xlu0 %v1079
        %v1123 = vpop.xlane.xlu0 %1122
        %1124 = vadd.xlane.f32.xlu0 %v1080
        %v1125 = vpop.xlane.xlu0 %1124
        %1126 = vadd.xlane.f32.xlu0 %v1081
        %v1127 = vpop.xlane.xlu0 %1126
        %1128 = vadd.xlane.f32.xlu0 %v1082
        %v1129 = vpop.xlane.xlu0 %1128
        %1130 = vadd.xlane.f32.xlu0 %v1083
        %v1131 = vpop.xlane.xlu0 %1130
        %1132 = vadd.xlane.f32.xlu0 %v1084
        %v1133 = vpop.xlane.xlu0 %1132
        %1134 = vadd.xlane.f32.xlu0 %v1085
        %v1135 = vpop.xlane.xlu0 %1134
        %1136 = vadd.xlane.f32.xlu0 %v1086
        %v1137 = vpop.xlane.xlu0 %1136
        %1138 = vadd.xlane.f32.xlu0 %v1087
        %v1139 = vpop.xlane.xlu0 %1138
        %1140 = vadd.xlane.f32.xlu0 %v1088
        %v1141 = vpop.xlane.xlu0 %1140
        %1142 = vadd.xlane.f32.xlu0 %v1089
        %v1143 = vpop.xlane.xlu0 %1142
        %1144 = vadd.xlane.f32.xlu0 %v1090
        %v1145 = vpop.xlane.xlu0 %1144
        %1146 = vadd.xlane.f32.xlu0 %v1091
        %v1147 = vpop.xlane.xlu0 %1146
        %1148 = vadd.xlane.f32.xlu0 %v1092
        %v1149 = vpop.xlane.xlu0 %1148
        %1150 = vadd.xlane.f32.xlu0 %v1093
        %v1151 = vpop.xlane.xlu0 %1150
        %1152 = vadd.xlane.f32.xlu0 %v1094
        %v1153 = vpop.xlane.xlu0 %1152
        %1154 = vadd.xlane.f32.xlu0 %v1095
        %v1155 = vpop.xlane.xlu0 %1154
        %1156 = vadd.xlane.f32.xlu0 %v1096
        %v1157 = vpop.xlane.xlu0 %1156
        %1158 = vadd.xlane.f32.xlu0 %v1097
        %v1159 = vpop.xlane.xlu0 %1158
        %1160 = vadd.xlane.f32.xlu0 %v1098
        %v1161 = vpop.xlane.xlu0 %1160
        %1162 = vadd.xlane.f32.xlu0 %v1099
        %v1163 = vpop.xlane.xlu0 %1162
        %v1164 = vmul.f32 %v1101, %v1003
        %v1165 = vmul.f32 %v1103, %v1003
        %v1166 = vmul.f32 %v1105, %v1003
        %v1167 = vmul.f32 %v1107, %v1003
        %v1168 = vmul.f32 %v1109, %v1003
        %v1169 = vmul.f32 %v1111, %v1003
        %v1170 = vmul.f32 %v1113, %v1003
        %v1171 = vmul.f32 %v1115, %v1003
        %v1172 = vmul.f32 %v1117, %v1003
        %v1173 = vmul.f32 %v1119, %v1003
        %v1174 = vmul.f32 %v1121, %v1003
        %v1175 = vmul.f32 %v1123, %v1003
        %v1176 = vmul.f32 %v1125, %v1003
        %v1177 = vmul.f32 %v1127, %v1003
        %v1178 = vmul.f32 %v1129, %v1003
        %v1179 = vmul.f32 %v1131, %v1003
        %v1180 = vmul.f32 %v1133, %v1003
        %v1181 = vmul.f32 %v1135, %v1003
        %v1182 = vmul.f32 %v1137, %v1003
        %v1183 = vmul.f32 %v1139, %v1003
        %v1184 = vmul.f32 %v1141, %v1003
        %v1185 = vmul.f32 %v1143, %v1003
        %v1186 = vmul.f32 %v1145, %v1003
        %v1187 = vmul.f32 %v1147, %v1003
        %v1188 = vmul.f32 %v1149, %v1003
        %v1189 = vmul.f32 %v1151, %v1003
        %v1190 = vmul.f32 %v1153, %v1003
        %v1191 = vmul.f32 %v1155, %v1003
        %v1192 = vmul.f32 %v1157, %v1003
        %v1193 = vmul.f32 %v1159, %v1003
        %v1194 = vmul.f32 %v1161, %v1003
        %v1195 = vmul.f32 %v1163, %v1003
        %v1196 = vadd.f32 %v1164, 1e-05
        %v1197 = vadd.f32 %v1165, 1e-05
        %v1198 = vadd.f32 %v1166, 1e-05
        %v1199 = vadd.f32 %v1167, 1e-05
        %v1200 = vadd.f32 %v1168, 1e-05
        %v1201 = vadd.f32 %v1169, 1e-05
        %v1202 = vadd.f32 %v1170, 1e-05
        %v1203 = vadd.f32 %v1171, 1e-05
        %v1204 = vadd.f32 %v1172, 1e-05
        %v1205 = vadd.f32 %v1173, 1e-05
        %v1206 = vadd.f32 %v1174, 1e-05
        %v1207 = vadd.f32 %v1175, 1e-05
        %v1208 = vadd.f32 %v1176, 1e-05
        %v1209 = vadd.f32 %v1177, 1e-05
        %v1210 = vadd.f32 %v1178, 1e-05
        %v1211 = vadd.f32 %v1179, 1e-05
        %v1212 = vadd.f32 %v1180, 1e-05
        %v1213 = vadd.f32 %v1181, 1e-05
        %v1214 = vadd.f32 %v1182, 1e-05
        %v1215 = vadd.f32 %v1183, 1e-05
        %v1216 = vadd.f32 %v1184, 1e-05
        %v1217 = vadd.f32 %v1185, 1e-05
        %v1218 = vadd.f32 %v1186, 1e-05
        %v1219 = vadd.f32 %v1187, 1e-05
        %v1220 = vadd.f32 %v1188, 1e-05
        %v1221 = vadd.f32 %v1189, 1e-05
        %v1222 = vadd.f32 %v1190, 1e-05
        %v1223 = vadd.f32 %v1191, 1e-05
        %v1224 = vadd.f32 %v1192, 1e-05
        %v1225 = vadd.f32 %v1193, 1e-05
        %v1226 = vadd.f32 %v1194, 1e-05
        %v1227 = vadd.f32 %v1195, 1e-05
        %v1228 = vrsqrt.pop %v1196
        %v1229 = vrsqrt.pop %v1197
        %v1230 = vrsqrt.pop %v1198
        %v1231 = vrsqrt.pop %v1199
        %v1232 = vrsqrt.pop %v1200
        %v1233 = vrsqrt.pop %v1201
        %v1234 = vrsqrt.pop %v1202
        %v1235 = vrsqrt.pop %v1203
        %v1236 = vrsqrt.pop %v1204
        %v1237 = vrsqrt.pop %v1205
        %v1238 = vrsqrt.pop %v1206
        %v1239 = vrsqrt.pop %v1207
        %v1240 = vrsqrt.pop %v1208
        %v1241 = vrsqrt.pop %v1209
        %v1242 = vrsqrt.pop %v1210
        %v1243 = vrsqrt.pop %v1211
        %v1244 = vrsqrt.pop %v1212
        %v1245 = vrsqrt.pop %v1213
        %v1246 = vrsqrt.pop %v1214
        %v1247 = vrsqrt.pop %v1215
        %v1248 = vrsqrt.pop %v1216
        %v1249 = vrsqrt.pop %v1217
        %v1250 = vrsqrt.pop %v1218
        %v1251 = vrsqrt.pop %v1219
        %v1252 = vrsqrt.pop %v1220
        %v1253 = vrsqrt.pop %v1221
        %v1254 = vrsqrt.pop %v1222
        %v1255 = vrsqrt.pop %v1223
        %v1256 = vrsqrt.pop %v1224
        %v1257 = vrsqrt.pop %v1225
        %v1258 = vrsqrt.pop %v1226
        %v1259 = vrsqrt.pop %v1227
        %v1260 = vmul.f32 %v1036, %v1228
        %v1261 = vmul.f32 %v1037, %v1229
        %v1262 = vmul.f32 %v1038, %v1230
        %v1263 = vmul.f32 %v1039, %v1231
        %v1264 = vmul.f32 %v1040, %v1232
        %v1265 = vmul.f32 %v1041, %v1233
        %v1266 = vmul.f32 %v1042, %v1234
        %v1267 = vmul.f32 %v1043, %v1235
        %v1268 = vmul.f32 %v1044, %v1236
        %v1269 = vmul.f32 %v1045, %v1237
        %v1270 = vmul.f32 %v1046, %v1238
        %v1271 = vmul.f32 %v1047, %v1239
        %v1272 = vmul.f32 %v1048, %v1240
        %v1273 = vmul.f32 %v1049, %v1241
        %v1274 = vmul.f32 %v1050, %v1242
        %v1275 = vmul.f32 %v1051, %v1243
        %v1276 = vmul.f32 %v1052, %v1244
        %v1277 = vmul.f32 %v1053, %v1245
        %v1278 = vmul.f32 %v1054, %v1246
        %v1279 = vmul.f32 %v1055, %v1247
        %v1280 = vmul.f32 %v1056, %v1248
        %v1281 = vmul.f32 %v1057, %v1249
        %v1282 = vmul.f32 %v1058, %v1250
        %v1283 = vmul.f32 %v1059, %v1251
        %v1284 = vmul.f32 %v1060, %v1252
        %v1285 = vmul.f32 %v1061, %v1253
        %v1286 = vmul.f32 %v1062, %v1254
        %v1287 = vmul.f32 %v1063, %v1255
        %v1288 = vmul.f32 %v1064, %v1256
        %v1289 = vmul.f32 %v1065, %v1257
        %v1290 = vmul.f32 %v1066, %v1258
        %v1291 = vmul.f32 %v1067, %v1259
        %v1293 = vlaneseq
        %v1294 = vshrl.u32 %v1293, 7
        %v1295 = vsub.s32 0, %v1294
        %v1296 = vrot.slane %v937, %v1295
        %v1298 = vmul.f32 %v1260, %v1296
        %v1299 = vmul.f32 %v1261, %v1296
        %v1300 = vmul.f32 %v1262, %v1296
        %v1301 = vmul.f32 %v1263, %v1296
        %v1302 = vmul.f32 %v1264, %v1296
        %v1303 = vmul.f32 %v1265, %v1296
        %v1304 = vmul.f32 %v1266, %v1296
        %v1305 = vmul.f32 %v1267, %v1296
        %v1306 = vmul.f32 %v1268, %v1296
        %v1307 = vmul.f32 %v1269, %v1296
        %v1308 = vmul.f32 %v1270, %v1296
        %v1309 = vmul.f32 %v1271, %v1296
        %v1310 = vmul.f32 %v1272, %v1296
        %v1311 = vmul.f32 %v1273, %v1296
        %v1312 = vmul.f32 %v1274, %v1296
        %v1313 = vmul.f32 %v1275, %v1296
        %v1314 = vmul.f32 %v1276, %v1296
        %v1315 = vmul.f32 %v1277, %v1296
        %v1316 = vmul.f32 %v1278, %v1296
        %v1317 = vmul.f32 %v1279, %v1296
        %v1318 = vmul.f32 %v1280, %v1296
        %v1319 = vmul.f32 %v1281, %v1296
        %v1320 = vmul.f32 %v1282, %v1296
        %v1321 = vmul.f32 %v1283, %v1296
        %v1322 = vmul.f32 %v1284, %v1296
        %v1323 = vmul.f32 %v1285, %v1296
        %v1324 = vmul.f32 %v1286, %v1296
        %v1325 = vmul.f32 %v1287, %v1296
        %v1326 = vmul.f32 %v1288, %v1296
        %v1327 = vmul.f32 %v1289, %v1296
        %v1328 = vmul.f32 %v1290, %v1296
        %v1329 = vmul.f32 %v1291, %v1296
        %v1331 = vlaneseq
        %v1332 = vshrl.u32 %v1331, 7
        %v1333 = vsub.s32 0, %v1332
        %v1334 = vrot.slane %v938, %v1333
        %v1336 = vadd.f32 %v1298, %v1334
        %v1337 = vadd.f32 %v1299, %v1334
        %v1338 = vadd.f32 %v1300, %v1334
        %v1339 = vadd.f32 %v1301, %v1334
        %v1340 = vadd.f32 %v1302, %v1334
        %v1341 = vadd.f32 %v1303, %v1334
        %v1342 = vadd.f32 %v1304, %v1334
        %v1343 = vadd.f32 %v1305, %v1334
        %v1344 = vadd.f32 %v1306, %v1334
        %v1345 = vadd.f32 %v1307, %v1334
        %v1346 = vadd.f32 %v1308, %v1334
        %v1347 = vadd.f32 %v1309, %v1334
        %v1348 = vadd.f32 %v1310, %v1334
        %v1349 = vadd.f32 %v1311, %v1334
        %v1350 = vadd.f32 %v1312, %v1334
        %v1351 = vadd.f32 %v1313, %v1334
        %v1352 = vadd.f32 %v1314, %v1334
        %v1353 = vadd.f32 %v1315, %v1334
        %v1354 = vadd.f32 %v1316, %v1334
        %v1355 = vadd.f32 %v1317, %v1334
        %v1356 = vadd.f32 %v1318, %v1334
        %v1357 = vadd.f32 %v1319, %v1334
        %v1358 = vadd.f32 %v1320, %v1334
        %v1359 = vadd.f32 %v1321, %v1334
        %v1360 = vadd.f32 %v1322, %v1334
        %v1361 = vadd.f32 %v1323, %v1334
        %v1362 = vadd.f32 %v1324, %v1334
        %v1363 = vadd.f32 %v1325, %v1334
        %v1364 = vadd.f32 %v1326, %v1334
        %v1365 = vadd.f32 %v1327, %v1334
        %v1366 = vadd.f32 %v1328, %v1334
        %v1367 = vadd.f32 %v1329, %v1334
        %v1368 = vpack.c.bf16 %v1337, %v1336
        %v1369 = vpack.c.bf16 %v1339, %v1338
        %v1370 = vpack.c.bf16 %v1341, %v1340
        %v1371 = vpack.c.bf16 %v1343, %v1342
        %v1372 = vpack.c.bf16 %v1345, %v1344
        %v1373 = vpack.c.bf16 %v1347, %v1346
        %v1374 = vpack.c.bf16 %v1349, %v1348
        %v1375 = vpack.c.bf16 %v1351, %v1350
        %v1376 = vpack.c.bf16 %v1353, %v1352
        %v1377 = vpack.c.bf16 %v1355, %v1354
        %v1378 = vpack.c.bf16 %v1357, %v1356
        %v1379 = vpack.c.bf16 %v1359, %v1358
        %v1380 = vpack.c.bf16 %v1361, %v1360
        %v1381 = vpack.c.bf16 %v1363, %v1362
        %v1382 = vpack.c.bf16 %v1365, %v1364
        %v1383 = vpack.c.bf16 %v1367, %v1366
        %v1384 = vld [vmem:[%s5] sm:$0xf]
        %v1385 = vld [vmem:[%s5 + $0x4] sm:$0xf]
        %v1386 = vld [vmem:[%s5 + $0x8] sm:$0xf]
        %v1387 = vld [vmem:[%s5 + $0xc] sm:$0xf]
        %v1388 = vld [vmem:[%s5 + $0x10] sm:$0xf]
        %v1389 = vld [vmem:[%s5 + $0x14] sm:$0xf]
        %v1390 = vld [vmem:[%s5 + $0x18] sm:$0xf]
        %v1391 = vld [vmem:[%s5 + $0x1c] sm:$0xf]
        %v1392 = vld [vmem:[%s5 + $0x20] sm:$0xf]
        %v1393 = vld [vmem:[%s5 + $0x24] sm:$0xf]
        %v1394 = vld [vmem:[%s5 + $0x28] sm:$0xf]
        %v1395 = vld [vmem:[%s5 + $0x2c] sm:$0xf]
        %v1396 = vld [vmem:[%s5 + $0x30] sm:$0xf]
        %v1397 = vld [vmem:[%s5 + $0x34] sm:$0xf]
        %v1398 = vld [vmem:[%s5 + $0x38] sm:$0xf]
        %v1399 = vld [vmem:[%s5 + $0x3c] sm:$0xf]
        %v1400 = vld [vmem:[%s8] sm:$0x1]
        %v1402 = vlaneseq
        %v1403 = vshrl.u32 %v1402, 7
        %v1404 = vsub.s32 0, %v1403
        %v1405 = vrot.slane %v1400, %v1404
        %v1423 = vunpack.c.l.b16 %v1384
        %v1424 = vunpack.c.l.b16 %v1385
        %v1425 = vunpack.c.l.b16 %v1386
        %v1426 = vunpack.c.l.b16 %v1387
        %v1427 = vunpack.c.l.b16 %v1388
        %v1428 = vunpack.c.l.b16 %v1389
        %v1429 = vunpack.c.l.b16 %v1390
        %v1430 = vunpack.c.l.b16 %v1391
        %v1431 = vunpack.c.l.b16 %v1392
        %v1432 = vunpack.c.l.b16 %v1393
        %v1433 = vunpack.c.l.b16 %v1394
        %v1434 = vunpack.c.l.b16 %v1395
        %v1435 = vunpack.c.l.b16 %v1396
        %v1436 = vunpack.c.l.b16 %v1397
        %v1437 = vunpack.c.l.b16 %v1398
        %v1438 = vunpack.c.l.b16 %v1399
        %v1439 = vpack.c.b16 %v1424, %v1423
        %v1440 = vpack.c.b16 %v1426, %v1425
        %v1441 = vpack.c.b16 %v1428, %v1427
        %v1442 = vpack.c.b16 %v1430, %v1429
        %v1443 = vpack.c.b16 %v1432, %v1431
        %v1444 = vpack.c.b16 %v1434, %v1433
        %v1445 = vpack.c.b16 %v1436, %v1435
        %v1446 = vpack.c.b16 %v1438, %v1437
        %1455 = vmatprep.subr.bf16.mxu0 0
        %1456 = vmatpush1.bf16.msra.mxu0 %v1439
        %1457 = vmatprep.subr.bf16.mxu0 0
        %1458 = vmatpush1.bf16.msra.mxu0 %v1440
        %1459 = vmatprep.subr.bf16.mxu0 0
        %1460 = vmatpush1.bf16.msra.mxu0 %v1441
        %1461 = vmatprep.subr.bf16.mxu0 0
        %1462 = vmatpush1.bf16.msra.mxu0 %v1442
        %1463 = vmatprep.subr.bf16.mxu0 0
        %1464 = vmatpush1.bf16.msra.mxu0 %v1443
        %1465 = vmatprep.subr.bf16.mxu0 0
        %1466 = vmatpush1.bf16.msra.mxu0 %v1444
        %1467 = vmatprep.subr.bf16.mxu0 0
        %1468 = vmatpush1.bf16.msra.mxu0 %v1445
        %1469 = vmatprep.subr.bf16.mxu0 0
        %1470 = vmatpush1.bf16.msra.mxu0 %v1446
        %1471 = vmatprep.subr.bf16.mxu0 0
        %1472 = vmatpush1.bf16.msra.mxu0 0
        %1473 = vmatprep.subr.bf16.mxu0 0
        %1474 = vmatpush1.bf16.msra.mxu0 0
        %1475 = vmatprep.subr.bf16.mxu0 0
        %1476 = vmatpush1.bf16.msra.mxu0 0
        %1477 = vmatprep.subr.bf16.mxu0 0
        %1478 = vmatpush1.bf16.msra.mxu0 0
        %1479 = vmatprep.subr.bf16.mxu0 0
        %1480 = vmatpush1.bf16.msra.mxu0 0
        %1481 = vmatprep.subr.bf16.mxu0 0
        %1482 = vmatpush1.bf16.msra.mxu0 0
        %1483 = vmatprep.subr.bf16.mxu0 0
        %1484 = vmatpush1.bf16.msra.mxu0 0
        %1485 = vmatprep.subr.bf16.mxu0 0
        %1486 = vmatpush1.bf16.msra.mxu0 0
        %1487 = vmatprep.mubr.bf16.mxu0 0
        %1488 = vmatmul.mubr.bf16.gmra.mrb[0].mxu0 %v1368
        %v1489 = vpop.f32.mrb[0].mxu0
        %v1490 = vadd.f32 %v1405, %v1489
        %v1491 = vpop.f32.mrb[0].mxu0
        %v1492 = vpop.f32.mrb[0].mxu0
        %v1493 = vadd.f32 %v1405, %v1492
        %v1494 = vpop.f32.mrb[0].mxu0
        %1495 = vmatprep.mubr.bf16.mxu0 0
        %1496 = vmatmul.mubr.bf16.gmra.mrb[0].mxu0 %v1369
        %v1497 = vpop.f32.mrb[0].mxu0
        %v1498 = vadd.f32 %v1405, %v1497
        %v1499 = vpop.f32.mrb[0].mxu0
        %v1500 = vpop.f32.mrb[0].mxu0
        %v1501 = vadd.f32 %v1405, %v1500
        %v1502 = vpop.f32.mrb[0].mxu0
        %1503 = vmatprep.mubr.bf16.mxu0 0
        %1504 = vmatmul.mubr.bf16.gmra.mrb[0].mxu0 %v1370
        %v1505 = vpop.f32.mrb[0].mxu0
        %v1506 = vadd.f32 %v1405, %v1505
        %v1507 = vpop.f32.mrb[0].mxu0
        %v1508 = vpop.f32.mrb[0].mxu0
        %v1509 = vadd.f32 %v1405, %v1508
        %v1510 = vpop.f32.mrb[0].mxu0
        %1511 = vmatprep.mubr.bf16.mxu0 0
        %1512 = vmatmul.mubr.bf16.gmra.mrb[0].mxu0 %v1371
        %v1513 = vpop.f32.mrb[0].mxu0
        %v1514 = vadd.f32 %v1405, %v1513
        %v1515 = vpop.f32.mrb[0].mxu0
        %v1516 = vpop.f32.mrb[0].mxu0
        %v1517 = vadd.f32 %v1405, %v1516
        %v1518 = vpop.f32.mrb[0].mxu0
        %1519 = vmatprep.mubr.bf16.mxu0 0
        %1520 = vmatmul.mubr.bf16.gmra.mrb[0].mxu0 %v1372
        %v1521 = vpop.f32.mrb[0].mxu0
        %v1522 = vadd.f32 %v1405, %v1521
        %v1523 = vpop.f32.mrb[0].mxu0
        %v1524 = vpop.f32.mrb[0].mxu0
        %v1525 = vadd.f32 %v1405, %v1524
        %v1526 = vpop.f32.mrb[0].mxu0
        %1527 = vmatprep.mubr.bf16.mxu0 0
        %1528 = vmatmul.mubr.bf16.gmra.mrb[0].mxu0 %v1373
        %v1529 = vpop.f32.mrb[0].mxu0
        %v1530 = vadd.f32 %v1405, %v1529
        %v1531 = vpop.f32.mrb[0].mxu0
        %v1532 = vpop.f32.mrb[0].mxu0
        %v1533 = vadd.f32 %v1405, %v1532
        %v1534 = vpop.f32.mrb[0].mxu0
        %1535 = vmatprep.mubr.bf16.mxu0 0
        %1536 = vmatmul.mubr.bf16.gmra.mrb[0].mxu0 %v1374
        %v1537 = vpop.f32.mrb[0].mxu0
        %v1538 = vadd.f32 %v1405, %v1537
        %v1539 = vpop.f32.mrb[0].mxu0
        %v1540 = vpop.f32.mrb[0].mxu0
        %v1541 = vadd.f32 %v1405, %v1540
        %v1542 = vpop.f32.mrb[0].mxu0
        %1543 = vmatprep.mubr.bf16.mxu0 0
        %1544 = vmatmul.mubr.bf16.gmra.mrb[0].mxu0 %v1375
        %v1545 = vpop.f32.mrb[0].mxu0
        %v1546 = vadd.f32 %v1405, %v1545
        %v1547 = vpop.f32.mrb[0].mxu0
        %v1548 = vpop.f32.mrb[0].mxu0
        %v1549 = vadd.f32 %v1405, %v1548
        %v1550 = vpop.f32.mrb[0].mxu0
        %1551 = vmatprep.mubr.bf16.mxu0 0
        %1552 = vmatmul.mubr.bf16.gmra.mrb[0].mxu0 %v1376
        %v1553 = vpop.f32.mrb[0].mxu0
        %v1554 = vadd.f32 %v1405, %v1553
        %v1555 = vpop.f32.mrb[0].mxu0
        %v1556 = vpop.f32.mrb[0].mxu0
        %v1557 = vadd.f32 %v1405, %v1556
        %v1558 = vpop.f32.mrb[0].mxu0
        %1559 = vmatprep.mubr.bf16.mxu0 0
        %1560 = vmatmul.mubr.bf16.gmra.mrb[0].mxu0 %v1377
        %v1561 = vpop.f32.mrb[0].mxu0
        %v1562 = vadd.f32 %v1405, %v1561
        %v1563 = vpop.f32.mrb[0].mxu0
        %v1564 = vpop.f32.mrb[0].mxu0
        %v1565 = vadd.f32 %v1405, %v1564
        %v1566 = vpop.f32.mrb[0].mxu0
        %1567 = vmatprep.mubr.bf16.mxu0 0
        %1568 = vmatmul.mubr.bf16.gmra.mrb[0].mxu0 %v1378
        %v1569 = vpop.f32.mrb[0].mxu0
        %v1570 = vadd.f32 %v1405, %v1569
        %v1571 = vpop.f32.mrb[0].mxu0
        %v1572 = vpop.f32.mrb[0].mxu0
        %v1573 = vadd.f32 %v1405, %v1572
        %v1574 = vpop.f32.mrb[0].mxu0
        %1575 = vmatprep.mubr.bf16.mxu0 0
        %1576 = vmatmul.mubr.bf16.gmra.mrb[0].mxu0 %v1379
        %v1577 = vpop.f32.mrb[0].mxu0
        %v1578 = vadd.f32 %v1405, %v1577
        %v1579 = vpop.f32.mrb[0].mxu0
        %v1580 = vpop.f32.mrb[0].mxu0
        %v1581 = vadd.f32 %v1405, %v1580
        %v1582 = vpop.f32.mrb[0].mxu0
        %1583 = vmatprep.mubr.bf16.mxu0 0
        %1584 = vmatmul.mubr.bf16.gmra.mrb[0].mxu0 %v1380
        %v1585 = vpop.f32.mrb[0].mxu0
        %v1586 = vadd.f32 %v1405, %v1585
        %v1587 = vpop.f32.mrb[0].mxu0
        %v1588 = vpop.f32.mrb[0].mxu0
        %v1589 = vadd.f32 %v1405, %v1588
        %v1590 = vpop.f32.mrb[0].mxu0
        %1591 = vmatprep.mubr.bf16.mxu0 0
        %1592 = vmatmul.mubr.bf16.gmra.mrb[0].mxu0 %v1381
        %v1593 = vpop.f32.mrb[0].mxu0
        %v1594 = vadd.f32 %v1405, %v1593
        %v1595 = vpop.f32.mrb[0].mxu0
        %v1596 = vpop.f32.mrb[0].mxu0
        %v1597 = vadd.f32 %v1405, %v1596
        %v1598 = vpop.f32.mrb[0].mxu0
        %1599 = vmatprep.mubr.bf16.mxu0 0
        %1600 = vmatmul.mubr.bf16.gmra.mrb[0].mxu0 %v1382
        %v1601 = vpop.f32.mrb[0].mxu0
        %v1602 = vadd.f32 %v1405, %v1601
        %v1603 = vpop.f32.mrb[0].mxu0
        %v1604 = vpop.f32.mrb[0].mxu0
        %v1605 = vadd.f32 %v1405, %v1604
        %v1606 = vpop.f32.mrb[0].mxu0
        %1607 = vmatprep.mubr.bf16.mxu0 0
        %1608 = vmatmul.mubr.bf16.gmra.mrb[0].mxu0 %v1383
        %v1609 = vpop.f32.mrb[0].mxu0
        %v1610 = vadd.f32 %v1405, %v1609
        %v1611 = vpop.f32.mrb[0].mxu0
        %v1612 = vpop.f32.mrb[0].mxu0
        %v1613 = vadd.f32 %v1405, %v1612
        %v1614 = vpop.f32.mrb[0].mxu0
        %1615 = vdwg.mxu0
        %v1616 = vld [vmem:[%s6] sm:$0xf]
        %v1617 = vld [vmem:[%s6 + $0x4] sm:$0xf]
        %v1618 = vld [vmem:[%s6 + $0x8] sm:$0xf]
        %v1619 = vld [vmem:[%s6 + $0xc] sm:$0xf]
        %v1620 = vld [vmem:[%s6 + $0x10] sm:$0xf]
        %v1621 = vld [vmem:[%s6 + $0x14] sm:$0xf]
        %v1622 = vld [vmem:[%s6 + $0x18] sm:$0xf]
        %v1623 = vld [vmem:[%s6 + $0x1c] sm:$0xf]
        %v1624 = vld [vmem:[%s6 + $0x20] sm:$0xf]
        %v1625 = vld [vmem:[%s6 + $0x24] sm:$0xf]
        %v1626 = vld [vmem:[%s6 + $0x28] sm:$0xf]
        %v1627 = vld [vmem:[%s6 + $0x2c] sm:$0xf]
        %v1628 = vld [vmem:[%s6 + $0x30] sm:$0xf]
        %v1629 = vld [vmem:[%s6 + $0x34] sm:$0xf]
        %v1630 = vld [vmem:[%s6 + $0x38] sm:$0xf]
        %v1631 = vld [vmem:[%s6 + $0x3c] sm:$0xf]
        %v1648 = vunpack.c.l.b16 %v1616
        %v1649 = vunpack.c.l.b16 %v1617
        %v1650 = vunpack.c.l.b16 %v1618
        %v1651 = vunpack.c.l.b16 %v1619
        %v1652 = vunpack.c.l.b16 %v1620
        %v1653 = vunpack.c.l.b16 %v1621
        %v1654 = vunpack.c.l.b16 %v1622
        %v1655 = vunpack.c.l.b16 %v1623
        %v1656 = vunpack.c.l.b16 %v1624
        %v1657 = vunpack.c.l.b16 %v1625
        %v1658 = vunpack.c.l.b16 %v1626
        %v1659 = vunpack.c.l.b16 %v1627
        %v1660 = vunpack.c.l.b16 %v1628
        %v1661 = vunpack.c.l.b16 %v1629
        %v1662 = vunpack.c.l.b16 %v1630
        %v1663 = vunpack.c.l.b16 %v1631
        %v1664 = vpack.c.b16 %v1649, %v1648
        %v1665 = vpack.c.b16 %v1651, %v1650
        %v1666 = vpack.c.b16 %v1653, %v1652
        %v1667 = vpack.c.b16 %v1655, %v1654
        %v1668 = vpack.c.b16 %v1657, %v1656
        %v1669 = vpack.c.b16 %v1659, %v1658
        %v1670 = vpack.c.b16 %v1661, %v1660
        %v1671 = vpack.c.b16 %v1663, %v1662
        %1680 = vmatprep.subr.bf16.mxu0 0
        %1681 = vmatpush1.bf16.msra.mxu0 %v1664
        %1682 = vmatprep.subr.bf16.mxu0 0
        %1683 = vmatpush1.bf16.msra.mxu0 %v1665
        %1684 = vmatprep.subr.bf16.mxu0 0
        %1685 = vmatpush1.bf16.msra.mxu0 %v1666
        %1686 = vmatprep.subr.bf16.mxu0 0
        %1687 = vmatpush1.bf16.msra.mxu0 %v1667
        %1688 = vmatprep.subr.bf16.mxu0 0
        %1689 = vmatpush1.bf16.msra.mxu0 %v1668
        %1690 = vmatprep.subr.bf16.mxu0 0
        %1691 = vmatpush1.bf16.msra.mxu0 %v1669
        %1692 = vmatprep.subr.bf16.mxu0 0
        %1693 = vmatpush1.bf16.msra.mxu0 %v1670
        %1694 = vmatprep.subr.bf16.mxu0 0
        %1695 = vmatpush1.bf16.msra.mxu0 %v1671
        %1696 = vmatprep.subr.bf16.mxu0 0
        %1697 = vmatpush1.bf16.msra.mxu0 0
        %1698 = vmatprep.subr.bf16.mxu0 0
        %1699 = vmatpush1.bf16.msra.mxu0 0
        %1700 = vmatprep.subr.bf16.mxu0 0
        %1701 = vmatpush1.bf16.msra.mxu0 0
        %1702 = vmatprep.subr.bf16.mxu0 0
        %1703 = vmatpush1.bf16.msra.mxu0 0
        %1704 = vmatprep.subr.bf16.mxu0 0
        %1705 = vmatpush1.bf16.msra.mxu0 0
        %1706 = vmatprep.subr.bf16.mxu0 0
        %1707 = vmatpush1.bf16.msra.mxu0 0
        %1708 = vmatprep.subr.bf16.mxu0 0
        %1709 = vmatpush1.bf16.msra.mxu0 0
        %1710 = vmatprep.subr.bf16.mxu0 0
        %1711 = vmatpush1.bf16.msra.mxu0 0
        %1712 = vmatprep.mubr.bf16.mxu0 0
        %1713 = vmatmul.mubr.bf16.gmra.mrb[0].mxu0 %v1368
        %v1714 = vpop.f32.mrb[0].mxu0
        %v1715 = vadd.f32 0.0, %v1714
        %v1716 = vpop.f32.mrb[0].mxu0
        %v1717 = vpop.f32.mrb[0].mxu0
        %v1718 = vadd.f32 0.0, %v1717
        %v1719 = vpop.f32.mrb[0].mxu0
        %1720 = vmatprep.mubr.bf16.mxu0 0
        %1721 = vmatmul.mubr.bf16.gmra.mrb[0].mxu0 %v1369
        %v1722 = vpop.f32.mrb[0].mxu0
        %v1723 = vadd.f32 0.0, %v1722
        %v1724 = vpop.f32.mrb[0].mxu0
        %v1725 = vpop.f32.mrb[0].mxu0
        %v1726 = vadd.f32 0.0, %v1725
        %v1727 = vpop.f32.mrb[0].mxu0
        %1728 = vmatprep.mubr.bf16.mxu0 0
        %1729 = vmatmul.mubr.bf16.gmra.mrb[0].mxu0 %v1370
        %v1730 = vpop.f32.mrb[0].mxu0
        %v1731 = vadd.f32 0.0, %v1730
        %v1732 = vpop.f32.mrb[0].mxu0
        %v1733 = vpop.f32.mrb[0].mxu0
        %v1734 = vadd.f32 0.0, %v1733
        %v1735 = vpop.f32.mrb[0].mxu0
        %1736 = vmatprep.mubr.bf16.mxu0 0
        %1737 = vmatmul.mubr.bf16.gmra.mrb[0].mxu0 %v1371
        %v1738 = vpop.f32.mrb[0].mxu0
        %v1739 = vadd.f32 0.0, %v1738
        %v1740 = vpop.f32.mrb[0].mxu0
        %v1741 = vpop.f32.mrb[0].mxu0
        %v1742 = vadd.f32 0.0, %v1741
        %v1743 = vpop.f32.mrb[0].mxu0
        %1744 = vmatprep.mubr.bf16.mxu0 0
        %1745 = vmatmul.mubr.bf16.gmra.mrb[0].mxu0 %v1372
        %v1746 = vpop.f32.mrb[0].mxu0
        %v1747 = vadd.f32 0.0, %v1746
        %v1748 = vpop.f32.mrb[0].mxu0
        %v1749 = vpop.f32.mrb[0].mxu0
        %v1750 = vadd.f32 0.0, %v1749
        %v1751 = vpop.f32.mrb[0].mxu0
        %1752 = vmatprep.mubr.bf16.mxu0 0
        %1753 = vmatmul.mubr.bf16.gmra.mrb[0].mxu0 %v1373
        %v1754 = vpop.f32.mrb[0].mxu0
        %v1755 = vadd.f32 0.0, %v1754
        %v1756 = vpop.f32.mrb[0].mxu0
        %v1757 = vpop.f32.mrb[0].mxu0
        %v1758 = vadd.f32 0.0, %v1757
        %v1759 = vpop.f32.mrb[0].mxu0
        %1760 = vmatprep.mubr.bf16.mxu0 0
        %1761 = vmatmul.mubr.bf16.gmra.mrb[0].mxu0 %v1374
        %v1762 = vpop.f32.mrb[0].mxu0
        %v1763 = vadd.f32 0.0, %v1762
        %v1764 = vpop.f32.mrb[0].mxu0
        %v1765 = vpop.f32.mrb[0].mxu0
        %v1766 = vadd.f32 0.0, %v1765
        %v1767 = vpop.f32.mrb[0].mxu0
        %1768 = vmatprep.mubr.bf16.mxu0 0
        %1769 = vmatmul.mubr.bf16.gmra.mrb[0].mxu0 %v1375
        %v1770 = vpop.f32.mrb[0].mxu0
        %v1771 = vadd.f32 0.0, %v1770
        %v1772 = vpop.f32.mrb[0].mxu0
        %v1773 = vpop.f32.mrb[0].mxu0
        %v1774 = vadd.f32 0.0, %v1773
        %v1775 = vpop.f32.mrb[0].mxu0
        %1776 = vmatprep.mubr.bf16.mxu0 0
        %1777 = vmatmul.mubr.bf16.gmra.mrb[0].mxu0 %v1376
        %v1778 = vpop.f32.mrb[0].mxu0
        %v1779 = vadd.f32 0.0, %v1778
        %v1780 = vpop.f32.mrb[0].mxu0
        %v1781 = vpop.f32.mrb[0].mxu0
        %v1782 = vadd.f32 0.0, %v1781
        %v1783 = vpop.f32.mrb[0].mxu0
        %1784 = vmatprep.mubr.bf16.mxu0 0
        %1785 = vmatmul.mubr.bf16.gmra.mrb[0].mxu0 %v1377
        %v1786 = vpop.f32.mrb[0].mxu0
        %v1787 = vadd.f32 0.0, %v1786
        %v1788 = vpop.f32.mrb[0].mxu0
        %v1789 = vpop.f32.mrb[0].mxu0
        %v1790 = vadd.f32 0.0, %v1789
        %v1791 = vpop.f32.mrb[0].mxu0
        %1792 = vmatprep.mubr.bf16.mxu0 0
        %1793 = vmatmul.mubr.bf16.gmra.mrb[0].mxu0 %v1378
        %v1794 = vpop.f32.mrb[0].mxu0
        %v1795 = vadd.f32 0.0, %v1794
        %v1796 = vpop.f32.mrb[0].mxu0
        %v1797 = vpop.f32.mrb[0].mxu0
        %v1798 = vadd.f32 0.0, %v1797
        %v1799 = vpop.f32.mrb[0].mxu0
        %1800 = vmatprep.mubr.bf16.mxu0 0
        %1801 = vmatmul.mubr.bf16.gmra.mrb[0].mxu0 %v1379
        %v1802 = vpop.f32.mrb[0].mxu0
        %v1803 = vadd.f32 0.0, %v1802
        %v1804 = vpop.f32.mrb[0].mxu0
        %v1805 = vpop.f32.mrb[0].mxu0
        %v1806 = vadd.f32 0.0, %v1805
        %v1807 = vpop.f32.mrb[0].mxu0
        %1808 = vmatprep.mubr.bf16.mxu0 0
        %1809 = vmatmul.mubr.bf16.gmra.mrb[0].mxu0 %v1380
        %v1810 = vpop.f32.mrb[0].mxu0
        %v1811 = vadd.f32 0.0, %v1810
        %v1812 = vpop.f32.mrb[0].mxu0
        %v1813 = vpop.f32.mrb[0].mxu0
        %v1814 = vadd.f32 0.0, %v1813
        %v1815 = vpop.f32.mrb[0].mxu0
        %1816 = vmatprep.mubr.bf16.mxu0 0
        %1817 = vmatmul.mubr.bf16.gmra.mrb[0].mxu0 %v1381
        %v1818 = vpop.f32.mrb[0].mxu0
        %v1819 = vadd.f32 0.0, %v1818
        %v1820 = vpop.f32.mrb[0].mxu0
        %v1821 = vpop.f32.mrb[0].mxu0
        %v1822 = vadd.f32 0.0, %v1821
        %v1823 = vpop.f32.mrb[0].mxu0
        %1824 = vmatprep.mubr.bf16.mxu0 0
        %1825 = vmatmul.mubr.bf16.gmra.mrb[0].mxu0 %v1382
        %v1826 = vpop.f32.mrb[0].mxu0
        %v1827 = vadd.f32 0.0, %v1826
        %v1828 = vpop.f32.mrb[0].mxu0
        %v1829 = vpop.f32.mrb[0].mxu0
        %v1830 = vadd.f32 0.0, %v1829
        %v1831 = vpop.f32.mrb[0].mxu0
        %1832 = vmatprep.mubr.bf16.mxu0 0
        %1833 = vmatmul.mubr.bf16.gmra.mrb[0].mxu0 %v1383
        %v1834 = vpop.f32.mrb[0].mxu0
        %v1835 = vadd.f32 0.0, %v1834
        %v1836 = vpop.f32.mrb[0].mxu0
        %v1837 = vpop.f32.mrb[0].mxu0
        %v1838 = vadd.f32 0.0, %v1837
        %v1839 = vpop.f32.mrb[0].mxu0
        %1840 = vdwg.mxu0
        %v1841 = vld [vmem:[%s7] sm:$0xf]
        %v1842 = vld [vmem:[%s7 + $0x4] sm:$0xf]
        %v1843 = vld [vmem:[%s7 + $0x8] sm:$0xf]
        %v1844 = vld [vmem:[%s7 + $0xc] sm:$0xf]
        %v1845 = vld [vmem:[%s7 + $0x10] sm:$0xf]
        %v1846 = vld [vmem:[%s7 + $0x14] sm:$0xf]
        %v1847 = vld [vmem:[%s7 + $0x18] sm:$0xf]
        %v1848 = vld [vmem:[%s7 + $0x1c] sm:$0xf]
        %v1849 = vld [vmem:[%s7 + $0x20] sm:$0xf]
        %v1850 = vld [vmem:[%s7 + $0x24] sm:$0xf]
        %v1851 = vld [vmem:[%s7 + $0x28] sm:$0xf]
        %v1852 = vld [vmem:[%s7 + $0x2c] sm:$0xf]
        %v1853 = vld [vmem:[%s7 + $0x30] sm:$0xf]
        %v1854 = vld [vmem:[%s7 + $0x34] sm:$0xf]
        %v1855 = vld [vmem:[%s7 + $0x38] sm:$0xf]
        %v1856 = vld [vmem:[%s7 + $0x3c] sm:$0xf]
        %v1857 = vld [vmem:[%s9] sm:$0x1]
        %v1859 = vlaneseq
        %v1860 = vshrl.u32 %v1859, 7
        %v1861 = vsub.s32 0, %v1860
        %v1862 = vrot.slane %v1857, %v1861
        %v1880 = vunpack.c.l.b16 %v1841
        %v1881 = vunpack.c.l.b16 %v1842
        %v1882 = vunpack.c.l.b16 %v1843
        %v1883 = vunpack.c.l.b16 %v1844
        %v1884 = vunpack.c.l.b16 %v1845
        %v1885 = vunpack.c.l.b16 %v1846
        %v1886 = vunpack.c.l.b16 %v1847
        %v1887 = vunpack.c.l.b16 %v1848
        %v1888 = vunpack.c.l.b16 %v1849
        %v1889 = vunpack.c.l.b16 %v1850
        %v1890 = vunpack.c.l.b16 %v1851
        %v1891 = vunpack.c.l.b16 %v1852
        %v1892 = vunpack.c.l.b16 %v1853
        %v1893 = vunpack.c.l.b16 %v1854
        %v1894 = vunpack.c.l.b16 %v1855
        %v1895 = vunpack.c.l.b16 %v1856
        %v1896 = vpack.c.b16 %v1881, %v1880
        %v1897 = vpack.c.b16 %v1883, %v1882
        %v1898 = vpack.c.b16 %v1885, %v1884
        %v1899 = vpack.c.b16 %v1887, %v1886
        %v1900 = vpack.c.b16 %v1889, %v1888
        %v1901 = vpack.c.b16 %v1891, %v1890
        %v1902 = vpack.c.b16 %v1893, %v1892
        %v1903 = vpack.c.b16 %v1895, %v1894
        %1912 = vmatprep.subr.bf16.mxu0 0
        %1913 = vmatpush1.bf16.msra.mxu0 %v1896
        %1914 = vmatprep.subr.bf16.mxu0 0
        %1915 = vmatpush1.bf16.msra.mxu0 %v1897
        %1916 = vmatprep.subr.bf16.mxu0 0
        %1917 = vmatpush1.bf16.msra.mxu0 %v1898
        %1918 = vmatprep.subr.bf16.mxu0 0
        %1919 = vmatpush1.bf16.msra.mxu0 %v1899
        %1920 = vmatprep.subr.bf16.mxu0 0
        %1921 = vmatpush1.bf16.msra.mxu0 %v1900
        %1922 = vmatprep.subr.bf16.mxu0 0
        %1923 = vmatpush1.bf16.msra.mxu0 %v1901
        %1924 = vmatprep.subr.bf16.mxu0 0
        %1925 = vmatpush1.bf16.msra.mxu0 %v1902
        %1926 = vmatprep.subr.bf16.mxu0 0
        %1927 = vmatpush1.bf16.msra.mxu0 %v1903
        %1928 = vmatprep.subr.bf16.mxu0 0
        %1929 = vmatpush1.bf16.msra.mxu0 0
        %1930 = vmatprep.subr.bf16.mxu0 0
        %1931 = vmatpush1.bf16.msra.mxu0 0
        %1932 = vmatprep.subr.bf16.mxu0 0
        %1933 = vmatpush1.bf16.msra.mxu0 0
        %1934 = vmatprep.subr.bf16.mxu0 0
        %1935 = vmatpush1.bf16.msra.mxu0 0
        %1936 = vmatprep.subr.bf16.mxu0 0
        %1937 = vmatpush1.bf16.msra.mxu0 0
        %1938 = vmatprep.subr.bf16.mxu0 0
        %1939 = vmatpush1.bf16.msra.mxu0 0
        %1940 = vmatprep.subr.bf16.mxu0 0
        %1941 = vmatpush1.bf16.msra.mxu0 0
        %1942 = vmatprep.subr.bf16.mxu0 0
        %1943 = vmatpush1.bf16.msra.mxu0 0
        %1944 = vmatprep.mubr.bf16.mxu0 0
        %1945 = vmatmul.mubr.bf16.gmra.mrb[0].mxu0 %v1368
        %v1946 = vpop.f32.mrb[0].mxu0
        %v1947 = vadd.f32 %v1862, %v1946
        %v1948 = vpop.f32.mrb[0].mxu0
        %v1949 = vpop.f32.mrb[0].mxu0
        %v1950 = vadd.f32 %v1862, %v1949
        %v1951 = vpop.f32.mrb[0].mxu0
        %1952 = vmatprep.mubr.bf16.mxu0 0
        %1953 = vmatmul.mubr.bf16.gmra.mrb[0].mxu0 %v1369
        %v1954 = vpop.f32.mrb[0].mxu0
        %v1955 = vadd.f32 %v1862, %v1954
        %v1956 = vpop.f32.mrb[0].mxu0
        %v1957 = vpop.f32.mrb[0].mxu0
        %v1958 = vadd.f32 %v1862, %v1957
        %v1959 = vpop.f32.mrb[0].mxu0
        %1960 = vmatprep.mubr.bf16.mxu0 0
        %1961 = vmatmul.mubr.bf16.gmra.mrb[0].mxu0 %v1370
        %v1962 = vpop.f32.mrb[0].mxu0
        %v1963 = vadd.f32 %v1862, %v1962
        %v1964 = vpop.f32.mrb[0].mxu0
        %v1965 = vpop.f32.mrb[0].mxu0
        %v1966 = vadd.f32 %v1862, %v1965
        %v1967 = vpop.f32.mrb[0].mxu0
        %1968 = vmatprep.mubr.bf16.mxu0 0
        %1969 = vmatmul.mubr.bf16.gmra.mrb[0].mxu0 %v1371
        %v1970 = vpop.f32.mrb[0].mxu0
        %v1971 = vadd.f32 %v1862, %v1970
        %v1972 = vpop.f32.mrb[0].mxu0
        %v1973 = vpop.f32.mrb[0].mxu0
        %v1974 = vadd.f32 %v1862, %v1973
        %v1975 = vpop.f32.mrb[0].mxu0
        %1976 = vmatprep.mubr.bf16.mxu0 0
        %1977 = vmatmul.mubr.bf16.gmra.mrb[0].mxu0 %v1372
        %v1978 = vpop.f32.mrb[0].mxu0
        %v1979 = vadd.f32 %v1862, %v1978
        %v1980 = vpop.f32.mrb[0].mxu0
        %v1981 = vpop.f32.mrb[0].mxu0
        %v1982 = vadd.f32 %v1862, %v1981
        %v1983 = vpop.f32.mrb[0].mxu0
        %1984 = vmatprep.mubr.bf16.mxu0 0
        %1985 = vmatmul.mubr.bf16.gmra.mrb[0].mxu0 %v1373
        %v1986 = vpop.f32.mrb[0].mxu0
        %v1987 = vadd.f32 %v1862, %v1986
        %v1988 = vpop.f32.mrb[0].mxu0
        %v1989 = vpop.f32.mrb[0].mxu0
        %v1990 = vadd.f32 %v1862, %v1989
        %v1991 = vpop.f32.mrb[0].mxu0
        %1992 = vmatprep.mubr.bf16.mxu0 0
        %1993 = vmatmul.mubr.bf16.gmra.mrb[0].mxu0 %v1374
        %v1994 = vpop.f32.mrb[0].mxu0
        %v1995 = vadd.f32 %v1862, %v1994
        %v1996 = vpop.f32.mrb[0].mxu0
        %v1997 = vpop.f32.mrb[0].mxu0
        %v1998 = vadd.f32 %v1862, %v1997
        %v1999 = vpop.f32.mrb[0].mxu0
        %2000 = vmatprep.mubr.bf16.mxu0 0
        %2001 = vmatmul.mubr.bf16.gmra.mrb[0].mxu0 %v1375
        %v2002 = vpop.f32.mrb[0].mxu0
        %v2003 = vadd.f32 %v1862, %v2002
        %v2004 = vpop.f32.mrb[0].mxu0
        %v2005 = vpop.f32.mrb[0].mxu0
        %v2006 = vadd.f32 %v1862, %v2005
        %v2007 = vpop.f32.mrb[0].mxu0
        %2008 = vmatprep.mubr.bf16.mxu0 0
        %2009 = vmatmul.mubr.bf16.gmra.mrb[0].mxu0 %v1376
        %v2010 = vpop.f32.mrb[0].mxu0
        %v2011 = vadd.f32 %v1862, %v2010
        %v2012 = vpop.f32.mrb[0].mxu0
        %v2013 = vpop.f32.mrb[0].mxu0
        %v2014 = vadd.f32 %v1862, %v2013
        %v2015 = vpop.f32.mrb[0].mxu0
        %2016 = vmatprep.mubr.bf16.mxu0 0
        %2017 = vmatmul.mubr.bf16.gmra.mrb[0].mxu0 %v1377
        %v2018 = vpop.f32.mrb[0].mxu0
        %v2019 = vadd.f32 %v1862, %v2018
        %v2020 = vpop.f32.mrb[0].mxu0
        %v2021 = vpop.f32.mrb[0].mxu0
        %v2022 = vadd.f32 %v1862, %v2021
        %v2023 = vpop.f32.mrb[0].mxu0
        %2024 = vmatprep.mubr.bf16.mxu0 0
        %2025 = vmatmul.mubr.bf16.gmra.mrb[0].mxu0 %v1378
        %v2026 = vpop.f32.mrb[0].mxu0
        %v2027 = vadd.f32 %v1862, %v2026
        %v2028 = vpop.f32.mrb[0].mxu0
        %v2029 = vpop.f32.mrb[0].mxu0
        %v2030 = vadd.f32 %v1862, %v2029
        %v2031 = vpop.f32.mrb[0].mxu0
        %2032 = vmatprep.mubr.bf16.mxu0 0
        %2033 = vmatmul.mubr.bf16.gmra.mrb[0].mxu0 %v1379
        %v2034 = vpop.f32.mrb[0].mxu0
        %v2035 = vadd.f32 %v1862, %v2034
        %v2036 = vpop.f32.mrb[0].mxu0
        %v2037 = vpop.f32.mrb[0].mxu0
        %v2038 = vadd.f32 %v1862, %v2037
        %v2039 = vpop.f32.mrb[0].mxu0
        %2040 = vmatprep.mubr.bf16.mxu0 0
        %2041 = vmatmul.mubr.bf16.gmra.mrb[0].mxu0 %v1380
        %v2042 = vpop.f32.mrb[0].mxu0
        %v2043 = vadd.f32 %v1862, %v2042
        %v2044 = vpop.f32.mrb[0].mxu0
        %v2045 = vpop.f32.mrb[0].mxu0
        %v2046 = vadd.f32 %v1862, %v2045
        %v2047 = vpop.f32.mrb[0].mxu0
        %2048 = vmatprep.mubr.bf16.mxu0 0
        %2049 = vmatmul.mubr.bf16.gmra.mrb[0].mxu0 %v1381
        %v2050 = vpop.f32.mrb[0].mxu0
        %v2051 = vadd.f32 %v1862, %v2050
        %v2052 = vpop.f32.mrb[0].mxu0
        %v2053 = vpop.f32.mrb[0].mxu0
        %v2054 = vadd.f32 %v1862, %v2053
        %v2055 = vpop.f32.mrb[0].mxu0
        %2056 = vmatprep.mubr.bf16.mxu0 0
        %2057 = vmatmul.mubr.bf16.gmra.mrb[0].mxu0 %v1382
        %v2058 = vpop.f32.mrb[0].mxu0
        %v2059 = vadd.f32 %v1862, %v2058
        %v2060 = vpop.f32.mrb[0].mxu0
        %v2061 = vpop.f32.mrb[0].mxu0
        %v2062 = vadd.f32 %v1862, %v2061
        %v2063 = vpop.f32.mrb[0].mxu0
        %2064 = vmatprep.mubr.bf16.mxu0 0
        %2065 = vmatmul.mubr.bf16.gmra.mrb[0].mxu0 %v1383
        %v2066 = vpop.f32.mrb[0].mxu0
        %v2067 = vadd.f32 %v1862, %v2066
        %v2068 = vpop.f32.mrb[0].mxu0
        %v2069 = vpop.f32.mrb[0].mxu0
        %v2070 = vadd.f32 %v1862, %v2069
        %v2071 = vpop.f32.mrb[0].mxu0
        %2072 = vdwg.mxu0
        %v2073 = vpack.c.bf16 %v1493, %v1490
        %v2074 = vpack.c.bf16 %v1501, %v1498
        %v2075 = vpack.c.bf16 %v1509, %v1506
        %v2076 = vpack.c.bf16 %v1517, %v1514
        %v2077 = vpack.c.bf16 %v1525, %v1522
        %v2078 = vpack.c.bf16 %v1533, %v1530
        %v2079 = vpack.c.bf16 %v1541, %v1538
        %v2080 = vpack.c.bf16 %v1549, %v1546
        %v2081 = vpack.c.bf16 %v1557, %v1554
        %v2082 = vpack.c.bf16 %v1565, %v1562
        %v2083 = vpack.c.bf16 %v1573, %v1570
        %v2084 = vpack.c.bf16 %v1581, %v1578
        %v2085 = vpack.c.bf16 %v1589, %v1586
        %v2086 = vpack.c.bf16 %v1597, %v1594
        %v2087 = vpack.c.bf16 %v1605, %v1602
        %v2088 = vpack.c.bf16 %v1613, %v1610
        %2089 = vst [vmem:[#allocation2] sm:$0xff] %v2073
        %2090 = vst [vmem:[#allocation2 + $0x8] sm:$0xff] %v2074
        %2091 = vst [vmem:[#allocation2 + $0x10] sm:$0xff] %v2075
        %2092 = vst [vmem:[#allocation2 + $0x18] sm:$0xff] %v2076
        %2093 = vst [vmem:[#allocation2 + $0x20] sm:$0xff] %v2077
        %2094 = vst [vmem:[#allocation2 + $0x28] sm:$0xff] %v2078
        %2095 = vst [vmem:[#allocation2 + $0x30] sm:$0xff] %v2079
        %2096 = vst [vmem:[#allocation2 + $0x38] sm:$0xff] %v2080
        %2097 = vst [vmem:[#allocation2 + $0x40] sm:$0xff] %v2081
        %2098 = vst [vmem:[#allocation2 + $0x48] sm:$0xff] %v2082
        %2099 = vst [vmem:[#allocation2 + $0x50] sm:$0xff] %v2083
        %2100 = vst [vmem:[#allocation2 + $0x58] sm:$0xff] %v2084
        %2101 = vst [vmem:[#allocation2 + $0x60] sm:$0xff] %v2085
        %2102 = vst [vmem:[#allocation2 + $0x68] sm:$0xff] %v2086
        %2103 = vst [vmem:[#allocation2 + $0x70] sm:$0xff] %v2087
        %2104 = vst [vmem:[#allocation2 + $0x78] sm:$0xff] %v2088
        %v2105 = vpack.c.bf16 %v1718, %v1715
        %v2106 = vpack.c.bf16 %v1726, %v1723
        %v2107 = vpack.c.bf16 %v1734, %v1731
        %v2108 = vpack.c.bf16 %v1742, %v1739
        %v2109 = vpack.c.bf16 %v1750, %v1747
        %v2110 = vpack.c.bf16 %v1758, %v1755
        %v2111 = vpack.c.bf16 %v1766, %v1763
        %v2112 = vpack.c.bf16 %v1774, %v1771
        %v2113 = vpack.c.bf16 %v1782, %v1779
        %v2114 = vpack.c.bf16 %v1790, %v1787
        %v2115 = vpack.c.bf16 %v1798, %v1795
        %v2116 = vpack.c.bf16 %v1806, %v1803
        %v2117 = vpack.c.bf16 %v1814, %v1811
        %v2118 = vpack.c.bf16 %v1822, %v1819
        %v2119 = vpack.c.bf16 %v1830, %v1827
        %v2120 = vpack.c.bf16 %v1838, %v1835
        %2121 = vst [vmem:[#allocation3] sm:$0xff] %v2105
        %2122 = vst [vmem:[#allocation3 + $0x8] sm:$0xff] %v2106
        %2123 = vst [vmem:[#allocation3 + $0x10] sm:$0xff] %v2107
        %2124 = vst [vmem:[#allocation3 + $0x18] sm:$0xff] %v2108
        %2125 = vst [vmem:[#allocation3 + $0x20] sm:$0xff] %v2109
        %2126 = vst [vmem:[#allocation3 + $0x28] sm:$0xff] %v2110
        %2127 = vst [vmem:[#allocation3 + $0x30] sm:$0xff] %v2111
        %2128 = vst [vmem:[#allocation3 + $0x38] sm:$0xff] %v2112
        %2129 = vst [vmem:[#allocation3 + $0x40] sm:$0xff] %v2113
        %2130 = vst [vmem:[#allocation3 + $0x48] sm:$0xff] %v2114
        %2131 = vst [vmem:[#allocation3 + $0x50] sm:$0xff] %v2115
        %2132 = vst [vmem:[#allocation3 + $0x58] sm:$0xff] %v2116
        %2133 = vst [vmem:[#allocation3 + $0x60] sm:$0xff] %v2117
        %2134 = vst [vmem:[#allocation3 + $0x68] sm:$0xff] %v2118
        %2135 = vst [vmem:[#allocation3 + $0x70] sm:$0xff] %v2119
        %2136 = vst [vmem:[#allocation3 + $0x78] sm:$0xff] %v2120
        %v2137 = vpack.c.bf16 %v1950, %v1947
        %v2138 = vpack.c.bf16 %v1958, %v1955
        %v2139 = vpack.c.bf16 %v1966, %v1963
        %v2140 = vpack.c.bf16 %v1974, %v1971
        %v2141 = vpack.c.bf16 %v1982, %v1979
        %v2142 = vpack.c.bf16 %v1990, %v1987
        %v2143 = vpack.c.bf16 %v1998, %v1995
        %v2144 = vpack.c.bf16 %v2006, %v2003
        %v2145 = vpack.c.bf16 %v2014, %v2011
        %v2146 = vpack.c.bf16 %v2022, %v2019
        %v2147 = vpack.c.bf16 %v2030, %v2027
        %v2148 = vpack.c.bf16 %v2038, %v2035
        %v2149 = vpack.c.bf16 %v2046, %v2043
        %v2150 = vpack.c.bf16 %v2054, %v2051
        %v2151 = vpack.c.bf16 %v2062, %v2059
        %v2152 = vpack.c.bf16 %v2070, %v2067
        %2153 = vst [vmem:[#allocation4] sm:$0xff] %v2137
        %2154 = vst [vmem:[#allocation4 + $0x8] sm:$0xff] %v2138
        %2155 = vst [vmem:[#allocation4 + $0x10] sm:$0xff] %v2139
        %2156 = vst [vmem:[#allocation4 + $0x18] sm:$0xff] %v2140
        %2157 = vst [vmem:[#allocation4 + $0x20] sm:$0xff] %v2141
        %2158 = vst [vmem:[#allocation4 + $0x28] sm:$0xff] %v2142
        %2159 = vst [vmem:[#allocation4 + $0x30] sm:$0xff] %v2143
        %2160 = vst [vmem:[#allocation4 + $0x38] sm:$0xff] %v2144
        %2161 = vst [vmem:[#allocation4 + $0x40] sm:$0xff] %v2145
        %2162 = vst [vmem:[#allocation4 + $0x48] sm:$0xff] %v2146
        %2163 = vst [vmem:[#allocation4 + $0x50] sm:$0xff] %v2147
        %2164 = vst [vmem:[#allocation4 + $0x58] sm:$0xff] %v2148
        %2165 = vst [vmem:[#allocation4 + $0x60] sm:$0xff] %v2149
        %2166 = vst [vmem:[#allocation4 + $0x68] sm:$0xff] %v2150
        %2167 = vst [vmem:[#allocation4 + $0x70] sm:$0xff] %v2151
        %2168 = vst [vmem:[#allocation4 + $0x78] sm:$0xff] %v2152
        %v2169 = vld [vmem:[#allocation2] sm:$0xff]
        %v2170 = vld [vmem:[#allocation2 + $0x8] sm:$0xff]
        %v2171 = vld [vmem:[#allocation2 + $0x10] sm:$0xff]
        %v2172 = vld [vmem:[#allocation2 + $0x18] sm:$0xff]
        %v2173 = vld [vmem:[#allocation2 + $0x20] sm:$0xff]
        %v2174 = vld [vmem:[#allocation2 + $0x28] sm:$0xff]
        %v2175 = vld [vmem:[#allocation2 + $0x30] sm:$0xff]
        %v2176 = vld [vmem:[#allocation2 + $0x38] sm:$0xff]
        %v2177 = vld [vmem:[#allocation2 + $0x40] sm:$0xff]
        %v2178 = vld [vmem:[#allocation2 + $0x48] sm:$0xff]
        %v2179 = vld [vmem:[#allocation2 + $0x50] sm:$0xff]
        %v2180 = vld [vmem:[#allocation2 + $0x58] sm:$0xff]
        %v2181 = vld [vmem:[#allocation2 + $0x60] sm:$0xff]
        %v2182 = vld [vmem:[#allocation2 + $0x68] sm:$0xff]
        %v2183 = vld [vmem:[#allocation2 + $0x70] sm:$0xff]
        %v2184 = vld [vmem:[#allocation2 + $0x78] sm:$0xff]
        %v2185 = vld [vmem:[#allocation3] sm:$0xff]
        %v2186 = vld [vmem:[#allocation3 + $0x8] sm:$0xff]
        %v2187 = vld [vmem:[#allocation3 + $0x10] sm:$0xff]
        %v2188 = vld [vmem:[#allocation3 + $0x18] sm:$0xff]
        %v2189 = vld [vmem:[#allocation3 + $0x20] sm:$0xff]
        %v2190 = vld [vmem:[#allocation3 + $0x28] sm:$0xff]
        %v2191 = vld [vmem:[#allocation3 + $0x30] sm:$0xff]
        %v2192 = vld [vmem:[#allocation3 + $0x38] sm:$0xff]
        %v2193 = vld [vmem:[#allocation3 + $0x40] sm:$0xff]
        %v2194 = vld [vmem:[#allocation3 + $0x48] sm:$0xff]
        %v2195 = vld [vmem:[#allocation3 + $0x50] sm:$0xff]
        %v2196 = vld [vmem:[#allocation3 + $0x58] sm:$0xff]
        %v2197 = vld [vmem:[#allocation3 + $0x60] sm:$0xff]
        %v2198 = vld [vmem:[#allocation3 + $0x68] sm:$0xff]
        %v2199 = vld [vmem:[#allocation3 + $0x70] sm:$0xff]
        %v2200 = vld [vmem:[#allocation3 + $0x78] sm:$0xff]
        %v2201 = vld [vmem:[#allocation4] sm:$0xff]
        %v2202 = vld [vmem:[#allocation4 + $0x8] sm:$0xff]
        %v2203 = vld [vmem:[#allocation4 + $0x10] sm:$0xff]
        %v2204 = vld [vmem:[#allocation4 + $0x18] sm:$0xff]
        %v2205 = vld [vmem:[#allocation4 + $0x20] sm:$0xff]
        %v2206 = vld [vmem:[#allocation4 + $0x28] sm:$0xff]
        %v2207 = vld [vmem:[#allocation4 + $0x30] sm:$0xff]
        %v2208 = vld [vmem:[#allocation4 + $0x38] sm:$0xff]
        %v2209 = vld [vmem:[#allocation4 + $0x40] sm:$0xff]
        %v2210 = vld [vmem:[#allocation4 + $0x48] sm:$0xff]
        %v2211 = vld [vmem:[#allocation4 + $0x50] sm:$0xff]
        %v2212 = vld [vmem:[#allocation4 + $0x58] sm:$0xff]
        %v2213 = vld [vmem:[#allocation4 + $0x60] sm:$0xff]
        %v2214 = vld [vmem:[#allocation4 + $0x68] sm:$0xff]
        %v2215 = vld [vmem:[#allocation4 + $0x70] sm:$0xff]
        %v2216 = vld [vmem:[#allocation4 + $0x78] sm:$0xff]
        %vm2217 = vcmask 261120
        %v2219 = vsel %vm2217, %v2169, 0
        %v2222 = vsel %vm2217, %v2170, 0
        %v2225 = vsel %vm2217, %v2171, 0
        %v2228 = vsel %vm2217, %v2172, 0
        %v2231 = vsel %vm2217, %v2173, 0
        %v2234 = vsel %vm2217, %v2174, 0
        %v2237 = vsel %vm2217, %v2175, 0
        %v2240 = vsel %vm2217, %v2176, 0
        %v2243 = vsel %vm2217, %v2177, 0
        %v2246 = vsel %vm2217, %v2178, 0
        %v2249 = vsel %vm2217, %v2179, 0
        %v2252 = vsel %vm2217, %v2180, 0
        %v2255 = vsel %vm2217, %v2181, 0
        %v2258 = vsel %vm2217, %v2182, 0
        %v2261 = vsel %vm2217, %v2183, 0
        %v2264 = vsel %vm2217, %v2184, 0
        %v2267 = vsel %vm2217, %v2185, 0
        %v2270 = vsel %vm2217, %v2186, 0
        %v2273 = vsel %vm2217, %v2187, 0
        %v2276 = vsel %vm2217, %v2188, 0
        %v2279 = vsel %vm2217, %v2189, 0
        %v2282 = vsel %vm2217, %v2190, 0
        %v2285 = vsel %vm2217, %v2191, 0
        %v2288 = vsel %vm2217, %v2192, 0
        %v2291 = vsel %vm2217, %v2193, 0
        %v2294 = vsel %vm2217, %v2194, 0
        %v2297 = vsel %vm2217, %v2195, 0
        %v2300 = vsel %vm2217, %v2196, 0
        %v2303 = vsel %vm2217, %v2197, 0
        %v2306 = vsel %vm2217, %v2198, 0
        %v2309 = vsel %vm2217, %v2199, 0
        %v2312 = vsel %vm2217, %v2200, 0
        %2314 = vmatprep.subr.bf16.mxu0 0
        %2315 = vmatpush1.bf16.xpose.msra.mxu0 %v2267
        %2316 = vmatprep.subr.bf16.mxu0 0
        %2317 = vmatpush1.bf16.xpose.msra.mxu0 %v2270
        %2318 = vmatprep.subr.bf16.mxu0 0
        %2319 = vmatpush1.bf16.xpose.msra.mxu0 %v2273
        %2320 = vmatprep.subr.bf16.mxu0 0
        %2321 = vmatpush1.bf16.xpose.msra.mxu0 %v2276
        %2322 = vmatprep.subr.bf16.mxu0 0
        %2323 = vmatpush1.bf16.xpose.msra.mxu0 %v2279
        %2324 = vmatprep.subr.bf16.mxu0 0
        %2325 = vmatpush1.bf16.xpose.msra.mxu0 %v2282
        %2326 = vmatprep.subr.bf16.mxu0 0
        %2327 = vmatpush1.bf16.xpose.msra.mxu0 %v2285
        %2328 = vmatprep.subr.bf16.mxu0 0
        %2329 = vmatpush1.bf16.xpose.msra.mxu0 %v2288
        %2330 = vmatprep.subr.bf16.mxu0 0
        %2331 = vmatpush1.bf16.xpose.msra.mxu0 %v2291
        %2332 = vmatprep.subr.bf16.mxu0 0
        %2333 = vmatpush1.bf16.xpose.msra.mxu0 %v2294
        %2334 = vmatprep.subr.bf16.mxu0 0
        %2335 = vmatpush1.bf16.xpose.msra.mxu0 %v2297
        %2336 = vmatprep.subr.bf16.mxu0 0
        %2337 = vmatpush1.bf16.xpose.msra.mxu0 %v2300
        %2338 = vmatprep.subr.bf16.mxu0 0
        %2339 = vmatpush1.bf16.xpose.msra.mxu0 %v2303
        %2340 = vmatprep.subr.bf16.mxu0 0
        %2341 = vmatpush1.bf16.xpose.msra.mxu0 %v2306
        %2342 = vmatprep.subr.bf16.mxu0 0
        %2343 = vmatpush1.bf16.xpose.msra.mxu0 %v2309
        %2344 = vmatprep.subr.bf16.mxu0 0
        %2345 = vmatpush1.bf16.xpose.msra.mxu0 %v2312
        %2346 = vmatprep.mubr.bf16.mxu0 0
        %2347 = vmatmul.mubr.bf16.gmra.mrb[0].mxu0 %v2219
        %v2348 = vpop.f32.mrb[0].mxu0
        %v2349 = vadd.f32 0.0, %v2348
        %v2350 = vpop.f32.mrb[0].mxu0
        %v2351 = vadd.f32 0.0, %v2350
        %v2352 = vpop.f32.mrb[0].mxu0
        %v2353 = vadd.f32 0.0, %v2352
        %v2354 = vpop.f32.mrb[0].mxu0
        %v2355 = vadd.f32 0.0, %v2354
        %2356 = vmatprep.mubr.bf16.mxu0 0
        %2357 = vmatmul.mubr.bf16.gmra.mrb[0].mxu0 %v2222
        %v2358 = vpop.f32.mrb[0].mxu0
        %v2359 = vadd.f32 0.0, %v2358
        %v2360 = vpop.f32.mrb[0].mxu0
        %v2361 = vadd.f32 0.0, %v2360
        %v2362 = vpop.f32.mrb[0].mxu0
        %v2363 = vadd.f32 0.0, %v2362
        %v2364 = vpop.f32.mrb[0].mxu0
        %v2365 = vadd.f32 0.0, %v2364
        %2366 = vmatprep.mubr.bf16.mxu0 0
        %2367 = vmatmul.mubr.bf16.gmra.mrb[0].mxu0 %v2225
        %v2368 = vpop.f32.mrb[0].mxu0
        %v2369 = vadd.f32 0.0, %v2368
        %v2370 = vpop.f32.mrb[0].mxu0
        %v2371 = vadd.f32 0.0, %v2370
        %v2372 = vpop.f32.mrb[0].mxu0
        %v2373 = vadd.f32 0.0, %v2372
        %v2374 = vpop.f32.mrb[0].mxu0
        %v2375 = vadd.f32 0.0, %v2374
        %2376 = vmatprep.mubr.bf16.mxu0 0
        %2377 = vmatmul.mubr.bf16.gmra.mrb[0].mxu0 %v2228
        %v2378 = vpop.f32.mrb[0].mxu0
        %v2379 = vadd.f32 0.0, %v2378
        %v2380 = vpop.f32.mrb[0].mxu0
        %v2381 = vadd.f32 0.0, %v2380
        %v2382 = vpop.f32.mrb[0].mxu0
        %v2383 = vadd.f32 0.0, %v2382
        %v2384 = vpop.f32.mrb[0].mxu0
        %v2385 = vadd.f32 0.0, %v2384
        %2386 = vmatprep.mubr.bf16.mxu0 0
        %2387 = vmatmul.mubr.bf16.gmra.mrb[0].mxu0 %v2231
        %v2388 = vpop.f32.mrb[0].mxu0
        %v2389 = vadd.f32 0.0, %v2388
        %v2390 = vpop.f32.mrb[0].mxu0
        %v2391 = vadd.f32 0.0, %v2390
        %v2392 = vpop.f32.mrb[0].mxu0
        %v2393 = vadd.f32 0.0, %v2392
        %v2394 = vpop.f32.mrb[0].mxu0
        %v2395 = vadd.f32 0.0, %v2394
        %2396 = vmatprep.mubr.bf16.mxu0 0
        %2397 = vmatmul.mubr.bf16.gmra.mrb[0].mxu0 %v2234
        %v2398 = vpop.f32.mrb[0].mxu0
        %v2399 = vadd.f32 0.0, %v2398
        %v2400 = vpop.f32.mrb[0].mxu0
        %v2401 = vadd.f32 0.0, %v2400
        %v2402 = vpop.f32.mrb[0].mxu0
        %v2403 = vadd.f32 0.0, %v2402
        %v2404 = vpop.f32.mrb[0].mxu0
        %v2405 = vadd.f32 0.0, %v2404
        %2406 = vmatprep.mubr.bf16.mxu0 0
        %2407 = vmatmul.mubr.bf16.gmra.mrb[0].mxu0 %v2237
        %v2408 = vpop.f32.mrb[0].mxu0
        %v2409 = vadd.f32 0.0, %v2408
        %v2410 = vpop.f32.mrb[0].mxu0
        %v2411 = vadd.f32 0.0, %v2410
        %v2412 = vpop.f32.mrb[0].mxu0
        %v2413 = vadd.f32 0.0, %v2412
        %v2414 = vpop.f32.mrb[0].mxu0
        %v2415 = vadd.f32 0.0, %v2414
        %2416 = vmatprep.mubr.bf16.mxu0 0
        %2417 = vmatmul.mubr.bf16.gmra.mrb[0].mxu0 %v2240
        %v2418 = vpop.f32.mrb[0].mxu0
        %v2419 = vadd.f32 0.0, %v2418
        %v2420 = vpop.f32.mrb[0].mxu0
        %v2421 = vadd.f32 0.0, %v2420
        %v2422 = vpop.f32.mrb[0].mxu0
        %v2423 = vadd.f32 0.0, %v2422
        %v2424 = vpop.f32.mrb[0].mxu0
        %v2425 = vadd.f32 0.0, %v2424
        %2426 = vmatprep.mubr.bf16.mxu0 0
        %2427 = vmatmul.mubr.bf16.gmra.mrb[0].mxu0 %v2243
        %v2428 = vpop.f32.mrb[0].mxu0
        %v2429 = vadd.f32 0.0, %v2428
        %v2430 = vpop.f32.mrb[0].mxu0
        %v2431 = vadd.f32 0.0, %v2430
        %v2432 = vpop.f32.mrb[0].mxu0
        %v2433 = vadd.f32 0.0, %v2432
        %v2434 = vpop.f32.mrb[0].mxu0
        %v2435 = vadd.f32 0.0, %v2434
        %2436 = vmatprep.mubr.bf16.mxu0 0
        %2437 = vmatmul.mubr.bf16.gmra.mrb[0].mxu0 %v2246
        %v2438 = vpop.f32.mrb[0].mxu0
        %v2439 = vadd.f32 0.0, %v2438
        %v2440 = vpop.f32.mrb[0].mxu0
        %v2441 = vadd.f32 0.0, %v2440
        %v2442 = vpop.f32.mrb[0].mxu0
        %v2443 = vadd.f32 0.0, %v2442
        %v2444 = vpop.f32.mrb[0].mxu0
        %v2445 = vadd.f32 0.0, %v2444
        %2446 = vmatprep.mubr.bf16.mxu0 0
        %2447 = vmatmul.mubr.bf16.gmra.mrb[0].mxu0 %v2249
        %v2448 = vpop.f32.mrb[0].mxu0
        %v2449 = vadd.f32 0.0, %v2448
        %v2450 = vpop.f32.mrb[0].mxu0
        %v2451 = vadd.f32 0.0, %v2450
        %v2452 = vpop.f32.mrb[0].mxu0
        %v2453 = vadd.f32 0.0, %v2452
        %v2454 = vpop.f32.mrb[0].mxu0
        %v2455 = vadd.f32 0.0, %v2454
        %2456 = vmatprep.mubr.bf16.mxu0 0
        %2457 = vmatmul.mubr.bf16.gmra.mrb[0].mxu0 %v2252
        %v2458 = vpop.f32.mrb[0].mxu0
        %v2459 = vadd.f32 0.0, %v2458
        %v2460 = vpop.f32.mrb[0].mxu0
        %v2461 = vadd.f32 0.0, %v2460
        %v2462 = vpop.f32.mrb[0].mxu0
        %v2463 = vadd.f32 0.0, %v2462
        %v2464 = vpop.f32.mrb[0].mxu0
        %v2465 = vadd.f32 0.0, %v2464
        %2466 = vmatprep.mubr.bf16.mxu0 0
        %2467 = vmatmul.mubr.bf16.gmra.mrb[0].mxu0 %v2255
        %v2468 = vpop.f32.mrb[0].mxu0
        %v2469 = vadd.f32 0.0, %v2468
        %v2470 = vpop.f32.mrb[0].mxu0
        %v2471 = vadd.f32 0.0, %v2470
        %v2472 = vpop.f32.mrb[0].mxu0
        %v2473 = vadd.f32 0.0, %v2472
        %v2474 = vpop.f32.mrb[0].mxu0
        %v2475 = vadd.f32 0.0, %v2474
        %2476 = vmatprep.mubr.bf16.mxu0 0
        %2477 = vmatmul.mubr.bf16.gmra.mrb[0].mxu0 %v2258
        %v2478 = vpop.f32.mrb[0].mxu0
        %v2479 = vadd.f32 0.0, %v2478
        %v2480 = vpop.f32.mrb[0].mxu0
        %v2481 = vadd.f32 0.0, %v2480
        %v2482 = vpop.f32.mrb[0].mxu0
        %v2483 = vadd.f32 0.0, %v2482
        %v2484 = vpop.f32.mrb[0].mxu0
        %v2485 = vadd.f32 0.0, %v2484
        %2486 = vmatprep.mubr.bf16.mxu0 0
        %2487 = vmatmul.mubr.bf16.gmra.mrb[0].mxu0 %v2261
        %v2488 = vpop.f32.mrb[0].mxu0
        %v2489 = vadd.f32 0.0, %v2488
        %v2490 = vpop.f32.mrb[0].mxu0
        %v2491 = vadd.f32 0.0, %v2490
        %v2492 = vpop.f32.mrb[0].mxu0
        %v2493 = vadd.f32 0.0, %v2492
        %v2494 = vpop.f32.mrb[0].mxu0
        %v2495 = vadd.f32 0.0, %v2494
        %2496 = vmatprep.mubr.bf16.mxu0 0
        %2497 = vmatmul.mubr.bf16.gmra.mrb[0].mxu0 %v2264
        %v2498 = vpop.f32.mrb[0].mxu0
        %v2499 = vadd.f32 0.0, %v2498
        %v2500 = vpop.f32.mrb[0].mxu0
        %v2501 = vadd.f32 0.0, %v2500
        %v2502 = vpop.f32.mrb[0].mxu0
        %v2503 = vadd.f32 0.0, %v2502
        %v2504 = vpop.f32.mrb[0].mxu0
        %v2505 = vadd.f32 0.0, %v2504
        %2506 = vdwg.mxu0
        %v2507 = vmax.f32 %v2349, %v2351
        %2508 = vmax.xlane.f32.xlu0 %v2507
        %v2509 = vpop.xlane.xlu0 %2508
        %v2510 = vmax.f32 %v2353, %v2355
        %2511 = vmax.xlane.f32.xlu0 %v2510
        %v2512 = vpop.xlane.xlu0 %2511
        %v2513 = vmax.f32 %v2359, %v2361
        %2514 = vmax.xlane.f32.xlu0 %v2513
        %v2515 = vpop.xlane.xlu0 %2514
        %v2516 = vmax.f32 %v2363, %v2365
        %2517 = vmax.xlane.f32.xlu0 %v2516
        %v2518 = vpop.xlane.xlu0 %2517
        %v2519 = vmax.f32 %v2369, %v2371
        %2520 = vmax.xlane.f32.xlu0 %v2519
        %v2521 = vpop.xlane.xlu0 %2520
        %v2522 = vmax.f32 %v2373, %v2375
        %2523 = vmax.xlane.f32.xlu0 %v2522
        %v2524 = vpop.xlane.xlu0 %2523
        %v2525 = vmax.f32 %v2379, %v2381
        %2526 = vmax.xlane.f32.xlu0 %v2525
        %v2527 = vpop.xlane.xlu0 %2526
        %v2528 = vmax.f32 %v2383, %v2385
        %2529 = vmax.xlane.f32.xlu0 %v2528
        %v2530 = vpop.xlane.xlu0 %2529
        %v2531 = vmax.f32 %v2389, %v2391
        %2532 = vmax.xlane.f32.xlu0 %v2531
        %v2533 = vpop.xlane.xlu0 %2532
        %v2534 = vmax.f32 %v2393, %v2395
        %2535 = vmax.xlane.f32.xlu0 %v2534
        %v2536 = vpop.xlane.xlu0 %2535
        %v2537 = vmax.f32 %v2399, %v2401
        %2538 = vmax.xlane.f32.xlu0 %v2537
        %v2539 = vpop.xlane.xlu0 %2538
        %v2540 = vmax.f32 %v2403, %v2405
        %2541 = vmax.xlane.f32.xlu0 %v2540
        %v2542 = vpop.xlane.xlu0 %2541
        %v2543 = vmax.f32 %v2409, %v2411
        %2544 = vmax.xlane.f32.xlu0 %v2543
        %v2545 = vpop.xlane.xlu0 %2544
        %v2546 = vmax.f32 %v2413, %v2415
        %2547 = vmax.xlane.f32.xlu0 %v2546
        %v2548 = vpop.xlane.xlu0 %2547
        %v2549 = vmax.f32 %v2419, %v2421
        %2550 = vmax.xlane.f32.xlu0 %v2549
        %v2551 = vpop.xlane.xlu0 %2550
        %v2552 = vmax.f32 %v2423, %v2425
        %2553 = vmax.xlane.f32.xlu0 %v2552
        %v2554 = vpop.xlane.xlu0 %2553
        %v2555 = vmax.f32 %v2429, %v2431
        %2556 = vmax.xlane.f32.xlu0 %v2555
        %v2557 = vpop.xlane.xlu0 %2556
        %v2558 = vmax.f32 %v2433, %v2435
        %2559 = vmax.xlane.f32.xlu0 %v2558
        %v2560 = vpop.xlane.xlu0 %2559
        %v2561 = vmax.f32 %v2439, %v2441
        %2562 = vmax.xlane.f32.xlu0 %v2561
        %v2563 = vpop.xlane.xlu0 %2562
        %v2564 = vmax.f32 %v2443, %v2445
        %2565 = vmax.xlane.f32.xlu0 %v2564
        %v2566 = vpop.xlane.xlu0 %2565
        %v2567 = vmax.f32 %v2449, %v2451
        %2568 = vmax.xlane.f32.xlu0 %v2567
        %v2569 = vpop.xlane.xlu0 %2568
        %v2570 = vmax.f32 %v2453, %v2455
        %2571 = vmax.xlane.f32.xlu0 %v2570
        %v2572 = vpop.xlane.xlu0 %2571
        %v2573 = vmax.f32 %v2459, %v2461
        %2574 = vmax.xlane.f32.xlu0 %v2573
        %v2575 = vpop.xlane.xlu0 %2574
        %v2576 = vmax.f32 %v2463, %v2465
        %2577 = vmax.xlane.f32.xlu0 %v2576
        %v2578 = vpop.xlane.xlu0 %2577
        %v2579 = vmax.f32 %v2469, %v2471
        %2580 = vmax.xlane.f32.xlu0 %v2579
        %v2581 = vpop.xlane.xlu0 %2580
        %v2582 = vmax.f32 %v2473, %v2475
        %2583 = vmax.xlane.f32.xlu0 %v2582
        %v2584 = vpop.xlane.xlu0 %2583
        %v2585 = vmax.f32 %v2479, %v2481
        %2586 = vmax.xlane.f32.xlu0 %v2585
        %v2587 = vpop.xlane.xlu0 %2586
        %v2588 = vmax.f32 %v2483, %v2485
        %2589 = vmax.xlane.f32.xlu0 %v2588
        %v2590 = vpop.xlane.xlu0 %2589
        %v2591 = vmax.f32 %v2489, %v2491
        %2592 = vmax.xlane.f32.xlu0 %v2591
        %v2593 = vpop.xlane.xlu0 %2592
        %v2594 = vmax.f32 %v2493, %v2495
        %2595 = vmax.xlane.f32.xlu0 %v2594
        %v2596 = vpop.xlane.xlu0 %2595
        %v2597 = vmax.f32 %v2499, %v2501
        %2598 = vmax.xlane.f32.xlu0 %v2597
        %v2599 = vpop.xlane.xlu0 %2598
        %v2600 = vmax.f32 %v2503, %v2505
        %2601 = vmax.xlane.f32.xlu0 %v2600
        %v2602 = vpop.xlane.xlu0 %2601
        %v2603 = vsub.f32 %v2349, %v2509
        %v2604 = vsub.f32 %v2351, %v2509
        %v2605 = vsub.f32 %v2353, %v2512
        %v2606 = vsub.f32 %v2355, %v2512
        %v2607 = vsub.f32 %v2359, %v2515
        %v2608 = vsub.f32 %v2361, %v2515
        %v2609 = vsub.f32 %v2363, %v2518
        %v2610 = vsub.f32 %v2365, %v2518
        %v2611 = vsub.f32 %v2369, %v2521
        %v2612 = vsub.f32 %v2371, %v2521
        %v2613 = vsub.f32 %v2373, %v2524
        %v2614 = vsub.f32 %v2375, %v2524
        %v2615 = vsub.f32 %v2379, %v2527
        %v2616 = vsub.f32 %v2381, %v2527
        %v2617 = vsub.f32 %v2383, %v2530
        %v2618 = vsub.f32 %v2385, %v2530
        %v2619 = vsub.f32 %v2389, %v2533
        %v2620 = vsub.f32 %v2391, %v2533
        %v2621 = vsub.f32 %v2393, %v2536
        %v2622 = vsub.f32 %v2395, %v2536
        %v2623 = vsub.f32 %v2399, %v2539
        %v2624 = vsub.f32 %v2401, %v2539
        %v2625 = vsub.f32 %v2403, %v2542
        %v2626 = vsub.f32 %v2405, %v2542
        %v2627 = vsub.f32 %v2409, %v2545
        %v2628 = vsub.f32 %v2411, %v2545
        %v2629 = vsub.f32 %v2413, %v2548
        %v2630 = vsub.f32 %v2415, %v2548
        %v2631 = vsub.f32 %v2419, %v2551
        %v2632 = vsub.f32 %v2421, %v2551
        %v2633 = vsub.f32 %v2423, %v2554
        %v2634 = vsub.f32 %v2425, %v2554
        %v2635 = vsub.f32 %v2429, %v2557
        %v2636 = vsub.f32 %v2431, %v2557
        %v2637 = vsub.f32 %v2433, %v2560
        %v2638 = vsub.f32 %v2435, %v2560
        %v2639 = vsub.f32 %v2439, %v2563
        %v2640 = vsub.f32 %v2441, %v2563
        %v2641 = vsub.f32 %v2443, %v2566
        %v2642 = vsub.f32 %v2445, %v2566
        %v2643 = vsub.f32 %v2449, %v2569
        %v2644 = vsub.f32 %v2451, %v2569
        %v2645 = vsub.f32 %v2453, %v2572
        %v2646 = vsub.f32 %v2455, %v2572
        %v2647 = vsub.f32 %v2459, %v2575
        %v2648 = vsub.f32 %v2461, %v2575
        %v2649 = vsub.f32 %v2463, %v2578
        %v2650 = vsub.f32 %v2465, %v2578
        %v2651 = vsub.f32 %v2469, %v2581
        %v2652 = vsub.f32 %v2471, %v2581
        %v2653 = vsub.f32 %v2473, %v2584
        %v2654 = vsub.f32 %v2475, %v2584
        %v2655 = vsub.f32 %v2479, %v2587
        %v2656 = vsub.f32 %v2481, %v2587
        %v2657 = vsub.f32 %v2483, %v2590
        %v2658 = vsub.f32 %v2485, %v2590
        %v2659 = vsub.f32 %v2489, %v2593
        %v2660 = vsub.f32 %v2491, %v2593
        %v2661 = vsub.f32 %v2493, %v2596
        %v2662 = vsub.f32 %v2495, %v2596
        %v2663 = vsub.f32 %v2499, %v2599
        %v2664 = vsub.f32 %v2501, %v2599
        %v2665 = vsub.f32 %v2503, %v2602
        %v2666 = vsub.f32 %v2505, %v2602
        %v2667 = vmul.f32 %v2603, 1.442695
        %v2668 = vpow.pop %v2667
        %v2669 = vmul.f32 %v2604, 1.442695
        %v2670 = vpow.pop %v2669
        %v2671 = vmul.f32 %v2605, 1.442695
        %v2672 = vpow.pop %v2671
        %v2673 = vmul.f32 %v2606, 1.442695
        %v2674 = vpow.pop %v2673
        %v2675 = vmul.f32 %v2607, 1.442695
        %v2676 = vpow.pop %v2675
        %v2677 = vmul.f32 %v2608, 1.442695
        %v2678 = vpow.pop %v2677
        %v2679 = vmul.f32 %v2609, 1.442695
        %v2680 = vpow.pop %v2679
        %v2681 = vmul.f32 %v2610, 1.442695
        %v2682 = vpow.pop %v2681
        %v2683 = vmul.f32 %v2611, 1.442695
        %v2684 = vpow.pop %v2683
        %v2685 = vmul.f32 %v2612, 1.442695
        %v2686 = vpow.pop %v2685
        %v2687 = vmul.f32 %v2613, 1.442695
        %v2688 = vpow.pop %v2687
        %v2689 = vmul.f32 %v2614, 1.442695
        %v2690 = vpow.pop %v2689
        %v2691 = vmul.f32 %v2615, 1.442695
        %v2692 = vpow.pop %v2691
        %v2693 = vmul.f32 %v2616, 1.442695
        %v2694 = vpow.pop %v2693
        %v2695 = vmul.f32 %v2617, 1.442695
        %v2696 = vpow.pop %v2695
        %v2697 = vmul.f32 %v2618, 1.442695
        %v2698 = vpow.pop %v2697
        %v2699 = vmul.f32 %v2619, 1.442695
        %v2700 = vpow.pop %v2699
        %v2701 = vmul.f32 %v2620, 1.442695
        %v2702 = vpow.pop %v2701
        %v2703 = vmul.f32 %v2621, 1.442695
        %v2704 = vpow.pop %v2703
        %v2705 = vmul.f32 %v2622, 1.442695
        %v2706 = vpow.pop %v2705
        %v2707 = vmul.f32 %v2623, 1.442695
        %v2708 = vpow.pop %v2707
        %v2709 = vmul.f32 %v2624, 1.442695
        %v2710 = vpow.pop %v2709
        %v2711 = vmul.f32 %v2625, 1.442695
        %v2712 = vpow.pop %v2711
        %v2713 = vmul.f32 %v2626, 1.442695
        %v2714 = vpow.pop %v2713
        %v2715 = vmul.f32 %v2627, 1.442695
        %v2716 = vpow.pop %v2715
        %v2717 = vmul.f32 %v2628, 1.442695
        %v2718 = vpow.pop %v2717
        %v2719 = vmul.f32 %v2629, 1.442695
        %v2720 = vpow.pop %v2719
        %v2721 = vmul.f32 %v2630, 1.442695
        %v2722 = vpow.pop %v2721
        %v2723 = vmul.f32 %v2631, 1.442695
        %v2724 = vpow.pop %v2723
        %v2725 = vmul.f32 %v2632, 1.442695
        %v2726 = vpow.pop %v2725
        %v2727 = vmul.f32 %v2633, 1.442695
        %v2728 = vpow.pop %v2727
        %v2729 = vmul.f32 %v2634, 1.442695
        %v2730 = vpow.pop %v2729
        %v2731 = vmul.f32 %v2635, 1.442695
        %v2732 = vpow.pop %v2731
        %v2733 = vmul.f32 %v2636, 1.442695
        %v2734 = vpow.pop %v2733
        %v2735 = vmul.f32 %v2637, 1.442695
        %v2736 = vpow.pop %v2735
        %v2737 = vmul.f32 %v2638, 1.442695
        %v2738 = vpow.pop %v2737
        %v2739 = vmul.f32 %v2639, 1.442695
        %v2740 = vpow.pop %v2739
        %v2741 = vmul.f32 %v2640, 1.442695
        %v2742 = vpow.pop %v2741
        %v2743 = vmul.f32 %v2641, 1.442695
        %v2744 = vpow.pop %v2743
        %v2745 = vmul.f32 %v2642, 1.442695
        %v2746 = vpow.pop %v2745
        %v2747 = vmul.f32 %v2643, 1.442695
        %v2748 = vpow.pop %v2747
        %v2749 = vmul.f32 %v2644, 1.442695
        %v2750 = vpow.pop %v2749
        %v2751 = vmul.f32 %v2645, 1.442695
        %v2752 = vpow.pop %v2751
        %v2753 = vmul.f32 %v2646, 1.442695
        %v2754 = vpow.pop %v2753
        %v2755 = vmul.f32 %v2647, 1.442695
        %v2756 = vpow.pop %v2755
        %v2757 = vmul.f32 %v2648, 1.442695
        %v2758 = vpow.pop %v2757
        %v2759 = vmul.f32 %v2649, 1.442695
        %v2760 = vpow.pop %v2759
        %v2761 = vmul.f32 %v2650, 1.442695
        %v2762 = vpow.pop %v2761
        %v2763 = vmul.f32 %v2651, 1.442695
        %v2764 = vpow.pop %v2763
        %v2765 = vmul.f32 %v2652, 1.442695
        %v2766 = vpow.pop %v2765
        %v2767 = vmul.f32 %v2653, 1.442695
        %v2768 = vpow.pop %v2767
        %v2769 = vmul.f32 %v2654, 1.442695
        %v2770 = vpow.pop %v2769
        %v2771 = vmul.f32 %v2655, 1.442695
        %v2772 = vpow.pop %v2771
        %v2773 = vmul.f32 %v2656, 1.442695
        %v2774 = vpow.pop %v2773
        %v2775 = vmul.f32 %v2657, 1.442695
        %v2776 = vpow.pop %v2775
        %v2777 = vmul.f32 %v2658, 1.442695
        %v2778 = vpow.pop %v2777
        %v2779 = vmul.f32 %v2659, 1.442695
        %v2780 = vpow.pop %v2779
        %v2781 = vmul.f32 %v2660, 1.442695
        %v2782 = vpow.pop %v2781
        %v2783 = vmul.f32 %v2661, 1.442695
        %v2784 = vpow.pop %v2783
        %v2785 = vmul.f32 %v2662, 1.442695
        %v2786 = vpow.pop %v2785
        %v2787 = vmul.f32 %v2663, 1.442695
        %v2788 = vpow.pop %v2787
        %v2789 = vmul.f32 %v2664, 1.442695
        %v2790 = vpow.pop %v2789
        %v2791 = vmul.f32 %v2665, 1.442695
        %v2792 = vpow.pop %v2791
        %v2793 = vmul.f32 %v2666, 1.442695
        %v2794 = vpow.pop %v2793
        %v2795 = vadd.f32 %v2668, %v2670
        %2796 = vadd.xlane.f32.xlu0 %v2795
        %v2797 = vpop.xlane.xlu0 %2796
        %v2798 = vadd.f32 %v2672, %v2674
        %2799 = vadd.xlane.f32.xlu0 %v2798
        %v2800 = vpop.xlane.xlu0 %2799
        %v2801 = vadd.f32 %v2676, %v2678
        %2802 = vadd.xlane.f32.xlu0 %v2801
        %v2803 = vpop.xlane.xlu0 %2802
        %v2804 = vadd.f32 %v2680, %v2682
        %2805 = vadd.xlane.f32.xlu0 %v2804
        %v2806 = vpop.xlane.xlu0 %2805
        %v2807 = vadd.f32 %v2684, %v2686
        %2808 = vadd.xlane.f32.xlu0 %v2807
        %v2809 = vpop.xlane.xlu0 %2808
        %v2810 = vadd.f32 %v2688, %v2690
        %2811 = vadd.xlane.f32.xlu0 %v2810
        %v2812 = vpop.xlane.xlu0 %2811
        %v2813 = vadd.f32 %v2692, %v2694
        %2814 = vadd.xlane.f32.xlu0 %v2813
        %v2815 = vpop.xlane.xlu0 %2814
        %v2816 = vadd.f32 %v2696, %v2698
        %2817 = vadd.xlane.f32.xlu0 %v2816
        %v2818 = vpop.xlane.xlu0 %2817
        %v2819 = vadd.f32 %v2700, %v2702
        %2820 = vadd.xlane.f32.xlu0 %v2819
        %v2821 = vpop.xlane.xlu0 %2820
        %v2822 = vadd.f32 %v2704, %v2706
        %2823 = vadd.xlane.f32.xlu0 %v2822
        %v2824 = vpop.xlane.xlu0 %2823
        %v2825 = vadd.f32 %v2708, %v2710
        %2826 = vadd.xlane.f32.xlu0 %v2825
        %v2827 = vpop.xlane.xlu0 %2826
        %v2828 = vadd.f32 %v2712, %v2714
        %2829 = vadd.xlane.f32.xlu0 %v2828
        %v2830 = vpop.xlane.xlu0 %2829
        %v2831 = vadd.f32 %v2716, %v2718
        %2832 = vadd.xlane.f32.xlu0 %v2831
        %v2833 = vpop.xlane.xlu0 %2832
        %v2834 = vadd.f32 %v2720, %v2722
        %2835 = vadd.xlane.f32.xlu0 %v2834
        %v2836 = vpop.xlane.xlu0 %2835
        %v2837 = vadd.f32 %v2724, %v2726
        %2838 = vadd.xlane.f32.xlu0 %v2837
        %v2839 = vpop.xlane.xlu0 %2838
        %v2840 = vadd.f32 %v2728, %v2730
        %2841 = vadd.xlane.f32.xlu0 %v2840
        %v2842 = vpop.xlane.xlu0 %2841
        %v2843 = vadd.f32 %v2732, %v2734
        %2844 = vadd.xlane.f32.xlu0 %v2843
        %v2845 = vpop.xlane.xlu0 %2844
        %v2846 = vadd.f32 %v2736, %v2738
        %2847 = vadd.xlane.f32.xlu0 %v2846
        %v2848 = vpop.xlane.xlu0 %2847
        %v2849 = vadd.f32 %v2740, %v2742
        %2850 = vadd.xlane.f32.xlu0 %v2849
        %v2851 = vpop.xlane.xlu0 %2850
        %v2852 = vadd.f32 %v2744, %v2746
        %2853 = vadd.xlane.f32.xlu0 %v2852
        %v2854 = vpop.xlane.xlu0 %2853
        %v2855 = vadd.f32 %v2748, %v2750
        %2856 = vadd.xlane.f32.xlu0 %v2855
        %v2857 = vpop.xlane.xlu0 %2856
        %v2858 = vadd.f32 %v2752, %v2754
        %2859 = vadd.xlane.f32.xlu0 %v2858
        %v2860 = vpop.xlane.xlu0 %2859
        %v2861 = vadd.f32 %v2756, %v2758
        %2862 = vadd.xlane.f32.xlu0 %v2861
        %v2863 = vpop.xlane.xlu0 %2862
        %v2864 = vadd.f32 %v2760, %v2762
        %2865 = vadd.xlane.f32.xlu0 %v2864
        %v2866 = vpop.xlane.xlu0 %2865
        %v2867 = vadd.f32 %v2764, %v2766
        %2868 = vadd.xlane.f32.xlu0 %v2867
        %v2869 = vpop.xlane.xlu0 %2868
        %v2870 = vadd.f32 %v2768, %v2770
        %2871 = vadd.xlane.f32.xlu0 %v2870
        %v2872 = vpop.xlane.xlu0 %2871
        %v2873 = vadd.f32 %v2772, %v2774
        %2874 = vadd.xlane.f32.xlu0 %v2873
        %v2875 = vpop.xlane.xlu0 %2874
        %v2876 = vadd.f32 %v2776, %v2778
        %2877 = vadd.xlane.f32.xlu0 %v2876
        %v2878 = vpop.xlane.xlu0 %2877
        %v2879 = vadd.f32 %v2780, %v2782
        %2880 = vadd.xlane.f32.xlu0 %v2879
        %v2881 = vpop.xlane.xlu0 %2880
        %v2882 = vadd.f32 %v2784, %v2786
        %2883 = vadd.xlane.f32.xlu0 %v2882
        %v2884 = vpop.xlane.xlu0 %2883
        %v2885 = vadd.f32 %v2788, %v2790
        %2886 = vadd.xlane.f32.xlu0 %v2885
        %v2887 = vpop.xlane.xlu0 %2886
        %v2888 = vadd.f32 %v2792, %v2794
        %2889 = vadd.xlane.f32.xlu0 %v2888
        %v2890 = vpop.xlane.xlu0 %2889
        %v2891 = vrcp.pop %v2797
        %v2892 = vrcp.pop %v2800
        %v2893 = vrcp.pop %v2803
        %v2894 = vrcp.pop %v2806
        %v2895 = vrcp.pop %v2809
        %v2896 = vrcp.pop %v2812
        %v2897 = vrcp.pop %v2815
        %v2898 = vrcp.pop %v2818
        %v2899 = vrcp.pop %v2821
        %v2900 = vrcp.pop %v2824
        %v2901 = vrcp.pop %v2827
        %v2902 = vrcp.pop %v2830
        %v2903 = vrcp.pop %v2833
        %v2904 = vrcp.pop %v2836
        %v2905 = vrcp.pop %v2839
        %v2906 = vrcp.pop %v2842
        %v2907 = vrcp.pop %v2845
        %v2908 = vrcp.pop %v2848
        %v2909 = vrcp.pop %v2851
        %v2910 = vrcp.pop %v2854
        %v2911 = vrcp.pop %v2857
        %v2912 = vrcp.pop %v2860
        %v2913 = vrcp.pop %v2863
        %v2914 = vrcp.pop %v2866
        %v2915 = vrcp.pop %v2869
        %v2916 = vrcp.pop %v2872
        %v2917 = vrcp.pop %v2875
        %v2918 = vrcp.pop %v2878
        %v2919 = vrcp.pop %v2881
        %v2920 = vrcp.pop %v2884
        %v2921 = vrcp.pop %v2887
        %v2922 = vrcp.pop %v2890
        %v2923 = vmul.f32 %v2891, 0.00390625
        %v2924 = vmul.f32 %v2892, 0.00390625
        %v2925 = vmul.f32 %v2893, 0.00390625
        %v2926 = vmul.f32 %v2894, 0.00390625
        %v2927 = vmul.f32 %v2895, 0.00390625
        %v2928 = vmul.f32 %v2896, 0.00390625
        %v2929 = vmul.f32 %v2897, 0.00390625
        %v2930 = vmul.f32 %v2898, 0.00390625
        %v2931 = vmul.f32 %v2899, 0.00390625
        %v2932 = vmul.f32 %v2900, 0.00390625
        %v2933 = vmul.f32 %v2901, 0.00390625
        %v2934 = vmul.f32 %v2902, 0.00390625
        %v2935 = vmul.f32 %v2903, 0.00390625
        %v2936 = vmul.f32 %v2904, 0.00390625
        %v2937 = vmul.f32 %v2905, 0.00390625
        %v2938 = vmul.f32 %v2906, 0.00390625
        %v2939 = vmul.f32 %v2907, 0.00390625
        %v2940 = vmul.f32 %v2908, 0.00390625
        %v2941 = vmul.f32 %v2909, 0.00390625
        %v2942 = vmul.f32 %v2910, 0.00390625
        %v2943 = vmul.f32 %v2911, 0.00390625
        %v2944 = vmul.f32 %v2912, 0.00390625
        %v2945 = vmul.f32 %v2913, 0.00390625
        %v2946 = vmul.f32 %v2914, 0.00390625
        %v2947 = vmul.f32 %v2915, 0.00390625
        %v2948 = vmul.f32 %v2916, 0.00390625
        %v2949 = vmul.f32 %v2917, 0.00390625
        %v2950 = vmul.f32 %v2918, 0.00390625
        %v2951 = vmul.f32 %v2919, 0.00390625
        %v2952 = vmul.f32 %v2920, 0.00390625
        %v2953 = vmul.f32 %v2921, 0.00390625
        %v2954 = vmul.f32 %v2922, 0.00390625
        %v2955 = vmul.f32 %v2668, %v2923
        %v2956 = vmul.f32 %v2670, %v2923
        %v2957 = vmul.f32 %v2672, %v2924
        %v2958 = vmul.f32 %v2674, %v2924
        %v2959 = vmul.f32 %v2676, %v2925
        %v2960 = vmul.f32 %v2678, %v2925
        %v2961 = vmul.f32 %v2680, %v2926
        %v2962 = vmul.f32 %v2682, %v2926
        %v2963 = vmul.f32 %v2684, %v2927
        %v2964 = vmul.f32 %v2686, %v2927
        %v2965 = vmul.f32 %v2688, %v2928
        %v2966 = vmul.f32 %v2690, %v2928
        %v2967 = vmul.f32 %v2692, %v2929
        %v2968 = vmul.f32 %v2694, %v2929
        %v2969 = vmul.f32 %v2696, %v2930
        %v2970 = vmul.f32 %v2698, %v2930
        %v2971 = vmul.f32 %v2700, %v2931
        %v2972 = vmul.f32 %v2702, %v2931
        %v2973 = vmul.f32 %v2704, %v2932
        %v2974 = vmul.f32 %v2706, %v2932
        %v2975 = vmul.f32 %v2708, %v2933
        %v2976 = vmul.f32 %v2710, %v2933
        %v2977 = vmul.f32 %v2712, %v2934
        %v2978 = vmul.f32 %v2714, %v2934
        %v2979 = vmul.f32 %v2716, %v2935
        %v2980 = vmul.f32 %v2718, %v2935
        %v2981 = vmul.f32 %v2720, %v2936
        %v2982 = vmul.f32 %v2722, %v2936
        %v2983 = vmul.f32 %v2724, %v2937
        %v2984 = vmul.f32 %v2726, %v2937
        %v2985 = vmul.f32 %v2728, %v2938
        %v2986 = vmul.f32 %v2730, %v2938
        %v2987 = vmul.f32 %v2732, %v2939
        %v2988 = vmul.f32 %v2734, %v2939
        %v2989 = vmul.f32 %v2736, %v2940
        %v2990 = vmul.f32 %v2738, %v2940
        %v2991 = vmul.f32 %v2740, %v2941
        %v2992 = vmul.f32 %v2742, %v2941
        %v2993 = vmul.f32 %v2744, %v2942
        %v2994 = vmul.f32 %v2746, %v2942
        %v2995 = vmul.f32 %v2748, %v2943
        %v2996 = vmul.f32 %v2750, %v2943
        %v2997 = vmul.f32 %v2752, %v2944
        %v2998 = vmul.f32 %v2754, %v2944
        %v2999 = vmul.f32 %v2756, %v2945
        %v3000 = vmul.f32 %v2758, %v2945
        %v3001 = vmul.f32 %v2760, %v2946
        %v3002 = vmul.f32 %v2762, %v2946
        %v3003 = vmul.f32 %v2764, %v2947
        %v3004 = vmul.f32 %v2766, %v2947
        %v3005 = vmul.f32 %v2768, %v2948
        %v3006 = vmul.f32 %v2770, %v2948
        %v3007 = vmul.f32 %v2772, %v2949
        %v3008 = vmul.f32 %v2774, %v2949
        %v3009 = vmul.f32 %v2776, %v2950
        %v3010 = vmul.f32 %v2778, %v2950
        %v3011 = vmul.f32 %v2780, %v2951
        %v3012 = vmul.f32 %v2782, %v2951
        %v3013 = vmul.f32 %v2784, %v2952
        %v3014 = vmul.f32 %v2786, %v2952
        %v3015 = vmul.f32 %v2788, %v2953
        %v3016 = vmul.f32 %v2790, %v2953
        %v3017 = vmul.f32 %v2792, %v2954
        %v3018 = vmul.f32 %v2794, %v2954
        %v3019 = vpack.c.bf16 %v2957, %v2955
        %v3020 = vpack.c.bf16 %v2958, %v2956
        %v3021 = vpack.c.bf16 %v2961, %v2959
        %v3022 = vpack.c.bf16 %v2962, %v2960
        %v3023 = vpack.c.bf16 %v2965, %v2963
        %v3024 = vpack.c.bf16 %v2966, %v2964
        %v3025 = vpack.c.bf16 %v2969, %v2967
        %v3026 = vpack.c.bf16 %v2970, %v2968
        %v3027 = vpack.c.bf16 %v2973, %v2971
        %v3028 = vpack.c.bf16 %v2974, %v2972
        %v3029 = vpack.c.bf16 %v2977, %v2975
        %v3030 = vpack.c.bf16 %v2978, %v2976
        %v3031 = vpack.c.bf16 %v2981, %v2979
        %v3032 = vpack.c.bf16 %v2982, %v2980
        %v3033 = vpack.c.bf16 %v2985, %v2983
        %v3034 = vpack.c.bf16 %v2986, %v2984
        %v3035 = vpack.c.bf16 %v2989, %v2987
        %v3036 = vpack.c.bf16 %v2990, %v2988
        %v3037 = vpack.c.bf16 %v2993, %v2991
        %v3038 = vpack.c.bf16 %v2994, %v2992
        %v3039 = vpack.c.bf16 %v2997, %v2995
        %v3040 = vpack.c.bf16 %v2998, %v2996
        %v3041 = vpack.c.bf16 %v3001, %v2999
        %v3042 = vpack.c.bf16 %v3002, %v3000
        %v3043 = vpack.c.bf16 %v3005, %v3003
        %v3044 = vpack.c.bf16 %v3006, %v3004
        %v3045 = vpack.c.bf16 %v3009, %v3007
        %v3046 = vpack.c.bf16 %v3010, %v3008
        %v3047 = vpack.c.bf16 %v3013, %v3011
        %v3048 = vpack.c.bf16 %v3014, %v3012
        %v3049 = vpack.c.bf16 %v3017, %v3015
        %v3050 = vpack.c.bf16 %v3018, %v3016
        %3051 = vmatprep.subr.bf16.mxu0 %v3020
        %3052 = vmatpush1.bf16.msra.mxu0 %v3019
        %3053 = vmatprep.subr.bf16.mxu0 %v3022
        %3054 = vmatpush1.bf16.msra.mxu0 %v3021
        %3055 = vmatprep.subr.bf16.mxu0 %v3024
        %3056 = vmatpush1.bf16.msra.mxu0 %v3023
        %3057 = vmatprep.subr.bf16.mxu0 %v3026
        %3058 = vmatpush1.bf16.msra.mxu0 %v3025
        %3059 = vmatprep.subr.bf16.mxu0 %v3028
        %3060 = vmatpush1.bf16.msra.mxu0 %v3027
        %3061 = vmatprep.subr.bf16.mxu0 %v3030
        %3062 = vmatpush1.bf16.msra.mxu0 %v3029
        %3063 = vmatprep.subr.bf16.mxu0 %v3032
        %3064 = vmatpush1.bf16.msra.mxu0 %v3031
        %3065 = vmatprep.subr.bf16.mxu0 %v3034
        %3066 = vmatpush1.bf16.msra.mxu0 %v3033
        %3067 = vmatprep.subr.bf16.mxu0 %v3036
        %3068 = vmatpush1.bf16.msra.mxu0 %v3035
        %3069 = vmatprep.subr.bf16.mxu0 %v3038
        %3070 = vmatpush1.bf16.msra.mxu0 %v3037
        %3071 = vmatprep.subr.bf16.mxu0 %v3040
        %3072 = vmatpush1.bf16.msra.mxu0 %v3039
        %3073 = vmatprep.subr.bf16.mxu0 %v3042
        %3074 = vmatpush1.bf16.msra.mxu0 %v3041
        %3075 = vmatprep.subr.bf16.mxu0 %v3044
        %3076 = vmatpush1.bf16.msra.mxu0 %v3043
        %3077 = vmatprep.subr.bf16.mxu0 %v3046
        %3078 = vmatpush1.bf16.msra.mxu0 %v3045
        %3079 = vmatprep.subr.bf16.mxu0 %v3048
        %3080 = vmatpush1.bf16.msra.mxu0 %v3047
        %3081 = vmatprep.subr.bf16.mxu0 %v3050
        %3082 = vmatpush1.bf16.msra.mxu0 %v3049
        %3083 = vmatprep.mubr.bf16.mxu0 1065369472
        %3084 = vmatmul.mubr.bf16.gmra.mrb[0].mxu0 1065369472
        %v3085 = vpop.f32.mrb[0].mxu0
        %v3086 = vadd.f32 0.0, %v3085
        %v3087 = vpop.f32.mrb[0].mxu0
        %v3088 = vadd.f32 0.0, %v3087
        %v3089 = vpop.f32.mrb[0].mxu0
        %v3090 = vpop.f32.mrb[0].mxu0
        %3091 = vdwg.mxu0
        %v3092 = vpack.c.bf16 %v3086, %v3086
        %v3093 = vpack.c.bf16 %v3088, %v3088
        %3094 = vmatprep.subr.bf16.mxu0 0
        %3095 = vmatpush1.bf16.msra.mxu0 %v2201
        %3096 = vmatprep.subr.bf16.mxu0 0
        %3097 = vmatpush1.bf16.msra.mxu0 %v2202
        %3098 = vmatprep.subr.bf16.mxu0 0
        %3099 = vmatpush1.bf16.msra.mxu0 %v2203
        %3100 = vmatprep.subr.bf16.mxu0 0
        %3101 = vmatpush1.bf16.msra.mxu0 %v2204
        %3102 = vmatprep.subr.bf16.mxu0 0
        %3103 = vmatpush1.bf16.msra.mxu0 %v2205
        %3104 = vmatprep.subr.bf16.mxu0 0
        %3105 = vmatpush1.bf16.msra.mxu0 %v2206
        %3106 = vmatprep.subr.bf16.mxu0 0
        %3107 = vmatpush1.bf16.msra.mxu0 %v2207
        %3108 = vmatprep.subr.bf16.mxu0 0
        %3109 = vmatpush1.bf16.msra.mxu0 %v2208
        %3110 = vmatprep.subr.bf16.mxu0 0
        %3111 = vmatpush1.bf16.msra.mxu0 %v2209
        %3112 = vmatprep.subr.bf16.mxu0 0
        %3113 = vmatpush1.bf16.msra.mxu0 %v2210
        %3114 = vmatprep.subr.bf16.mxu0 0
        %3115 = vmatpush1.bf16.msra.mxu0 %v2211
        %3116 = vmatprep.subr.bf16.mxu0 0
        %3117 = vmatpush1.bf16.msra.mxu0 %v2212
        %3118 = vmatprep.subr.bf16.mxu0 0
        %3119 = vmatpush1.bf16.msra.mxu0 %v2213
        %3120 = vmatprep.subr.bf16.mxu0 0
        %3121 = vmatpush1.bf16.msra.mxu0 %v2214
        %3122 = vmatprep.subr.bf16.mxu0 0
        %3123 = vmatpush1.bf16.msra.mxu0 %v2215
        %3124 = vmatprep.subr.bf16.mxu0 0
        %3125 = vmatpush1.bf16.msra.mxu0 %v2216
        %3126 = vmatprep.mubr.bf16.mxu0 %v3093
        %3127 = vmatmul.mubr.bf16.gmra.mrb[0].mxu0 %v3092
        %v3128 = vpop.f32.mrb[0].mxu0
        %v3129 = vadd.f32 0.0, %v3128
        %v3130 = vpop.f32.mrb[0].mxu0
        %v3131 = vpop.f32.mrb[0].mxu0
        %v3132 = vpop.f32.mrb[0].mxu0
        %3133 = vdwg.mxu0
        %vm3134 = vcmask 253952
        %3135 = vst.msk [vmem:[#allocation5] sm:$0x1] %vm3134, %v3129
        %3152 = vrot.lane.b32.xlu0 %v2169, 96
        %v3153 = vpop.permute.xlu0 %3152
        %3154 = vrot.lane.b32.xlu0 %v2170, 96
        %v3155 = vpop.permute.xlu0 %3154
        %3156 = vrot.lane.b32.xlu0 %v2171, 96
        %v3157 = vpop.permute.xlu0 %3156
        %3158 = vrot.lane.b32.xlu0 %v2172, 96
        %v3159 = vpop.permute.xlu0 %3158
        %3160 = vrot.lane.b32.xlu0 %v2173, 96
        %v3161 = vpop.permute.xlu0 %3160
        %3162 = vrot.lane.b32.xlu0 %v2174, 96
        %v3163 = vpop.permute.xlu0 %3162
        %3164 = vrot.lane.b32.xlu0 %v2175, 96
        %v3165 = vpop.permute.xlu0 %3164
        %3166 = vrot.lane.b32.xlu0 %v2176, 96
        %v3167 = vpop.permute.xlu0 %3166
        %3168 = vrot.lane.b32.xlu0 %v2177, 96
        %v3169 = vpop.permute.xlu0 %3168
        %3170 = vrot.lane.b32.xlu0 %v2178, 96
        %v3171 = vpop.permute.xlu0 %3170
        %3172 = vrot.lane.b32.xlu0 %v2179, 96
        %v3173 = vpop.permute.xlu0 %3172
        %3174 = vrot.lane.b32.xlu0 %v2180, 96
        %v3175 = vpop.permute.xlu0 %3174
        %3176 = vrot.lane.b32.xlu0 %v2181, 96
        %v3177 = vpop.permute.xlu0 %3176
        %3178 = vrot.lane.b32.xlu0 %v2182, 96
        %v3179 = vpop.permute.xlu0 %3178
        %3180 = vrot.lane.b32.xlu0 %v2183, 96
        %v3181 = vpop.permute.xlu0 %3180
        %3182 = vrot.lane.b32.xlu0 %v2184, 96
        %v3183 = vpop.permute.xlu0 %3182
        %3200 = vrot.lane.b32.xlu0 %v2185, 96
        %v3201 = vpop.permute.xlu0 %3200
        %3202 = vrot.lane.b32.xlu0 %v2186, 96
        %v3203 = vpop.permute.xlu0 %3202
        %3204 = vrot.lane.b32.xlu0 %v2187, 96
        %v3205 = vpop.permute.xlu0 %3204
        %3206 = vrot.lane.b32.xlu0 %v2188, 96
        %v3207 = vpop.permute.xlu0 %3206
        %3208 = vrot.lane.b32.xlu0 %v2189, 96
        %v3209 = vpop.permute.xlu0 %3208
        %3210 = vrot.lane.b32.xlu0 %v2190, 96
        %v3211 = vpop.permute.xlu0 %3210
        %3212 = vrot.lane.b32.xlu0 %v2191, 96
        %v3213 = vpop.permute.xlu0 %3212
        %3214 = vrot.lane.b32.xlu0 %v2192, 96
        %v3215 = vpop.permute.xlu0 %3214
        %3216 = vrot.lane.b32.xlu0 %v2193, 96
        %v3217 = vpop.permute.xlu0 %3216
        %3218 = vrot.lane.b32.xlu0 %v2194, 96
        %v3219 = vpop.permute.xlu0 %3218
        %3220 = vrot.lane.b32.xlu0 %v2195, 96
        %v3221 = vpop.permute.xlu0 %3220
        %3222 = vrot.lane.b32.xlu0 %v2196, 96
        %v3223 = vpop.permute.xlu0 %3222
        %3224 = vrot.lane.b32.xlu0 %v2197, 96
        %v3225 = vpop.permute.xlu0 %3224
        %3226 = vrot.lane.b32.xlu0 %v2198, 96
        %v3227 = vpop.permute.xlu0 %3226
        %3228 = vrot.lane.b32.xlu0 %v2199, 96
        %v3229 = vpop.permute.xlu0 %3228
        %3230 = vrot.lane.b32.xlu0 %v2200, 96
        %v3231 = vpop.permute.xlu0 %3230
        %v3233 = vsel %vm2217, %v3153, 0
        %v3236 = vsel %vm2217, %v3155, 0
        %v3239 = vsel %vm2217, %v3157, 0
        %v3242 = vsel %vm2217, %v3159, 0
        %v3245 = vsel %vm2217, %v3161, 0
        %v3248 = vsel %vm2217, %v3163, 0
        %v3251 = vsel %vm2217, %v3165, 0
        %v3254 = vsel %vm2217, %v3167, 0
        %v3257 = vsel %vm2217, %v3169, 0
        %v3260 = vsel %vm2217, %v3171, 0
        %v3263 = vsel %vm2217, %v3173, 0
        %v3266 = vsel %vm2217, %v3175, 0
        %v3269 = vsel %vm2217, %v3177, 0
        %v3272 = vsel %vm2217, %v3179, 0
        %v3275 = vsel %vm2217, %v3181, 0
        %v3278 = vsel %vm2217, %v3183, 0
        %v3281 = vsel %vm2217, %v3201, 0
        %v3284 = vsel %vm2217, %v3203, 0
        %v3287 = vsel %vm2217, %v3205, 0
        %v3290 = vsel %vm2217, %v3207, 0
        %v3293 = vsel %vm2217, %v3209, 0
        %v3296 = vsel %vm2217, %v3211, 0
        %v3299 = vsel %vm2217, %v3213, 0
        %v3302 = vsel %vm2217, %v3215, 0
        %v3305 = vsel %vm2217, %v3217, 0
        %v3308 = vsel %vm2217, %v3219, 0
        %v3311 = vsel %vm2217, %v3221, 0
        %v3314 = vsel %vm2217, %v3223, 0
        %v3317 = vsel %vm2217, %v3225, 0
        %v3320 = vsel %vm2217, %v3227, 0
        %v3323 = vsel %vm2217, %v3229, 0
        %v3326 = vsel %vm2217, %v3231, 0
        %3328 = vmatprep.subr.bf16.mxu0 0
        %3329 = vmatpush1.bf16.xpose.msra.mxu0 %v3281
        %3330 = vmatprep.subr.bf16.mxu0 0
        %3331 = vmatpush1.bf16.xpose.msra.mxu0 %v3284
        %3332 = vmatprep.subr.bf16.mxu0 0
        %3333 = vmatpush1.bf16.xpose.msra.mxu0 %v3287
        %3334 = vmatprep.subr.bf16.mxu0 0
        %3335 = vmatpush1.bf16.xpose.msra.mxu0 %v3290
        %3336 = vmatprep.subr.bf16.mxu0 0
        %3337 = vmatpush1.bf16.xpose.msra.mxu0 %v3293
        %3338 = vmatprep.subr.bf16.mxu0 0
        %3339 = vmatpush1.bf16.xpose.msra.mxu0 %v3296
        %3340 = vmatprep.subr.bf16.mxu0 0
        %3341 = vmatpush1.bf16.xpose.msra.mxu0 %v3299
        %3342 = vmatprep.subr.bf16.mxu0 0
        %3343 = vmatpush1.bf16.xpose.msra.mxu0 %v3302
        %3344 = vmatprep.subr.bf16.mxu0 0
        %3345 = vmatpush1.bf16.xpose.msra.mxu0 %v3305
        %3346 = vmatprep.subr.bf16.mxu0 0
        %3347 = vmatpush1.bf16.xpose.msra.mxu0 %v3308
        %3348 = vmatprep.subr.bf16.mxu0 0
        %3349 = vmatpush1.bf16.xpose.msra.mxu0 %v3311
        %3350 = vmatprep.subr.bf16.mxu0 0
        %3351 = vmatpush1.bf16.xpose.msra.mxu0 %v3314
        %3352 = vmatprep.subr.bf16.mxu0 0
        %3353 = vmatpush1.bf16.xpose.msra.mxu0 %v3317
        %3354 = vmatprep.subr.bf16.mxu0 0
        %3355 = vmatpush1.bf16.xpose.msra.mxu0 %v3320
        %3356 = vmatprep.subr.bf16.mxu0 0
        %3357 = vmatpush1.bf16.xpose.msra.mxu0 %v3323
        %3358 = vmatprep.subr.bf16.mxu0 0
        %3359 = vmatpush1.bf16.xpose.msra.mxu0 %v3326
        %3360 = vmatprep.mubr.bf16.mxu0 0
        %3361 = vmatmul.mubr.bf16.gmra.mrb[0].mxu0 %v3233
        %v3362 = vpop.f32.mrb[0].mxu0
        %v3363 = vadd.f32 0.0, %v3362
        %v3364 = vpop.f32.mrb[0].mxu0
        %v3365 = vadd.f32 0.0, %v3364
        %v3366 = vpop.f32.mrb[0].mxu0
        %v3367 = vadd.f32 0.0, %v3366
        %v3368 = vpop.f32.mrb[0].mxu0
        %v3369 = vadd.f32 0.0, %v3368
        %3370 = vmatprep.mubr.bf16.mxu0 0
        %3371 = vmatmul.mubr.bf16.gmra.mrb[0].mxu0 %v3236
        %v3372 = vpop.f32.mrb[0].mxu0
        %v3373 = vadd.f32 0.0, %v3372
        %v3374 = vpop.f32.mrb[0].mxu0
        %v3375 = vadd.f32 0.0, %v3374
        %v3376 = vpop.f32.mrb[0].mxu0
        %v3377 = vadd.f32 0.0, %v3376
        %v3378 = vpop.f32.mrb[0].mxu0
        %v3379 = vadd.f32 0.0, %v3378
        %3380 = vmatprep.mubr.bf16.mxu0 0
        %3381 = vmatmul.mubr.bf16.gmra.mrb[0].mxu0 %v3239
        %v3382 = vpop.f32.mrb[0].mxu0
        %v3383 = vadd.f32 0.0, %v3382
        %v3384 = vpop.f32.mrb[0].mxu0
        %v3385 = vadd.f32 0.0, %v3384
        %v3386 = vpop.f32.mrb[0].mxu0
        %v3387 = vadd.f32 0.0, %v3386
        %v3388 = vpop.f32.mrb[0].mxu0
        %v3389 = vadd.f32 0.0, %v3388
        %3390 = vmatprep.mubr.bf16.mxu0 0
        %3391 = vmatmul.mubr.bf16.gmra.mrb[0].mxu0 %v3242
        %v3392 = vpop.f32.mrb[0].mxu0
        %v3393 = vadd.f32 0.0, %v3392
        %v3394 = vpop.f32.mrb[0].mxu0
        %v3395 = vadd.f32 0.0, %v3394
        %v3396 = vpop.f32.mrb[0].mxu0
        %v3397 = vadd.f32 0.0, %v3396
        %v3398 = vpop.f32.mrb[0].mxu0
        %v3399 = vadd.f32 0.0, %v3398
        %3400 = vmatprep.mubr.bf16.mxu0 0
        %3401 = vmatmul.mubr.bf16.gmra.mrb[0].mxu0 %v3245
        %v3402 = vpop.f32.mrb[0].mxu0
        %v3403 = vadd.f32 0.0, %v3402
        %v3404 = vpop.f32.mrb[0].mxu0
        %v3405 = vadd.f32 0.0, %v3404
        %v3406 = vpop.f32.mrb[0].mxu0
        %v3407 = vadd.f32 0.0, %v3406
        %v3408 = vpop.f32.mrb[0].mxu0
        %v3409 = vadd.f32 0.0, %v3408
        %3410 = vmatprep.mubr.bf16.mxu0 0
        %3411 = vmatmul.mubr.bf16.gmra.mrb[0].mxu0 %v3248
        %v3412 = vpop.f32.mrb[0].mxu0
        %v3413 = vadd.f32 0.0, %v3412
        %v3414 = vpop.f32.mrb[0].mxu0
        %v3415 = vadd.f32 0.0, %v3414
        %v3416 = vpop.f32.mrb[0].mxu0
        %v3417 = vadd.f32 0.0, %v3416
        %v3418 = vpop.f32.mrb[0].mxu0
        %v3419 = vadd.f32 0.0, %v3418
        %3420 = vmatprep.mubr.bf16.mxu0 0
        %3421 = vmatmul.mubr.bf16.gmra.mrb[0].mxu0 %v3251
        %v3422 = vpop.f32.mrb[0].mxu0
        %v3423 = vadd.f32 0.0, %v3422
        %v3424 = vpop.f32.mrb[0].mxu0
        %v3425 = vadd.f32 0.0, %v3424
        %v3426 = vpop.f32.mrb[0].mxu0
        %v3427 = vadd.f32 0.0, %v3426
        %v3428 = vpop.f32.mrb[0].mxu0
        %v3429 = vadd.f32 0.0, %v3428
        %3430 = vmatprep.mubr.bf16.mxu0 0
        %3431 = vmatmul.mubr.bf16.gmra.mrb[0].mxu0 %v3254
        %v3432 = vpop.f32.mrb[0].mxu0
        %v3433 = vadd.f32 0.0, %v3432
        %v3434 = vpop.f32.mrb[0].mxu0
        %v3435 = vadd.f32 0.0, %v3434
        %v3436 = vpop.f32.mrb[0].mxu0
        %v3437 = vadd.f32 0.0, %v3436
        %v3438 = vpop.f32.mrb[0].mxu0
        %v3439 = vadd.f32 0.0, %v3438
        %3440 = vmatprep.mubr.bf16.mxu0 0
        %3441 = vmatmul.mubr.bf16.gmra.mrb[0].mxu0 %v3257
        %v3442 = vpop.f32.mrb[0].mxu0
        %v3443 = vadd.f32 0.0, %v3442
        %v3444 = vpop.f32.mrb[0].mxu0
        %v3445 = vadd.f32 0.0, %v3444
        %v3446 = vpop.f32.mrb[0].mxu0
        %v3447 = vadd.f32 0.0, %v3446
        %v3448 = vpop.f32.mrb[0].mxu0
        %v3449 = vadd.f32 0.0, %v3448
        %3450 = vmatprep.mubr.bf16.mxu0 0
        %3451 = vmatmul.mubr.bf16.gmra.mrb[0].mxu0 %v3260
        %v3452 = vpop.f32.mrb[0].mxu0
        %v3453 = vadd.f32 0.0, %v3452
        %v3454 = vpop.f32.mrb[0].mxu0
        %v3455 = vadd.f32 0.0, %v3454
        %v3456 = vpop.f32.mrb[0].mxu0
        %v3457 = vadd.f32 0.0, %v3456
        %v3458 = vpop.f32.mrb[0].mxu0
        %v3459 = vadd.f32 0.0, %v3458
        %3460 = vmatprep.mubr.bf16.mxu0 0
        %3461 = vmatmul.mubr.bf16.gmra.mrb[0].mxu0 %v3263
        %v3462 = vpop.f32.mrb[0].mxu0
        %v3463 = vadd.f32 0.0, %v3462
        %v3464 = vpop.f32.mrb[0].mxu0
        %v3465 = vadd.f32 0.0, %v3464
        %v3466 = vpop.f32.mrb[0].mxu0
        %v3467 = vadd.f32 0.0, %v3466
        %v3468 = vpop.f32.mrb[0].mxu0
        %v3469 = vadd.f32 0.0, %v3468
        %3470 = vmatprep.mubr.bf16.mxu0 0
        %3471 = vmatmul.mubr.bf16.gmra.mrb[0].mxu0 %v3266
        %v3472 = vpop.f32.mrb[0].mxu0
        %v3473 = vadd.f32 0.0, %v3472
        %v3474 = vpop.f32.mrb[0].mxu0
        %v3475 = vadd.f32 0.0, %v3474
        %v3476 = vpop.f32.mrb[0].mxu0
        %v3477 = vadd.f32 0.0, %v3476
        %v3478 = vpop.f32.mrb[0].mxu0
        %v3479 = vadd.f32 0.0, %v3478
        %3480 = vmatprep.mubr.bf16.mxu0 0
        %3481 = vmatmul.mubr.bf16.gmra.mrb[0].mxu0 %v3269
        %v3482 = vpop.f32.mrb[0].mxu0
        %v3483 = vadd.f32 0.0, %v3482
        %v3484 = vpop.f32.mrb[0].mxu0
        %v3485 = vadd.f32 0.0, %v3484
        %v3486 = vpop.f32.mrb[0].mxu0
        %v3487 = vadd.f32 0.0, %v3486
        %v3488 = vpop.f32.mrb[0].mxu0
        %v3489 = vadd.f32 0.0, %v3488
        %3490 = vmatprep.mubr.bf16.mxu0 0
        %3491 = vmatmul.mubr.bf16.gmra.mrb[0].mxu0 %v3272
        %v3492 = vpop.f32.mrb[0].mxu0
        %v3493 = vadd.f32 0.0, %v3492
        %v3494 = vpop.f32.mrb[0].mxu0
        %v3495 = vadd.f32 0.0, %v3494
        %v3496 = vpop.f32.mrb[0].mxu0
        %v3497 = vadd.f32 0.0, %v3496
        %v3498 = vpop.f32.mrb[0].mxu0
        %v3499 = vadd.f32 0.0, %v3498
        %3500 = vmatprep.mubr.bf16.mxu0 0
        %3501 = vmatmul.mubr.bf16.gmra.mrb[0].mxu0 %v3275
        %v3502 = vpop.f32.mrb[0].mxu0
        %v3503 = vadd.f32 0.0, %v3502
        %v3504 = vpop.f32.mrb[0].mxu0
        %v3505 = vadd.f32 0.0, %v3504
        %v3506 = vpop.f32.mrb[0].mxu0
        %v3507 = vadd.f32 0.0, %v3506
        %v3508 = vpop.f32.mrb[0].mxu0
        %v3509 = vadd.f32 0.0, %v3508
        %3510 = vmatprep.mubr.bf16.mxu0 0
        %3511 = vmatmul.mubr.bf16.gmra.mrb[0].mxu0 %v3278
        %v3512 = vpop.f32.mrb[0].mxu0
        %v3513 = vadd.f32 0.0, %v3512
        %v3514 = vpop.f32.mrb[0].mxu0
        %v3515 = vadd.f32 0.0, %v3514
        %v3516 = vpop.f32.mrb[0].mxu0
        %v3517 = vadd.f32 0.0, %v3516
        %v3518 = vpop.f32.mrb[0].mxu0
        %v3519 = vadd.f32 0.0, %v3518
        %3520 = vdwg.mxu0
        %v3521 = vmax.f32 %v3363, %v3365
        %3522 = vmax.xlane.f32.xlu0 %v3521
        %v3523 = vpop.xlane.xlu0 %3522
        %v3524 = vmax.f32 %v3367, %v3369
        %3525 = vmax.xlane.f32.xlu0 %v3524
        %v3526 = vpop.xlane.xlu0 %3525
        %v3527 = vmax.f32 %v3373, %v3375
        %3528 = vmax.xlane.f32.xlu0 %v3527
        %v3529 = vpop.xlane.xlu0 %3528
        %v3530 = vmax.f32 %v3377, %v3379
        %3531 = vmax.xlane.f32.xlu0 %v3530
        %v3532 = vpop.xlane.xlu0 %3531
        %v3533 = vmax.f32 %v3383, %v3385
        %3534 = vmax.xlane.f32.xlu0 %v3533
        %v3535 = vpop.xlane.xlu0 %3534
        %v3536 = vmax.f32 %v3387, %v3389
        %3537 = vmax.xlane.f32.xlu0 %v3536
        %v3538 = vpop.xlane.xlu0 %3537
        %v3539 = vmax.f32 %v3393, %v3395
        %3540 = vmax.xlane.f32.xlu0 %v3539
        %v3541 = vpop.xlane.xlu0 %3540
        %v3542 = vmax.f32 %v3397, %v3399
        %3543 = vmax.xlane.f32.xlu0 %v3542
        %v3544 = vpop.xlane.xlu0 %3543
        %v3545 = vmax.f32 %v3403, %v3405
        %3546 = vmax.xlane.f32.xlu0 %v3545
        %v3547 = vpop.xlane.xlu0 %3546
        %v3548 = vmax.f32 %v3407, %v3409
        %3549 = vmax.xlane.f32.xlu0 %v3548
        %v3550 = vpop.xlane.xlu0 %3549
        %v3551 = vmax.f32 %v3413, %v3415
        %3552 = vmax.xlane.f32.xlu0 %v3551
        %v3553 = vpop.xlane.xlu0 %3552
        %v3554 = vmax.f32 %v3417, %v3419
        %3555 = vmax.xlane.f32.xlu0 %v3554
        %v3556 = vpop.xlane.xlu0 %3555
        %v3557 = vmax.f32 %v3423, %v3425
        %3558 = vmax.xlane.f32.xlu0 %v3557
        %v3559 = vpop.xlane.xlu0 %3558
        %v3560 = vmax.f32 %v3427, %v3429
        %3561 = vmax.xlane.f32.xlu0 %v3560
        %v3562 = vpop.xlane.xlu0 %3561
        %v3563 = vmax.f32 %v3433, %v3435
        %3564 = vmax.xlane.f32.xlu0 %v3563
        %v3565 = vpop.xlane.xlu0 %3564
        %v3566 = vmax.f32 %v3437, %v3439
        %3567 = vmax.xlane.f32.xlu0 %v3566
        %v3568 = vpop.xlane.xlu0 %3567
        %v3569 = vmax.f32 %v3443, %v3445
        %3570 = vmax.xlane.f32.xlu0 %v3569
        %v3571 = vpop.xlane.xlu0 %3570
        %v3572 = vmax.f32 %v3447, %v3449
        %3573 = vmax.xlane.f32.xlu0 %v3572
        %v3574 = vpop.xlane.xlu0 %3573
        %v3575 = vmax.f32 %v3453, %v3455
        %3576 = vmax.xlane.f32.xlu0 %v3575
        %v3577 = vpop.xlane.xlu0 %3576
        %v3578 = vmax.f32 %v3457, %v3459
        %3579 = vmax.xlane.f32.xlu0 %v3578
        %v3580 = vpop.xlane.xlu0 %3579
        %v3581 = vmax.f32 %v3463, %v3465
        %3582 = vmax.xlane.f32.xlu0 %v3581
        %v3583 = vpop.xlane.xlu0 %3582
        %v3584 = vmax.f32 %v3467, %v3469
        %3585 = vmax.xlane.f32.xlu0 %v3584
        %v3586 = vpop.xlane.xlu0 %3585
        %v3587 = vmax.f32 %v3473, %v3475
        %3588 = vmax.xlane.f32.xlu0 %v3587
        %v3589 = vpop.xlane.xlu0 %3588
        %v3590 = vmax.f32 %v3477, %v3479
        %3591 = vmax.xlane.f32.xlu0 %v3590
        %v3592 = vpop.xlane.xlu0 %3591
        %v3593 = vmax.f32 %v3483, %v3485
        %3594 = vmax.xlane.f32.xlu0 %v3593
        %v3595 = vpop.xlane.xlu0 %3594
        %v3596 = vmax.f32 %v3487, %v3489
        %3597 = vmax.xlane.f32.xlu0 %v3596
        %v3598 = vpop.xlane.xlu0 %3597
        %v3599 = vmax.f32 %v3493, %v3495
        %3600 = vmax.xlane.f32.xlu0 %v3599
        %v3601 = vpop.xlane.xlu0 %3600
        %v3602 = vmax.f32 %v3497, %v3499
        %3603 = vmax.xlane.f32.xlu0 %v3602
        %v3604 = vpop.xlane.xlu0 %3603
        %v3605 = vmax.f32 %v3503, %v3505
        %3606 = vmax.xlane.f32.xlu0 %v3605
        %v3607 = vpop.xlane.xlu0 %3606
        %v3608 = vmax.f32 %v3507, %v3509
        %3609 = vmax.xlane.f32.xlu0 %v3608
        %v3610 = vpop.xlane.xlu0 %3609
        %v3611 = vmax.f32 %v3513, %v3515
        %3612 = vmax.xlane.f32.xlu0 %v3611
        %v3613 = vpop.xlane.xlu0 %3612
        %v3614 = vmax.f32 %v3517, %v3519
        %3615 = vmax.xlane.f32.xlu0 %v3614
        %v3616 = vpop.xlane.xlu0 %3615
        %v3617 = vsub.f32 %v3363, %v3523
        %v3618 = vsub.f32 %v3365, %v3523
        %v3619 = vsub.f32 %v3367, %v3526
        %v3620 = vsub.f32 %v3369, %v3526
        %v3621 = vsub.f32 %v3373, %v3529
        %v3622 = vsub.f32 %v3375, %v3529
        %v3623 = vsub.f32 %v3377, %v3532
        %v3624 = vsub.f32 %v3379, %v3532
        %v3625 = vsub.f32 %v3383, %v3535
        %v3626 = vsub.f32 %v3385, %v3535
        %v3627 = vsub.f32 %v3387, %v3538
        %v3628 = vsub.f32 %v3389, %v3538
        %v3629 = vsub.f32 %v3393, %v3541
        %v3630 = vsub.f32 %v3395, %v3541
        %v3631 = vsub.f32 %v3397, %v3544
        %v3632 = vsub.f32 %v3399, %v3544
        %v3633 = vsub.f32 %v3403, %v3547
        %v3634 = vsub.f32 %v3405, %v3547
        %v3635 = vsub.f32 %v3407, %v3550
        %v3636 = vsub.f32 %v3409, %v3550
        %v3637 = vsub.f32 %v3413, %v3553
        %v3638 = vsub.f32 %v3415, %v3553
        %v3639 = vsub.f32 %v3417, %v3556
        %v3640 = vsub.f32 %v3419, %v3556
        %v3641 = vsub.f32 %v3423, %v3559
        %v3642 = vsub.f32 %v3425, %v3559
        %v3643 = vsub.f32 %v3427, %v3562
        %v3644 = vsub.f32 %v3429, %v3562
        %v3645 = vsub.f32 %v3433, %v3565
        %v3646 = vsub.f32 %v3435, %v3565
        %v3647 = vsub.f32 %v3437, %v3568
        %v3648 = vsub.f32 %v3439, %v3568
        %v3649 = vsub.f32 %v3443, %v3571
        %v3650 = vsub.f32 %v3445, %v3571
        %v3651 = vsub.f32 %v3447, %v3574
        %v3652 = vsub.f32 %v3449, %v3574
        %v3653 = vsub.f32 %v3453, %v3577
        %v3654 = vsub.f32 %v3455, %v3577
        %v3655 = vsub.f32 %v3457, %v3580
        %v3656 = vsub.f32 %v3459, %v3580
        %v3657 = vsub.f32 %v3463, %v3583
        %v3658 = vsub.f32 %v3465, %v3583
        %v3659 = vsub.f32 %v3467, %v3586
        %v3660 = vsub.f32 %v3469, %v3586
        %v3661 = vsub.f32 %v3473, %v3589
        %v3662 = vsub.f32 %v3475, %v3589
        %v3663 = vsub.f32 %v3477, %v3592
        %v3664 = vsub.f32 %v3479, %v3592
        %v3665 = vsub.f32 %v3483, %v3595
        %v3666 = vsub.f32 %v3485, %v3595
        %v3667 = vsub.f32 %v3487, %v3598
        %v3668 = vsub.f32 %v3489, %v3598
        %v3669 = vsub.f32 %v3493, %v3601
        %v3670 = vsub.f32 %v3495, %v3601
        %v3671 = vsub.f32 %v3497, %v3604
        %v3672 = vsub.f32 %v3499, %v3604
        %v3673 = vsub.f32 %v3503, %v3607
        %v3674 = vsub.f32 %v3505, %v3607
        %v3675 = vsub.f32 %v3507, %v3610
        %v3676 = vsub.f32 %v3509, %v3610
        %v3677 = vsub.f32 %v3513, %v3613
        %v3678 = vsub.f32 %v3515, %v3613
        %v3679 = vsub.f32 %v3517, %v3616
        %v3680 = vsub.f32 %v3519, %v3616
        %v3681 = vmul.f32 %v3617, 1.442695
        %v3682 = vpow.pop %v3681
        %v3683 = vmul.f32 %v3618, 1.442695
        %v3684 = vpow.pop %v3683
        %v3685 = vmul.f32 %v3619, 1.442695
        %v3686 = vpow.pop %v3685
        %v3687 = vmul.f32 %v3620, 1.442695
        %v3688 = vpow.pop %v3687
        %v3689 = vmul.f32 %v3621, 1.442695
        %v3690 = vpow.pop %v3689
        %v3691 = vmul.f32 %v3622, 1.442695
        %v3692 = vpow.pop %v3691
        %v3693 = vmul.f32 %v3623, 1.442695
        %v3694 = vpow.pop %v3693
        %v3695 = vmul.f32 %v3624, 1.442695
        %v3696 = vpow.pop %v3695
        %v3697 = vmul.f32 %v3625, 1.442695
        %v3698 = vpow.pop %v3697
        %v3699 = vmul.f32 %v3626, 1.442695
        %v3700 = vpow.pop %v3699
        %v3701 = vmul.f32 %v3627, 1.442695
        %v3702 = vpow.pop %v3701
        %v3703 = vmul.f32 %v3628, 1.442695
        %v3704 = vpow.pop %v3703
        %v3705 = vmul.f32 %v3629, 1.442695
        %v3706 = vpow.pop %v3705
        %v3707 = vmul.f32 %v3630, 1.442695
        %v3708 = vpow.pop %v3707
        %v3709 = vmul.f32 %v3631, 1.442695
        %v3710 = vpow.pop %v3709
        %v3711 = vmul.f32 %v3632, 1.442695
        %v3712 = vpow.pop %v3711
        %v3713 = vmul.f32 %v3633, 1.442695
        %v3714 = vpow.pop %v3713
        %v3715 = vmul.f32 %v3634, 1.442695
        %v3716 = vpow.pop %v3715
        %v3717 = vmul.f32 %v3635, 1.442695
        %v3718 = vpow.pop %v3717
        %v3719 = vmul.f32 %v3636, 1.442695
        %v3720 = vpow.pop %v3719
        %v3721 = vmul.f32 %v3637, 1.442695
        %v3722 = vpow.pop %v3721
        %v3723 = vmul.f32 %v3638, 1.442695
        %v3724 = vpow.pop %v3723
        %v3725 = vmul.f32 %v3639, 1.442695
        %v3726 = vpow.pop %v3725
        %v3727 = vmul.f32 %v3640, 1.442695
        %v3728 = vpow.pop %v3727
        %v3729 = vmul.f32 %v3641, 1.442695
        %v3730 = vpow.pop %v3729
        %v3731 = vmul.f32 %v3642, 1.442695
        %v3732 = vpow.pop %v3731
        %v3733 = vmul.f32 %v3643, 1.442695
        %v3734 = vpow.pop %v3733
        %v3735 = vmul.f32 %v3644, 1.442695
        %v3736 = vpow.pop %v3735
        %v3737 = vmul.f32 %v3645, 1.442695
        %v3738 = vpow.pop %v3737
        %v3739 = vmul.f32 %v3646, 1.442695
        %v3740 = vpow.pop %v3739
        %v3741 = vmul.f32 %v3647, 1.442695
        %v3742 = vpow.pop %v3741
        %v3743 = vmul.f32 %v3648, 1.442695
        %v3744 = vpow.pop %v3743
        %v3745 = vmul.f32 %v3649, 1.442695
        %v3746 = vpow.pop %v3745
        %v3747 = vmul.f32 %v3650, 1.442695
        %v3748 = vpow.pop %v3747
        %v3749 = vmul.f32 %v3651, 1.442695
        %v3750 = vpow.pop %v3749
        %v3751 = vmul.f32 %v3652, 1.442695
        %v3752 = vpow.pop %v3751
        %v3753 = vmul.f32 %v3653, 1.442695
        %v3754 = vpow.pop %v3753
        %v3755 = vmul.f32 %v3654, 1.442695
        %v3756 = vpow.pop %v3755
        %v3757 = vmul.f32 %v3655, 1.442695
        %v3758 = vpow.pop %v3757
        %v3759 = vmul.f32 %v3656, 1.442695
        %v3760 = vpow.pop %v3759
        %v3761 = vmul.f32 %v3657, 1.442695
        %v3762 = vpow.pop %v3761
        %v3763 = vmul.f32 %v3658, 1.442695
        %v3764 = vpow.pop %v3763
        %v3765 = vmul.f32 %v3659, 1.442695
        %v3766 = vpow.pop %v3765
        %v3767 = vmul.f32 %v3660, 1.442695
        %v3768 = vpow.pop %v3767
        %v3769 = vmul.f32 %v3661, 1.442695
        %v3770 = vpow.pop %v3769
        %v3771 = vmul.f32 %v3662, 1.442695
        %v3772 = vpow.pop %v3771
        %v3773 = vmul.f32 %v3663, 1.442695
        %v3774 = vpow.pop %v3773
        %v3775 = vmul.f32 %v3664, 1.442695
        %v3776 = vpow.pop %v3775
        %v3777 = vmul.f32 %v3665, 1.442695
        %v3778 = vpow.pop %v3777
        %v3779 = vmul.f32 %v3666, 1.442695
        %v3780 = vpow.pop %v3779
        %v3781 = vmul.f32 %v3667, 1.442695
        %v3782 = vpow.pop %v3781
        %v3783 = vmul.f32 %v3668, 1.442695
        %v3784 = vpow.pop %v3783
        %v3785 = vmul.f32 %v3669, 1.442695
        %v3786 = vpow.pop %v3785
        %v3787 = vmul.f32 %v3670, 1.442695
        %v3788 = vpow.pop %v3787
        %v3789 = vmul.f32 %v3671, 1.442695
        %v3790 = vpow.pop %v3789
        %v3791 = vmul.f32 %v3672, 1.442695
        %v3792 = vpow.pop %v3791
        %v3793 = vmul.f32 %v3673, 1.442695
        %v3794 = vpow.pop %v3793
        %v3795 = vmul.f32 %v3674, 1.442695
        %v3796 = vpow.pop %v3795
        %v3797 = vmul.f32 %v3675, 1.442695
        %v3798 = vpow.pop %v3797
        %v3799 = vmul.f32 %v3676, 1.442695
        %v3800 = vpow.pop %v3799
        %v3801 = vmul.f32 %v3677, 1.442695
        %v3802 = vpow.pop %v3801
        %v3803 = vmul.f32 %v3678, 1.442695
        %v3804 = vpow.pop %v3803
        %v3805 = vmul.f32 %v3679, 1.442695
        %v3806 = vpow.pop %v3805
        %v3807 = vmul.f32 %v3680, 1.442695
        %v3808 = vpow.pop %v3807
        %v3809 = vadd.f32 %v3682, %v3684
        %3810 = vadd.xlane.f32.xlu0 %v3809
        %v3811 = vpop.xlane.xlu0 %3810
        %v3812 = vadd.f32 %v3686, %v3688
        %3813 = vadd.xlane.f32.xlu0 %v3812
        %v3814 = vpop.xlane.xlu0 %3813
        %v3815 = vadd.f32 %v3690, %v3692
        %3816 = vadd.xlane.f32.xlu0 %v3815
        %v3817 = vpop.xlane.xlu0 %3816
        %v3818 = vadd.f32 %v3694, %v3696
        %3819 = vadd.xlane.f32.xlu0 %v3818
        %v3820 = vpop.xlane.xlu0 %3819
        %v3821 = vadd.f32 %v3698, %v3700
        %3822 = vadd.xlane.f32.xlu0 %v3821
        %v3823 = vpop.xlane.xlu0 %3822
        %v3824 = vadd.f32 %v3702, %v3704
        %3825 = vadd.xlane.f32.xlu0 %v3824
        %v3826 = vpop.xlane.xlu0 %3825
        %v3827 = vadd.f32 %v3706, %v3708
        %3828 = vadd.xlane.f32.xlu0 %v3827
        %v3829 = vpop.xlane.xlu0 %3828
        %v3830 = vadd.f32 %v3710, %v3712
        %3831 = vadd.xlane.f32.xlu0 %v3830
        %v3832 = vpop.xlane.xlu0 %3831
        %v3833 = vadd.f32 %v3714, %v3716
        %3834 = vadd.xlane.f32.xlu0 %v3833
        %v3835 = vpop.xlane.xlu0 %3834
        %v3836 = vadd.f32 %v3718, %v3720
        %3837 = vadd.xlane.f32.xlu0 %v3836
        %v3838 = vpop.xlane.xlu0 %3837
        %v3839 = vadd.f32 %v3722, %v3724
        %3840 = vadd.xlane.f32.xlu0 %v3839
        %v3841 = vpop.xlane.xlu0 %3840
        %v3842 = vadd.f32 %v3726, %v3728
        %3843 = vadd.xlane.f32.xlu0 %v3842
        %v3844 = vpop.xlane.xlu0 %3843
        %v3845 = vadd.f32 %v3730, %v3732
        %3846 = vadd.xlane.f32.xlu0 %v3845
        %v3847 = vpop.xlane.xlu0 %3846
        %v3848 = vadd.f32 %v3734, %v3736
        %3849 = vadd.xlane.f32.xlu0 %v3848
        %v3850 = vpop.xlane.xlu0 %3849
        %v3851 = vadd.f32 %v3738, %v3740
        %3852 = vadd.xlane.f32.xlu0 %v3851
        %v3853 = vpop.xlane.xlu0 %3852
        %v3854 = vadd.f32 %v3742, %v3744
        %3855 = vadd.xlane.f32.xlu0 %v3854
        %v3856 = vpop.xlane.xlu0 %3855
        %v3857 = vadd.f32 %v3746, %v3748
        %3858 = vadd.xlane.f32.xlu0 %v3857
        %v3859 = vpop.xlane.xlu0 %3858
        %v3860 = vadd.f32 %v3750, %v3752
        %3861 = vadd.xlane.f32.xlu0 %v3860
        %v3862 = vpop.xlane.xlu0 %3861
        %v3863 = vadd.f32 %v3754, %v3756
        %3864 = vadd.xlane.f32.xlu0 %v3863
        %v3865 = vpop.xlane.xlu0 %3864
        %v3866 = vadd.f32 %v3758, %v3760
        %3867 = vadd.xlane.f32.xlu0 %v3866
        %v3868 = vpop.xlane.xlu0 %3867
        %v3869 = vadd.f32 %v3762, %v3764
        %3870 = vadd.xlane.f32.xlu0 %v3869
        %v3871 = vpop.xlane.xlu0 %3870
        %v3872 = vadd.f32 %v3766, %v3768
        %3873 = vadd.xlane.f32.xlu0 %v3872
        %v3874 = vpop.xlane.xlu0 %3873
        %v3875 = vadd.f32 %v3770, %v3772
        %3876 = vadd.xlane.f32.xlu0 %v3875
        %v3877 = vpop.xlane.xlu0 %3876
        %v3878 = vadd.f32 %v3774, %v3776
        %3879 = vadd.xlane.f32.xlu0 %v3878
        %v3880 = vpop.xlane.xlu0 %3879
        %v3881 = vadd.f32 %v3778, %v3780
        %3882 = vadd.xlane.f32.xlu0 %v3881
        %v3883 = vpop.xlane.xlu0 %3882
        %v3884 = vadd.f32 %v3782, %v3784
        %3885 = vadd.xlane.f32.xlu0 %v3884
        %v3886 = vpop.xlane.xlu0 %3885
        %v3887 = vadd.f32 %v3786, %v3788
        %3888 = vadd.xlane.f32.xlu0 %v3887
        %v3889 = vpop.xlane.xlu0 %3888
        %v3890 = vadd.f32 %v3790, %v3792
        %3891 = vadd.xlane.f32.xlu0 %v3890
        %v3892 = vpop.xlane.xlu0 %3891
        %v3893 = vadd.f32 %v3794, %v3796
        %3894 = vadd.xlane.f32.xlu0 %v3893
        %v3895 = vpop.xlane.xlu0 %3894
        %v3896 = vadd.f32 %v3798, %v3800
        %3897 = vadd.xlane.f32.xlu0 %v3896
        %v3898 = vpop.xlane.xlu0 %3897
        %v3899 = vadd.f32 %v3802, %v3804
        %3900 = vadd.xlane.f32.xlu0 %v3899
        %v3901 = vpop.xlane.xlu0 %3900
        %v3902 = vadd.f32 %v3806, %v3808
        %3903 = vadd.xlane.f32.xlu0 %v3902
        %v3904 = vpop.xlane.xlu0 %3903
        %v3905 = vrcp.pop %v3811
        %v3906 = vrcp.pop %v3814
        %v3907 = vrcp.pop %v3817
        %v3908 = vrcp.pop %v3820
        %v3909 = vrcp.pop %v3823
        %v3910 = vrcp.pop %v3826
        %v3911 = vrcp.pop %v3829
        %v3912 = vrcp.pop %v3832
        %v3913 = vrcp.pop %v3835
        %v3914 = vrcp.pop %v3838
        %v3915 = vrcp.pop %v3841
        %v3916 = vrcp.pop %v3844
        %v3917 = vrcp.pop %v3847
        %v3918 = vrcp.pop %v3850
        %v3919 = vrcp.pop %v3853
        %v3920 = vrcp.pop %v3856
        %v3921 = vrcp.pop %v3859
        %v3922 = vrcp.pop %v3862
        %v3923 = vrcp.pop %v3865
        %v3924 = vrcp.pop %v3868
        %v3925 = vrcp.pop %v3871
        %v3926 = vrcp.pop %v3874
        %v3927 = vrcp.pop %v3877
        %v3928 = vrcp.pop %v3880
        %v3929 = vrcp.pop %v3883
        %v3930 = vrcp.pop %v3886
        %v3931 = vrcp.pop %v3889
        %v3932 = vrcp.pop %v3892
        %v3933 = vrcp.pop %v3895
        %v3934 = vrcp.pop %v3898
        %v3935 = vrcp.pop %v3901
        %v3936 = vrcp.pop %v3904
        %v3937 = vmul.f32 %v3905, 0.00390625
        %v3938 = vmul.f32 %v3906, 0.00390625
        %v3939 = vmul.f32 %v3907, 0.00390625
        %v3940 = vmul.f32 %v3908, 0.00390625
        %v3941 = vmul.f32 %v3909, 0.00390625
        %v3942 = vmul.f32 %v3910, 0.00390625
        %v3943 = vmul.f32 %v3911, 0.00390625
        %v3944 = vmul.f32 %v3912, 0.00390625
        %v3945 = vmul.f32 %v3913, 0.00390625
        %v3946 = vmul.f32 %v3914, 0.00390625
        %v3947 = vmul.f32 %v3915, 0.00390625
        %v3948 = vmul.f32 %v3916, 0.00390625
        %v3949 = vmul.f32 %v3917, 0.00390625
        %v3950 = vmul.f32 %v3918, 0.00390625
        %v3951 = vmul.f32 %v3919, 0.00390625
        %v3952 = vmul.f32 %v3920, 0.00390625
        %v3953 = vmul.f32 %v3921, 0.00390625
        %v3954 = vmul.f32 %v3922, 0.00390625
        %v3955 = vmul.f32 %v3923, 0.00390625
        %v3956 = vmul.f32 %v3924, 0.00390625
        %v3957 = vmul.f32 %v3925, 0.00390625
        %v3958 = vmul.f32 %v3926, 0.00390625
        %v3959 = vmul.f32 %v3927, 0.00390625
        %v3960 = vmul.f32 %v3928, 0.00390625
        %v3961 = vmul.f32 %v3929, 0.00390625
        %v3962 = vmul.f32 %v3930, 0.00390625
        %v3963 = vmul.f32 %v3931, 0.00390625
        %v3964 = vmul.f32 %v3932, 0.00390625
        %v3965 = vmul.f32 %v3933, 0.00390625
        %v3966 = vmul.f32 %v3934, 0.00390625
        %v3967 = vmul.f32 %v3935, 0.00390625
        %v3968 = vmul.f32 %v3936, 0.00390625
        %v3969 = vmul.f32 %v3682, %v3937
        %v3970 = vmul.f32 %v3684, %v3937
        %v3971 = vmul.f32 %v3686, %v3938
        %v3972 = vmul.f32 %v3688, %v3938
        %v3973 = vmul.f32 %v3690, %v3939
        %v3974 = vmul.f32 %v3692, %v3939
        %v3975 = vmul.f32 %v3694, %v3940
        %v3976 = vmul.f32 %v3696, %v3940
        %v3977 = vmul.f32 %v3698, %v3941
        %v3978 = vmul.f32 %v3700, %v3941
        %v3979 = vmul.f32 %v3702, %v3942
        %v3980 = vmul.f32 %v3704, %v3942
        %v3981 = vmul.f32 %v3706, %v3943
        %v3982 = vmul.f32 %v3708, %v3943
        %v3983 = vmul.f32 %v3710, %v3944
        %v3984 = vmul.f32 %v3712, %v3944
        %v3985 = vmul.f32 %v3714, %v3945
        %v3986 = vmul.f32 %v3716, %v3945
        %v3987 = vmul.f32 %v3718, %v3946
        %v3988 = vmul.f32 %v3720, %v3946
        %v3989 = vmul.f32 %v3722, %v3947
        %v3990 = vmul.f32 %v3724, %v3947
        %v3991 = vmul.f32 %v3726, %v3948
        %v3992 = vmul.f32 %v3728, %v3948
        %v3993 = vmul.f32 %v3730, %v3949
        %v3994 = vmul.f32 %v3732, %v3949
        %v3995 = vmul.f32 %v3734, %v3950
        %v3996 = vmul.f32 %v3736, %v3950
        %v3997 = vmul.f32 %v3738, %v3951
        %v3998 = vmul.f32 %v3740, %v3951
        %v3999 = vmul.f32 %v3742, %v3952
        %v4000 = vmul.f32 %v3744, %v3952
        %v4001 = vmul.f32 %v3746, %v3953
        %v4002 = vmul.f32 %v3748, %v3953
        %v4003 = vmul.f32 %v3750, %v3954
        %v4004 = vmul.f32 %v3752, %v3954
        %v4005 = vmul.f32 %v3754, %v3955
        %v4006 = vmul.f32 %v3756, %v3955
        %v4007 = vmul.f32 %v3758, %v3956
        %v4008 = vmul.f32 %v3760, %v3956
        %v4009 = vmul.f32 %v3762, %v3957
        %v4010 = vmul.f32 %v3764, %v3957
        %v4011 = vmul.f32 %v3766, %v3958
        %v4012 = vmul.f32 %v3768, %v3958
        %v4013 = vmul.f32 %v3770, %v3959
        %v4014 = vmul.f32 %v3772, %v3959
        %v4015 = vmul.f32 %v3774, %v3960
        %v4016 = vmul.f32 %v3776, %v3960
        %v4017 = vmul.f32 %v3778, %v3961
        %v4018 = vmul.f32 %v3780, %v3961
        %v4019 = vmul.f32 %v3782, %v3962
        %v4020 = vmul.f32 %v3784, %v3962
        %v4021 = vmul.f32 %v3786, %v3963
        %v4022 = vmul.f32 %v3788, %v3963
        %v4023 = vmul.f32 %v3790, %v3964
        %v4024 = vmul.f32 %v3792, %v3964
        %v4025 = vmul.f32 %v3794, %v3965
        %v4026 = vmul.f32 %v3796, %v3965
        %v4027 = vmul.f32 %v3798, %v3966
        %v4028 = vmul.f32 %v3800, %v3966
        %v4029 = vmul.f32 %v3802, %v3967
        %v4030 = vmul.f32 %v3804, %v3967
        %v4031 = vmul.f32 %v3806, %v3968
        %v4032 = vmul.f32 %v3808, %v3968
        %v4033 = vpack.c.bf16 %v3971, %v3969
        %v4034 = vpack.c.bf16 %v3972, %v3970
        %v4035 = vpack.c.bf16 %v3975, %v3973
        %v4036 = vpack.c.bf16 %v3976, %v3974
        %v4037 = vpack.c.bf16 %v3979, %v3977
        %v4038 = vpack.c.bf16 %v3980, %v3978
        %v4039 = vpack.c.bf16 %v3983, %v3981
        %v4040 = vpack.c.bf16 %v3984, %v3982
        %v4041 = vpack.c.bf16 %v3987, %v3985
        %v4042 = vpack.c.bf16 %v3988, %v3986
        %v4043 = vpack.c.bf16 %v3991, %v3989
        %v4044 = vpack.c.bf16 %v3992, %v3990
        %v4045 = vpack.c.bf16 %v3995, %v3993
        %v4046 = vpack.c.bf16 %v3996, %v3994
        %v4047 = vpack.c.bf16 %v3999, %v3997
        %v4048 = vpack.c.bf16 %v4000, %v3998
        %v4049 = vpack.c.bf16 %v4003, %v4001
        %v4050 = vpack.c.bf16 %v4004, %v4002
        %v4051 = vpack.c.bf16 %v4007, %v4005
        %v4052 = vpack.c.bf16 %v4008, %v4006
        %v4053 = vpack.c.bf16 %v4011, %v4009
        %v4054 = vpack.c.bf16 %v4012, %v4010
        %v4055 = vpack.c.bf16 %v4015, %v4013
        %v4056 = vpack.c.bf16 %v4016, %v4014
        %v4057 = vpack.c.bf16 %v4019, %v4017
        %v4058 = vpack.c.bf16 %v4020, %v4018
        %v4059 = vpack.c.bf16 %v4023, %v4021
        %v4060 = vpack.c.bf16 %v4024, %v4022
        %v4061 = vpack.c.bf16 %v4027, %v4025
        %v4062 = vpack.c.bf16 %v4028, %v4026
        %v4063 = vpack.c.bf16 %v4031, %v4029
        %v4064 = vpack.c.bf16 %v4032, %v4030
        %4065 = vmatprep.subr.bf16.mxu0 %v4034
        %4066 = vmatpush1.bf16.msra.mxu0 %v4033
        %4067 = vmatprep.subr.bf16.mxu0 %v4036
        %4068 = vmatpush1.bf16.msra.mxu0 %v4035
        %4069 = vmatprep.subr.bf16.mxu0 %v4038
        %4070 = vmatpush1.bf16.msra.mxu0 %v4037
        %4071 = vmatprep.subr.bf16.mxu0 %v4040
        %4072 = vmatpush1.bf16.msra.mxu0 %v4039
        %4073 = vmatprep.subr.bf16.mxu0 %v4042
        %4074 = vmatpush1.bf16.msra.mxu0 %v4041
        %4075 = vmatprep.subr.bf16.mxu0 %v4044
        %4076 = vmatpush1.bf16.msra.mxu0 %v4043
        %4077 = vmatprep.subr.bf16.mxu0 %v4046
        %4078 = vmatpush1.bf16.msra.mxu0 %v4045
        %4079 = vmatprep.subr.bf16.mxu0 %v4048
        %4080 = vmatpush1.bf16.msra.mxu0 %v4047
        %4081 = vmatprep.subr.bf16.mxu0 %v4050
        %4082 = vmatpush1.bf16.msra.mxu0 %v4049
        %4083 = vmatprep.subr.bf16.mxu0 %v4052
        %4084 = vmatpush1.bf16.msra.mxu0 %v4051
        %4085 = vmatprep.subr.bf16.mxu0 %v4054
        %4086 = vmatpush1.bf16.msra.mxu0 %v4053
        %4087 = vmatprep.subr.bf16.mxu0 %v4056
        %4088 = vmatpush1.bf16.msra.mxu0 %v4055
        %4089 = vmatprep.subr.bf16.mxu0 %v4058
        %4090 = vmatpush1.bf16.msra.mxu0 %v4057
        %4091 = vmatprep.subr.bf16.mxu0 %v4060
        %4092 = vmatpush1.bf16.msra.mxu0 %v4059
        %4093 = vmatprep.subr.bf16.mxu0 %v4062
        %4094 = vmatpush1.bf16.msra.mxu0 %v4061
        %4095 = vmatprep.subr.bf16.mxu0 %v4064
        %4096 = vmatpush1.bf16.msra.mxu0 %v4063
        %4097 = vmatprep.mubr.bf16.mxu0 1065369472
        %4098 = vmatmul.mubr.bf16.gmra.mrb[0].mxu0 1065369472
        %v4099 = vpop.f32.mrb[0].mxu0
        %v4100 = vadd.f32 0.0, %v4099
        %v4101 = vpop.f32.mrb[0].mxu0
        %v4102 = vadd.f32 0.0, %v4101
        %v4103 = vpop.f32.mrb[0].mxu0
        %v4104 = vpop.f32.mrb[0].mxu0
        %4105 = vdwg.mxu0
        %v4106 = vpack.c.bf16 %v4100, %v4100
        %v4107 = vpack.c.bf16 %v4102, %v4102
        %4124 = vrot.lane.b32.xlu0 %v2201, 96
        %v4125 = vpop.permute.xlu0 %4124
        %4126 = vrot.lane.b32.xlu0 %v2202, 96
        %v4127 = vpop.permute.xlu0 %4126
        %4128 = vrot.lane.b32.xlu0 %v2203, 96
        %v4129 = vpop.permute.xlu0 %4128
        %4130 = vrot.lane.b32.xlu0 %v2204, 96
        %v4131 = vpop.permute.xlu0 %4130
        %4132 = vrot.lane.b32.xlu0 %v2205, 96
        %v4133 = vpop.permute.xlu0 %4132
        %4134 = vrot.lane.b32.xlu0 %v2206, 96
        %v4135 = vpop.permute.xlu0 %4134
        %4136 = vrot.lane.b32.xlu0 %v2207, 96
        %v4137 = vpop.permute.xlu0 %4136
        %4138 = vrot.lane.b32.xlu0 %v2208, 96
        %v4139 = vpop.permute.xlu0 %4138
        %4140 = vrot.lane.b32.xlu0 %v2209, 96
        %v4141 = vpop.permute.xlu0 %4140
        %4142 = vrot.lane.b32.xlu0 %v2210, 96
        %v4143 = vpop.permute.xlu0 %4142
        %4144 = vrot.lane.b32.xlu0 %v2211, 96
        %v4145 = vpop.permute.xlu0 %4144
        %4146 = vrot.lane.b32.xlu0 %v2212, 96
        %v4147 = vpop.permute.xlu0 %4146
        %4148 = vrot.lane.b32.xlu0 %v2213, 96
        %v4149 = vpop.permute.xlu0 %4148
        %4150 = vrot.lane.b32.xlu0 %v2214, 96
        %v4151 = vpop.permute.xlu0 %4150
        %4152 = vrot.lane.b32.xlu0 %v2215, 96
        %v4153 = vpop.permute.xlu0 %4152
        %4154 = vrot.lane.b32.xlu0 %v2216, 96
        %v4155 = vpop.permute.xlu0 %4154
        %4172 = vmatprep.subr.bf16.mxu0 0
        %4173 = vmatpush1.bf16.msra.mxu0 %v4125
        %4174 = vmatprep.subr.bf16.mxu0 0
        %4175 = vmatpush1.bf16.msra.mxu0 %v4127
        %4176 = vmatprep.subr.bf16.mxu0 0
        %4177 = vmatpush1.bf16.msra.mxu0 %v4129
        %4178 = vmatprep.subr.bf16.mxu0 0
        %4179 = vmatpush1.bf16.msra.mxu0 %v4131
        %4180 = vmatprep.subr.bf16.mxu0 0
        %4181 = vmatpush1.bf16.msra.mxu0 %v4133
        %4182 = vmatprep.subr.bf16.mxu0 0
        %4183 = vmatpush1.bf16.msra.mxu0 %v4135
        %4184 = vmatprep.subr.bf16.mxu0 0
        %4185 = vmatpush1.bf16.msra.mxu0 %v4137
        %4186 = vmatprep.subr.bf16.mxu0 0
        %4187 = vmatpush1.bf16.msra.mxu0 %v4139
        %4188 = vmatprep.subr.bf16.mxu0 0
        %4189 = vmatpush1.bf16.msra.mxu0 %v4141
        %4190 = vmatprep.subr.bf16.mxu0 0
        %4191 = vmatpush1.bf16.msra.mxu0 %v4143
        %4192 = vmatprep.subr.bf16.mxu0 0
        %4193 = vmatpush1.bf16.msra.mxu0 %v4145
        %4194 = vmatprep.subr.bf16.mxu0 0
        %4195 = vmatpush1.bf16.msra.mxu0 %v4147
        %4196 = vmatprep.subr.bf16.mxu0 0
        %4197 = vmatpush1.bf16.msra.mxu0 %v4149
        %4198 = vmatprep.subr.bf16.mxu0 0
        %4199 = vmatpush1.bf16.msra.mxu0 %v4151
        %4200 = vmatprep.subr.bf16.mxu0 0
        %4201 = vmatpush1.bf16.msra.mxu0 %v4153
        %4202 = vmatprep.subr.bf16.mxu0 0
        %4203 = vmatpush1.bf16.msra.mxu0 %v4155
        %4204 = vmatprep.mubr.bf16.mxu0 %v4107
        %4205 = vmatmul.mubr.bf16.gmra.mrb[0].mxu0 %v4106
        %v4206 = vpop.f32.mrb[0].mxu0
        %v4207 = vadd.f32 0.0, %v4206
        %v4208 = vpop.f32.mrb[0].mxu0
        %v4209 = vpop.f32.mrb[0].mxu0
        %v4210 = vpop.f32.mrb[0].mxu0
        %4211 = vdwg.mxu0
        %4213 = vrot.lane.b32.xlu0 %v4207, 32
        %v4214 = vpop.permute.xlu0 %4213
        %vm4216 = vcmask 516352
        %4217 = vst.msk [vmem:[#allocation5] sm:$0x1] %vm4216, %v4214
        %4218 = vrot.lane.b32.xlu0 %v2169, 64
        %v4219 = vpop.permute.xlu0 %4218
        %4220 = vrot.lane.b32.xlu0 %v2170, 64
        %v4221 = vpop.permute.xlu0 %4220
        %4222 = vrot.lane.b32.xlu0 %v2171, 64
        %v4223 = vpop.permute.xlu0 %4222
        %4224 = vrot.lane.b32.xlu0 %v2172, 64
        %v4225 = vpop.permute.xlu0 %4224
        %4226 = vrot.lane.b32.xlu0 %v2173, 64
        %v4227 = vpop.permute.xlu0 %4226
        %4228 = vrot.lane.b32.xlu0 %v2174, 64
        %v4229 = vpop.permute.xlu0 %4228
        %4230 = vrot.lane.b32.xlu0 %v2175, 64
        %v4231 = vpop.permute.xlu0 %4230
        %4232 = vrot.lane.b32.xlu0 %v2176, 64
        %v4233 = vpop.permute.xlu0 %4232
        %4234 = vrot.lane.b32.xlu0 %v2177, 64
        %v4235 = vpop.permute.xlu0 %4234
        %4236 = vrot.lane.b32.xlu0 %v2178, 64
        %v4237 = vpop.permute.xlu0 %4236
        %4238 = vrot.lane.b32.xlu0 %v2179, 64
        %v4239 = vpop.permute.xlu0 %4238
        %4240 = vrot.lane.b32.xlu0 %v2180, 64
        %v4241 = vpop.permute.xlu0 %4240
        %4242 = vrot.lane.b32.xlu0 %v2181, 64
        %v4243 = vpop.permute.xlu0 %4242
        %4244 = vrot.lane.b32.xlu0 %v2182, 64
        %v4245 = vpop.permute.xlu0 %4244
        %4246 = vrot.lane.b32.xlu0 %v2183, 64
        %v4247 = vpop.permute.xlu0 %4246
        %4248 = vrot.lane.b32.xlu0 %v2184, 64
        %v4249 = vpop.permute.xlu0 %4248
        %4250 = vrot.lane.b32.xlu0 %v2185, 64
        %v4251 = vpop.permute.xlu0 %4250
        %4252 = vrot.lane.b32.xlu0 %v2186, 64
        %v4253 = vpop.permute.xlu0 %4252
        %4254 = vrot.lane.b32.xlu0 %v2187, 64
        %v4255 = vpop.permute.xlu0 %4254
        %4256 = vrot.lane.b32.xlu0 %v2188, 64
        %v4257 = vpop.permute.xlu0 %4256
        %4258 = vrot.lane.b32.xlu0 %v2189, 64
        %v4259 = vpop.permute.xlu0 %4258
        %4260 = vrot.lane.b32.xlu0 %v2190, 64
        %v4261 = vpop.permute.xlu0 %4260
        %4262 = vrot.lane.b32.xlu0 %v2191, 64
        %v4263 = vpop.permute.xlu0 %4262
        %4264 = vrot.lane.b32.xlu0 %v2192, 64
        %v4265 = vpop.permute.xlu0 %4264
        %4266 = vrot.lane.b32.xlu0 %v2193, 64
        %v4267 = vpop.permute.xlu0 %4266
        %4268 = vrot.lane.b32.xlu0 %v2194, 64
        %v4269 = vpop.permute.xlu0 %4268
        %4270 = vrot.lane.b32.xlu0 %v2195, 64
        %v4271 = vpop.permute.xlu0 %4270
        %4272 = vrot.lane.b32.xlu0 %v2196, 64
        %v4273 = vpop.permute.xlu0 %4272
        %4274 = vrot.lane.b32.xlu0 %v2197, 64
        %v4275 = vpop.permute.xlu0 %4274
        %4276 = vrot.lane.b32.xlu0 %v2198, 64
        %v4277 = vpop.permute.xlu0 %4276
        %4278 = vrot.lane.b32.xlu0 %v2199, 64
        %v4279 = vpop.permute.xlu0 %4278
        %4280 = vrot.lane.b32.xlu0 %v2200, 64
        %v4281 = vpop.permute.xlu0 %4280
        %v4283 = vsel %vm2217, %v4219, 0
        %v4286 = vsel %vm2217, %v4221, 0
        %v4289 = vsel %vm2217, %v4223, 0
        %v4292 = vsel %vm2217, %v4225, 0
        %v4295 = vsel %vm2217, %v4227, 0
        %v4298 = vsel %vm2217, %v4229, 0
        %v4301 = vsel %vm2217, %v4231, 0
        %v4304 = vsel %vm2217, %v4233, 0
        %v4307 = vsel %vm2217, %v4235, 0
        %v4310 = vsel %vm2217, %v4237, 0
        %v4313 = vsel %vm2217, %v4239, 0
        %v4316 = vsel %vm2217, %v4241, 0
        %v4319 = vsel %vm2217, %v4243, 0
        %v4322 = vsel %vm2217, %v4245, 0
        %v4325 = vsel %vm2217, %v4247, 0
        %v4328 = vsel %vm2217, %v4249, 0
        %v4331 = vsel %vm2217, %v4251, 0
        %v4334 = vsel %vm2217, %v4253, 0
        %v4337 = vsel %vm2217, %v4255, 0
        %v4340 = vsel %vm2217, %v4257, 0
        %v4343 = vsel %vm2217, %v4259, 0
        %v4346 = vsel %vm2217, %v4261, 0
        %v4349 = vsel %vm2217, %v4263, 0
        %v4352 = vsel %vm2217, %v4265, 0
        %v4355 = vsel %vm2217, %v4267, 0
        %v4358 = vsel %vm2217, %v4269, 0
        %v4361 = vsel %vm2217, %v4271, 0
        %v4364 = vsel %vm2217, %v4273, 0
        %v4367 = vsel %vm2217, %v4275, 0
        %v4370 = vsel %vm2217, %v4277, 0
        %v4373 = vsel %vm2217, %v4279, 0
        %v4376 = vsel %vm2217, %v4281, 0
        %4378 = vmatprep.subr.bf16.mxu0 0
        %4379 = vmatpush1.bf16.xpose.msra.mxu0 %v4331
        %4380 = vmatprep.subr.bf16.mxu0 0
        %4381 = vmatpush1.bf16.xpose.msra.mxu0 %v4334
        %4382 = vmatprep.subr.bf16.mxu0 0
        %4383 = vmatpush1.bf16.xpose.msra.mxu0 %v4337
        %4384 = vmatprep.subr.bf16.mxu0 0
        %4385 = vmatpush1.bf16.xpose.msra.mxu0 %v4340
        %4386 = vmatprep.subr.bf16.mxu0 0
        %4387 = vmatpush1.bf16.xpose.msra.mxu0 %v4343
        %4388 = vmatprep.subr.bf16.mxu0 0
        %4389 = vmatpush1.bf16.xpose.msra.mxu0 %v4346
        %4390 = vmatprep.subr.bf16.mxu0 0
        %4391 = vmatpush1.bf16.xpose.msra.mxu0 %v4349
        %4392 = vmatprep.subr.bf16.mxu0 0
        %4393 = vmatpush1.bf16.xpose.msra.mxu0 %v4352
        %4394 = vmatprep.subr.bf16.mxu0 0
        %4395 = vmatpush1.bf16.xpose.msra.mxu0 %v4355
        %4396 = vmatprep.subr.bf16.mxu0 0
        %4397 = vmatpush1.bf16.xpose.msra.mxu0 %v4358
        %4398 = vmatprep.subr.bf16.mxu0 0
        %4399 = vmatpush1.bf16.xpose.msra.mxu0 %v4361
        %4400 = vmatprep.subr.bf16.mxu0 0
        %4401 = vmatpush1.bf16.xpose.msra.mxu0 %v4364
        %4402 = vmatprep.subr.bf16.mxu0 0
        %4403 = vmatpush1.bf16.xpose.msra.mxu0 %v4367
        %4404 = vmatprep.subr.bf16.mxu0 0
        %4405 = vmatpush1.bf16.xpose.msra.mxu0 %v4370
        %4406 = vmatprep.subr.bf16.mxu0 0
        %4407 = vmatpush1.bf16.xpose.msra.mxu0 %v4373
        %4408 = vmatprep.subr.bf16.mxu0 0
        %4409 = vmatpush1.bf16.xpose.msra.mxu0 %v4376
        %4410 = vmatprep.mubr.bf16.mxu0 0
        %4411 = vmatmul.mubr.bf16.gmra.mrb[0].mxu0 %v4283
        %v4412 = vpop.f32.mrb[0].mxu0
        %v4413 = vadd.f32 0.0, %v4412
        %v4414 = vpop.f32.mrb[0].mxu0
        %v4415 = vadd.f32 0.0, %v4414
        %v4416 = vpop.f32.mrb[0].mxu0
        %v4417 = vadd.f32 0.0, %v4416
        %v4418 = vpop.f32.mrb[0].mxu0
        %v4419 = vadd.f32 0.0, %v4418
        %4420 = vmatprep.mubr.bf16.mxu0 0
        %4421 = vmatmul.mubr.bf16.gmra.mrb[0].mxu0 %v4286
        %v4422 = vpop.f32.mrb[0].mxu0
        %v4423 = vadd.f32 0.0, %v4422
        %v4424 = vpop.f32.mrb[0].mxu0
        %v4425 = vadd.f32 0.0, %v4424
        %v4426 = vpop.f32.mrb[0].mxu0
        %v4427 = vadd.f32 0.0, %v4426
        %v4428 = vpop.f32.mrb[0].mxu0
        %v4429 = vadd.f32 0.0, %v4428
        %4430 = vmatprep.mubr.bf16.mxu0 0
        %4431 = vmatmul.mubr.bf16.gmra.mrb[0].mxu0 %v4289
        %v4432 = vpop.f32.mrb[0].mxu0
        %v4433 = vadd.f32 0.0, %v4432
        %v4434 = vpop.f32.mrb[0].mxu0
        %v4435 = vadd.f32 0.0, %v4434
        %v4436 = vpop.f32.mrb[0].mxu0
        %v4437 = vadd.f32 0.0, %v4436
        %v4438 = vpop.f32.mrb[0].mxu0
        %v4439 = vadd.f32 0.0, %v4438
        %4440 = vmatprep.mubr.bf16.mxu0 0
        %4441 = vmatmul.mubr.bf16.gmra.mrb[0].mxu0 %v4292
        %v4442 = vpop.f32.mrb[0].mxu0
        %v4443 = vadd.f32 0.0, %v4442
        %v4444 = vpop.f32.mrb[0].mxu0
        %v4445 = vadd.f32 0.0, %v4444
        %v4446 = vpop.f32.mrb[0].mxu0
        %v4447 = vadd.f32 0.0, %v4446
        %v4448 = vpop.f32.mrb[0].mxu0
        %v4449 = vadd.f32 0.0, %v4448
        %4450 = vmatprep.mubr.bf16.mxu0 0
        %4451 = vmatmul.mubr.bf16.gmra.mrb[0].mxu0 %v4295
        %v4452 = vpop.f32.mrb[0].mxu0
        %v4453 = vadd.f32 0.0, %v4452
        %v4454 = vpop.f32.mrb[0].mxu0
        %v4455 = vadd.f32 0.0, %v4454
        %v4456 = vpop.f32.mrb[0].mxu0
        %v4457 = vadd.f32 0.0, %v4456
        %v4458 = vpop.f32.mrb[0].mxu0
        %v4459 = vadd.f32 0.0, %v4458
        %4460 = vmatprep.mubr.bf16.mxu0 0
        %4461 = vmatmul.mubr.bf16.gmra.mrb[0].mxu0 %v4298
        %v4462 = vpop.f32.mrb[0].mxu0
        %v4463 = vadd.f32 0.0, %v4462
        %v4464 = vpop.f32.mrb[0].mxu0
        %v4465 = vadd.f32 0.0, %v4464
        %v4466 = vpop.f32.mrb[0].mxu0
        %v4467 = vadd.f32 0.0, %v4466
        %v4468 = vpop.f32.mrb[0].mxu0
        %v4469 = vadd.f32 0.0, %v4468
        %4470 = vmatprep.mubr.bf16.mxu0 0
        %4471 = vmatmul.mubr.bf16.gmra.mrb[0].mxu0 %v4301
        %v4472 = vpop.f32.mrb[0].mxu0
        %v4473 = vadd.f32 0.0, %v4472
        %v4474 = vpop.f32.mrb[0].mxu0
        %v4475 = vadd.f32 0.0, %v4474
        %v4476 = vpop.f32.mrb[0].mxu0
        %v4477 = vadd.f32 0.0, %v4476
        %v4478 = vpop.f32.mrb[0].mxu0
        %v4479 = vadd.f32 0.0, %v4478
        %4480 = vmatprep.mubr.bf16.mxu0 0
        %4481 = vmatmul.mubr.bf16.gmra.mrb[0].mxu0 %v4304
        %v4482 = vpop.f32.mrb[0].mxu0
        %v4483 = vadd.f32 0.0, %v4482
        %v4484 = vpop.f32.mrb[0].mxu0
        %v4485 = vadd.f32 0.0, %v4484
        %v4486 = vpop.f32.mrb[0].mxu0
        %v4487 = vadd.f32 0.0, %v4486
        %v4488 = vpop.f32.mrb[0].mxu0
        %v4489 = vadd.f32 0.0, %v4488
        %4490 = vmatprep.mubr.bf16.mxu0 0
        %4491 = vmatmul.mubr.bf16.gmra.mrb[0].mxu0 %v4307
        %v4492 = vpop.f32.mrb[0].mxu0
        %v4493 = vadd.f32 0.0, %v4492
        %v4494 = vpop.f32.mrb[0].mxu0
        %v4495 = vadd.f32 0.0, %v4494
        %v4496 = vpop.f32.mrb[0].mxu0
        %v4497 = vadd.f32 0.0, %v4496
        %v4498 = vpop.f32.mrb[0].mxu0
        %v4499 = vadd.f32 0.0, %v4498
        %4500 = vmatprep.mubr.bf16.mxu0 0
        %4501 = vmatmul.mubr.bf16.gmra.mrb[0].mxu0 %v4310
        %v4502 = vpop.f32.mrb[0].mxu0
        %v4503 = vadd.f32 0.0, %v4502
        %v4504 = vpop.f32.mrb[0].mxu0
        %v4505 = vadd.f32 0.0, %v4504
        %v4506 = vpop.f32.mrb[0].mxu0
        %v4507 = vadd.f32 0.0, %v4506
        %v4508 = vpop.f32.mrb[0].mxu0
        %v4509 = vadd.f32 0.0, %v4508
        %4510 = vmatprep.mubr.bf16.mxu0 0
        %4511 = vmatmul.mubr.bf16.gmra.mrb[0].mxu0 %v4313
        %v4512 = vpop.f32.mrb[0].mxu0
        %v4513 = vadd.f32 0.0, %v4512
        %v4514 = vpop.f32.mrb[0].mxu0
        %v4515 = vadd.f32 0.0, %v4514
        %v4516 = vpop.f32.mrb[0].mxu0
        %v4517 = vadd.f32 0.0, %v4516
        %v4518 = vpop.f32.mrb[0].mxu0
        %v4519 = vadd.f32 0.0, %v4518
        %4520 = vmatprep.mubr.bf16.mxu0 0
        %4521 = vmatmul.mubr.bf16.gmra.mrb[0].mxu0 %v4316
        %v4522 = vpop.f32.mrb[0].mxu0
        %v4523 = vadd.f32 0.0, %v4522
        %v4524 = vpop.f32.mrb[0].mxu0
        %v4525 = vadd.f32 0.0, %v4524
        %v4526 = vpop.f32.mrb[0].mxu0
        %v4527 = vadd.f32 0.0, %v4526
        %v4528 = vpop.f32.mrb[0].mxu0
        %v4529 = vadd.f32 0.0, %v4528
        %4530 = vmatprep.mubr.bf16.mxu0 0
        %4531 = vmatmul.mubr.bf16.gmra.mrb[0].mxu0 %v4319
        %v4532 = vpop.f32.mrb[0].mxu0
        %v4533 = vadd.f32 0.0, %v4532
        %v4534 = vpop.f32.mrb[0].mxu0
        %v4535 = vadd.f32 0.0, %v4534
        %v4536 = vpop.f32.mrb[0].mxu0
        %v4537 = vadd.f32 0.0, %v4536
        %v4538 = vpop.f32.mrb[0].mxu0
        %v4539 = vadd.f32 0.0, %v4538
        %4540 = vmatprep.mubr.bf16.mxu0 0
        %4541 = vmatmul.mubr.bf16.gmra.mrb[0].mxu0 %v4322
        %v4542 = vpop.f32.mrb[0].mxu0
        %v4543 = vadd.f32 0.0, %v4542
        %v4544 = vpop.f32.mrb[0].mxu0
        %v4545 = vadd.f32 0.0, %v4544
        %v4546 = vpop.f32.mrb[0].mxu0
        %v4547 = vadd.f32 0.0, %v4546
        %v4548 = vpop.f32.mrb[0].mxu0
        %v4549 = vadd.f32 0.0, %v4548
        %4550 = vmatprep.mubr.bf16.mxu0 0
        %4551 = vmatmul.mubr.bf16.gmra.mrb[0].mxu0 %v4325
        %v4552 = vpop.f32.mrb[0].mxu0
        %v4553 = vadd.f32 0.0, %v4552
        %v4554 = vpop.f32.mrb[0].mxu0
        %v4555 = vadd.f32 0.0, %v4554
        %v4556 = vpop.f32.mrb[0].mxu0
        %v4557 = vadd.f32 0.0, %v4556
        %v4558 = vpop.f32.mrb[0].mxu0
        %v4559 = vadd.f32 0.0, %v4558
        %4560 = vmatprep.mubr.bf16.mxu0 0
        %4561 = vmatmul.mubr.bf16.gmra.mrb[0].mxu0 %v4328
        %v4562 = vpop.f32.mrb[0].mxu0
        %v4563 = vadd.f32 0.0, %v4562
        %v4564 = vpop.f32.mrb[0].mxu0
        %v4565 = vadd.f32 0.0, %v4564
        %v4566 = vpop.f32.mrb[0].mxu0
        %v4567 = vadd.f32 0.0, %v4566
        %v4568 = vpop.f32.mrb[0].mxu0
        %v4569 = vadd.f32 0.0, %v4568
        %4570 = vdwg.mxu0
        %v4571 = vmax.f32 %v4413, %v4415
        %4572 = vmax.xlane.f32.xlu0 %v4571
        %v4573 = vpop.xlane.xlu0 %4572
        %v4574 = vmax.f32 %v4417, %v4419
        %4575 = vmax.xlane.f32.xlu0 %v4574
        %v4576 = vpop.xlane.xlu0 %4575
        %v4577 = vmax.f32 %v4423, %v4425
        %4578 = vmax.xlane.f32.xlu0 %v4577
        %v4579 = vpop.xlane.xlu0 %4578
        %v4580 = vmax.f32 %v4427, %v4429
        %4581 = vmax.xlane.f32.xlu0 %v4580
        %v4582 = vpop.xlane.xlu0 %4581
        %v4583 = vmax.f32 %v4433, %v4435
        %4584 = vmax.xlane.f32.xlu0 %v4583
        %v4585 = vpop.xlane.xlu0 %4584
        %v4586 = vmax.f32 %v4437, %v4439
        %4587 = vmax.xlane.f32.xlu0 %v4586
        %v4588 = vpop.xlane.xlu0 %4587
        %v4589 = vmax.f32 %v4443, %v4445
        %4590 = vmax.xlane.f32.xlu0 %v4589
        %v4591 = vpop.xlane.xlu0 %4590
        %v4592 = vmax.f32 %v4447, %v4449
        %4593 = vmax.xlane.f32.xlu0 %v4592
        %v4594 = vpop.xlane.xlu0 %4593
        %v4595 = vmax.f32 %v4453, %v4455
        %4596 = vmax.xlane.f32.xlu0 %v4595
        %v4597 = vpop.xlane.xlu0 %4596
        %v4598 = vmax.f32 %v4457, %v4459
        %4599 = vmax.xlane.f32.xlu0 %v4598
        %v4600 = vpop.xlane.xlu0 %4599
        %v4601 = vmax.f32 %v4463, %v4465
        %4602 = vmax.xlane.f32.xlu0 %v4601
        %v4603 = vpop.xlane.xlu0 %4602
        %v4604 = vmax.f32 %v4467, %v4469
        %4605 = vmax.xlane.f32.xlu0 %v4604
        %v4606 = vpop.xlane.xlu0 %4605
        %v4607 = vmax.f32 %v4473, %v4475
        %4608 = vmax.xlane.f32.xlu0 %v4607
        %v4609 = vpop.xlane.xlu0 %4608
        %v4610 = vmax.f32 %v4477, %v4479
        %4611 = vmax.xlane.f32.xlu0 %v4610
        %v4612 = vpop.xlane.xlu0 %4611
        %v4613 = vmax.f32 %v4483, %v4485
        %4614 = vmax.xlane.f32.xlu0 %v4613
        %v4615 = vpop.xlane.xlu0 %4614
        %v4616 = vmax.f32 %v4487, %v4489
        %4617 = vmax.xlane.f32.xlu0 %v4616
        %v4618 = vpop.xlane.xlu0 %4617
        %v4619 = vmax.f32 %v4493, %v4495
        %4620 = vmax.xlane.f32.xlu0 %v4619
        %v4621 = vpop.xlane.xlu0 %4620
        %v4622 = vmax.f32 %v4497, %v4499
        %4623 = vmax.xlane.f32.xlu0 %v4622
        %v4624 = vpop.xlane.xlu0 %4623
        %v4625 = vmax.f32 %v4503, %v4505
        %4626 = vmax.xlane.f32.xlu0 %v4625
        %v4627 = vpop.xlane.xlu0 %4626
        %v4628 = vmax.f32 %v4507, %v4509
        %4629 = vmax.xlane.f32.xlu0 %v4628
        %v4630 = vpop.xlane.xlu0 %4629
        %v4631 = vmax.f32 %v4513, %v4515
        %4632 = vmax.xlane.f32.xlu0 %v4631
        %v4633 = vpop.xlane.xlu0 %4632
        %v4634 = vmax.f32 %v4517, %v4519
        %4635 = vmax.xlane.f32.xlu0 %v4634
        %v4636 = vpop.xlane.xlu0 %4635
        %v4637 = vmax.f32 %v4523, %v4525
        %4638 = vmax.xlane.f32.xlu0 %v4637
        %v4639 = vpop.xlane.xlu0 %4638
        %v4640 = vmax.f32 %v4527, %v4529
        %4641 = vmax.xlane.f32.xlu0 %v4640
        %v4642 = vpop.xlane.xlu0 %4641
        %v4643 = vmax.f32 %v4533, %v4535
        %4644 = vmax.xlane.f32.xlu0 %v4643
        %v4645 = vpop.xlane.xlu0 %4644
        %v4646 = vmax.f32 %v4537, %v4539
        %4647 = vmax.xlane.f32.xlu0 %v4646
        %v4648 = vpop.xlane.xlu0 %4647
        %v4649 = vmax.f32 %v4543, %v4545
        %4650 = vmax.xlane.f32.xlu0 %v4649
        %v4651 = vpop.xlane.xlu0 %4650
        %v4652 = vmax.f32 %v4547, %v4549
        %4653 = vmax.xlane.f32.xlu0 %v4652
        %v4654 = vpop.xlane.xlu0 %4653
        %v4655 = vmax.f32 %v4553, %v4555
        %4656 = vmax.xlane.f32.xlu0 %v4655
        %v4657 = vpop.xlane.xlu0 %4656
        %v4658 = vmax.f32 %v4557, %v4559
        %4659 = vmax.xlane.f32.xlu0 %v4658
        %v4660 = vpop.xlane.xlu0 %4659
        %v4661 = vmax.f32 %v4563, %v4565
        %4662 = vmax.xlane.f32.xlu0 %v4661
        %v4663 = vpop.xlane.xlu0 %4662
        %v4664 = vmax.f32 %v4567, %v4569
        %4665 = vmax.xlane.f32.xlu0 %v4664
        %v4666 = vpop.xlane.xlu0 %4665
        %v4667 = vsub.f32 %v4413, %v4573
        %v4668 = vsub.f32 %v4415, %v4573
        %v4669 = vsub.f32 %v4417, %v4576
        %v4670 = vsub.f32 %v4419, %v4576
        %v4671 = vsub.f32 %v4423, %v4579
        %v4672 = vsub.f32 %v4425, %v4579
        %v4673 = vsub.f32 %v4427, %v4582
        %v4674 = vsub.f32 %v4429, %v4582
        %v4675 = vsub.f32 %v4433, %v4585
        %v4676 = vsub.f32 %v4435, %v4585
        %v4677 = vsub.f32 %v4437, %v4588
        %v4678 = vsub.f32 %v4439, %v4588
        %v4679 = vsub.f32 %v4443, %v4591
        %v4680 = vsub.f32 %v4445, %v4591
        %v4681 = vsub.f32 %v4447, %v4594
        %v4682 = vsub.f32 %v4449, %v4594
        %v4683 = vsub.f32 %v4453, %v4597
        %v4684 = vsub.f32 %v4455, %v4597
        %v4685 = vsub.f32 %v4457, %v4600
        %v4686 = vsub.f32 %v4459, %v4600
        %v4687 = vsub.f32 %v4463, %v4603
        %v4688 = vsub.f32 %v4465, %v4603
        %v4689 = vsub.f32 %v4467, %v4606
        %v4690 = vsub.f32 %v4469, %v4606
        %v4691 = vsub.f32 %v4473, %v4609
        %v4692 = vsub.f32 %v4475, %v4609
        %v4693 = vsub.f32 %v4477, %v4612
        %v4694 = vsub.f32 %v4479, %v4612
        %v4695 = vsub.f32 %v4483, %v4615
        %v4696 = vsub.f32 %v4485, %v4615
        %v4697 = vsub.f32 %v4487, %v4618
        %v4698 = vsub.f32 %v4489, %v4618
        %v4699 = vsub.f32 %v4493, %v4621
        %v4700 = vsub.f32 %v4495, %v4621
        %v4701 = vsub.f32 %v4497, %v4624
        %v4702 = vsub.f32 %v4499, %v4624
        %v4703 = vsub.f32 %v4503, %v4627
        %v4704 = vsub.f32 %v4505, %v4627
        %v4705 = vsub.f32 %v4507, %v4630
        %v4706 = vsub.f32 %v4509, %v4630
        %v4707 = vsub.f32 %v4513, %v4633
        %v4708 = vsub.f32 %v4515, %v4633
        %v4709 = vsub.f32 %v4517, %v4636
        %v4710 = vsub.f32 %v4519, %v4636
        %v4711 = vsub.f32 %v4523, %v4639
        %v4712 = vsub.f32 %v4525, %v4639
        %v4713 = vsub.f32 %v4527, %v4642
        %v4714 = vsub.f32 %v4529, %v4642
        %v4715 = vsub.f32 %v4533, %v4645
        %v4716 = vsub.f32 %v4535, %v4645
        %v4717 = vsub.f32 %v4537, %v4648
        %v4718 = vsub.f32 %v4539, %v4648
        %v4719 = vsub.f32 %v4543, %v4651
        %v4720 = vsub.f32 %v4545, %v4651
        %v4721 = vsub.f32 %v4547, %v4654
        %v4722 = vsub.f32 %v4549, %v4654
        %v4723 = vsub.f32 %v4553, %v4657
        %v4724 = vsub.f32 %v4555, %v4657
        %v4725 = vsub.f32 %v4557, %v4660
        %v4726 = vsub.f32 %v4559, %v4660
        %v4727 = vsub.f32 %v4563, %v4663
        %v4728 = vsub.f32 %v4565, %v4663
        %v4729 = vsub.f32 %v4567, %v4666
        %v4730 = vsub.f32 %v4569, %v4666
        %v4731 = vmul.f32 %v4667, 1.442695
        %v4732 = vpow.pop %v4731
        %v4733 = vmul.f32 %v4668, 1.442695
        %v4734 = vpow.pop %v4733
        %v4735 = vmul.f32 %v4669, 1.442695
        %v4736 = vpow.pop %v4735
        %v4737 = vmul.f32 %v4670, 1.442695
        %v4738 = vpow.pop %v4737
        %v4739 = vmul.f32 %v4671, 1.442695
        %v4740 = vpow.pop %v4739
        %v4741 = vmul.f32 %v4672, 1.442695
        %v4742 = vpow.pop %v4741
        %v4743 = vmul.f32 %v4673, 1.442695
        %v4744 = vpow.pop %v4743
        %v4745 = vmul.f32 %v4674, 1.442695
        %v4746 = vpow.pop %v4745
        %v4747 = vmul.f32 %v4675, 1.442695
        %v4748 = vpow.pop %v4747
        %v4749 = vmul.f32 %v4676, 1.442695
        %v4750 = vpow.pop %v4749
        %v4751 = vmul.f32 %v4677, 1.442695
        %v4752 = vpow.pop %v4751
        %v4753 = vmul.f32 %v4678, 1.442695
        %v4754 = vpow.pop %v4753
        %v4755 = vmul.f32 %v4679, 1.442695
        %v4756 = vpow.pop %v4755
        %v4757 = vmul.f32 %v4680, 1.442695
        %v4758 = vpow.pop %v4757
        %v4759 = vmul.f32 %v4681, 1.442695
        %v4760 = vpow.pop %v4759
        %v4761 = vmul.f32 %v4682, 1.442695
        %v4762 = vpow.pop %v4761
        %v4763 = vmul.f32 %v4683, 1.442695
        %v4764 = vpow.pop %v4763
        %v4765 = vmul.f32 %v4684, 1.442695
        %v4766 = vpow.pop %v4765
        %v4767 = vmul.f32 %v4685, 1.442695
        %v4768 = vpow.pop %v4767
        %v4769 = vmul.f32 %v4686, 1.442695
        %v4770 = vpow.pop %v4769
        %v4771 = vmul.f32 %v4687, 1.442695
        %v4772 = vpow.pop %v4771
        %v4773 = vmul.f32 %v4688, 1.442695
        %v4774 = vpow.pop %v4773
        %v4775 = vmul.f32 %v4689, 1.442695
        %v4776 = vpow.pop %v4775
        %v4777 = vmul.f32 %v4690, 1.442695
        %v4778 = vpow.pop %v4777
        %v4779 = vmul.f32 %v4691, 1.442695
        %v4780 = vpow.pop %v4779
        %v4781 = vmul.f32 %v4692, 1.442695
        %v4782 = vpow.pop %v4781
        %v4783 = vmul.f32 %v4693, 1.442695
        %v4784 = vpow.pop %v4783
        %v4785 = vmul.f32 %v4694, 1.442695
        %v4786 = vpow.pop %v4785
        %v4787 = vmul.f32 %v4695, 1.442695
        %v4788 = vpow.pop %v4787
        %v4789 = vmul.f32 %v4696, 1.442695
        %v4790 = vpow.pop %v4789
        %v4791 = vmul.f32 %v4697, 1.442695
        %v4792 = vpow.pop %v4791
        %v4793 = vmul.f32 %v4698, 1.442695
        %v4794 = vpow.pop %v4793
        %v4795 = vmul.f32 %v4699, 1.442695
        %v4796 = vpow.pop %v4795
        %v4797 = vmul.f32 %v4700, 1.442695
        %v4798 = vpow.pop %v4797
        %v4799 = vmul.f32 %v4701, 1.442695
        %v4800 = vpow.pop %v4799
        %v4801 = vmul.f32 %v4702, 1.442695
        %v4802 = vpow.pop %v4801
        %v4803 = vmul.f32 %v4703, 1.442695
        %v4804 = vpow.pop %v4803
        %v4805 = vmul.f32 %v4704, 1.442695
        %v4806 = vpow.pop %v4805
        %v4807 = vmul.f32 %v4705, 1.442695
        %v4808 = vpow.pop %v4807
        %v4809 = vmul.f32 %v4706, 1.442695
        %v4810 = vpow.pop %v4809
        %v4811 = vmul.f32 %v4707, 1.442695
        %v4812 = vpow.pop %v4811
        %v4813 = vmul.f32 %v4708, 1.442695
        %v4814 = vpow.pop %v4813
        %v4815 = vmul.f32 %v4709, 1.442695
        %v4816 = vpow.pop %v4815
        %v4817 = vmul.f32 %v4710, 1.442695
        %v4818 = vpow.pop %v4817
        %v4819 = vmul.f32 %v4711, 1.442695
        %v4820 = vpow.pop %v4819
        %v4821 = vmul.f32 %v4712, 1.442695
        %v4822 = vpow.pop %v4821
        %v4823 = vmul.f32 %v4713, 1.442695
        %v4824 = vpow.pop %v4823
        %v4825 = vmul.f32 %v4714, 1.442695
        %v4826 = vpow.pop %v4825
        %v4827 = vmul.f32 %v4715, 1.442695
        %v4828 = vpow.pop %v4827
        %v4829 = vmul.f32 %v4716, 1.442695
        %v4830 = vpow.pop %v4829
        %v4831 = vmul.f32 %v4717, 1.442695
        %v4832 = vpow.pop %v4831
        %v4833 = vmul.f32 %v4718, 1.442695
        %v4834 = vpow.pop %v4833
        %v4835 = vmul.f32 %v4719, 1.442695
        %v4836 = vpow.pop %v4835
        %v4837 = vmul.f32 %v4720, 1.442695
        %v4838 = vpow.pop %v4837
        %v4839 = vmul.f32 %v4721, 1.442695
        %v4840 = vpow.pop %v4839
        %v4841 = vmul.f32 %v4722, 1.442695
        %v4842 = vpow.pop %v4841
        %v4843 = vmul.f32 %v4723, 1.442695
        %v4844 = vpow.pop %v4843
        %v4845 = vmul.f32 %v4724, 1.442695
        %v4846 = vpow.pop %v4845
        %v4847 = vmul.f32 %v4725, 1.442695
        %v4848 = vpow.pop %v4847
        %v4849 = vmul.f32 %v4726, 1.442695
        %v4850 = vpow.pop %v4849
        %v4851 = vmul.f32 %v4727, 1.442695
        %v4852 = vpow.pop %v4851
        %v4853 = vmul.f32 %v4728, 1.442695
        %v4854 = vpow.pop %v4853
        %v4855 = vmul.f32 %v4729, 1.442695
        %v4856 = vpow.pop %v4855
        %v4857 = vmul.f32 %v4730, 1.442695
        %v4858 = vpow.pop %v4857
        %v4859 = vadd.f32 %v4732, %v4734
        %4860 = vadd.xlane.f32.xlu0 %v4859
        %v4861 = vpop.xlane.xlu0 %4860
        %v4862 = vadd.f32 %v4736, %v4738
        %4863 = vadd.xlane.f32.xlu0 %v4862
        %v4864 = vpop.xlane.xlu0 %4863
        %v4865 = vadd.f32 %v4740, %v4742
        %4866 = vadd.xlane.f32.xlu0 %v4865
        %v4867 = vpop.xlane.xlu0 %4866
        %v4868 = vadd.f32 %v4744, %v4746
        %4869 = vadd.xlane.f32.xlu0 %v4868
        %v4870 = vpop.xlane.xlu0 %4869
        %v4871 = vadd.f32 %v4748, %v4750
        %4872 = vadd.xlane.f32.xlu0 %v4871
        %v4873 = vpop.xlane.xlu0 %4872
        %v4874 = vadd.f32 %v4752, %v4754
        %4875 = vadd.xlane.f32.xlu0 %v4874
        %v4876 = vpop.xlane.xlu0 %4875
        %v4877 = vadd.f32 %v4756, %v4758
        %4878 = vadd.xlane.f32.xlu0 %v4877
        %v4879 = vpop.xlane.xlu0 %4878
        %v4880 = vadd.f32 %v4760, %v4762
        %4881 = vadd.xlane.f32.xlu0 %v4880
        %v4882 = vpop.xlane.xlu0 %4881
        %v4883 = vadd.f32 %v4764, %v4766
        %4884 = vadd.xlane.f32.xlu0 %v4883
        %v4885 = vpop.xlane.xlu0 %4884
        %v4886 = vadd.f32 %v4768, %v4770
        %4887 = vadd.xlane.f32.xlu0 %v4886
        %v4888 = vpop.xlane.xlu0 %4887
        %v4889 = vadd.f32 %v4772, %v4774
        %4890 = vadd.xlane.f32.xlu0 %v4889
        %v4891 = vpop.xlane.xlu0 %4890
        %v4892 = vadd.f32 %v4776, %v4778
        %4893 = vadd.xlane.f32.xlu0 %v4892
        %v4894 = vpop.xlane.xlu0 %4893
        %v4895 = vadd.f32 %v4780, %v4782
        %4896 = vadd.xlane.f32.xlu0 %v4895
        %v4897 = vpop.xlane.xlu0 %4896
        %v4898 = vadd.f32 %v4784, %v4786
        %4899 = vadd.xlane.f32.xlu0 %v4898
        %v4900 = vpop.xlane.xlu0 %4899
        %v4901 = vadd.f32 %v4788, %v4790
        %4902 = vadd.xlane.f32.xlu0 %v4901
        %v4903 = vpop.xlane.xlu0 %4902
        %v4904 = vadd.f32 %v4792, %v4794
        %4905 = vadd.xlane.f32.xlu0 %v4904
        %v4906 = vpop.xlane.xlu0 %4905
        %v4907 = vadd.f32 %v4796, %v4798
        %4908 = vadd.xlane.f32.xlu0 %v4907
        %v4909 = vpop.xlane.xlu0 %4908
        %v4910 = vadd.f32 %v4800, %v4802
        %4911 = vadd.xlane.f32.xlu0 %v4910
        %v4912 = vpop.xlane.xlu0 %4911
        %v4913 = vadd.f32 %v4804, %v4806
        %4914 = vadd.xlane.f32.xlu0 %v4913
        %v4915 = vpop.xlane.xlu0 %4914
        %v4916 = vadd.f32 %v4808, %v4810
        %4917 = vadd.xlane.f32.xlu0 %v4916
        %v4918 = vpop.xlane.xlu0 %4917
        %v4919 = vadd.f32 %v4812, %v4814
        %4920 = vadd.xlane.f32.xlu0 %v4919
        %v4921 = vpop.xlane.xlu0 %4920
        %v4922 = vadd.f32 %v4816, %v4818
        %4923 = vadd.xlane.f32.xlu0 %v4922
        %v4924 = vpop.xlane.xlu0 %4923
        %v4925 = vadd.f32 %v4820, %v4822
        %4926 = vadd.xlane.f32.xlu0 %v4925
        %v4927 = vpop.xlane.xlu0 %4926
        %v4928 = vadd.f32 %v4824, %v4826
        %4929 = vadd.xlane.f32.xlu0 %v4928
        %v4930 = vpop.xlane.xlu0 %4929
        %v4931 = vadd.f32 %v4828, %v4830
        %4932 = vadd.xlane.f32.xlu0 %v4931
        %v4933 = vpop.xlane.xlu0 %4932
        %v4934 = vadd.f32 %v4832, %v4834
        %4935 = vadd.xlane.f32.xlu0 %v4934
        %v4936 = vpop.xlane.xlu0 %4935
        %v4937 = vadd.f32 %v4836, %v4838
        %4938 = vadd.xlane.f32.xlu0 %v4937
        %v4939 = vpop.xlane.xlu0 %4938
        %v4940 = vadd.f32 %v4840, %v4842
        %4941 = vadd.xlane.f32.xlu0 %v4940
        %v4942 = vpop.xlane.xlu0 %4941
        %v4943 = vadd.f32 %v4844, %v4846
        %4944 = vadd.xlane.f32.xlu0 %v4943
        %v4945 = vpop.xlane.xlu0 %4944
        %v4946 = vadd.f32 %v4848, %v4850
        %4947 = vadd.xlane.f32.xlu0 %v4946
        %v4948 = vpop.xlane.xlu0 %4947
        %v4949 = vadd.f32 %v4852, %v4854
        %4950 = vadd.xlane.f32.xlu0 %v4949
        %v4951 = vpop.xlane.xlu0 %4950
        %v4952 = vadd.f32 %v4856, %v4858
        %4953 = vadd.xlane.f32.xlu0 %v4952
        %v4954 = vpop.xlane.xlu0 %4953
        %v4955 = vrcp.pop %v4861
        %v4956 = vrcp.pop %v4864
        %v4957 = vrcp.pop %v4867
        %v4958 = vrcp.pop %v4870
        %v4959 = vrcp.pop %v4873
        %v4960 = vrcp.pop %v4876
        %v4961 = vrcp.pop %v4879
        %v4962 = vrcp.pop %v4882
        %v4963 = vrcp.pop %v4885
        %v4964 = vrcp.pop %v4888
        %v4965 = vrcp.pop %v4891
        %v4966 = vrcp.pop %v4894
        %v4967 = vrcp.pop %v4897
        %v4968 = vrcp.pop %v4900
        %v4969 = vrcp.pop %v4903
        %v4970 = vrcp.pop %v4906
        %v4971 = vrcp.pop %v4909
        %v4972 = vrcp.pop %v4912
        %v4973 = vrcp.pop %v4915
        %v4974 = vrcp.pop %v4918
        %v4975 = vrcp.pop %v4921
        %v4976 = vrcp.pop %v4924
        %v4977 = vrcp.pop %v4927
        %v4978 = vrcp.pop %v4930
        %v4979 = vrcp.pop %v4933
        %v4980 = vrcp.pop %v4936
        %v4981 = vrcp.pop %v4939
        %v4982 = vrcp.pop %v4942
        %v4983 = vrcp.pop %v4945
        %v4984 = vrcp.pop %v4948
        %v4985 = vrcp.pop %v4951
        %v4986 = vrcp.pop %v4954
        %v4987 = vmul.f32 %v4955, 0.00390625
        %v4988 = vmul.f32 %v4956, 0.00390625
        %v4989 = vmul.f32 %v4957, 0.00390625
        %v4990 = vmul.f32 %v4958, 0.00390625
        %v4991 = vmul.f32 %v4959, 0.00390625
        %v4992 = vmul.f32 %v4960, 0.00390625
        %v4993 = vmul.f32 %v4961, 0.00390625
        %v4994 = vmul.f32 %v4962, 0.00390625
        %v4995 = vmul.f32 %v4963, 0.00390625
        %v4996 = vmul.f32 %v4964, 0.00390625
        %v4997 = vmul.f32 %v4965, 0.00390625
        %v4998 = vmul.f32 %v4966, 0.00390625
        %v4999 = vmul.f32 %v4967, 0.00390625
        %v5000 = vmul.f32 %v4968, 0.00390625
        %v5001 = vmul.f32 %v4969, 0.00390625
        %v5002 = vmul.f32 %v4970, 0.00390625
        %v5003 = vmul.f32 %v4971, 0.00390625
        %v5004 = vmul.f32 %v4972, 0.00390625
        %v5005 = vmul.f32 %v4973, 0.00390625
        %v5006 = vmul.f32 %v4974, 0.00390625
        %v5007 = vmul.f32 %v4975, 0.00390625
        %v5008 = vmul.f32 %v4976, 0.00390625
        %v5009 = vmul.f32 %v4977, 0.00390625
        %v5010 = vmul.f32 %v4978, 0.00390625
        %v5011 = vmul.f32 %v4979, 0.00390625
        %v5012 = vmul.f32 %v4980, 0.00390625
        %v5013 = vmul.f32 %v4981, 0.00390625
        %v5014 = vmul.f32 %v4982, 0.00390625
        %v5015 = vmul.f32 %v4983, 0.00390625
        %v5016 = vmul.f32 %v4984, 0.00390625
        %v5017 = vmul.f32 %v4985, 0.00390625
        %v5018 = vmul.f32 %v4986, 0.00390625
        %v5019 = vmul.f32 %v4732, %v4987
        %v5020 = vmul.f32 %v4734, %v4987
        %v5021 = vmul.f32 %v4736, %v4988
        %v5022 = vmul.f32 %v4738, %v4988
        %v5023 = vmul.f32 %v4740, %v4989
        %v5024 = vmul.f32 %v4742, %v4989
        %v5025 = vmul.f32 %v4744, %v4990
        %v5026 = vmul.f32 %v4746, %v4990
        %v5027 = vmul.f32 %v4748, %v4991
        %v5028 = vmul.f32 %v4750, %v4991
        %v5029 = vmul.f32 %v4752, %v4992
        %v5030 = vmul.f32 %v4754, %v4992
        %v5031 = vmul.f32 %v4756, %v4993
        %v5032 = vmul.f32 %v4758, %v4993
        %v5033 = vmul.f32 %v4760, %v4994
        %v5034 = vmul.f32 %v4762, %v4994
        %v5035 = vmul.f32 %v4764, %v4995
        %v5036 = vmul.f32 %v4766, %v4995
        %v5037 = vmul.f32 %v4768, %v4996
        %v5038 = vmul.f32 %v4770, %v4996
        %v5039 = vmul.f32 %v4772, %v4997
        %v5040 = vmul.f32 %v4774, %v4997
        %v5041 = vmul.f32 %v4776, %v4998
        %v5042 = vmul.f32 %v4778, %v4998
        %v5043 = vmul.f32 %v4780, %v4999
        %v5044 = vmul.f32 %v4782, %v4999
        %v5045 = vmul.f32 %v4784, %v5000
        %v5046 = vmul.f32 %v4786, %v5000
        %v5047 = vmul.f32 %v4788, %v5001
        %v5048 = vmul.f32 %v4790, %v5001
        %v5049 = vmul.f32 %v4792, %v5002
        %v5050 = vmul.f32 %v4794, %v5002
        %v5051 = vmul.f32 %v4796, %v5003
        %v5052 = vmul.f32 %v4798, %v5003
        %v5053 = vmul.f32 %v4800, %v5004
        %v5054 = vmul.f32 %v4802, %v5004
        %v5055 = vmul.f32 %v4804, %v5005
        %v5056 = vmul.f32 %v4806, %v5005
        %v5057 = vmul.f32 %v4808, %v5006
        %v5058 = vmul.f32 %v4810, %v5006
        %v5059 = vmul.f32 %v4812, %v5007
        %v5060 = vmul.f32 %v4814, %v5007
        %v5061 = vmul.f32 %v4816, %v5008
        %v5062 = vmul.f32 %v4818, %v5008
        %v5063 = vmul.f32 %v4820, %v5009
        %v5064 = vmul.f32 %v4822, %v5009
        %v5065 = vmul.f32 %v4824, %v5010
        %v5066 = vmul.f32 %v4826, %v5010
        %v5067 = vmul.f32 %v4828, %v5011
        %v5068 = vmul.f32 %v4830, %v5011
        %v5069 = vmul.f32 %v4832, %v5012
        %v5070 = vmul.f32 %v4834, %v5012
        %v5071 = vmul.f32 %v4836, %v5013
        %v5072 = vmul.f32 %v4838, %v5013
        %v5073 = vmul.f32 %v4840, %v5014
        %v5074 = vmul.f32 %v4842, %v5014
        %v5075 = vmul.f32 %v4844, %v5015
        %v5076 = vmul.f32 %v4846, %v5015
        %v5077 = vmul.f32 %v4848, %v5016
        %v5078 = vmul.f32 %v4850, %v5016
        %v5079 = vmul.f32 %v4852, %v5017
        %v5080 = vmul.f32 %v4854, %v5017
        %v5081 = vmul.f32 %v4856, %v5018
        %v5082 = vmul.f32 %v4858, %v5018
        %v5083 = vpack.c.bf16 %v5021, %v5019
        %v5084 = vpack.c.bf16 %v5022, %v5020
        %v5085 = vpack.c.bf16 %v5025, %v5023
        %v5086 = vpack.c.bf16 %v5026, %v5024
        %v5087 = vpack.c.bf16 %v5029, %v5027
        %v5088 = vpack.c.bf16 %v5030, %v5028
        %v5089 = vpack.c.bf16 %v5033, %v5031
        %v5090 = vpack.c.bf16 %v5034, %v5032
        %v5091 = vpack.c.bf16 %v5037, %v5035
        %v5092 = vpack.c.bf16 %v5038, %v5036
        %v5093 = vpack.c.bf16 %v5041, %v5039
        %v5094 = vpack.c.bf16 %v5042, %v5040
        %v5095 = vpack.c.bf16 %v5045, %v5043
        %v5096 = vpack.c.bf16 %v5046, %v5044
        %v5097 = vpack.c.bf16 %v5049, %v5047
        %v5098 = vpack.c.bf16 %v5050, %v5048
        %v5099 = vpack.c.bf16 %v5053, %v5051
        %v5100 = vpack.c.bf16 %v5054, %v5052
        %v5101 = vpack.c.bf16 %v5057, %v5055
        %v5102 = vpack.c.bf16 %v5058, %v5056
        %v5103 = vpack.c.bf16 %v5061, %v5059
        %v5104 = vpack.c.bf16 %v5062, %v5060
        %v5105 = vpack.c.bf16 %v5065, %v5063
        %v5106 = vpack.c.bf16 %v5066, %v5064
        %v5107 = vpack.c.bf16 %v5069, %v5067
        %v5108 = vpack.c.bf16 %v5070, %v5068
        %v5109 = vpack.c.bf16 %v5073, %v5071
        %v5110 = vpack.c.bf16 %v5074, %v5072
        %v5111 = vpack.c.bf16 %v5077, %v5075
        %v5112 = vpack.c.bf16 %v5078, %v5076
        %v5113 = vpack.c.bf16 %v5081, %v5079
        %v5114 = vpack.c.bf16 %v5082, %v5080
        %5115 = vmatprep.subr.bf16.mxu0 %v5084
        %5116 = vmatpush1.bf16.msra.mxu0 %v5083
        %5117 = vmatprep.subr.bf16.mxu0 %v5086
        %5118 = vmatpush1.bf16.msra.mxu0 %v5085
        %5119 = vmatprep.subr.bf16.mxu0 %v5088
        %5120 = vmatpush1.bf16.msra.mxu0 %v5087
        %5121 = vmatprep.subr.bf16.mxu0 %v5090
        %5122 = vmatpush1.bf16.msra.mxu0 %v5089
        %5123 = vmatprep.subr.bf16.mxu0 %v5092
        %5124 = vmatpush1.bf16.msra.mxu0 %v5091
        %5125 = vmatprep.subr.bf16.mxu0 %v5094
        %5126 = vmatpush1.bf16.msra.mxu0 %v5093
        %5127 = vmatprep.subr.bf16.mxu0 %v5096
        %5128 = vmatpush1.bf16.msra.mxu0 %v5095
        %5129 = vmatprep.subr.bf16.mxu0 %v5098
        %5130 = vmatpush1.bf16.msra.mxu0 %v5097
        %5131 = vmatprep.subr.bf16.mxu0 %v5100
        %5132 = vmatpush1.bf16.msra.mxu0 %v5099
        %5133 = vmatprep.subr.bf16.mxu0 %v5102
        %5134 = vmatpush1.bf16.msra.mxu0 %v5101
        %5135 = vmatprep.subr.bf16.mxu0 %v5104
        %5136 = vmatpush1.bf16.msra.mxu0 %v5103
        %5137 = vmatprep.subr.bf16.mxu0 %v5106
        %5138 = vmatpush1.bf16.msra.mxu0 %v5105
        %5139 = vmatprep.subr.bf16.mxu0 %v5108
        %5140 = vmatpush1.bf16.msra.mxu0 %v5107
        %5141 = vmatprep.subr.bf16.mxu0 %v5110
        %5142 = vmatpush1.bf16.msra.mxu0 %v5109
        %5143 = vmatprep.subr.bf16.mxu0 %v5112
        %5144 = vmatpush1.bf16.msra.mxu0 %v5111
        %5145 = vmatprep.subr.bf16.mxu0 %v5114
        %5146 = vmatpush1.bf16.msra.mxu0 %v5113
        %5147 = vmatprep.mubr.bf16.mxu0 1065369472
        %5148 = vmatmul.mubr.bf16.gmra.mrb[0].mxu0 1065369472
        %v5149 = vpop.f32.mrb[0].mxu0
        %v5150 = vadd.f32 0.0, %v5149
        %v5151 = vpop.f32.mrb[0].mxu0
        %v5152 = vadd.f32 0.0, %v5151
        %v5153 = vpop.f32.mrb[0].mxu0
        %v5154 = vpop.f32.mrb[0].mxu0
        %5155 = vdwg.mxu0
        %v5156 = vpack.c.bf16 %v5150, %v5150
        %v5157 = vpack.c.bf16 %v5152, %v5152
        %5158 = vrot.lane.b32.xlu0 %v2201, 64
        %v5159 = vpop.permute.xlu0 %5158
        %5160 = vrot.lane.b32.xlu0 %v2202, 64
        %v5161 = vpop.permute.xlu0 %5160
        %5162 = vrot.lane.b32.xlu0 %v2203, 64
        %v5163 = vpop.permute.xlu0 %5162
        %5164 = vrot.lane.b32.xlu0 %v2204, 64
        %v5165 = vpop.permute.xlu0 %5164
        %5166 = vrot.lane.b32.xlu0 %v2205, 64
        %v5167 = vpop.permute.xlu0 %5166
        %5168 = vrot.lane.b32.xlu0 %v2206, 64
        %v5169 = vpop.permute.xlu0 %5168
        %5170 = vrot.lane.b32.xlu0 %v2207, 64
        %v5171 = vpop.permute.xlu0 %5170
        %5172 = vrot.lane.b32.xlu0 %v2208, 64
        %v5173 = vpop.permute.xlu0 %5172
        %5174 = vrot.lane.b32.xlu0 %v2209, 64
        %v5175 = vpop.permute.xlu0 %5174
        %5176 = vrot.lane.b32.xlu0 %v2210, 64
        %v5177 = vpop.permute.xlu0 %5176
        %5178 = vrot.lane.b32.xlu0 %v2211, 64
        %v5179 = vpop.permute.xlu0 %5178
        %5180 = vrot.lane.b32.xlu0 %v2212, 64
        %v5181 = vpop.permute.xlu0 %5180
        %5182 = vrot.lane.b32.xlu0 %v2213, 64
        %v5183 = vpop.permute.xlu0 %5182
        %5184 = vrot.lane.b32.xlu0 %v2214, 64
        %v5185 = vpop.permute.xlu0 %5184
        %5186 = vrot.lane.b32.xlu0 %v2215, 64
        %v5187 = vpop.permute.xlu0 %5186
        %5188 = vrot.lane.b32.xlu0 %v2216, 64
        %v5189 = vpop.permute.xlu0 %5188
        %5206 = vmatprep.subr.bf16.mxu0 0
        %5207 = vmatpush1.bf16.msra.mxu0 %v5159
        %5208 = vmatprep.subr.bf16.mxu0 0
        %5209 = vmatpush1.bf16.msra.mxu0 %v5161
        %5210 = vmatprep.subr.bf16.mxu0 0
        %5211 = vmatpush1.bf16.msra.mxu0 %v5163
        %5212 = vmatprep.subr.bf16.mxu0 0
        %5213 = vmatpush1.bf16.msra.mxu0 %v5165
        %5214 = vmatprep.subr.bf16.mxu0 0
        %5215 = vmatpush1.bf16.msra.mxu0 %v5167
        %5216 = vmatprep.subr.bf16.mxu0 0
        %5217 = vmatpush1.bf16.msra.mxu0 %v5169
        %5218 = vmatprep.subr.bf16.mxu0 0
        %5219 = vmatpush1.bf16.msra.mxu0 %v5171
        %5220 = vmatprep.subr.bf16.mxu0 0
        %5221 = vmatpush1.bf16.msra.mxu0 %v5173
        %5222 = vmatprep.subr.bf16.mxu0 0
        %5223 = vmatpush1.bf16.msra.mxu0 %v5175
        %5224 = vmatprep.subr.bf16.mxu0 0
        %5225 = vmatpush1.bf16.msra.mxu0 %v5177
        %5226 = vmatprep.subr.bf16.mxu0 0
        %5227 = vmatpush1.bf16.msra.mxu0 %v5179
        %5228 = vmatprep.subr.bf16.mxu0 0
        %5229 = vmatpush1.bf16.msra.mxu0 %v5181
        %5230 = vmatprep.subr.bf16.mxu0 0
        %5231 = vmatpush1.bf16.msra.mxu0 %v5183
        %5232 = vmatprep.subr.bf16.mxu0 0
        %5233 = vmatpush1.bf16.msra.mxu0 %v5185
        %5234 = vmatprep.subr.bf16.mxu0 0
        %5235 = vmatpush1.bf16.msra.mxu0 %v5187
        %5236 = vmatprep.subr.bf16.mxu0 0
        %5237 = vmatpush1.bf16.msra.mxu0 %v5189
        %5238 = vmatprep.mubr.bf16.mxu0 %v5157
        %5239 = vmatmul.mubr.bf16.gmra.mrb[0].mxu0 %v5156
        %v5240 = vpop.f32.mrb[0].mxu0
        %v5241 = vadd.f32 0.0, %v5240
        %v5242 = vpop.f32.mrb[0].mxu0
        %v5243 = vpop.f32.mrb[0].mxu0
        %v5244 = vpop.f32.mrb[0].mxu0
        %5245 = vdwg.mxu0
        %5247 = vrot.lane.b32.xlu0 %v5241, 64
        %v5248 = vpop.permute.xlu0 %5247
        %vm5250 = vcmask 778752
        %5251 = vst.msk [vmem:[#allocation5] sm:$0x1] %vm5250, %v5248
        %5252 = vrot.lane.b32.xlu0 %v2169, 32
        %v5253 = vpop.permute.xlu0 %5252
        %5254 = vrot.lane.b32.xlu0 %v2170, 32
        %v5255 = vpop.permute.xlu0 %5254
        %5256 = vrot.lane.b32.xlu0 %v2171, 32
        %v5257 = vpop.permute.xlu0 %5256
        %5258 = vrot.lane.b32.xlu0 %v2172, 32
        %v5259 = vpop.permute.xlu0 %5258
        %5260 = vrot.lane.b32.xlu0 %v2173, 32
        %v5261 = vpop.permute.xlu0 %5260
        %5262 = vrot.lane.b32.xlu0 %v2174, 32
        %v5263 = vpop.permute.xlu0 %5262
        %5264 = vrot.lane.b32.xlu0 %v2175, 32
        %v5265 = vpop.permute.xlu0 %5264
        %5266 = vrot.lane.b32.xlu0 %v2176, 32
        %v5267 = vpop.permute.xlu0 %5266
        %5268 = vrot.lane.b32.xlu0 %v2177, 32
        %v5269 = vpop.permute.xlu0 %5268
        %5270 = vrot.lane.b32.xlu0 %v2178, 32
        %v5271 = vpop.permute.xlu0 %5270
        %5272 = vrot.lane.b32.xlu0 %v2179, 32
        %v5273 = vpop.permute.xlu0 %5272
        %5274 = vrot.lane.b32.xlu0 %v2180, 32
        %v5275 = vpop.permute.xlu0 %5274
        %5276 = vrot.lane.b32.xlu0 %v2181, 32
        %v5277 = vpop.permute.xlu0 %5276
        %5278 = vrot.lane.b32.xlu0 %v2182, 32
        %v5279 = vpop.permute.xlu0 %5278
        %5280 = vrot.lane.b32.xlu0 %v2183, 32
        %v5281 = vpop.permute.xlu0 %5280
        %5282 = vrot.lane.b32.xlu0 %v2184, 32
        %v5283 = vpop.permute.xlu0 %5282
        %5284 = vrot.lane.b32.xlu0 %v2185, 32
        %v5285 = vpop.permute.xlu0 %5284
        %5286 = vrot.lane.b32.xlu0 %v2186, 32
        %v5287 = vpop.permute.xlu0 %5286
        %5288 = vrot.lane.b32.xlu0 %v2187, 32
        %v5289 = vpop.permute.xlu0 %5288
        %5290 = vrot.lane.b32.xlu0 %v2188, 32
        %v5291 = vpop.permute.xlu0 %5290
        %5292 = vrot.lane.b32.xlu0 %v2189, 32
        %v5293 = vpop.permute.xlu0 %5292
        %5294 = vrot.lane.b32.xlu0 %v2190, 32
        %v5295 = vpop.permute.xlu0 %5294
        %5296 = vrot.lane.b32.xlu0 %v2191, 32
        %v5297 = vpop.permute.xlu0 %5296
        %5298 = vrot.lane.b32.xlu0 %v2192, 32
        %v5299 = vpop.permute.xlu0 %5298
        %5300 = vrot.lane.b32.xlu0 %v2193, 32
        %v5301 = vpop.permute.xlu0 %5300
        %5302 = vrot.lane.b32.xlu0 %v2194, 32
        %v5303 = vpop.permute.xlu0 %5302
        %5304 = vrot.lane.b32.xlu0 %v2195, 32
        %v5305 = vpop.permute.xlu0 %5304
        %5306 = vrot.lane.b32.xlu0 %v2196, 32
        %v5307 = vpop.permute.xlu0 %5306
        %5308 = vrot.lane.b32.xlu0 %v2197, 32
        %v5309 = vpop.permute.xlu0 %5308
        %5310 = vrot.lane.b32.xlu0 %v2198, 32
        %v5311 = vpop.permute.xlu0 %5310
        %5312 = vrot.lane.b32.xlu0 %v2199, 32
        %v5313 = vpop.permute.xlu0 %5312
        %5314 = vrot.lane.b32.xlu0 %v2200, 32
        %v5315 = vpop.permute.xlu0 %5314
        %v5317 = vsel %vm2217, %v5253, 0
        %v5320 = vsel %vm2217, %v5255, 0
        %v5323 = vsel %vm2217, %v5257, 0
        %v5326 = vsel %vm2217, %v5259, 0
        %v5329 = vsel %vm2217, %v5261, 0
        %v5332 = vsel %vm2217, %v5263, 0
        %v5335 = vsel %vm2217, %v5265, 0
        %v5338 = vsel %vm2217, %v5267, 0
        %v5341 = vsel %vm2217, %v5269, 0
        %v5344 = vsel %vm2217, %v5271, 0
        %v5347 = vsel %vm2217, %v5273, 0
        %v5350 = vsel %vm2217, %v5275, 0
        %v5353 = vsel %vm2217, %v5277, 0
        %v5356 = vsel %vm2217, %v5279, 0
        %v5359 = vsel %vm2217, %v5281, 0
        %v5362 = vsel %vm2217, %v5283, 0
        %v5365 = vsel %vm2217, %v5285, 0
        %v5368 = vsel %vm2217, %v5287, 0
        %v5371 = vsel %vm2217, %v5289, 0
        %v5374 = vsel %vm2217, %v5291, 0
        %v5377 = vsel %vm2217, %v5293, 0
        %v5380 = vsel %vm2217, %v5295, 0
        %v5383 = vsel %vm2217, %v5297, 0
        %v5386 = vsel %vm2217, %v5299, 0
        %v5389 = vsel %vm2217, %v5301, 0
        %v5392 = vsel %vm2217, %v5303, 0
        %v5395 = vsel %vm2217, %v5305, 0
        %v5398 = vsel %vm2217, %v5307, 0
        %v5401 = vsel %vm2217, %v5309, 0
        %v5404 = vsel %vm2217, %v5311, 0
        %v5407 = vsel %vm2217, %v5313, 0
        %v5410 = vsel %vm2217, %v5315, 0
        %5412 = vmatprep.subr.bf16.mxu0 0
        %5413 = vmatpush1.bf16.xpose.msra.mxu0 %v5365
        %5414 = vmatprep.subr.bf16.mxu0 0
        %5415 = vmatpush1.bf16.xpose.msra.mxu0 %v5368
        %5416 = vmatprep.subr.bf16.mxu0 0
        %5417 = vmatpush1.bf16.xpose.msra.mxu0 %v5371
        %5418 = vmatprep.subr.bf16.mxu0 0
        %5419 = vmatpush1.bf16.xpose.msra.mxu0 %v5374
        %5420 = vmatprep.subr.bf16.mxu0 0
        %5421 = vmatpush1.bf16.xpose.msra.mxu0 %v5377
        %5422 = vmatprep.subr.bf16.mxu0 0
        %5423 = vmatpush1.bf16.xpose.msra.mxu0 %v5380
        %5424 = vmatprep.subr.bf16.mxu0 0
        %5425 = vmatpush1.bf16.xpose.msra.mxu0 %v5383
        %5426 = vmatprep.subr.bf16.mxu0 0
        %5427 = vmatpush1.bf16.xpose.msra.mxu0 %v5386
        %5428 = vmatprep.subr.bf16.mxu0 0
        %5429 = vmatpush1.bf16.xpose.msra.mxu0 %v5389
        %5430 = vmatprep.subr.bf16.mxu0 0
        %5431 = vmatpush1.bf16.xpose.msra.mxu0 %v5392
        %5432 = vmatprep.subr.bf16.mxu0 0
        %5433 = vmatpush1.bf16.xpose.msra.mxu0 %v5395
        %5434 = vmatprep.subr.bf16.mxu0 0
        %5435 = vmatpush1.bf16.xpose.msra.mxu0 %v5398
        %5436 = vmatprep.subr.bf16.mxu0 0
        %5437 = vmatpush1.bf16.xpose.msra.mxu0 %v5401
        %5438 = vmatprep.subr.bf16.mxu0 0
        %5439 = vmatpush1.bf16.xpose.msra.mxu0 %v5404
        %5440 = vmatprep.subr.bf16.mxu0 0
        %5441 = vmatpush1.bf16.xpose.msra.mxu0 %v5407
        %5442 = vmatprep.subr.bf16.mxu0 0
        %5443 = vmatpush1.bf16.xpose.msra.mxu0 %v5410
        %5444 = vmatprep.mubr.bf16.mxu0 0
        %5445 = vmatmul.mubr.bf16.gmra.mrb[0].mxu0 %v5317
        %v5446 = vpop.f32.mrb[0].mxu0
        %v5447 = vadd.f32 0.0, %v5446
        %v5448 = vpop.f32.mrb[0].mxu0
        %v5449 = vadd.f32 0.0, %v5448
        %v5450 = vpop.f32.mrb[0].mxu0
        %v5451 = vadd.f32 0.0, %v5450
        %v5452 = vpop.f32.mrb[0].mxu0
        %v5453 = vadd.f32 0.0, %v5452
        %5454 = vmatprep.mubr.bf16.mxu0 0
        %5455 = vmatmul.mubr.bf16.gmra.mrb[0].mxu0 %v5320
        %v5456 = vpop.f32.mrb[0].mxu0
        %v5457 = vadd.f32 0.0, %v5456
        %v5458 = vpop.f32.mrb[0].mxu0
        %v5459 = vadd.f32 0.0, %v5458
        %v5460 = vpop.f32.mrb[0].mxu0
        %v5461 = vadd.f32 0.0, %v5460
        %v5462 = vpop.f32.mrb[0].mxu0
        %v5463 = vadd.f32 0.0, %v5462
        %5464 = vmatprep.mubr.bf16.mxu0 0
        %5465 = vmatmul.mubr.bf16.gmra.mrb[0].mxu0 %v5323
        %v5466 = vpop.f32.mrb[0].mxu0
        %v5467 = vadd.f32 0.0, %v5466
        %v5468 = vpop.f32.mrb[0].mxu0
        %v5469 = vadd.f32 0.0, %v5468
        %v5470 = vpop.f32.mrb[0].mxu0
        %v5471 = vadd.f32 0.0, %v5470
        %v5472 = vpop.f32.mrb[0].mxu0
        %v5473 = vadd.f32 0.0, %v5472
        %5474 = vmatprep.mubr.bf16.mxu0 0
        %5475 = vmatmul.mubr.bf16.gmra.mrb[0].mxu0 %v5326
        %v5476 = vpop.f32.mrb[0].mxu0
        %v5477 = vadd.f32 0.0, %v5476
        %v5478 = vpop.f32.mrb[0].mxu0
        %v5479 = vadd.f32 0.0, %v5478
        %v5480 = vpop.f32.mrb[0].mxu0
        %v5481 = vadd.f32 0.0, %v5480
        %v5482 = vpop.f32.mrb[0].mxu0
        %v5483 = vadd.f32 0.0, %v5482
        %5484 = vmatprep.mubr.bf16.mxu0 0
        %5485 = vmatmul.mubr.bf16.gmra.mrb[0].mxu0 %v5329
        %v5486 = vpop.f32.mrb[0].mxu0
        %v5487 = vadd.f32 0.0, %v5486
        %v5488 = vpop.f32.mrb[0].mxu0
        %v5489 = vadd.f32 0.0, %v5488
        %v5490 = vpop.f32.mrb[0].mxu0
        %v5491 = vadd.f32 0.0, %v5490
        %v5492 = vpop.f32.mrb[0].mxu0
        %v5493 = vadd.f32 0.0, %v5492
        %5494 = vmatprep.mubr.bf16.mxu0 0
        %5495 = vmatmul.mubr.bf16.gmra.mrb[0].mxu0 %v5332
        %v5496 = vpop.f32.mrb[0].mxu0
        %v5497 = vadd.f32 0.0, %v5496
        %v5498 = vpop.f32.mrb[0].mxu0
        %v5499 = vadd.f32 0.0, %v5498
        %v5500 = vpop.f32.mrb[0].mxu0
        %v5501 = vadd.f32 0.0, %v5500
        %v5502 = vpop.f32.mrb[0].mxu0
        %v5503 = vadd.f32 0.0, %v5502
        %5504 = vmatprep.mubr.bf16.mxu0 0
        %5505 = vmatmul.mubr.bf16.gmra.mrb[0].mxu0 %v5335
        %v5506 = vpop.f32.mrb[0].mxu0
        %v5507 = vadd.f32 0.0, %v5506
        %v5508 = vpop.f32.mrb[0].mxu0
        %v5509 = vadd.f32 0.0, %v5508
        %v5510 = vpop.f32.mrb[0].mxu0
        %v5511 = vadd.f32 0.0, %v5510
        %v5512 = vpop.f32.mrb[0].mxu0
        %v5513 = vadd.f32 0.0, %v5512
        %5514 = vmatprep.mubr.bf16.mxu0 0
        %5515 = vmatmul.mubr.bf16.gmra.mrb[0].mxu0 %v5338
        %v5516 = vpop.f32.mrb[0].mxu0
        %v5517 = vadd.f32 0.0, %v5516
        %v5518 = vpop.f32.mrb[0].mxu0
        %v5519 = vadd.f32 0.0, %v5518
        %v5520 = vpop.f32.mrb[0].mxu0
        %v5521 = vadd.f32 0.0, %v5520
        %v5522 = vpop.f32.mrb[0].mxu0
        %v5523 = vadd.f32 0.0, %v5522
        %5524 = vmatprep.mubr.bf16.mxu0 0
        %5525 = vmatmul.mubr.bf16.gmra.mrb[0].mxu0 %v5341
        %v5526 = vpop.f32.mrb[0].mxu0
        %v5527 = vadd.f32 0.0, %v5526
        %v5528 = vpop.f32.mrb[0].mxu0
        %v5529 = vadd.f32 0.0, %v5528
        %v5530 = vpop.f32.mrb[0].mxu0
        %v5531 = vadd.f32 0.0, %v5530
        %v5532 = vpop.f32.mrb[0].mxu0
        %v5533 = vadd.f32 0.0, %v5532
        %5534 = vmatprep.mubr.bf16.mxu0 0
        %5535 = vmatmul.mubr.bf16.gmra.mrb[0].mxu0 %v5344
        %v5536 = vpop.f32.mrb[0].mxu0
        %v5537 = vadd.f32 0.0, %v5536
        %v5538 = vpop.f32.mrb[0].mxu0
        %v5539 = vadd.f32 0.0, %v5538
        %v5540 = vpop.f32.mrb[0].mxu0
        %v5541 = vadd.f32 0.0, %v5540
        %v5542 = vpop.f32.mrb[0].mxu0
        %v5543 = vadd.f32 0.0, %v5542
        %5544 = vmatprep.mubr.bf16.mxu0 0
        %5545 = vmatmul.mubr.bf16.gmra.mrb[0].mxu0 %v5347
        %v5546 = vpop.f32.mrb[0].mxu0
        %v5547 = vadd.f32 0.0, %v5546
        %v5548 = vpop.f32.mrb[0].mxu0
        %v5549 = vadd.f32 0.0, %v5548
        %v5550 = vpop.f32.mrb[0].mxu0
        %v5551 = vadd.f32 0.0, %v5550
        %v5552 = vpop.f32.mrb[0].mxu0
        %v5553 = vadd.f32 0.0, %v5552
        %5554 = vmatprep.mubr.bf16.mxu0 0
        %5555 = vmatmul.mubr.bf16.gmra.mrb[0].mxu0 %v5350
        %v5556 = vpop.f32.mrb[0].mxu0
        %v5557 = vadd.f32 0.0, %v5556
        %v5558 = vpop.f32.mrb[0].mxu0
        %v5559 = vadd.f32 0.0, %v5558
        %v5560 = vpop.f32.mrb[0].mxu0
        %v5561 = vadd.f32 0.0, %v5560
        %v5562 = vpop.f32.mrb[0].mxu0
        %v5563 = vadd.f32 0.0, %v5562
        %5564 = vmatprep.mubr.bf16.mxu0 0
        %5565 = vmatmul.mubr.bf16.gmra.mrb[0].mxu0 %v5353
        %v5566 = vpop.f32.mrb[0].mxu0
        %v5567 = vadd.f32 0.0, %v5566
        %v5568 = vpop.f32.mrb[0].mxu0
        %v5569 = vadd.f32 0.0, %v5568
        %v5570 = vpop.f32.mrb[0].mxu0
        %v5571 = vadd.f32 0.0, %v5570
        %v5572 = vpop.f32.mrb[0].mxu0
        %v5573 = vadd.f32 0.0, %v5572
        %5574 = vmatprep.mubr.bf16.mxu0 0
        %5575 = vmatmul.mubr.bf16.gmra.mrb[0].mxu0 %v5356
        %v5576 = vpop.f32.mrb[0].mxu0
        %v5577 = vadd.f32 0.0, %v5576
        %v5578 = vpop.f32.mrb[0].mxu0
        %v5579 = vadd.f32 0.0, %v5578
        %v5580 = vpop.f32.mrb[0].mxu0
        %v5581 = vadd.f32 0.0, %v5580
        %v5582 = vpop.f32.mrb[0].mxu0
        %v5583 = vadd.f32 0.0, %v5582
        %5584 = vmatprep.mubr.bf16.mxu0 0
        %5585 = vmatmul.mubr.bf16.gmra.mrb[0].mxu0 %v5359
        %v5586 = vpop.f32.mrb[0].mxu0
        %v5587 = vadd.f32 0.0, %v5586
        %v5588 = vpop.f32.mrb[0].mxu0
        %v5589 = vadd.f32 0.0, %v5588
        %v5590 = vpop.f32.mrb[0].mxu0
        %v5591 = vadd.f32 0.0, %v5590
        %v5592 = vpop.f32.mrb[0].mxu0
        %v5593 = vadd.f32 0.0, %v5592
        %5594 = vmatprep.mubr.bf16.mxu0 0
        %5595 = vmatmul.mubr.bf16.gmra.mrb[0].mxu0 %v5362
        %v5596 = vpop.f32.mrb[0].mxu0
        %v5597 = vadd.f32 0.0, %v5596
        %v5598 = vpop.f32.mrb[0].mxu0
        %v5599 = vadd.f32 0.0, %v5598
        %v5600 = vpop.f32.mrb[0].mxu0
        %v5601 = vadd.f32 0.0, %v5600
        %v5602 = vpop.f32.mrb[0].mxu0
        %v5603 = vadd.f32 0.0, %v5602
        %5604 = vdwg.mxu0
        %v5605 = vmax.f32 %v5447, %v5449
        %5606 = vmax.xlane.f32.xlu0 %v5605
        %v5607 = vpop.xlane.xlu0 %5606
        %v5608 = vmax.f32 %v5451, %v5453
        %5609 = vmax.xlane.f32.xlu0 %v5608
        %v5610 = vpop.xlane.xlu0 %5609
        %v5611 = vmax.f32 %v5457, %v5459
        %5612 = vmax.xlane.f32.xlu0 %v5611
        %v5613 = vpop.xlane.xlu0 %5612
        %v5614 = vmax.f32 %v5461, %v5463
        %5615 = vmax.xlane.f32.xlu0 %v5614
        %v5616 = vpop.xlane.xlu0 %5615
        %v5617 = vmax.f32 %v5467, %v5469
        %5618 = vmax.xlane.f32.xlu0 %v5617
        %v5619 = vpop.xlane.xlu0 %5618
        %v5620 = vmax.f32 %v5471, %v5473
        %5621 = vmax.xlane.f32.xlu0 %v5620
        %v5622 = vpop.xlane.xlu0 %5621
        %v5623 = vmax.f32 %v5477, %v5479
        %5624 = vmax.xlane.f32.xlu0 %v5623
        %v5625 = vpop.xlane.xlu0 %5624
        %v5626 = vmax.f32 %v5481, %v5483
        %5627 = vmax.xlane.f32.xlu0 %v5626
        %v5628 = vpop.xlane.xlu0 %5627
        %v5629 = vmax.f32 %v5487, %v5489
        %5630 = vmax.xlane.f32.xlu0 %v5629
        %v5631 = vpop.xlane.xlu0 %5630
        %v5632 = vmax.f32 %v5491, %v5493
        %5633 = vmax.xlane.f32.xlu0 %v5632
        %v5634 = vpop.xlane.xlu0 %5633
        %v5635 = vmax.f32 %v5497, %v5499
        %5636 = vmax.xlane.f32.xlu0 %v5635
        %v5637 = vpop.xlane.xlu0 %5636
        %v5638 = vmax.f32 %v5501, %v5503
        %5639 = vmax.xlane.f32.xlu0 %v5638
        %v5640 = vpop.xlane.xlu0 %5639
        %v5641 = vmax.f32 %v5507, %v5509
        %5642 = vmax.xlane.f32.xlu0 %v5641
        %v5643 = vpop.xlane.xlu0 %5642
        %v5644 = vmax.f32 %v5511, %v5513
        %5645 = vmax.xlane.f32.xlu0 %v5644
        %v5646 = vpop.xlane.xlu0 %5645
        %v5647 = vmax.f32 %v5517, %v5519
        %5648 = vmax.xlane.f32.xlu0 %v5647
        %v5649 = vpop.xlane.xlu0 %5648
        %v5650 = vmax.f32 %v5521, %v5523
        %5651 = vmax.xlane.f32.xlu0 %v5650
        %v5652 = vpop.xlane.xlu0 %5651
        %v5653 = vmax.f32 %v5527, %v5529
        %5654 = vmax.xlane.f32.xlu0 %v5653
        %v5655 = vpop.xlane.xlu0 %5654
        %v5656 = vmax.f32 %v5531, %v5533
        %5657 = vmax.xlane.f32.xlu0 %v5656
        %v5658 = vpop.xlane.xlu0 %5657
        %v5659 = vmax.f32 %v5537, %v5539
        %5660 = vmax.xlane.f32.xlu0 %v5659
        %v5661 = vpop.xlane.xlu0 %5660
        %v5662 = vmax.f32 %v5541, %v5543
        %5663 = vmax.xlane.f32.xlu0 %v5662
        %v5664 = vpop.xlane.xlu0 %5663
        %v5665 = vmax.f32 %v5547, %v5549
        %5666 = vmax.xlane.f32.xlu0 %v5665
        %v5667 = vpop.xlane.xlu0 %5666
        %v5668 = vmax.f32 %v5551, %v5553
        %5669 = vmax.xlane.f32.xlu0 %v5668
        %v5670 = vpop.xlane.xlu0 %5669
        %v5671 = vmax.f32 %v5557, %v5559
        %5672 = vmax.xlane.f32.xlu0 %v5671
        %v5673 = vpop.xlane.xlu0 %5672
        %v5674 = vmax.f32 %v5561, %v5563
        %5675 = vmax.xlane.f32.xlu0 %v5674
        %v5676 = vpop.xlane.xlu0 %5675
        %v5677 = vmax.f32 %v5567, %v5569
        %5678 = vmax.xlane.f32.xlu0 %v5677
        %v5679 = vpop.xlane.xlu0 %5678
        %v5680 = vmax.f32 %v5571, %v5573
        %5681 = vmax.xlane.f32.xlu0 %v5680
        %v5682 = vpop.xlane.xlu0 %5681
        %v5683 = vmax.f32 %v5577, %v5579
        %5684 = vmax.xlane.f32.xlu0 %v5683
        %v5685 = vpop.xlane.xlu0 %5684
        %v5686 = vmax.f32 %v5581, %v5583
        %5687 = vmax.xlane.f32.xlu0 %v5686
        %v5688 = vpop.xlane.xlu0 %5687
        %v5689 = vmax.f32 %v5587, %v5589
        %5690 = vmax.xlane.f32.xlu0 %v5689
        %v5691 = vpop.xlane.xlu0 %5690
        %v5692 = vmax.f32 %v5591, %v5593
        %5693 = vmax.xlane.f32.xlu0 %v5692
        %v5694 = vpop.xlane.xlu0 %5693
        %v5695 = vmax.f32 %v5597, %v5599
        %5696 = vmax.xlane.f32.xlu0 %v5695
        %v5697 = vpop.xlane.xlu0 %5696
        %v5698 = vmax.f32 %v5601, %v5603
        %5699 = vmax.xlane.f32.xlu0 %v5698
        %v5700 = vpop.xlane.xlu0 %5699
        %v5701 = vsub.f32 %v5447, %v5607
        %v5702 = vsub.f32 %v5449, %v5607
        %v5703 = vsub.f32 %v5451, %v5610
        %v5704 = vsub.f32 %v5453, %v5610
        %v5705 = vsub.f32 %v5457, %v5613
        %v5706 = vsub.f32 %v5459, %v5613
        %v5707 = vsub.f32 %v5461, %v5616
        %v5708 = vsub.f32 %v5463, %v5616
        %v5709 = vsub.f32 %v5467, %v5619
        %v5710 = vsub.f32 %v5469, %v5619
        %v5711 = vsub.f32 %v5471, %v5622
        %v5712 = vsub.f32 %v5473, %v5622
        %v5713 = vsub.f32 %v5477, %v5625
        %v5714 = vsub.f32 %v5479, %v5625
        %v5715 = vsub.f32 %v5481, %v5628
        %v5716 = vsub.f32 %v5483, %v5628
        %v5717 = vsub.f32 %v5487, %v5631
        %v5718 = vsub.f32 %v5489, %v5631
        %v5719 = vsub.f32 %v5491, %v5634
        %v5720 = vsub.f32 %v5493, %v5634
        %v5721 = vsub.f32 %v5497, %v5637
        %v5722 = vsub.f32 %v5499, %v5637
        %v5723 = vsub.f32 %v5501, %v5640
        %v5724 = vsub.f32 %v5503, %v5640
        %v5725 = vsub.f32 %v5507, %v5643
        %v5726 = vsub.f32 %v5509, %v5643
        %v5727 = vsub.f32 %v5511, %v5646
        %v5728 = vsub.f32 %v5513, %v5646
        %v5729 = vsub.f32 %v5517, %v5649
        %v5730 = vsub.f32 %v5519, %v5649
        %v5731 = vsub.f32 %v5521, %v5652
        %v5732 = vsub.f32 %v5523, %v5652
        %v5733 = vsub.f32 %v5527, %v5655
        %v5734 = vsub.f32 %v5529, %v5655
        %v5735 = vsub.f32 %v5531, %v5658
        %v5736 = vsub.f32 %v5533, %v5658
        %v5737 = vsub.f32 %v5537, %v5661
        %v5738 = vsub.f32 %v5539, %v5661
        %v5739 = vsub.f32 %v5541, %v5664
        %v5740 = vsub.f32 %v5543, %v5664
        %v5741 = vsub.f32 %v5547, %v5667
        %v5742 = vsub.f32 %v5549, %v5667
        %v5743 = vsub.f32 %v5551, %v5670
        %v5744 = vsub.f32 %v5553, %v5670
        %v5745 = vsub.f32 %v5557, %v5673
        %v5746 = vsub.f32 %v5559, %v5673
        %v5747 = vsub.f32 %v5561, %v5676
        %v5748 = vsub.f32 %v5563, %v5676
        %v5749 = vsub.f32 %v5567, %v5679
        %v5750 = vsub.f32 %v5569, %v5679
        %v5751 = vsub.f32 %v5571, %v5682
        %v5752 = vsub.f32 %v5573, %v5682
        %v5753 = vsub.f32 %v5577, %v5685
        %v5754 = vsub.f32 %v5579, %v5685
        %v5755 = vsub.f32 %v5581, %v5688
        %v5756 = vsub.f32 %v5583, %v5688
        %v5757 = vsub.f32 %v5587, %v5691
        %v5758 = vsub.f32 %v5589, %v5691
        %v5759 = vsub.f32 %v5591, %v5694
        %v5760 = vsub.f32 %v5593, %v5694
        %v5761 = vsub.f32 %v5597, %v5697
        %v5762 = vsub.f32 %v5599, %v5697
        %v5763 = vsub.f32 %v5601, %v5700
        %v5764 = vsub.f32 %v5603, %v5700
        %v5765 = vmul.f32 %v5701, 1.442695
        %v5766 = vpow.pop %v5765
        %v5767 = vmul.f32 %v5702, 1.442695
        %v5768 = vpow.pop %v5767
        %v5769 = vmul.f32 %v5703, 1.442695
        %v5770 = vpow.pop %v5769
        %v5771 = vmul.f32 %v5704, 1.442695
        %v5772 = vpow.pop %v5771
        %v5773 = vmul.f32 %v5705, 1.442695
        %v5774 = vpow.pop %v5773
        %v5775 = vmul.f32 %v5706, 1.442695
        %v5776 = vpow.pop %v5775
        %v5777 = vmul.f32 %v5707, 1.442695
        %v5778 = vpow.pop %v5777
        %v5779 = vmul.f32 %v5708, 1.442695
        %v5780 = vpow.pop %v5779
        %v5781 = vmul.f32 %v5709, 1.442695
        %v5782 = vpow.pop %v5781
        %v5783 = vmul.f32 %v5710, 1.442695
        %v5784 = vpow.pop %v5783
        %v5785 = vmul.f32 %v5711, 1.442695
        %v5786 = vpow.pop %v5785
        %v5787 = vmul.f32 %v5712, 1.442695
        %v5788 = vpow.pop %v5787
        %v5789 = vmul.f32 %v5713, 1.442695
        %v5790 = vpow.pop %v5789
        %v5791 = vmul.f32 %v5714, 1.442695
        %v5792 = vpow.pop %v5791
        %v5793 = vmul.f32 %v5715, 1.442695
        %v5794 = vpow.pop %v5793
        %v5795 = vmul.f32 %v5716, 1.442695
        %v5796 = vpow.pop %v5795
        %v5797 = vmul.f32 %v5717, 1.442695
        %v5798 = vpow.pop %v5797
        %v5799 = vmul.f32 %v5718, 1.442695
        %v5800 = vpow.pop %v5799
        %v5801 = vmul.f32 %v5719, 1.442695
        %v5802 = vpow.pop %v5801
        %v5803 = vmul.f32 %v5720, 1.442695
        %v5804 = vpow.pop %v5803
        %v5805 = vmul.f32 %v5721, 1.442695
        %v5806 = vpow.pop %v5805
        %v5807 = vmul.f32 %v5722, 1.442695
        %v5808 = vpow.pop %v5807
        %v5809 = vmul.f32 %v5723, 1.442695
        %v5810 = vpow.pop %v5809
        %v5811 = vmul.f32 %v5724, 1.442695
        %v5812 = vpow.pop %v5811
        %v5813 = vmul.f32 %v5725, 1.442695
        %v5814 = vpow.pop %v5813
        %v5815 = vmul.f32 %v5726, 1.442695
        %v5816 = vpow.pop %v5815
        %v5817 = vmul.f32 %v5727, 1.442695
        %v5818 = vpow.pop %v5817
        %v5819 = vmul.f32 %v5728, 1.442695
        %v5820 = vpow.pop %v5819
        %v5821 = vmul.f32 %v5729, 1.442695
        %v5822 = vpow.pop %v5821
        %v5823 = vmul.f32 %v5730, 1.442695
        %v5824 = vpow.pop %v5823
        %v5825 = vmul.f32 %v5731, 1.442695
        %v5826 = vpow.pop %v5825
        %v5827 = vmul.f32 %v5732, 1.442695
        %v5828 = vpow.pop %v5827
        %v5829 = vmul.f32 %v5733, 1.442695
        %v5830 = vpow.pop %v5829
        %v5831 = vmul.f32 %v5734, 1.442695
        %v5832 = vpow.pop %v5831
        %v5833 = vmul.f32 %v5735, 1.442695
        %v5834 = vpow.pop %v5833
        %v5835 = vmul.f32 %v5736, 1.442695
        %v5836 = vpow.pop %v5835
        %v5837 = vmul.f32 %v5737, 1.442695
        %v5838 = vpow.pop %v5837
        %v5839 = vmul.f32 %v5738, 1.442695
        %v5840 = vpow.pop %v5839
        %v5841 = vmul.f32 %v5739, 1.442695
        %v5842 = vpow.pop %v5841
        %v5843 = vmul.f32 %v5740, 1.442695
        %v5844 = vpow.pop %v5843
        %v5845 = vmul.f32 %v5741, 1.442695
        %v5846 = vpow.pop %v5845
        %v5847 = vmul.f32 %v5742, 1.442695
        %v5848 = vpow.pop %v5847
        %v5849 = vmul.f32 %v5743, 1.442695
        %v5850 = vpow.pop %v5849
        %v5851 = vmul.f32 %v5744, 1.442695
        %v5852 = vpow.pop %v5851
        %v5853 = vmul.f32 %v5745, 1.442695
        %v5854 = vpow.pop %v5853
        %v5855 = vmul.f32 %v5746, 1.442695
        %v5856 = vpow.pop %v5855
        %v5857 = vmul.f32 %v5747, 1.442695
        %v5858 = vpow.pop %v5857
        %v5859 = vmul.f32 %v5748, 1.442695
        %v5860 = vpow.pop %v5859
        %v5861 = vmul.f32 %v5749, 1.442695
        %v5862 = vpow.pop %v5861
        %v5863 = vmul.f32 %v5750, 1.442695
        %v5864 = vpow.pop %v5863
        %v5865 = vmul.f32 %v5751, 1.442695
        %v5866 = vpow.pop %v5865
        %v5867 = vmul.f32 %v5752, 1.442695
        %v5868 = vpow.pop %v5867
        %v5869 = vmul.f32 %v5753, 1.442695
        %v5870 = vpow.pop %v5869
        %v5871 = vmul.f32 %v5754, 1.442695
        %v5872 = vpow.pop %v5871
        %v5873 = vmul.f32 %v5755, 1.442695
        %v5874 = vpow.pop %v5873
        %v5875 = vmul.f32 %v5756, 1.442695
        %v5876 = vpow.pop %v5875
        %v5877 = vmul.f32 %v5757, 1.442695
        %v5878 = vpow.pop %v5877
        %v5879 = vmul.f32 %v5758, 1.442695
        %v5880 = vpow.pop %v5879
        %v5881 = vmul.f32 %v5759, 1.442695
        %v5882 = vpow.pop %v5881
        %v5883 = vmul.f32 %v5760, 1.442695
        %v5884 = vpow.pop %v5883
        %v5885 = vmul.f32 %v5761, 1.442695
        %v5886 = vpow.pop %v5885
        %v5887 = vmul.f32 %v5762, 1.442695
        %v5888 = vpow.pop %v5887
        %v5889 = vmul.f32 %v5763, 1.442695
        %v5890 = vpow.pop %v5889
        %v5891 = vmul.f32 %v5764, 1.442695
        %v5892 = vpow.pop %v5891
        %v5893 = vadd.f32 %v5766, %v5768
        %5894 = vadd.xlane.f32.xlu0 %v5893
        %v5895 = vpop.xlane.xlu0 %5894
        %v5896 = vadd.f32 %v5770, %v5772
        %5897 = vadd.xlane.f32.xlu0 %v5896
        %v5898 = vpop.xlane.xlu0 %5897
        %v5899 = vadd.f32 %v5774, %v5776
        %5900 = vadd.xlane.f32.xlu0 %v5899
        %v5901 = vpop.xlane.xlu0 %5900
        %v5902 = vadd.f32 %v5778, %v5780
        %5903 = vadd.xlane.f32.xlu0 %v5902
        %v5904 = vpop.xlane.xlu0 %5903
        %v5905 = vadd.f32 %v5782, %v5784
        %5906 = vadd.xlane.f32.xlu0 %v5905
        %v5907 = vpop.xlane.xlu0 %5906
        %v5908 = vadd.f32 %v5786, %v5788
        %5909 = vadd.xlane.f32.xlu0 %v5908
        %v5910 = vpop.xlane.xlu0 %5909
        %v5911 = vadd.f32 %v5790, %v5792
        %5912 = vadd.xlane.f32.xlu0 %v5911
        %v5913 = vpop.xlane.xlu0 %5912
        %v5914 = vadd.f32 %v5794, %v5796
        %5915 = vadd.xlane.f32.xlu0 %v5914
        %v5916 = vpop.xlane.xlu0 %5915
        %v5917 = vadd.f32 %v5798, %v5800
        %5918 = vadd.xlane.f32.xlu0 %v5917
        %v5919 = vpop.xlane.xlu0 %5918
        %v5920 = vadd.f32 %v5802, %v5804
        %5921 = vadd.xlane.f32.xlu0 %v5920
        %v5922 = vpop.xlane.xlu0 %5921
        %v5923 = vadd.f32 %v5806, %v5808
        %5924 = vadd.xlane.f32.xlu0 %v5923
        %v5925 = vpop.xlane.xlu0 %5924
        %v5926 = vadd.f32 %v5810, %v5812
        %5927 = vadd.xlane.f32.xlu0 %v5926
        %v5928 = vpop.xlane.xlu0 %5927
        %v5929 = vadd.f32 %v5814, %v5816
        %5930 = vadd.xlane.f32.xlu0 %v5929
        %v5931 = vpop.xlane.xlu0 %5930
        %v5932 = vadd.f32 %v5818, %v5820
        %5933 = vadd.xlane.f32.xlu0 %v5932
        %v5934 = vpop.xlane.xlu0 %5933
        %v5935 = vadd.f32 %v5822, %v5824
        %5936 = vadd.xlane.f32.xlu0 %v5935
        %v5937 = vpop.xlane.xlu0 %5936
        %v5938 = vadd.f32 %v5826, %v5828
        %5939 = vadd.xlane.f32.xlu0 %v5938
        %v5940 = vpop.xlane.xlu0 %5939
        %v5941 = vadd.f32 %v5830, %v5832
        %5942 = vadd.xlane.f32.xlu0 %v5941
        %v5943 = vpop.xlane.xlu0 %5942
        %v5944 = vadd.f32 %v5834, %v5836
        %5945 = vadd.xlane.f32.xlu0 %v5944
        %v5946 = vpop.xlane.xlu0 %5945
        %v5947 = vadd.f32 %v5838, %v5840
        %5948 = vadd.xlane.f32.xlu0 %v5947
        %v5949 = vpop.xlane.xlu0 %5948
        %v5950 = vadd.f32 %v5842, %v5844
        %5951 = vadd.xlane.f32.xlu0 %v5950
        %v5952 = vpop.xlane.xlu0 %5951
        %v5953 = vadd.f32 %v5846, %v5848
        %5954 = vadd.xlane.f32.xlu0 %v5953
        %v5955 = vpop.xlane.xlu0 %5954
        %v5956 = vadd.f32 %v5850, %v5852
        %5957 = vadd.xlane.f32.xlu0 %v5956
        %v5958 = vpop.xlane.xlu0 %5957
        %v5959 = vadd.f32 %v5854, %v5856
        %5960 = vadd.xlane.f32.xlu0 %v5959
        %v5961 = vpop.xlane.xlu0 %5960
        %v5962 = vadd.f32 %v5858, %v5860
        %5963 = vadd.xlane.f32.xlu0 %v5962
        %v5964 = vpop.xlane.xlu0 %5963
        %v5965 = vadd.f32 %v5862, %v5864
        %5966 = vadd.xlane.f32.xlu0 %v5965
        %v5967 = vpop.xlane.xlu0 %5966
        %v5968 = vadd.f32 %v5866, %v5868
        %5969 = vadd.xlane.f32.xlu0 %v5968
        %v5970 = vpop.xlane.xlu0 %5969
        %v5971 = vadd.f32 %v5870, %v5872
        %5972 = vadd.xlane.f32.xlu0 %v5971
        %v5973 = vpop.xlane.xlu0 %5972
        %v5974 = vadd.f32 %v5874, %v5876
        %5975 = vadd.xlane.f32.xlu0 %v5974
        %v5976 = vpop.xlane.xlu0 %5975
        %v5977 = vadd.f32 %v5878, %v5880
        %5978 = vadd.xlane.f32.xlu0 %v5977
        %v5979 = vpop.xlane.xlu0 %5978
        %v5980 = vadd.f32 %v5882, %v5884
        %5981 = vadd.xlane.f32.xlu0 %v5980
        %v5982 = vpop.xlane.xlu0 %5981
        %v5983 = vadd.f32 %v5886, %v5888
        %5984 = vadd.xlane.f32.xlu0 %v5983
        %v5985 = vpop.xlane.xlu0 %5984
        %v5986 = vadd.f32 %v5890, %v5892
        %5987 = vadd.xlane.f32.xlu0 %v5986
        %v5988 = vpop.xlane.xlu0 %5987
        %v5989 = vrcp.pop %v5895
        %v5990 = vrcp.pop %v5898
        %v5991 = vrcp.pop %v5901
        %v5992 = vrcp.pop %v5904
        %v5993 = vrcp.pop %v5907
        %v5994 = vrcp.pop %v5910
        %v5995 = vrcp.pop %v5913
        %v5996 = vrcp.pop %v5916
        %v5997 = vrcp.pop %v5919
        %v5998 = vrcp.pop %v5922
        %v5999 = vrcp.pop %v5925
        %v6000 = vrcp.pop %v5928
        %v6001 = vrcp.pop %v5931
        %v6002 = vrcp.pop %v5934
        %v6003 = vrcp.pop %v5937
        %v6004 = vrcp.pop %v5940
        %v6005 = vrcp.pop %v5943
        %v6006 = vrcp.pop %v5946
        %v6007 = vrcp.pop %v5949
        %v6008 = vrcp.pop %v5952
        %v6009 = vrcp.pop %v5955
        %v6010 = vrcp.pop %v5958
        %v6011 = vrcp.pop %v5961
        %v6012 = vrcp.pop %v5964
        %v6013 = vrcp.pop %v5967
        %v6014 = vrcp.pop %v5970
        %v6015 = vrcp.pop %v5973
        %v6016 = vrcp.pop %v5976
        %v6017 = vrcp.pop %v5979
        %v6018 = vrcp.pop %v5982
        %v6019 = vrcp.pop %v5985
        %v6020 = vrcp.pop %v5988
        %v6021 = vmul.f32 %v5989, 0.00390625
        %v6022 = vmul.f32 %v5990, 0.00390625
        %v6023 = vmul.f32 %v5991, 0.00390625
        %v6024 = vmul.f32 %v5992, 0.00390625
        %v6025 = vmul.f32 %v5993, 0.00390625
        %v6026 = vmul.f32 %v5994, 0.00390625
        %v6027 = vmul.f32 %v5995, 0.00390625
        %v6028 = vmul.f32 %v5996, 0.00390625
        %v6029 = vmul.f32 %v5997, 0.00390625
        %v6030 = vmul.f32 %v5998, 0.00390625
        %v6031 = vmul.f32 %v5999, 0.00390625
        %v6032 = vmul.f32 %v6000, 0.00390625
        %v6033 = vmul.f32 %v6001, 0.00390625
        %v6034 = vmul.f32 %v6002, 0.00390625
        %v6035 = vmul.f32 %v6003, 0.00390625
        %v6036 = vmul.f32 %v6004, 0.00390625
        %v6037 = vmul.f32 %v6005, 0.00390625
        %v6038 = vmul.f32 %v6006, 0.00390625
        %v6039 = vmul.f32 %v6007, 0.00390625
        %v6040 = vmul.f32 %v6008, 0.00390625
        %v6041 = vmul.f32 %v6009, 0.00390625
        %v6042 = vmul.f32 %v6010, 0.00390625
        %v6043 = vmul.f32 %v6011, 0.00390625
        %v6044 = vmul.f32 %v6012, 0.00390625
        %v6045 = vmul.f32 %v6013, 0.00390625
        %v6046 = vmul.f32 %v6014, 0.00390625
        %v6047 = vmul.f32 %v6015, 0.00390625
        %v6048 = vmul.f32 %v6016, 0.00390625
        %v6049 = vmul.f32 %v6017, 0.00390625
        %v6050 = vmul.f32 %v6018, 0.00390625
        %v6051 = vmul.f32 %v6019, 0.00390625
        %v6052 = vmul.f32 %v6020, 0.00390625
        %v6053 = vmul.f32 %v5766, %v6021
        %v6054 = vmul.f32 %v5768, %v6021
        %v6055 = vmul.f32 %v5770, %v6022
        %v6056 = vmul.f32 %v5772, %v6022
        %v6057 = vmul.f32 %v5774, %v6023
        %v6058 = vmul.f32 %v5776, %v6023
        %v6059 = vmul.f32 %v5778, %v6024
        %v6060 = vmul.f32 %v5780, %v6024
        %v6061 = vmul.f32 %v5782, %v6025
        %v6062 = vmul.f32 %v5784, %v6025
        %v6063 = vmul.f32 %v5786, %v6026
        %v6064 = vmul.f32 %v5788, %v6026
        %v6065 = vmul.f32 %v5790, %v6027
        %v6066 = vmul.f32 %v5792, %v6027
        %v6067 = vmul.f32 %v5794, %v6028
        %v6068 = vmul.f32 %v5796, %v6028
        %v6069 = vmul.f32 %v5798, %v6029
        %v6070 = vmul.f32 %v5800, %v6029
        %v6071 = vmul.f32 %v5802, %v6030
        %v6072 = vmul.f32 %v5804, %v6030
        %v6073 = vmul.f32 %v5806, %v6031
        %v6074 = vmul.f32 %v5808, %v6031
        %v6075 = vmul.f32 %v5810, %v6032
        %v6076 = vmul.f32 %v5812, %v6032
        %v6077 = vmul.f32 %v5814, %v6033
        %v6078 = vmul.f32 %v5816, %v6033
        %v6079 = vmul.f32 %v5818, %v6034
        %v6080 = vmul.f32 %v5820, %v6034
        %v6081 = vmul.f32 %v5822, %v6035
        %v6082 = vmul.f32 %v5824, %v6035
        %v6083 = vmul.f32 %v5826, %v6036
        %v6084 = vmul.f32 %v5828, %v6036
        %v6085 = vmul.f32 %v5830, %v6037
        %v6086 = vmul.f32 %v5832, %v6037
        %v6087 = vmul.f32 %v5834, %v6038
        %v6088 = vmul.f32 %v5836, %v6038
        %v6089 = vmul.f32 %v5838, %v6039
        %v6090 = vmul.f32 %v5840, %v6039
        %v6091 = vmul.f32 %v5842, %v6040
        %v6092 = vmul.f32 %v5844, %v6040
        %v6093 = vmul.f32 %v5846, %v6041
        %v6094 = vmul.f32 %v5848, %v6041
        %v6095 = vmul.f32 %v5850, %v6042
        %v6096 = vmul.f32 %v5852, %v6042
        %v6097 = vmul.f32 %v5854, %v6043
        %v6098 = vmul.f32 %v5856, %v6043
        %v6099 = vmul.f32 %v5858, %v6044
        %v6100 = vmul.f32 %v5860, %v6044
        %v6101 = vmul.f32 %v5862, %v6045
        %v6102 = vmul.f32 %v5864, %v6045
        %v6103 = vmul.f32 %v5866, %v6046
        %v6104 = vmul.f32 %v5868, %v6046
        %v6105 = vmul.f32 %v5870, %v6047
        %v6106 = vmul.f32 %v5872, %v6047
        %v6107 = vmul.f32 %v5874, %v6048
        %v6108 = vmul.f32 %v5876, %v6048
        %v6109 = vmul.f32 %v5878, %v6049
        %v6110 = vmul.f32 %v5880, %v6049
        %v6111 = vmul.f32 %v5882, %v6050
        %v6112 = vmul.f32 %v5884, %v6050
        %v6113 = vmul.f32 %v5886, %v6051
        %v6114 = vmul.f32 %v5888, %v6051
        %v6115 = vmul.f32 %v5890, %v6052
        %v6116 = vmul.f32 %v5892, %v6052
        %v6117 = vpack.c.bf16 %v6055, %v6053
        %v6118 = vpack.c.bf16 %v6056, %v6054
        %v6119 = vpack.c.bf16 %v6059, %v6057
        %v6120 = vpack.c.bf16 %v6060, %v6058
        %v6121 = vpack.c.bf16 %v6063, %v6061
        %v6122 = vpack.c.bf16 %v6064, %v6062
        %v6123 = vpack.c.bf16 %v6067, %v6065
        %v6124 = vpack.c.bf16 %v6068, %v6066
        %v6125 = vpack.c.bf16 %v6071, %v6069
        %v6126 = vpack.c.bf16 %v6072, %v6070
        %v6127 = vpack.c.bf16 %v6075, %v6073
        %v6128 = vpack.c.bf16 %v6076, %v6074
        %v6129 = vpack.c.bf16 %v6079, %v6077
        %v6130 = vpack.c.bf16 %v6080, %v6078
        %v6131 = vpack.c.bf16 %v6083, %v6081
        %v6132 = vpack.c.bf16 %v6084, %v6082
        %v6133 = vpack.c.bf16 %v6087, %v6085
        %v6134 = vpack.c.bf16 %v6088, %v6086
        %v6135 = vpack.c.bf16 %v6091, %v6089
        %v6136 = vpack.c.bf16 %v6092, %v6090
        %v6137 = vpack.c.bf16 %v6095, %v6093
        %v6138 = vpack.c.bf16 %v6096, %v6094
        %v6139 = vpack.c.bf16 %v6099, %v6097
        %v6140 = vpack.c.bf16 %v6100, %v6098
        %v6141 = vpack.c.bf16 %v6103, %v6101
        %v6142 = vpack.c.bf16 %v6104, %v6102
        %v6143 = vpack.c.bf16 %v6107, %v6105
        %v6144 = vpack.c.bf16 %v6108, %v6106
        %v6145 = vpack.c.bf16 %v6111, %v6109
        %v6146 = vpack.c.bf16 %v6112, %v6110
        %v6147 = vpack.c.bf16 %v6115, %v6113
        %v6148 = vpack.c.bf16 %v6116, %v6114
        %6149 = vmatprep.subr.bf16.mxu0 %v6118
        %6150 = vmatpush1.bf16.msra.mxu0 %v6117
        %6151 = vmatprep.subr.bf16.mxu0 %v6120
        %6152 = vmatpush1.bf16.msra.mxu0 %v6119
        %6153 = vmatprep.subr.bf16.mxu0 %v6122
        %6154 = vmatpush1.bf16.msra.mxu0 %v6121
        %6155 = vmatprep.subr.bf16.mxu0 %v6124
        %6156 = vmatpush1.bf16.msra.mxu0 %v6123
        %6157 = vmatprep.subr.bf16.mxu0 %v6126
        %6158 = vmatpush1.bf16.msra.mxu0 %v6125
        %6159 = vmatprep.subr.bf16.mxu0 %v6128
        %6160 = vmatpush1.bf16.msra.mxu0 %v6127
        %6161 = vmatprep.subr.bf16.mxu0 %v6130
        %6162 = vmatpush1.bf16.msra.mxu0 %v6129
        %6163 = vmatprep.subr.bf16.mxu0 %v6132
        %6164 = vmatpush1.bf16.msra.mxu0 %v6131
        %6165 = vmatprep.subr.bf16.mxu0 %v6134
        %6166 = vmatpush1.bf16.msra.mxu0 %v6133
        %6167 = vmatprep.subr.bf16.mxu0 %v6136
        %6168 = vmatpush1.bf16.msra.mxu0 %v6135
        %6169 = vmatprep.subr.bf16.mxu0 %v6138
        %6170 = vmatpush1.bf16.msra.mxu0 %v6137
        %6171 = vmatprep.subr.bf16.mxu0 %v6140
        %6172 = vmatpush1.bf16.msra.mxu0 %v6139
        %6173 = vmatprep.subr.bf16.mxu0 %v6142
        %6174 = vmatpush1.bf16.msra.mxu0 %v6141
        %6175 = vmatprep.subr.bf16.mxu0 %v6144
        %6176 = vmatpush1.bf16.msra.mxu0 %v6143
        %6177 = vmatprep.subr.bf16.mxu0 %v6146
        %6178 = vmatpush1.bf16.msra.mxu0 %v6145
        %6179 = vmatprep.subr.bf16.mxu0 %v6148
        %6180 = vmatpush1.bf16.msra.mxu0 %v6147
        %6181 = vmatprep.mubr.bf16.mxu0 1065369472
        %6182 = vmatmul.mubr.bf16.gmra.mrb[0].mxu0 1065369472
        %v6183 = vpop.f32.mrb[0].mxu0
        %v6184 = vadd.f32 0.0, %v6183
        %v6185 = vpop.f32.mrb[0].mxu0
        %v6186 = vadd.f32 0.0, %v6185
        %v6187 = vpop.f32.mrb[0].mxu0
        %v6188 = vpop.f32.mrb[0].mxu0
        %6189 = vdwg.mxu0
        %v6190 = vpack.c.bf16 %v6184, %v6184
        %v6191 = vpack.c.bf16 %v6186, %v6186
        %6192 = vrot.lane.b32.xlu0 %v2201, 32
        %v6193 = vpop.permute.xlu0 %6192
        %6194 = vrot.lane.b32.xlu0 %v2202, 32
        %v6195 = vpop.permute.xlu0 %6194
        %6196 = vrot.lane.b32.xlu0 %v2203, 32
        %v6197 = vpop.permute.xlu0 %6196
        %6198 = vrot.lane.b32.xlu0 %v2204, 32
        %v6199 = vpop.permute.xlu0 %6198
        %6200 = vrot.lane.b32.xlu0 %v2205, 32
        %v6201 = vpop.permute.xlu0 %6200
        %6202 = vrot.lane.b32.xlu0 %v2206, 32
        %v6203 = vpop.permute.xlu0 %6202
        %6204 = vrot.lane.b32.xlu0 %v2207, 32
        %v6205 = vpop.permute.xlu0 %6204
        %6206 = vrot.lane.b32.xlu0 %v2208, 32
        %v6207 = vpop.permute.xlu0 %6206
        %6208 = vrot.lane.b32.xlu0 %v2209, 32
        %v6209 = vpop.permute.xlu0 %6208
        %6210 = vrot.lane.b32.xlu0 %v2210, 32
        %v6211 = vpop.permute.xlu0 %6210
        %6212 = vrot.lane.b32.xlu0 %v2211, 32
        %v6213 = vpop.permute.xlu0 %6212
        %6214 = vrot.lane.b32.xlu0 %v2212, 32
        %v6215 = vpop.permute.xlu0 %6214
        %6216 = vrot.lane.b32.xlu0 %v2213, 32
        %v6217 = vpop.permute.xlu0 %6216
        %6218 = vrot.lane.b32.xlu0 %v2214, 32
        %v6219 = vpop.permute.xlu0 %6218
        %6220 = vrot.lane.b32.xlu0 %v2215, 32
        %v6221 = vpop.permute.xlu0 %6220
        %6222 = vrot.lane.b32.xlu0 %v2216, 32
        %v6223 = vpop.permute.xlu0 %6222
        %6240 = vmatprep.subr.bf16.mxu0 0
        %6241 = vmatpush1.bf16.msra.mxu0 %v6193
        %6242 = vmatprep.subr.bf16.mxu0 0
        %6243 = vmatpush1.bf16.msra.mxu0 %v6195
        %6244 = vmatprep.subr.bf16.mxu0 0
        %6245 = vmatpush1.bf16.msra.mxu0 %v6197
        %6246 = vmatprep.subr.bf16.mxu0 0
        %6247 = vmatpush1.bf16.msra.mxu0 %v6199
        %6248 = vmatprep.subr.bf16.mxu0 0
        %6249 = vmatpush1.bf16.msra.mxu0 %v6201
        %6250 = vmatprep.subr.bf16.mxu0 0
        %6251 = vmatpush1.bf16.msra.mxu0 %v6203
        %6252 = vmatprep.subr.bf16.mxu0 0
        %6253 = vmatpush1.bf16.msra.mxu0 %v6205
        %6254 = vmatprep.subr.bf16.mxu0 0
        %6255 = vmatpush1.bf16.msra.mxu0 %v6207
        %6256 = vmatprep.subr.bf16.mxu0 0
        %6257 = vmatpush1.bf16.msra.mxu0 %v6209
        %6258 = vmatprep.subr.bf16.mxu0 0
        %6259 = vmatpush1.bf16.msra.mxu0 %v6211
        %6260 = vmatprep.subr.bf16.mxu0 0
        %6261 = vmatpush1.bf16.msra.mxu0 %v6213
        %6262 = vmatprep.subr.bf16.mxu0 0
        %6263 = vmatpush1.bf16.msra.mxu0 %v6215
        %6264 = vmatprep.subr.bf16.mxu0 0
        %6265 = vmatpush1.bf16.msra.mxu0 %v6217
        %6266 = vmatprep.subr.bf16.mxu0 0
        %6267 = vmatpush1.bf16.msra.mxu0 %v6219
        %6268 = vmatprep.subr.bf16.mxu0 0
        %6269 = vmatpush1.bf16.msra.mxu0 %v6221
        %6270 = vmatprep.subr.bf16.mxu0 0
        %6271 = vmatpush1.bf16.msra.mxu0 %v6223
        %6272 = vmatprep.mubr.bf16.mxu0 %v6191
        %6273 = vmatmul.mubr.bf16.gmra.mrb[0].mxu0 %v6190
        %v6274 = vpop.f32.mrb[0].mxu0
        %v6275 = vadd.f32 0.0, %v6274
        %v6276 = vpop.f32.mrb[0].mxu0
        %v6277 = vpop.f32.mrb[0].mxu0
        %v6278 = vpop.f32.mrb[0].mxu0
        %6279 = vdwg.mxu0
        %6281 = vrot.lane.b32.xlu0 %v6275, 96
        %v6282 = vpop.permute.xlu0 %6281
        %vm6284 = vcmask 1041152
        %6285 = vst.msk [vmem:[#allocation5] sm:$0x1] %vm6284, %v6282
        %v6286 = vld [vmem:[#allocation5] sm:$0x1]
        %v6287 = vld [vmem:[%s10] sm:$0xff]
        %v6288 = vld [vmem:[%s10 + $0x8] sm:$0xff]
        %v6289 = vld [vmem:[%s10 + $0x10] sm:$0xff]
        %v6290 = vld [vmem:[%s10 + $0x18] sm:$0xff]
        %v6291 = vld [vmem:[%s10 + $0x20] sm:$0xff]
        %v6292 = vld [vmem:[%s10 + $0x28] sm:$0xff]
        %v6293 = vld [vmem:[%s10 + $0x30] sm:$0xff]
        %v6294 = vld [vmem:[%s10 + $0x38] sm:$0xff]
        %v6295 = vld [vmem:[%s10 + $0x40] sm:$0xff]
        %v6296 = vld [vmem:[%s10 + $0x48] sm:$0xff]
        %v6297 = vld [vmem:[%s10 + $0x50] sm:$0xff]
        %v6298 = vld [vmem:[%s10 + $0x58] sm:$0xff]
        %v6299 = vld [vmem:[%s10 + $0x60] sm:$0xff]
        %v6300 = vld [vmem:[%s10 + $0x68] sm:$0xff]
        %v6301 = vld [vmem:[%s10 + $0x70] sm:$0xff]
        %v6302 = vld [vmem:[%s10 + $0x78] sm:$0xff]
        %v6303 = vld [vmem:[%s11] sm:$0x1]
        %6304 = vmatprep.subr.mxu0 0.0
        %6305 = vmatpush1.msra.mxu0 %v6287
        %6306 = vmatprep.subr.mxu0 0.0
        %6307 = vmatpush1.msra.mxu0 %v6288
        %6308 = vmatprep.subr.mxu0 0.0
        %6309 = vmatpush1.msra.mxu0 %v6289
        %6310 = vmatprep.subr.mxu0 0.0
        %6311 = vmatpush1.msra.mxu0 %v6290
        %6312 = vmatprep.subr.mxu0 0.0
        %6313 = vmatpush1.msra.mxu0 %v6291
        %6314 = vmatprep.subr.mxu0 0.0
        %6315 = vmatpush1.msra.mxu0 %v6292
        %6316 = vmatprep.subr.mxu0 0.0
        %6317 = vmatpush1.msra.mxu0 %v6293
        %6318 = vmatprep.subr.mxu0 0.0
        %6319 = vmatpush1.msra.mxu0 %v6294
        %6320 = vmatprep.subr.mxu0 0.0
        %6321 = vmatpush1.msra.mxu0 %v6295
        %6322 = vmatprep.subr.mxu0 0.0
        %6323 = vmatpush1.msra.mxu0 %v6296
        %6324 = vmatprep.subr.mxu0 0.0
        %6325 = vmatpush1.msra.mxu0 %v6297
        %6326 = vmatprep.subr.mxu0 0.0
        %6327 = vmatpush1.msra.mxu0 %v6298
        %6328 = vmatprep.subr.mxu0 0.0
        %6329 = vmatpush1.msra.mxu0 %v6299
        %6330 = vmatprep.subr.mxu0 0.0
        %6331 = vmatpush1.msra.mxu0 %v6300
        %6332 = vmatprep.subr.mxu0 0.0
        %6333 = vmatpush1.msra.mxu0 %v6301
        %6334 = vmatprep.subr.mxu0 0.0
        %6335 = vmatpush1.msra.mxu0 %v6302
        %6336 = vmatprep.subr.mxu0 0.0
        %6337 = vmatpush1.msra.mxu0 0.0
        %6338 = vmatprep.subr.mxu0 0.0
        %6339 = vmatpush1.msra.mxu0 0.0
        %6340 = vmatprep.subr.mxu0 0.0
        %6341 = vmatpush1.msra.mxu0 0.0
        %6342 = vmatprep.subr.mxu0 0.0
        %6343 = vmatpush1.msra.mxu0 0.0
        %6344 = vmatprep.subr.mxu0 0.0
        %6345 = vmatpush1.msra.mxu0 0.0
        %6346 = vmatprep.subr.mxu0 0.0
        %6347 = vmatpush1.msra.mxu0 0.0
        %6348 = vmatprep.subr.mxu0 0.0
        %6349 = vmatpush1.msra.mxu0 0.0
        %6350 = vmatprep.subr.mxu0 0.0
        %6351 = vmatpush1.msra.mxu0 0.0
        %6352 = vmatprep.subr.mxu0 0.0
        %6353 = vmatpush1.msra.mxu0 0.0
        %6354 = vmatprep.subr.mxu0 0.0
        %6355 = vmatpush1.msra.mxu0 0.0
        %6356 = vmatprep.subr.mxu0 0.0
        %6357 = vmatpush1.msra.mxu0 0.0
        %6358 = vmatprep.subr.mxu0 0.0
        %6359 = vmatpush1.msra.mxu0 0.0
        %6360 = vmatprep.subr.mxu0 0.0
        %6361 = vmatpush1.msra.mxu0 0.0
        %6362 = vmatprep.subr.mxu0 0.0
        %6363 = vmatpush1.msra.mxu0 0.0
        %6364 = vmatprep.subr.mxu0 0.0
        %6365 = vmatpush1.msra.mxu0 0.0
        %6366 = vmatprep.subr.mxu0 0.0
        %6367 = vmatpush1.msra.mxu0 0.0
        %6368 = vmatprep.mubr.f32.mxu0 0.0
        %6369 = vmatmul.mubr.f32.gmra.mrb[0].mxu0 %v6286
        %v6370 = vpop.f32.mrb[0].mxu0
        %v6371 = vadd.f32 %v6303, %v6370
        %v6372 = vpop.f32.mrb[0].mxu0
        %6373 = vdwg.mxu0
        %v6374 = vld [vmem:[%s12] sm:$0xff]
        %v6375 = vld [vmem:[%s12 + $0x8] sm:$0xff]
        %v6376 = vld [vmem:[%s12 + $0x10] sm:$0xff]
        %v6377 = vld [vmem:[%s12 + $0x18] sm:$0xff]
        %v6378 = vld [vmem:[%s12 + $0x20] sm:$0xff]
        %v6379 = vld [vmem:[%s12 + $0x28] sm:$0xff]
        %v6380 = vld [vmem:[%s12 + $0x30] sm:$0xff]
        %v6381 = vld [vmem:[%s12 + $0x38] sm:$0xff]
        %v6382 = vld [vmem:[%s12 + $0x40] sm:$0xff]
        %v6383 = vld [vmem:[%s12 + $0x48] sm:$0xff]
        %v6384 = vld [vmem:[%s12 + $0x50] sm:$0xff]
        %v6385 = vld [vmem:[%s12 + $0x58] sm:$0xff]
        %v6386 = vld [vmem:[%s12 + $0x60] sm:$0xff]
        %v6387 = vld [vmem:[%s12 + $0x68] sm:$0xff]
        %v6388 = vld [vmem:[%s12 + $0x70] sm:$0xff]
        %v6389 = vld [vmem:[%s12 + $0x78] sm:$0xff]
        %v6390 = vld [vmem:[%s13] sm:$0x1]
        %6391 = vmatprep.subr.mxu0 0.0
        %6392 = vmatpush1.msra.mxu0 %v6374
        %6393 = vmatprep.subr.mxu0 0.0
        %6394 = vmatpush1.msra.mxu0 %v6375
        %6395 = vmatprep.subr.mxu0 0.0
        %6396 = vmatpush1.msra.mxu0 %v6376
        %6397 = vmatprep.subr.mxu0 0.0
        %6398 = vmatpush1.msra.mxu0 %v6377
        %6399 = vmatprep.subr.mxu0 0.0
        %6400 = vmatpush1.msra.mxu0 %v6378
        %6401 = vmatprep.subr.mxu0 0.0
        %6402 = vmatpush1.msra.mxu0 %v6379
        %6403 = vmatprep.subr.mxu0 0.0
        %6404 = vmatpush1.msra.mxu0 %v6380
        %6405 = vmatprep.subr.mxu0 0.0
        %6406 = vmatpush1.msra.mxu0 %v6381
        %6407 = vmatprep.subr.mxu0 0.0
        %6408 = vmatpush1.msra.mxu0 %v6382
        %6409 = vmatprep.subr.mxu0 0.0
        %6410 = vmatpush1.msra.mxu0 %v6383
        %6411 = vmatprep.subr.mxu0 0.0
        %6412 = vmatpush1.msra.mxu0 %v6384
        %6413 = vmatprep.subr.mxu0 0.0
        %6414 = vmatpush1.msra.mxu0 %v6385
        %6415 = vmatprep.subr.mxu0 0.0
        %6416 = vmatpush1.msra.mxu0 %v6386
        %6417 = vmatprep.subr.mxu0 0.0
        %6418 = vmatpush1.msra.mxu0 %v6387
        %6419 = vmatprep.subr.mxu0 0.0
        %6420 = vmatpush1.msra.mxu0 %v6388
        %6421 = vmatprep.subr.mxu0 0.0
        %6422 = vmatpush1.msra.mxu0 %v6389
        %6423 = vmatprep.subr.mxu0 0.0
        %6424 = vmatpush1.msra.mxu0 0.0
        %6425 = vmatprep.subr.mxu0 0.0
        %6426 = vmatpush1.msra.mxu0 0.0
        %6427 = vmatprep.subr.mxu0 0.0
        %6428 = vmatpush1.msra.mxu0 0.0
        %6429 = vmatprep.subr.mxu0 0.0
        %6430 = vmatpush1.msra.mxu0 0.0
        %6431 = vmatprep.subr.mxu0 0.0
        %6432 = vmatpush1.msra.mxu0 0.0
        %6433 = vmatprep.subr.mxu0 0.0
        %6434 = vmatpush1.msra.mxu0 0.0
        %6435 = vmatprep.subr.mxu0 0.0
        %6436 = vmatpush1.msra.mxu0 0.0
        %6437 = vmatprep.subr.mxu0 0.0
        %6438 = vmatpush1.msra.mxu0 0.0
        %6439 = vmatprep.subr.mxu0 0.0
        %6440 = vmatpush1.msra.mxu0 0.0
        %6441 = vmatprep.subr.mxu0 0.0
        %6442 = vmatpush1.msra.mxu0 0.0
        %6443 = vmatprep.subr.mxu0 0.0
        %6444 = vmatpush1.msra.mxu0 0.0
        %6445 = vmatprep.subr.mxu0 0.0
        %6446 = vmatpush1.msra.mxu0 0.0
        %6447 = vmatprep.subr.mxu0 0.0
        %6448 = vmatpush1.msra.mxu0 0.0
        %6449 = vmatprep.subr.mxu0 0.0
        %6450 = vmatpush1.msra.mxu0 0.0
        %6451 = vmatprep.subr.mxu0 0.0
        %6452 = vmatpush1.msra.mxu0 0.0
        %6453 = vmatprep.subr.mxu0 0.0
        %6454 = vmatpush1.msra.mxu0 0.0
        %6455 = vmatprep.mubr.f32.mxu0 0.0
        %6456 = vmatmul.mubr.f32.gmra.mrb[0].mxu0 %v6371
        %v6457 = vpop.f32.mrb[0].mxu0
        %v6458 = vadd.f32 %v6390, %v6457
        %v6459 = vpop.f32.mrb[0].mxu0
        %6460 = vdwg.mxu0
        %v6461 = vmax.f32 %v6458, 0.0
        %v6462 = vld [vmem:[%s14] sm:$0x1]
        %v6463 = vld [vmem:[%s15] sm:$0x1]
        %vm6464 = vcmask 516096
        %v6465 = vsel %vm6464, %v6461, 0.0
        %6466 = vadd.xlane.f32.xlu0 %v6465
        %v6467 = vpop.xlane.xlu0 %6466
        %v6468 = vrcp.pop 64.0
        %v6469 = vmul.f32 %v6467, %v6468
        %v6470 = vsub.f32 %v6461, %v6469
        %v6471 = vmul.f32 %v6470, %v6470
        %v6472 = vsel %vm6464, %v6471, 0.0
        %6473 = vadd.xlane.f32.xlu0 %v6472
        %v6474 = vpop.xlane.xlu0 %6473
        %v6475 = vmul.f32 %v6474, %v6468
        %v6476 = vadd.f32 %v6475, 1e-05
        %v6477 = vrsqrt.pop %v6476
        %v6478 = vmul.f32 %v6470, %v6477
        %v6479 = vmul.f32 %v6478, %v6462
        %v6480 = vadd.f32 %v6479, %v6463
        %v6481 = vld [vmem:[%s16] sm:$0xff]
        %v6482 = vld [vmem:[%s16 + $0x8] sm:$0xff]
        %v6483 = vld [vmem:[%s16 + $0x10] sm:$0xff]
        %v6484 = vld [vmem:[%s16 + $0x18] sm:$0xff]
        %v6485 = vld [vmem:[%s16 + $0x20] sm:$0xff]
        %v6486 = vld [vmem:[%s16 + $0x28] sm:$0xff]
        %v6487 = vld [vmem:[%s16 + $0x30] sm:$0xff]
        %v6488 = vld [vmem:[%s16 + $0x38] sm:$0xff]
        %v6489 = vld [vmem:[%s17] sm:$0x1]
        %vm6490 = vcmask 523264
        %v6492 = vsel %vm6490, %v6480, 0
        %6494 = vmatprep.subr.mxu0 0.0
        %6495 = vmatpush1.msra.mxu0 %v6481
        %6496 = vmatprep.subr.mxu0 0.0
        %6497 = vmatpush1.msra.mxu0 %v6482
        %6498 = vmatprep.subr.mxu0 0.0
        %6499 = vmatpush1.msra.mxu0 %v6483
        %6500 = vmatprep.subr.mxu0 0.0
        %6501 = vmatpush1.msra.mxu0 %v6484
        %6502 = vmatprep.subr.mxu0 0.0
        %6503 = vmatpush1.msra.mxu0 %v6485
        %6504 = vmatprep.subr.mxu0 0.0
        %6505 = vmatpush1.msra.mxu0 %v6486
        %6506 = vmatprep.subr.mxu0 0.0
        %6507 = vmatpush1.msra.mxu0 %v6487
        %6508 = vmatprep.subr.mxu0 0.0
        %6509 = vmatpush1.msra.mxu0 %v6488
        %6510 = vmatprep.subr.mxu0 0.0
        %6511 = vmatpush1.msra.mxu0 0.0
        %6512 = vmatprep.subr.mxu0 0.0
        %6513 = vmatpush1.msra.mxu0 0.0
        %6514 = vmatprep.subr.mxu0 0.0
        %6515 = vmatpush1.msra.mxu0 0.0
        %6516 = vmatprep.subr.mxu0 0.0
        %6517 = vmatpush1.msra.mxu0 0.0
        %6518 = vmatprep.subr.mxu0 0.0
        %6519 = vmatpush1.msra.mxu0 0.0
        %6520 = vmatprep.subr.mxu0 0.0
        %6521 = vmatpush1.msra.mxu0 0.0
        %6522 = vmatprep.subr.mxu0 0.0
        %6523 = vmatpush1.msra.mxu0 0.0
        %6524 = vmatprep.subr.mxu0 0.0
        %6525 = vmatpush1.msra.mxu0 0.0
        %6526 = vmatprep.subr.mxu0 0.0
        %6527 = vmatpush1.msra.mxu0 0.0
        %6528 = vmatprep.subr.mxu0 0.0
        %6529 = vmatpush1.msra.mxu0 0.0
        %6530 = vmatprep.subr.mxu0 0.0
        %6531 = vmatpush1.msra.mxu0 0.0
        %6532 = vmatprep.subr.mxu0 0.0
        %6533 = vmatpush1.msra.mxu0 0.0
        %6534 = vmatprep.subr.mxu0 0.0
        %6535 = vmatpush1.msra.mxu0 0.0
        %6536 = vmatprep.subr.mxu0 0.0
        %6537 = vmatpush1.msra.mxu0 0.0
        %6538 = vmatprep.subr.mxu0 0.0
        %6539 = vmatpush1.msra.mxu0 0.0
        %6540 = vmatprep.subr.mxu0 0.0
        %6541 = vmatpush1.msra.mxu0 0.0
        %6542 = vmatprep.subr.mxu0 0.0
        %6543 = vmatpush1.msra.mxu0 0.0
        %6544 = vmatprep.subr.mxu0 0.0
        %6545 = vmatpush1.msra.mxu0 0.0
        %6546 = vmatprep.subr.mxu0 0.0
        %6547 = vmatpush1.msra.mxu0 0.0
        %6548 = vmatprep.subr.mxu0 0.0
        %6549 = vmatpush1.msra.mxu0 0.0
        %6550 = vmatprep.subr.mxu0 0.0
        %6551 = vmatpush1.msra.mxu0 0.0
        %6552 = vmatprep.subr.mxu0 0.0
        %6553 = vmatpush1.msra.mxu0 0.0
        %6554 = vmatprep.subr.mxu0 0.0
        %6555 = vmatpush1.msra.mxu0 0.0
        %6556 = vmatprep.subr.mxu0 0.0
        %6557 = vmatpush1.msra.mxu0 0.0
        %6558 = vmatprep.mubr.f32.mxu0 0.0
        %6559 = vmatmul.mubr.f32.gmra.mrb[0].mxu0 %v6492
        %v6560 = vpop.f32.mrb[0].mxu0
        %v6561 = vadd.f32 %v6489, %v6560
        %v6562 = vpop.f32.mrb[0].mxu0
        %6563 = vdwg.mxu0
        %vm6564 = vcmask 1040384
        %v6565 = vsel %vm6564, %v6561, -inf
        %6566 = vmax.xlane.f32.xlu0 %v6565
        %v6567 = vpop.xlane.xlu0 %6566
        %v6568 = vsub.f32 %v6561, %v6567
        %v6569 = vmul.f32 %v6568, 1.442695
        %v6570 = vpow.pop %v6569
        %v6571 = vsel %vm6564, %v6570, 0.0
        %6572 = vadd.xlane.f32.xlu0 %v6571
        %v6573 = vpop.xlane.xlu0 %6572
        %v6574 = vrcp.pop %v6573
        %v6575 = vmul.f32 %v6570, %v6574
        %6576 = vst [vmem:[%s567] sm:$0x1] %v6575
        %s6577 = sand.u32 %s423, 1
        %s6578 = scalar_lea.sflag [#allocation7], %s6577
        %s6579 = sand.u32 %s423, 1
        %s6580 = scalar_lea.vmem [#allocation6], %s6579
        // Predicated region
        $region93: #{tpu_custom_call.1} parent=91 // pred_check
          %p6581 = pneg %p433
        $region94: #{tpu_custom_call.1} parent=91 // pred_check_branch
          %6583 = sbr.rel (%p6581) target = $region96
        $region95: #{tpu_custom_call.1} parent=91 // pred_region
          %s6585 = ssub.s32 16, 16
          %6586 = vsyncadd %s6578, %s6585
          %s6587 = smul.addr %s32, 16
          %s6588 = scalar_lea.hbm %s18, %s6587
          %s6590 = sshll.u32 %s6580, 4
          %s6591 = int_to_ptr.vmem [resolvable:$true] %s6590
          %6593 = dma.vmem_to_hbm [thread:$0]  %s6591, 16, %s6588, %s6578
        $region96: #{tpu_custom_call.1} parent=91 // pred_fallthru
          _
      $region92: #{tpu_custom_call.1} parent=5 // pred_fallthru
        _
      %p6594 = scmp.le.s32.totalorder 2, %s27
      // Predicated region
      $region97: #{tpu_custom_call.1} parent=5 // pred_check
        %p6595 = pneg %p6594
      $region98: #{tpu_custom_call.1} parent=5 // pred_check_branch
        %6597 = sbr.rel (%p6595) target = $region100
      $region99: #{tpu_custom_call.1} parent=5 // pred_region
        %s6598 = ssub.s32 %s27, 2
        // Predicated region
        $region101: #{tpu_custom_call.1} parent=99 // pred_check
          %p6599 = pneg %p439
        $region102: #{tpu_custom_call.1} parent=99 // pred_check_branch
          %6601 = sbr.rel (%p6599) target = $region104
        $region103: #{tpu_custom_call.1} parent=99 // pred_region
          %s6602 = sand.u32 %s424, 1
          %s6603 = scalar_lea.sflag [#allocation7], %s6602
          %s6604 = sand.u32 %s424, 1
          %s6605 = scalar_lea.vmem [#allocation6], %s6604
          %6606 = dma.done %s6603, 16
        $region104: #{tpu_custom_call.1} parent=99 // pred_fallthru
          _
      $region100: #{tpu_custom_call.1} parent=5 // pred_fallthru
        _
    $region6: #{tpu_custom_call.1} parent=1 // loop_footer
      %s31 = sadd.s32 1, %s27
    $region7: #{tpu_custom_call.1} parent=1 // loop_footer_branch
      %26 = sbr.rel target = $region3
    $region8: #{tpu_custom_call.1} parent=1 // loop_exit
      _
    %6607 = vsyncpa [#allocation7], 1
    %s6608 = scalar_lea.sflag [#allocation7], 1
    %6609 = vsyncpa %s6608, 1

</llo_original>
